<compile_context>
chip_gen: v5e
topology: v5e:2x2
jax: 0.10.0
libtpu: 0.0.40
codegen_flags: <defaults>
</compile_context>

<pallas_src>
import math

import jax
import jax.numpy as jnp
from jax.experimental import pallas as pl
from jax.experimental.pallas import tpu as pltpu

# Constants from the PyTorch module definition.
CONV_IN = 2        # conv_input = len(['tempmax', 'tempmin'])
LSTM_IN = 12       # input_size (conv out channels)
HIDDEN = 64        # hidden_size
NUM_LAYERS = 5     # num_layers
OUT_SIZE = 1       # output_size


def cnn_lstm_kernel(x_ref, w_ih0_ref, b0_ref, w_ih_ref, w_hh_ref, b_ref,
                    fc_w_ref, fc_b_ref, out_ref, seq_buf, xw_buf):
    S, B, F = x_ref.shape
    H = HIDDEN
    L = NUM_LAYERS

    # TODO(synk): nn.LSTM inter-layer dropout=0.2 is training-only; this is the
    # inference (eval-mode) forward, so no dropout is applied.
    for l in range(L):
        # ---- Hoisted input projection: one big matmul per layer ----
        if l == 0:
            # Conv1d(k=1) already folded into w_ih0/b0 on the host.
            xin = x_ref[...].reshape(S * B, F)                       # (S*B, 2)
            xw = jnp.dot(xin, w_ih0_ref[...],
                         preferred_element_type=jnp.float32) + b0_ref[...]
        else:
            xin = seq_buf[...].reshape(S * B, H)                     # (S*B, H)
            xw = jnp.dot(xin, w_ih_ref[l - 1],
                         preferred_element_type=jnp.float32) + b_ref[l - 1]
        xw_buf[...] = xw.reshape(S, B, 4 * H)                        # (S, B, 4H)

        w_hh = w_hh_ref[l]                                           # (H, 4H), static index

        # ---- Serial recurrence: only h @ W_hh + XW[t] on the critical path ----
        h = jnp.zeros((B, H), jnp.float32)
        c = jnp.zeros((B, H), jnp.float32)
        for t in range(S):
            gates = (jnp.dot(h, w_hh, preferred_element_type=jnp.float32)
                     + xw_buf[t])                                    # (B, 4H); order i,f,g,o
            # Activate full vregs on the EUP, slice afterwards.
            sg = jax.nn.sigmoid(gates)
            i_g = sg[:, 0:H]
            f_g = sg[:, H:2 * H]
            o_g = sg[:, 3 * H:4 * H]
            g_g = jnp.tanh(gates[:, 2 * H:3 * H])
            c = f_g * c + i_g * g_g
            h = o_g * jnp.tanh(c)
            seq_buf[t] = h                 # this layer's output -> next layer's input

    # ---- Final fully-connected layer on the last timestep ----
    h_last = seq_buf[S - 1]                                          # (B, H)
    out_ref[...] = (jnp.dot(h_last, fc_w_ref[...],
                            preferred_element_type=jnp.float32)
                    + fc_b_ref[...])


def cnn_lstm_forward(x, params):
    """x: (B, S, CONV_IN) float32, batch-first (same as the PyTorch module)."""
    B, S, F = x.shape
    B_pad = max(8, ((B + 7) // 8) * 8)      # fill vreg sublanes; slice back below
    x_tm = jnp.transpose(x, (1, 0, 2))      # (S, B, F) time-major for the kernel
    if B_pad != B:
        x_tm = jnp.pad(x_tm, ((0, 0), (0, B_pad - B), (0, 0)))

    vmem = pl.BlockSpec(memory_space=pltpu.MemorySpace.VMEM)
    out = pl.pallas_call(
        cnn_lstm_kernel,
        out_shape=jax.ShapeDtypeStruct((B_pad, OUT_SIZE), jnp.float32),
        in_specs=[vmem] * 8,
        out_specs=vmem,
        scratch_shapes=[
            pltpu.VMEM((S, B_pad, HIDDEN), jnp.float32),       # per-layer hidden sequence
            pltpu.VMEM((S, B_pad, 4 * HIDDEN), jnp.float32),   # hoisted input projection
        ],
    )(x_tm, params['w_ih0'], params['b0'], params['w_ih_rest'],
      params['w_hh'], params['b_rest'], params['fc_w'], params['fc_b'])
    return out[:B]


def init_params(key):
    """Deterministic synthetic parameters with PyTorch-like uniform init."""
    H, L, IN, F = HIDDEN, NUM_LAYERS, LSTM_IN, CONV_IN
    ks = jax.random.split(key, 8)

    # Conv1d weight (out=IN, in=F, k=1) stored transposed as (F, IN).
    c_std = 1.0 / math.sqrt(F)
    conv_w = jax.random.uniform(ks[0], (F, IN), jnp.float32, -c_std, c_std)
    conv_b = jax.random.uniform(ks[1], (1, IN), jnp.float32, -c_std, c_std)

    # LSTM weights, transposed to (in_dim, 4H); gate order i, f, g, o.
    std = 1.0 / math.sqrt(H)
    w_ih0 = jax.random.uniform(jax.random.fold_in(ks[2], 0),
                               (IN, 4 * H), jnp.float32, -std, std)   # (12, 4H)
    w_ih_rest = jnp.stack([
        jax.random.uniform(jax.random.fold_in(ks[2], l),
                           (H, 4 * H), jnp.float32, -std, std)
        for l in range(1, L)])                                        # (L-1, H, 4H)
    w_hh = jnp.stack([
        jax.random.uniform(jax.random.fold_in(ks[3], l),
                           (H, 4 * H), jnp.float32, -std, std)
        for l in range(L)])                                           # (L, H, 4H)
    b_ih = jax.random.uniform(ks[4], (L, 1, 4 * H), jnp.float32, -std, std)
    b_hh = jax.random.uniform(ks[5], (L, 1, 4 * H), jnp.float32, -std, std)
    b = b_ih + b_hh                                                   # (L, 1, 4H)

    # Fold Conv1d(k=1) into layer-0's input weights/bias (numerically exact):
    #   gates0 = (x @ conv_w + conv_b) @ w_ih0 + b0
    #          = x @ (conv_w @ w_ih0) + (conv_b @ w_ih0 + b0)
    w_ih0_eff = conv_w @ w_ih0                                        # (F, 4H)
    b0_eff = conv_b @ w_ih0 + b[0]                                    # (1, 4H)

    fc_w = jax.random.uniform(ks[6], (H, OUT_SIZE), jnp.float32, -std, std)
    fc_b = jax.random.uniform(ks[7], (1, OUT_SIZE), jnp.float32, -std, std)

    return dict(w_ih0=w_ih0_eff, b0=b0_eff, w_ih_rest=w_ih_rest,
                w_hh=w_hh, b_rest=b[1:], fc_w=fc_w, fc_b=fc_b)


if __name__ == "__main__":
    key = jax.random.PRNGKey(0)
    pkey, xkey = jax.random.split(key)
    params = init_params(pkey)

    B, S = 4, 8
    x = jax.random.normal(xkey, (B, S, CONV_IN), jnp.float32)

    out = cnn_lstm_forward(x, params)
    jax.block_until_ready(out)
    assert out.shape == (B, OUT_SIZE) and out.dtype == jnp.float32
    print("KERNEL_OK")
</pallas_src>

<mosaic_0001>
module attributes {stable_mosaic.version = 11 : i64} {
  func.func @cnn_lstm_kernel(%arg0: memref<8x8x2xf32, #tpu.memory_space<vmem>>, %arg1: memref<2x256xf32, #tpu.memory_space<vmem>>, %arg2: memref<1x256xf32, #tpu.memory_space<vmem>>, %arg3: memref<4x64x256xf32, #tpu.memory_space<vmem>>, %arg4: memref<5x64x256xf32, #tpu.memory_space<vmem>>, %arg5: memref<4x1x256xf32, #tpu.memory_space<vmem>>, %arg6: memref<64x1xf32, #tpu.memory_space<vmem>>, %arg7: memref<1x1xf32, #tpu.memory_space<vmem>>, %arg8: memref<8x1xf32, #tpu.memory_space<vmem>>, %arg9: memref<8x8x64xf32, #tpu.memory_space<vmem>>, %arg10: memref<8x8x256xf32, #tpu.memory_space<vmem>>) attributes {dimension_semantics = [], scalar_prefetch = 0 : i64, scratch_operands = 2 : i64, tpu.core_type = #tpu.core_type<tc>} {
    %c0 = arith.constant 0 : index
    %c0_0 = arith.constant 0 : index
    %c0_1 = arith.constant 0 : index
    %0 = vector.load %arg0[%c0, %c0_0, %c0_1] : memref<8x8x2xf32, #tpu.memory_space<vmem>>, vector<8x8x2xf32>
    %1 = vector.shape_cast %0 : vector<8x8x2xf32> to vector<64x2xf32>
    %c0_2 = arith.constant 0 : index
    %c0_3 = arith.constant 0 : index
    %2 = vector.load %arg1[%c0_2, %c0_3] : memref<2x256xf32, #tpu.memory_space<vmem>>, vector<2x256xf32>
    %cst = arith.constant dense<0.000000e+00> : vector<64x256xf32>
    %3 = tpu.matmul %1, %2, %cst {dimension_numbers = #tpu.dot_dimension_numbers<[1], [0], [0], [1], [0, 0, 1, 1], [], []>} : vector<64x2xf32>, vector<2x256xf32>, vector<64x256xf32> -> vector<64x256xf32>
    %c0_4 = arith.constant 0 : index
    %c0_5 = arith.constant 0 : index
    %4 = vector.load %arg2[%c0_4, %c0_5] : memref<1x256xf32, #tpu.memory_space<vmem>>, vector<1x256xf32>
    %5 = vector.broadcast %4 : vector<1x256xf32> to vector<64x256xf32>
    %6 = arith.addf %3, %5 : vector<64x256xf32>
    %7 = vector.shape_cast %6 : vector<64x256xf32> to vector<8x8x256xf32>
    %c0_6 = arith.constant 0 : index
    %c0_7 = arith.constant 0 : index
    %c0_8 = arith.constant 0 : index
    %8 = vector.load %arg10[%c0_6, %c0_7, %c0_8] : memref<8x8x256xf32, #tpu.memory_space<vmem>>, vector<8x8x256xf32>
    tpu.vector_store %arg10[%c0_6, %c0_7, %c0_8], %7 {strides = array<i32>} : memref<8x8x256xf32, #tpu.memory_space<vmem>>, vector<8x8x256xf32>,
    %c0_9 = arith.constant 0 : index
    %c0_10 = arith.constant 0 : index
    %c0_11 = arith.constant 0 : index
    %9 = vector.load %arg4[%c0_9, %c0_10, %c0_11] : memref<5x64x256xf32, #tpu.memory_space<vmem>>, vector<1x64x256xf32>
    %10 = vector.shape_cast %9 : vector<1x64x256xf32> to vector<64x256xf32>
    %cst_12 = arith.constant 0.000000e+00 : f32
    %11 = vector.broadcast %cst_12 : f32 to vector<8x64xf32>
    %cst_13 = arith.constant 0.000000e+00 : f32
    %12 = vector.broadcast %cst_13 : f32 to vector<8x64xf32>
    %cst_14 = arith.constant dense<0.000000e+00> : vector<8x256xf32>
    %13 = tpu.matmul %11, %10, %cst_14 {dimension_numbers = #tpu.dot_dimension_numbers<[1], [0], [0], [1], [0, 0, 1, 1], [], []>} : vector<8x64xf32>, vector<64x256xf32>, vector<8x256xf32> -> vector<8x256xf32>
    %c0_15 = arith.constant 0 : index
    %c0_16 = arith.constant 0 : index
    %c0_17 = arith.constant 0 : index
    %14 = vector.load %arg10[%c0_15, %c0_16, %c0_17] : memref<8x8x256xf32, #tpu.memory_space<vmem>>, vector<1x8x256xf32>
    %15 = vector.shape_cast %14 : vector<1x8x256xf32> to vector<8x256xf32>
    %16 = arith.addf %13, %15 : vector<8x256xf32>
    %17 = arith.negf %16 : vector<8x256xf32>
    %18 = math.exp %17 : vector<8x256xf32>
    %cst_18 = arith.constant 1.000000e+00 : f32
    %19 = vector.broadcast %cst_18 : f32 to vector<8x256xf32>
    %20 = arith.addf %19, %18 : vector<8x256xf32>
    %21 = arith.divf %19, %20 : vector<8x256xf32>
    %22 = vector.extract_strided_slice %21 {offsets = [0, 0], sizes = [8, 64], strides = [1, 1]} : vector<8x256xf32> to vector<8x64xf32>
    %23 = vector.extract_strided_slice %21 {offsets = [0, 64], sizes = [8, 64], strides = [1, 1]} : vector<8x256xf32> to vector<8x64xf32>
    %24 = vector.extract_strided_slice %21 {offsets = [0, 192], sizes = [8, 64], strides = [1, 1]} : vector<8x256xf32> to vector<8x64xf32>
    %25 = vector.extract_strided_slice %16 {offsets = [0, 128], sizes = [8, 64], strides = [1, 1]} : vector<8x256xf32> to vector<8x64xf32>
    %26 = math.tanh %25 : vector<8x64xf32>
    %27 = arith.mulf %23, %12 : vector<8x64xf32>
    %28 = arith.mulf %22, %26 : vector<8x64xf32>
    %29 = arith.addf %27, %28 : vector<8x64xf32>
    %30 = math.tanh %29 : vector<8x64xf32>
    %31 = arith.mulf %24, %30 : vector<8x64xf32>
    %c0_19 = arith.constant 0 : index
    %c0_20 = arith.constant 0 : index
    %c0_21 = arith.constant 0 : index
    %32 = vector.load %arg9[%c0_19, %c0_20, %c0_21] : memref<8x8x64xf32, #tpu.memory_space<vmem>>, vector<1x8x64xf32>
    %33 = vector.shape_cast %32 : vector<1x8x64xf32> to vector<8x64xf32>
    %34 = vector.shape_cast %31 : vector<8x64xf32> to vector<1x8x64xf32>
    tpu.vector_store %arg9[%c0_19, %c0_20, %c0_21], %34 {strides = array<i32>} : memref<8x8x64xf32, #tpu.memory_space<vmem>>, vector<1x8x64xf32>,
    %cst_22 = arith.constant dense<0.000000e+00> : vector<8x256xf32>
    %35 = tpu.matmul %31, %10, %cst_22 {dimension_numbers = #tpu.dot_dimension_numbers<[1], [0], [0], [1], [0, 0, 1, 1], [], []>} : vector<8x64xf32>, vector<64x256xf32>, vector<8x256xf32> -> vector<8x256xf32>
    %c1 = arith.constant 1 : index
    %c0_23 = arith.constant 0 : index
    %c0_24 = arith.constant 0 : index
    %36 = vector.load %arg10[%c1, %c0_23, %c0_24] : memref<8x8x256xf32, #tpu.memory_space<vmem>>, vector<1x8x256xf32>
    %37 = vector.shape_cast %36 : vector<1x8x256xf32> to vector<8x256xf32>
    %38 = arith.addf %35, %37 : vector<8x256xf32>
    %39 = arith.negf %38 : vector<8x256xf32>
    %40 = math.exp %39 : vector<8x256xf32>
    %cst_25 = arith.constant 1.000000e+00 : f32
    %41 = vector.broadcast %cst_25 : f32 to vector<8x256xf32>
    %42 = arith.addf %41, %40 : vector<8x256xf32>
    %43 = arith.divf %41, %42 : vector<8x256xf32>
    %44 = vector.extract_strided_slice %43 {offsets = [0, 0], sizes = [8, 64], strides = [1, 1]} : vector<8x256xf32> to vector<8x64xf32>
    %45 = vector.extract_strided_slice %43 {offsets = [0, 64], sizes = [8, 64], strides = [1, 1]} : vector<8x256xf32> to vector<8x64xf32>
    %46 = vector.extract_strided_slice %43 {offsets = [0, 192], sizes = [8, 64], strides = [1, 1]} : vector<8x256xf32> to vector<8x64xf32>
    %47 = vector.extract_strided_slice %38 {offsets = [0, 128], sizes = [8, 64], strides = [1, 1]} : vector<8x256xf32> to vector<8x64xf32>
    %48 = math.tanh %47 : vector<8x64xf32>
    %49 = arith.mulf %45, %29 : vector<8x64xf32>
    %50 = arith.mulf %44, %48 : vector<8x64xf32>
    %51 = arith.addf %49, %50 : vector<8x64xf32>
    %52 = math.tanh %51 : vector<8x64xf32>
    %53 = arith.mulf %46, %52 : vector<8x64xf32>
    %c1_26 = arith.constant 1 : index
    %c0_27 = arith.constant 0 : index
    %c0_28 = arith.constant 0 : index
    %54 = vector.load %arg9[%c1_26, %c0_27, %c0_28] : memref<8x8x64xf32, #tpu.memory_space<vmem>>, vector<1x8x64xf32>
    %55 = vector.shape_cast %54 : vector<1x8x64xf32> to vector<8x64xf32>
    %56 = vector.shape_cast %53 : vector<8x64xf32> to vector<1x8x64xf32>
    tpu.vector_store %arg9[%c1_26, %c0_27, %c0_28], %56 {strides = array<i32>} : memref<8x8x64xf32, #tpu.memory_space<vmem>>, vector<1x8x64xf32>,
    %cst_29 = arith.constant dense<0.000000e+00> : vector<8x256xf32>
    %57 = tpu.matmul %53, %10, %cst_29 {dimension_numbers = #tpu.dot_dimension_numbers<[1], [0], [0], [1], [0, 0, 1, 1], [], []>} : vector<8x64xf32>, vector<64x256xf32>, vector<8x256xf32> -> vector<8x256xf32>
    %c2 = arith.constant 2 : index
    %c0_30 = arith.constant 0 : index
    %c0_31 = arith.constant 0 : index
    %58 = vector.load %arg10[%c2, %c0_30, %c0_31] : memref<8x8x256xf32, #tpu.memory_space<vmem>>, vector<1x8x256xf32>
    %59 = vector.shape_cast %58 : vector<1x8x256xf32> to vector<8x256xf32>
    %60 = arith.addf %57, %59 : vector<8x256xf32>
    %61 = arith.negf %60 : vector<8x256xf32>
    %62 = math.exp %61 : vector<8x256xf32>
    %cst_32 = arith.constant 1.000000e+00 : f32
    %63 = vector.broadcast %cst_32 : f32 to vector<8x256xf32>
    %64 = arith.addf %63, %62 : vector<8x256xf32>
    %65 = arith.divf %63, %64 : vector<8x256xf32>
    %66 = vector.extract_strided_slice %65 {offsets = [0, 0], sizes = [8, 64], strides = [1, 1]} : vector<8x256xf32> to vector<8x64xf32>
    %67 = vector.extract_strided_slice %65 {offsets = [0, 64], sizes = [8, 64], strides = [1, 1]} : vector<8x256xf32> to vector<8x64xf32>
    %68 = vector.extract_strided_slice %65 {offsets = [0, 192], sizes = [8, 64], strides = [1, 1]} : vector<8x256xf32> to vector<8x64xf32>
    %69 = vector.extract_strided_slice %60 {offsets = [0, 128], sizes = [8, 64], strides = [1, 1]} : vector<8x256xf32> to vector<8x64xf32>
    %70 = math.tanh %69 : vector<8x64xf32>
    %71 = arith.mulf %67, %51 : vector<8x64xf32>
    %72 = arith.mulf %66, %70 : vector<8x64xf32>
    %73 = arith.addf %71, %72 : vector<8x64xf32>
    %74 = math.tanh %73 : vector<8x64xf32>
    %75 = arith.mulf %68, %74 : vector<8x64xf32>
    %c2_33 = arith.constant 2 : index
    %c0_34 = arith.constant 0 : index
    %c0_35 = arith.constant 0 : index
    %76 = vector.load %arg9[%c2_33, %c0_34, %c0_35] : memref<8x8x64xf32, #tpu.memory_space<vmem>>, vector<1x8x64xf32>
    %77 = vector.shape_cast %76 : vector<1x8x64xf32> to vector<8x64xf32>
    %78 = vector.shape_cast %75 : vector<8x64xf32> to vector<1x8x64xf32>
    tpu.vector_store %arg9[%c2_33, %c0_34, %c0_35], %78 {strides = array<i32>} : memref<8x8x64xf32, #tpu.memory_space<vmem>>, vector<1x8x64xf32>,
    %cst_36 = arith.constant dense<0.000000e+00> : vector<8x256xf32>
    %79 = tpu.matmul %75, %10, %cst_36 {dimension_numbers = #tpu.dot_dimension_numbers<[1], [0], [0], [1], [0, 0, 1, 1], [], []>} : vector<8x64xf32>, vector<64x256xf32>, vector<8x256xf32> -> vector<8x256xf32>
    %c3 = arith.constant 3 : index
    %c0_37 = arith.constant 0 : index
    %c0_38 = arith.constant 0 : index
    %80 = vector.load %arg10[%c3, %c0_37, %c0_38] : memref<8x8x256xf32, #tpu.memory_space<vmem>>, vector<1x8x256xf32>
    %81 = vector.shape_cast %80 : vector<1x8x256xf32> to vector<8x256xf32>
    %82 = arith.addf %79, %81 : vector<8x256xf32>
    %83 = arith.negf %82 : vector<8x256xf32>
    %84 = math.exp %83 : vector<8x256xf32>
    %cst_39 = arith.constant 1.000000e+00 : f32
    %85 = vector.broadcast %cst_39 : f32 to vector<8x256xf32>
    %86 = arith.addf %85, %84 : vector<8x256xf32>
    %87 = arith.divf %85, %86 : vector<8x256xf32>
    %88 = vector.extract_strided_slice %87 {offsets = [0, 0], sizes = [8, 64], strides = [1, 1]} : vector<8x256xf32> to vector<8x64xf32>
    %89 = vector.extract_strided_slice %87 {offsets = [0, 64], sizes = [8, 64], strides = [1, 1]} : vector<8x256xf32> to vector<8x64xf32>
    %90 = vector.extract_strided_slice %87 {offsets = [0, 192], sizes = [8, 64], strides = [1, 1]} : vector<8x256xf32> to vector<8x64xf32>
    %91 = vector.extract_strided_slice %82 {offsets = [0, 128], sizes = [8, 64], strides = [1, 1]} : vector<8x256xf32> to vector<8x64xf32>
    %92 = math.tanh %91 : vector<8x64xf32>
    %93 = arith.mulf %89, %73 : vector<8x64xf32>
    %94 = arith.mulf %88, %92 : vector<8x64xf32>
    %95 = arith.addf %93, %94 : vector<8x64xf32>
    %96 = math.tanh %95 : vector<8x64xf32>
    %97 = arith.mulf %90, %96 : vector<8x64xf32>
    %c3_40 = arith.constant 3 : index
    %c0_41 = arith.constant 0 : index
    %c0_42 = arith.constant 0 : index
    %98 = vector.load %arg9[%c3_40, %c0_41, %c0_42] : memref<8x8x64xf32, #tpu.memory_space<vmem>>, vector<1x8x64xf32>
    %99 = vector.shape_cast %98 : vector<1x8x64xf32> to vector<8x64xf32>
    %100 = vector.shape_cast %97 : vector<8x64xf32> to vector<1x8x64xf32>
    tpu.vector_store %arg9[%c3_40, %c0_41, %c0_42], %100 {strides = array<i32>} : memref<8x8x64xf32, #tpu.memory_space<vmem>>, vector<1x8x64xf32>,
    %cst_43 = arith.constant dense<0.000000e+00> : vector<8x256xf32>
    %101 = tpu.matmul %97, %10, %cst_43 {dimension_numbers = #tpu.dot_dimension_numbers<[1], [0], [0], [1], [0, 0, 1, 1], [], []>} : vector<8x64xf32>, vector<64x256xf32>, vector<8x256xf32> -> vector<8x256xf32>
    %c4 = arith.constant 4 : index
    %c0_44 = arith.constant 0 : index
    %c0_45 = arith.constant 0 : index
    %102 = vector.load %arg10[%c4, %c0_44, %c0_45] : memref<8x8x256xf32, #tpu.memory_space<vmem>>, vector<1x8x256xf32>
    %103 = vector.shape_cast %102 : vector<1x8x256xf32> to vector<8x256xf32>
    %104 = arith.addf %101, %103 : vector<8x256xf32>
    %105 = arith.negf %104 : vector<8x256xf32>
    %106 = math.exp %105 : vector<8x256xf32>
    %cst_46 = arith.constant 1.000000e+00 : f32
    %107 = vector.broadcast %cst_46 : f32 to vector<8x256xf32>
    %108 = arith.addf %107, %106 : vector<8x256xf32>
    %109 = arith.divf %107, %108 : vector<8x256xf32>
    %110 = vector.extract_strided_slice %109 {offsets = [0, 0], sizes = [8, 64], strides = [1, 1]} : vector<8x256xf32> to vector<8x64xf32>
    %111 = vector.extract_strided_slice %109 {offsets = [0, 64], sizes = [8, 64], strides = [1, 1]} : vector<8x256xf32> to vector<8x64xf32>
    %112 = vector.extract_strided_slice %109 {offsets = [0, 192], sizes = [8, 64], strides = [1, 1]} : vector<8x256xf32> to vector<8x64xf32>
    %113 = vector.extract_strided_slice %104 {offsets = [0, 128], sizes = [8, 64], strides = [1, 1]} : vector<8x256xf32> to vector<8x64xf32>
    %114 = math.tanh %113 : vector<8x64xf32>
    %115 = arith.mulf %111, %95 : vector<8x64xf32>
    %116 = arith.mulf %110, %114 : vector<8x64xf32>
    %117 = arith.addf %115, %116 : vector<8x64xf32>
    %118 = math.tanh %117 : vector<8x64xf32>
    %119 = arith.mulf %112, %118 : vector<8x64xf32>
    %c4_47 = arith.constant 4 : index
    %c0_48 = arith.constant 0 : index
    %c0_49 = arith.constant 0 : index
    %120 = vector.load %arg9[%c4_47, %c0_48, %c0_49] : memref<8x8x64xf32, #tpu.memory_space<vmem>>, vector<1x8x64xf32>
    %121 = vector.shape_cast %120 : vector<1x8x64xf32> to vector<8x64xf32>
    %122 = vector.shape_cast %119 : vector<8x64xf32> to vector<1x8x64xf32>
    tpu.vector_store %arg9[%c4_47, %c0_48, %c0_49], %122 {strides = array<i32>} : memref<8x8x64xf32, #tpu.memory_space<vmem>>, vector<1x8x64xf32>,
    %cst_50 = arith.constant dense<0.000000e+00> : vector<8x256xf32>
    %123 = tpu.matmul %119, %10, %cst_50 {dimension_numbers = #tpu.dot_dimension_numbers<[1], [0], [0], [1], [0, 0, 1, 1], [], []>} : vector<8x64xf32>, vector<64x256xf32>, vector<8x256xf32> -> vector<8x256xf32>
    %c5 = arith.constant 5 : index
    %c0_51 = arith.constant 0 : index
    %c0_52 = arith.constant 0 : index
    %124 = vector.load %arg10[%c5, %c0_51, %c0_52] : memref<8x8x256xf32, #tpu.memory_space<vmem>>, vector<1x8x256xf32>
    %125 = vector.shape_cast %124 : vector<1x8x256xf32> to vector<8x256xf32>
    %126 = arith.addf %123, %125 : vector<8x256xf32>
    %127 = arith.negf %126 : vector<8x256xf32>
    %128 = math.exp %127 : vector<8x256xf32>
    %cst_53 = arith.constant 1.000000e+00 : f32
    %129 = vector.broadcast %cst_53 : f32 to vector<8x256xf32>
    %130 = arith.addf %129, %128 : vector<8x256xf32>
    %131 = arith.divf %129, %130 : vector<8x256xf32>
    %132 = vector.extract_strided_slice %131 {offsets = [0, 0], sizes = [8, 64], strides = [1, 1]} : vector<8x256xf32> to vector<8x64xf32>
    %133 = vector.extract_strided_slice %131 {offsets = [0, 64], sizes = [8, 64], strides = [1, 1]} : vector<8x256xf32> to vector<8x64xf32>
    %134 = vector.extract_strided_slice %131 {offsets = [0, 192], sizes = [8, 64], strides = [1, 1]} : vector<8x256xf32> to vector<8x64xf32>
    %135 = vector.extract_strided_slice %126 {offsets = [0, 128], sizes = [8, 64], strides = [1, 1]} : vector<8x256xf32> to vector<8x64xf32>
    %136 = math.tanh %135 : vector<8x64xf32>
    %137 = arith.mulf %133, %117 : vector<8x64xf32>
    %138 = arith.mulf %132, %136 : vector<8x64xf32>
    %139 = arith.addf %137, %138 : vector<8x64xf32>
    %140 = math.tanh %139 : vector<8x64xf32>
    %141 = arith.mulf %134, %140 : vector<8x64xf32>
    %c5_54 = arith.constant 5 : index
    %c0_55 = arith.constant 0 : index
    %c0_56 = arith.constant 0 : index
    %142 = vector.load %arg9[%c5_54, %c0_55, %c0_56] : memref<8x8x64xf32, #tpu.memory_space<vmem>>, vector<1x8x64xf32>
    %143 = vector.shape_cast %142 : vector<1x8x64xf32> to vector<8x64xf32>
    %144 = vector.shape_cast %141 : vector<8x64xf32> to vector<1x8x64xf32>
    tpu.vector_store %arg9[%c5_54, %c0_55, %c0_56], %144 {strides = array<i32>} : memref<8x8x64xf32, #tpu.memory_space<vmem>>, vector<1x8x64xf32>,
    %cst_57 = arith.constant dense<0.000000e+00> : vector<8x256xf32>
    %145 = tpu.matmul %141, %10, %cst_57 {dimension_numbers = #tpu.dot_dimension_numbers<[1], [0], [0], [1], [0, 0, 1, 1], [], []>} : vector<8x64xf32>, vector<64x256xf32>, vector<8x256xf32> -> vector<8x256xf32>
    %c6 = arith.constant 6 : index
    %c0_58 = arith.constant 0 : index
    %c0_59 = arith.constant 0 : index
    %146 = vector.load %arg10[%c6, %c0_58, %c0_59] : memref<8x8x256xf32, #tpu.memory_space<vmem>>, vector<1x8x256xf32>
    %147 = vector.shape_cast %146 : vector<1x8x256xf32> to vector<8x256xf32>
    %148 = arith.addf %145, %147 : vector<8x256xf32>
    %149 = arith.negf %148 : vector<8x256xf32>
    %150 = math.exp %149 : vector<8x256xf32>
    %cst_60 = arith.constant 1.000000e+00 : f32
    %151 = vector.broadcast %cst_60 : f32 to vector<8x256xf32>
    %152 = arith.addf %151, %150 : vector<8x256xf32>
    %153 = arith.divf %151, %152 : vector<8x256xf32>
    %154 = vector.extract_strided_slice %153 {offsets = [0, 0], sizes = [8, 64], strides = [1, 1]} : vector<8x256xf32> to vector<8x64xf32>
    %155 = vector.extract_strided_slice %153 {offsets = [0, 64], sizes = [8, 64], strides = [1, 1]} : vector<8x256xf32> to vector<8x64xf32>
    %156 = vector.extract_strided_slice %153 {offsets = [0, 192], sizes = [8, 64], strides = [1, 1]} : vector<8x256xf32> to vector<8x64xf32>
    %157 = vector.extract_strided_slice %148 {offsets = [0, 128], sizes = [8, 64], strides = [1, 1]} : vector<8x256xf32> to vector<8x64xf32>
    %158 = math.tanh %157 : vector<8x64xf32>
    %159 = arith.mulf %155, %139 : vector<8x64xf32>
    %160 = arith.mulf %154, %158 : vector<8x64xf32>
    %161 = arith.addf %159, %160 : vector<8x64xf32>
    %162 = math.tanh %161 : vector<8x64xf32>
    %163 = arith.mulf %156, %162 : vector<8x64xf32>
    %c6_61 = arith.constant 6 : index
    %c0_62 = arith.constant 0 : index
    %c0_63 = arith.constant 0 : index
    %164 = vector.load %arg9[%c6_61, %c0_62, %c0_63] : memref<8x8x64xf32, #tpu.memory_space<vmem>>, vector<1x8x64xf32>
    %165 = vector.shape_cast %164 : vector<1x8x64xf32> to vector<8x64xf32>
    %166 = vector.shape_cast %163 : vector<8x64xf32> to vector<1x8x64xf32>
    tpu.vector_store %arg9[%c6_61, %c0_62, %c0_63], %166 {strides = array<i32>} : memref<8x8x64xf32, #tpu.memory_space<vmem>>, vector<1x8x64xf32>,
    %cst_64 = arith.constant dense<0.000000e+00> : vector<8x256xf32>
    %167 = tpu.matmul %163, %10, %cst_64 {dimension_numbers = #tpu.dot_dimension_numbers<[1], [0], [0], [1], [0, 0, 1, 1], [], []>} : vector<8x64xf32>, vector<64x256xf32>, vector<8x256xf32> -> vector<8x256xf32>
    %c7 = arith.constant 7 : index
    %c0_65 = arith.constant 0 : index
    %c0_66 = arith.constant 0 : index
    %168 = vector.load %arg10[%c7, %c0_65, %c0_66] : memref<8x8x256xf32, #tpu.memory_space<vmem>>, vector<1x8x256xf32>
    %169 = vector.shape_cast %168 : vector<1x8x256xf32> to vector<8x256xf32>
    %170 = arith.addf %167, %169 : vector<8x256xf32>
    %171 = arith.negf %170 : vector<8x256xf32>
    %172 = math.exp %171 : vector<8x256xf32>
    %cst_67 = arith.constant 1.000000e+00 : f32
    %173 = vector.broadcast %cst_67 : f32 to vector<8x256xf32>
    %174 = arith.addf %173, %172 : vector<8x256xf32>
    %175 = arith.divf %173, %174 : vector<8x256xf32>
    %176 = vector.extract_strided_slice %175 {offsets = [0, 0], sizes = [8, 64], strides = [1, 1]} : vector<8x256xf32> to vector<8x64xf32>
    %177 = vector.extract_strided_slice %175 {offsets = [0, 64], sizes = [8, 64], strides = [1, 1]} : vector<8x256xf32> to vector<8x64xf32>
    %178 = vector.extract_strided_slice %175 {offsets = [0, 192], sizes = [8, 64], strides = [1, 1]} : vector<8x256xf32> to vector<8x64xf32>
    %179 = vector.extract_strided_slice %170 {offsets = [0, 128], sizes = [8, 64], strides = [1, 1]} : vector<8x256xf32> to vector<8x64xf32>
    %180 = math.tanh %179 : vector<8x64xf32>
    %181 = arith.mulf %177, %161 : vector<8x64xf32>
    %182 = arith.mulf %176, %180 : vector<8x64xf32>
    %183 = arith.addf %181, %182 : vector<8x64xf32>
    %184 = math.tanh %183 : vector<8x64xf32>
    %185 = arith.mulf %178, %184 : vector<8x64xf32>
    %c7_68 = arith.constant 7 : index
    %c0_69 = arith.constant 0 : index
    %c0_70 = arith.constant 0 : index
    %186 = vector.load %arg9[%c7_68, %c0_69, %c0_70] : memref<8x8x64xf32, #tpu.memory_space<vmem>>, vector<1x8x64xf32>
    %187 = vector.shape_cast %186 : vector<1x8x64xf32> to vector<8x64xf32>
    %188 = vector.shape_cast %185 : vector<8x64xf32> to vector<1x8x64xf32>
    tpu.vector_store %arg9[%c7_68, %c0_69, %c0_70], %188 {strides = array<i32>} : memref<8x8x64xf32, #tpu.memory_space<vmem>>, vector<1x8x64xf32>,
    %c0_71 = arith.constant 0 : index
    %c0_72 = arith.constant 0 : index
    %c0_73 = arith.constant 0 : index
    %189 = vector.load %arg9[%c0_71, %c0_72, %c0_73] : memref<8x8x64xf32, #tpu.memory_space<vmem>>, vector<8x8x64xf32>
    %190 = vector.shape_cast %189 : vector<8x8x64xf32> to vector<64x64xf32>
    %c0_74 = arith.constant 0 : index
    %c0_75 = arith.constant 0 : index
    %c0_76 = arith.constant 0 : index
    %191 = vector.load %arg3[%c0_74, %c0_75, %c0_76] : memref<4x64x256xf32, #tpu.memory_space<vmem>>, vector<1x64x256xf32>
    %192 = vector.shape_cast %191 : vector<1x64x256xf32> to vector<64x256xf32>
    %cst_77 = arith.constant dense<0.000000e+00> : vector<64x256xf32>
    %193 = tpu.matmul %190, %192, %cst_77 {dimension_numbers = #tpu.dot_dimension_numbers<[1], [0], [0], [1], [0, 0, 1, 1], [], []>} : vector<64x64xf32>, vector<64x256xf32>, vector<64x256xf32> -> vector<64x256xf32>
    %c0_78 = arith.constant 0 : index
    %c0_79 = arith.constant 0 : index
    %c0_80 = arith.constant 0 : index
    %194 = vector.load %arg5[%c0_78, %c0_79, %c0_80] : memref<4x1x256xf32, #tpu.memory_space<vmem>>, vector<1x1x256xf32>
    %195 = vector.shape_cast %194 : vector<1x1x256xf32> to vector<1x256xf32>
    %196 = vector.broadcast %195 : vector<1x256xf32> to vector<64x256xf32>
    %197 = arith.addf %193, %196 : vector<64x256xf32>
    %198 = vector.shape_cast %197 : vector<64x256xf32> to vector<8x8x256xf32>
    %c0_81 = arith.constant 0 : index
    %c0_82 = arith.constant 0 : index
    %c0_83 = arith.constant 0 : index
    %199 = vector.load %arg10[%c0_81, %c0_82, %c0_83] : memref<8x8x256xf32, #tpu.memory_space<vmem>>, vector<8x8x256xf32>
    tpu.vector_store %arg10[%c0_81, %c0_82, %c0_83], %198 {strides = array<i32>} : memref<8x8x256xf32, #tpu.memory_space<vmem>>, vector<8x8x256xf32>,
    %c1_84 = arith.constant 1 : index
    %c0_85 = arith.constant 0 : index
    %c0_86 = arith.constant 0 : index
    %200 = vector.load %arg4[%c1_84, %c0_85, %c0_86] : memref<5x64x256xf32, #tpu.memory_space<vmem>>, vector<1x64x256xf32>
    %201 = vector.shape_cast %200 : vector<1x64x256xf32> to vector<64x256xf32>
    %cst_87 = arith.constant 0.000000e+00 : f32
    %202 = vector.broadcast %cst_87 : f32 to vector<8x64xf32>
    %cst_88 = arith.constant 0.000000e+00 : f32
    %203 = vector.broadcast %cst_88 : f32 to vector<8x64xf32>
    %cst_89 = arith.constant dense<0.000000e+00> : vector<8x256xf32>
    %204 = tpu.matmul %202, %201, %cst_89 {dimension_numbers = #tpu.dot_dimension_numbers<[1], [0], [0], [1], [0, 0, 1, 1], [], []>} : vector<8x64xf32>, vector<64x256xf32>, vector<8x256xf32> -> vector<8x256xf32>
    %c0_90 = arith.constant 0 : index
    %c0_91 = arith.constant 0 : index
    %c0_92 = arith.constant 0 : index
    %205 = vector.load %arg10[%c0_90, %c0_91, %c0_92] : memref<8x8x256xf32, #tpu.memory_space<vmem>>, vector<1x8x256xf32>
    %206 = vector.shape_cast %205 : vector<1x8x256xf32> to vector<8x256xf32>
    %207 = arith.addf %204, %206 : vector<8x256xf32>
    %208 = arith.negf %207 : vector<8x256xf32>
    %209 = math.exp %208 : vector<8x256xf32>
    %cst_93 = arith.constant 1.000000e+00 : f32
    %210 = vector.broadcast %cst_93 : f32 to vector<8x256xf32>
    %211 = arith.addf %210, %209 : vector<8x256xf32>
    %212 = arith.divf %210, %211 : vector<8x256xf32>
    %213 = vector.extract_strided_slice %212 {offsets = [0, 0], sizes = [8, 64], strides = [1, 1]} : vector<8x256xf32> to vector<8x64xf32>
    %214 = vector.extract_strided_slice %212 {offsets = [0, 64], sizes = [8, 64], strides = [1, 1]} : vector<8x256xf32> to vector<8x64xf32>
    %215 = vector.extract_strided_slice %212 {offsets = [0, 192], sizes = [8, 64], strides = [1, 1]} : vector<8x256xf32> to vector<8x64xf32>
    %216 = vector.extract_strided_slice %207 {offsets = [0, 128], sizes = [8, 64], strides = [1, 1]} : vector<8x256xf32> to vector<8x64xf32>
    %217 = math.tanh %216 : vector<8x64xf32>
    %218 = arith.mulf %214, %203 : vector<8x64xf32>
    %219 = arith.mulf %213, %217 : vector<8x64xf32>
    %220 = arith.addf %218, %219 : vector<8x64xf32>
    %221 = math.tanh %220 : vector<8x64xf32>
    %222 = arith.mulf %215, %221 : vector<8x64xf32>
    %c0_94 = arith.constant 0 : index
    %c0_95 = arith.constant 0 : index
    %c0_96 = arith.constant 0 : index
    %223 = vector.load %arg9[%c0_94, %c0_95, %c0_96] : memref<8x8x64xf32, #tpu.memory_space<vmem>>, vector<1x8x64xf32>
    %224 = vector.shape_cast %223 : vector<1x8x64xf32> to vector<8x64xf32>
    %225 = vector.shape_cast %222 : vector<8x64xf32> to vector<1x8x64xf32>
    tpu.vector_store %arg9[%c0_94, %c0_95, %c0_96], %225 {strides = array<i32>} : memref<8x8x64xf32, #tpu.memory_space<vmem>>, vector<1x8x64xf32>,
    %cst_97 = arith.constant dense<0.000000e+00> : vector<8x256xf32>
    %226 = tpu.matmul %222, %201, %cst_97 {dimension_numbers = #tpu.dot_dimension_numbers<[1], [0], [0], [1], [0, 0, 1, 1], [], []>} : vector<8x64xf32>, vector<64x256xf32>, vector<8x256xf32> -> vector<8x256xf32>
    %c1_98 = arith.constant 1 : index
    %c0_99 = arith.constant 0 : index
    %c0_100 = arith.constant 0 : index
    %227 = vector.load %arg10[%c1_98, %c0_99, %c0_100] : memref<8x8x256xf32, #tpu.memory_space<vmem>>, vector<1x8x256xf32>
    %228 = vector.shape_cast %227 : vector<1x8x256xf32> to vector<8x256xf32>
    %229 = arith.addf %226, %228 : vector<8x256xf32>
    %230 = arith.negf %229 : vector<8x256xf32>
    %231 = math.exp %230 : vector<8x256xf32>
    %cst_101 = arith.constant 1.000000e+00 : f32
    %232 = vector.broadcast %cst_101 : f32 to vector<8x256xf32>
    %233 = arith.addf %232, %231 : vector<8x256xf32>
    %234 = arith.divf %232, %233 : vector<8x256xf32>
    %235 = vector.extract_strided_slice %234 {offsets = [0, 0], sizes = [8, 64], strides = [1, 1]} : vector<8x256xf32> to vector<8x64xf32>
    %236 = vector.extract_strided_slice %234 {offsets = [0, 64], sizes = [8, 64], strides = [1, 1]} : vector<8x256xf32> to vector<8x64xf32>
    %237 = vector.extract_strided_slice %234 {offsets = [0, 192], sizes = [8, 64], strides = [1, 1]} : vector<8x256xf32> to vector<8x64xf32>
    %238 = vector.extract_strided_slice %229 {offsets = [0, 128], sizes = [8, 64], strides = [1, 1]} : vector<8x256xf32> to vector<8x64xf32>
    %239 = math.tanh %238 : vector<8x64xf32>
    %240 = arith.mulf %236, %220 : vector<8x64xf32>
    %241 = arith.mulf %235, %239 : vector<8x64xf32>
    %242 = arith.addf %240, %241 : vector<8x64xf32>
    %243 = math.tanh %242 : vector<8x64xf32>
    %244 = arith.mulf %237, %243 : vector<8x64xf32>
    %c1_102 = arith.constant 1 : index
    %c0_103 = arith.constant 0 : index
    %c0_104 = arith.constant 0 : index
    %245 = vector.load %arg9[%c1_102, %c0_103, %c0_104] : memref<8x8x64xf32, #tpu.memory_space<vmem>>, vector<1x8x64xf32>
    %246 = vector.shape_cast %245 : vector<1x8x64xf32> to vector<8x64xf32>
    %247 = vector.shape_cast %244 : vector<8x64xf32> to vector<1x8x64xf32>
    tpu.vector_store %arg9[%c1_102, %c0_103, %c0_104], %247 {strides = array<i32>} : memref<8x8x64xf32, #tpu.memory_space<vmem>>, vector<1x8x64xf32>,
    %cst_105 = arith.constant dense<0.000000e+00> : vector<8x256xf32>
    %248 = tpu.matmul %244, %201, %cst_105 {dimension_numbers = #tpu.dot_dimension_numbers<[1], [0], [0], [1], [0, 0, 1, 1], [], []>} : vector<8x64xf32>, vector<64x256xf32>, vector<8x256xf32> -> vector<8x256xf32>
    %c2_106 = arith.constant 2 : index
    %c0_107 = arith.constant 0 : index
    %c0_108 = arith.constant 0 : index
    %249 = vector.load %arg10[%c2_106, %c0_107, %c0_108] : memref<8x8x256xf32, #tpu.memory_space<vmem>>, vector<1x8x256xf32>
    %250 = vector.shape_cast %249 : vector<1x8x256xf32> to vector<8x256xf32>
    %251 = arith.addf %248, %250 : vector<8x256xf32>
    %252 = arith.negf %251 : vector<8x256xf32>
    %253 = math.exp %252 : vector<8x256xf32>
    %cst_109 = arith.constant 1.000000e+00 : f32
    %254 = vector.broadcast %cst_109 : f32 to vector<8x256xf32>
    %255 = arith.addf %254, %253 : vector<8x256xf32>
    %256 = arith.divf %254, %255 : vector<8x256xf32>
    %257 = vector.extract_strided_slice %256 {offsets = [0, 0], sizes = [8, 64], strides = [1, 1]} : vector<8x256xf32> to vector<8x64xf32>
    %258 = vector.extract_strided_slice %256 {offsets = [0, 64], sizes = [8, 64], strides = [1, 1]} : vector<8x256xf32> to vector<8x64xf32>
    %259 = vector.extract_strided_slice %256 {offsets = [0, 192], sizes = [8, 64], strides = [1, 1]} : vector<8x256xf32> to vector<8x64xf32>
    %260 = vector.extract_strided_slice %251 {offsets = [0, 128], sizes = [8, 64], strides = [1, 1]} : vector<8x256xf32> to vector<8x64xf32>
    %261 = math.tanh %260 : vector<8x64xf32>
    %262 = arith.mulf %258, %242 : vector<8x64xf32>
    %263 = arith.mulf %257, %261 : vector<8x64xf32>
    %264 = arith.addf %262, %263 : vector<8x64xf32>
    %265 = math.tanh %264 : vector<8x64xf32>
    %266 = arith.mulf %259, %265 : vector<8x64xf32>
    %c2_110 = arith.constant 2 : index
    %c0_111 = arith.constant 0 : index
    %c0_112 = arith.constant 0 : index
    %267 = vector.load %arg9[%c2_110, %c0_111, %c0_112] : memref<8x8x64xf32, #tpu.memory_space<vmem>>, vector<1x8x64xf32>
    %268 = vector.shape_cast %267 : vector<1x8x64xf32> to vector<8x64xf32>
    %269 = vector.shape_cast %266 : vector<8x64xf32> to vector<1x8x64xf32>
    tpu.vector_store %arg9[%c2_110, %c0_111, %c0_112], %269 {strides = array<i32>} : memref<8x8x64xf32, #tpu.memory_space<vmem>>, vector<1x8x64xf32>,
    %cst_113 = arith.constant dense<0.000000e+00> : vector<8x256xf32>
    %270 = tpu.matmul %266, %201, %cst_113 {dimension_numbers = #tpu.dot_dimension_numbers<[1], [0], [0], [1], [0, 0, 1, 1], [], []>} : vector<8x64xf32>, vector<64x256xf32>, vector<8x256xf32> -> vector<8x256xf32>
    %c3_114 = arith.constant 3 : index
    %c0_115 = arith.constant 0 : index
    %c0_116 = arith.constant 0 : index
    %271 = vector.load %arg10[%c3_114, %c0_115, %c0_116] : memref<8x8x256xf32, #tpu.memory_space<vmem>>, vector<1x8x256xf32>
    %272 = vector.shape_cast %271 : vector<1x8x256xf32> to vector<8x256xf32>
    %273 = arith.addf %270, %272 : vector<8x256xf32>
    %274 = arith.negf %273 : vector<8x256xf32>
    %275 = math.exp %274 : vector<8x256xf32>
    %cst_117 = arith.constant 1.000000e+00 : f32
    %276 = vector.broadcast %cst_117 : f32 to vector<8x256xf32>
    %277 = arith.addf %276, %275 : vector<8x256xf32>
    %278 = arith.divf %276, %277 : vector<8x256xf32>
    %279 = vector.extract_strided_slice %278 {offsets = [0, 0], sizes = [8, 64], strides = [1, 1]} : vector<8x256xf32> to vector<8x64xf32>
    %280 = vector.extract_strided_slice %278 {offsets = [0, 64], sizes = [8, 64], strides = [1, 1]} : vector<8x256xf32> to vector<8x64xf32>
    %281 = vector.extract_strided_slice %278 {offsets = [0, 192], sizes = [8, 64], strides = [1, 1]} : vector<8x256xf32> to vector<8x64xf32>
    %282 = vector.extract_strided_slice %273 {offsets = [0, 128], sizes = [8, 64], strides = [1, 1]} : vector<8x256xf32> to vector<8x64xf32>
    %283 = math.tanh %282 : vector<8x64xf32>
    %284 = arith.mulf %280, %264 : vector<8x64xf32>
    %285 = arith.mulf %279, %283 : vector<8x64xf32>
    %286 = arith.addf %284, %285 : vector<8x64xf32>
    %287 = math.tanh %286 : vector<8x64xf32>
    %288 = arith.mulf %281, %287 : vector<8x64xf32>
    %c3_118 = arith.constant 3 : index
    %c0_119 = arith.constant 0 : index
    %c0_120 = arith.constant 0 : index
    %289 = vector.load %arg9[%c3_118, %c0_119, %c0_120] : memref<8x8x64xf32, #tpu.memory_space<vmem>>, vector<1x8x64xf32>
    %290 = vector.shape_cast %289 : vector<1x8x64xf32> to vector<8x64xf32>
    %291 = vector.shape_cast %288 : vector<8x64xf32> to vector<1x8x64xf32>
    tpu.vector_store %arg9[%c3_118, %c0_119, %c0_120], %291 {strides = array<i32>} : memref<8x8x64xf32, #tpu.memory_space<vmem>>, vector<1x8x64xf32>,
    %cst_121 = arith.constant dense<0.000000e+00> : vector<8x256xf32>
    %292 = tpu.matmul %288, %201, %cst_121 {dimension_numbers = #tpu.dot_dimension_numbers<[1], [0], [0], [1], [0, 0, 1, 1], [], []>} : vector<8x64xf32>, vector<64x256xf32>, vector<8x256xf32> -> vector<8x256xf32>
    %c4_122 = arith.constant 4 : index
    %c0_123 = arith.constant 0 : index
    %c0_124 = arith.constant 0 : index
    %293 = vector.load %arg10[%c4_122, %c0_123, %c0_124] : memref<8x8x256xf32, #tpu.memory_space<vmem>>, vector<1x8x256xf32>
    %294 = vector.shape_cast %293 : vector<1x8x256xf32> to vector<8x256xf32>
    %295 = arith.addf %292, %294 : vector<8x256xf32>
    %296 = arith.negf %295 : vector<8x256xf32>
    %297 = math.exp %296 : vector<8x256xf32>
    %cst_125 = arith.constant 1.000000e+00 : f32
    %298 = vector.broadcast %cst_125 : f32 to vector<8x256xf32>
    %299 = arith.addf %298, %297 : vector<8x256xf32>
    %300 = arith.divf %298, %299 : vector<8x256xf32>
    %301 = vector.extract_strided_slice %300 {offsets = [0, 0], sizes = [8, 64], strides = [1, 1]} : vector<8x256xf32> to vector<8x64xf32>
    %302 = vector.extract_strided_slice %300 {offsets = [0, 64], sizes = [8, 64], strides = [1, 1]} : vector<8x256xf32> to vector<8x64xf32>
    %303 = vector.extract_strided_slice %300 {offsets = [0, 192], sizes = [8, 64], strides = [1, 1]} : vector<8x256xf32> to vector<8x64xf32>
    %304 = vector.extract_strided_slice %295 {offsets = [0, 128], sizes = [8, 64], strides = [1, 1]} : vector<8x256xf32> to vector<8x64xf32>
    %305 = math.tanh %304 : vector<8x64xf32>
    %306 = arith.mulf %302, %286 : vector<8x64xf32>
    %307 = arith.mulf %301, %305 : vector<8x64xf32>
    %308 = arith.addf %306, %307 : vector<8x64xf32>
    %309 = math.tanh %308 : vector<8x64xf32>
    %310 = arith.mulf %303, %309 : vector<8x64xf32>
    %c4_126 = arith.constant 4 : index
    %c0_127 = arith.constant 0 : index
    %c0_128 = arith.constant 0 : index
    %311 = vector.load %arg9[%c4_126, %c0_127, %c0_128] : memref<8x8x64xf32, #tpu.memory_space<vmem>>, vector<1x8x64xf32>
    %312 = vector.shape_cast %311 : vector<1x8x64xf32> to vector<8x64xf32>
    %313 = vector.shape_cast %310 : vector<8x64xf32> to vector<1x8x64xf32>
    tpu.vector_store %arg9[%c4_126, %c0_127, %c0_128], %313 {strides = array<i32>} : memref<8x8x64xf32, #tpu.memory_space<vmem>>, vector<1x8x64xf32>,
    %cst_129 = arith.constant dense<0.000000e+00> : vector<8x256xf32>
    %314 = tpu.matmul %310, %201, %cst_129 {dimension_numbers = #tpu.dot_dimension_numbers<[1], [0], [0], [1], [0, 0, 1, 1], [], []>} : vector<8x64xf32>, vector<64x256xf32>, vector<8x256xf32> -> vector<8x256xf32>
    %c5_130 = arith.constant 5 : index
    %c0_131 = arith.constant 0 : index
    %c0_132 = arith.constant 0 : index
    %315 = vector.load %arg10[%c5_130, %c0_131, %c0_132] : memref<8x8x256xf32, #tpu.memory_space<vmem>>, vector<1x8x256xf32>
    %316 = vector.shape_cast %315 : vector<1x8x256xf32> to vector<8x256xf32>
    %317 = arith.addf %314, %316 : vector<8x256xf32>
    %318 = arith.negf %317 : vector<8x256xf32>
    %319 = math.exp %318 : vector<8x256xf32>
    %cst_133 = arith.constant 1.000000e+00 : f32
    %320 = vector.broadcast %cst_133 : f32 to vector<8x256xf32>
    %321 = arith.addf %320, %319 : vector<8x256xf32>
    %322 = arith.divf %320, %321 : vector<8x256xf32>
    %323 = vector.extract_strided_slice %322 {offsets = [0, 0], sizes = [8, 64], strides = [1, 1]} : vector<8x256xf32> to vector<8x64xf32>
    %324 = vector.extract_strided_slice %322 {offsets = [0, 64], sizes = [8, 64], strides = [1, 1]} : vector<8x256xf32> to vector<8x64xf32>
    %325 = vector.extract_strided_slice %322 {offsets = [0, 192], sizes = [8, 64], strides = [1, 1]} : vector<8x256xf32> to vector<8x64xf32>
    %326 = vector.extract_strided_slice %317 {offsets = [0, 128], sizes = [8, 64], strides = [1, 1]} : vector<8x256xf32> to vector<8x64xf32>
    %327 = math.tanh %326 : vector<8x64xf32>
    %328 = arith.mulf %324, %308 : vector<8x64xf32>
    %329 = arith.mulf %323, %327 : vector<8x64xf32>
    %330 = arith.addf %328, %329 : vector<8x64xf32>
    %331 = math.tanh %330 : vector<8x64xf32>
    %332 = arith.mulf %325, %331 : vector<8x64xf32>
    %c5_134 = arith.constant 5 : index
    %c0_135 = arith.constant 0 : index
    %c0_136 = arith.constant 0 : index
    %333 = vector.load %arg9[%c5_134, %c0_135, %c0_136] : memref<8x8x64xf32, #tpu.memory_space<vmem>>, vector<1x8x64xf32>
    %334 = vector.shape_cast %333 : vector<1x8x64xf32> to vector<8x64xf32>
    %335 = vector.shape_cast %332 : vector<8x64xf32> to vector<1x8x64xf32>
    tpu.vector_store %arg9[%c5_134, %c0_135, %c0_136], %335 {strides = array<i32>} : memref<8x8x64xf32, #tpu.memory_space<vmem>>, vector<1x8x64xf32>,
    %cst_137 = arith.constant dense<0.000000e+00> : vector<8x256xf32>
    %336 = tpu.matmul %332, %201, %cst_137 {dimension_numbers = #tpu.dot_dimension_numbers<[1], [0], [0], [1], [0, 0, 1, 1], [], []>} : vector<8x64xf32>, vector<64x256xf32>, vector<8x256xf32> -> vector<8x256xf32>
    %c6_138 = arith.constant 6 : index
    %c0_139 = arith.constant 0 : index
    %c0_140 = arith.constant 0 : index
    %337 = vector.load %arg10[%c6_138, %c0_139, %c0_140] : memref<8x8x256xf32, #tpu.memory_space<vmem>>, vector<1x8x256xf32>
    %338 = vector.shape_cast %337 : vector<1x8x256xf32> to vector<8x256xf32>
    %339 = arith.addf %336, %338 : vector<8x256xf32>
    %340 = arith.negf %339 : vector<8x256xf32>
    %341 = math.exp %340 : vector<8x256xf32>
    %cst_141 = arith.constant 1.000000e+00 : f32
    %342 = vector.broadcast %cst_141 : f32 to vector<8x256xf32>
    %343 = arith.addf %342, %341 : vector<8x256xf32>
    %344 = arith.divf %342, %343 : vector<8x256xf32>
    %345 = vector.extract_strided_slice %344 {offsets = [0, 0], sizes = [8, 64], strides = [1, 1]} : vector<8x256xf32> to vector<8x64xf32>
    %346 = vector.extract_strided_slice %344 {offsets = [0, 64], sizes = [8, 64], strides = [1, 1]} : vector<8x256xf32> to vector<8x64xf32>
    %347 = vector.extract_strided_slice %344 {offsets = [0, 192], sizes = [8, 64], strides = [1, 1]} : vector<8x256xf32> to vector<8x64xf32>
    %348 = vector.extract_strided_slice %339 {offsets = [0, 128], sizes = [8, 64], strides = [1, 1]} : vector<8x256xf32> to vector<8x64xf32>
    %349 = math.tanh %348 : vector<8x64xf32>
    %350 = arith.mulf %346, %330 : vector<8x64xf32>
    %351 = arith.mulf %345, %349 : vector<8x64xf32>
    %352 = arith.addf %350, %351 : vector<8x64xf32>
    %353 = math.tanh %352 : vector<8x64xf32>
    %354 = arith.mulf %347, %353 : vector<8x64xf32>
    %c6_142 = arith.constant 6 : index
    %c0_143 = arith.constant 0 : index
    %c0_144 = arith.constant 0 : index
    %355 = vector.load %arg9[%c6_142, %c0_143, %c0_144] : memref<8x8x64xf32, #tpu.memory_space<vmem>>, vector<1x8x64xf32>
    %356 = vector.shape_cast %355 : vector<1x8x64xf32> to vector<8x64xf32>
    %357 = vector.shape_cast %354 : vector<8x64xf32> to vector<1x8x64xf32>
    tpu.vector_store %arg9[%c6_142, %c0_143, %c0_144], %357 {strides = array<i32>} : memref<8x8x64xf32, #tpu.memory_space<vmem>>, vector<1x8x64xf32>,
    %cst_145 = arith.constant dense<0.000000e+00> : vector<8x256xf32>
    %358 = tpu.matmul %354, %201, %cst_145 {dimension_numbers = #tpu.dot_dimension_numbers<[1], [0], [0], [1], [0, 0, 1, 1], [], []>} : vector<8x64xf32>, vector<64x256xf32>, vector<8x256xf32> -> vector<8x256xf32>
    %c7_146 = arith.constant 7 : index
    %c0_147 = arith.constant 0 : index
    %c0_148 = arith.constant 0 : index
    %359 = vector.load %arg10[%c7_146, %c0_147, %c0_148] : memref<8x8x256xf32, #tpu.memory_space<vmem>>, vector<1x8x256xf32>
    %360 = vector.shape_cast %359 : vector<1x8x256xf32> to vector<8x256xf32>
    %361 = arith.addf %358, %360 : vector<8x256xf32>
    %362 = arith.negf %361 : vector<8x256xf32>
    %363 = math.exp %362 : vector<8x256xf32>
    %cst_149 = arith.constant 1.000000e+00 : f32
    %364 = vector.broadcast %cst_149 : f32 to vector<8x256xf32>
    %365 = arith.addf %364, %363 : vector<8x256xf32>
    %366 = arith.divf %364, %365 : vector<8x256xf32>
    %367 = vector.extract_strided_slice %366 {offsets = [0, 0], sizes = [8, 64], strides = [1, 1]} : vector<8x256xf32> to vector<8x64xf32>
    %368 = vector.extract_strided_slice %366 {offsets = [0, 64], sizes = [8, 64], strides = [1, 1]} : vector<8x256xf32> to vector<8x64xf32>
    %369 = vector.extract_strided_slice %366 {offsets = [0, 192], sizes = [8, 64], strides = [1, 1]} : vector<8x256xf32> to vector<8x64xf32>
    %370 = vector.extract_strided_slice %361 {offsets = [0, 128], sizes = [8, 64], strides = [1, 1]} : vector<8x256xf32> to vector<8x64xf32>
    %371 = math.tanh %370 : vector<8x64xf32>
    %372 = arith.mulf %368, %352 : vector<8x64xf32>
    %373 = arith.mulf %367, %371 : vector<8x64xf32>
    %374 = arith.addf %372, %373 : vector<8x64xf32>
    %375 = math.tanh %374 : vector<8x64xf32>
    %376 = arith.mulf %369, %375 : vector<8x64xf32>
    %c7_150 = arith.constant 7 : index
    %c0_151 = arith.constant 0 : index
    %c0_152 = arith.constant 0 : index
    %377 = vector.load %arg9[%c7_150, %c0_151, %c0_152] : memref<8x8x64xf32, #tpu.memory_space<vmem>>, vector<1x8x64xf32>
    %378 = vector.shape_cast %377 : vector<1x8x64xf32> to vector<8x64xf32>
    %379 = vector.shape_cast %376 : vector<8x64xf32> to vector<1x8x64xf32>
    tpu.vector_store %arg9[%c7_150, %c0_151, %c0_152], %379 {strides = array<i32>} : memref<8x8x64xf32, #tpu.memory_space<vmem>>, vector<1x8x64xf32>,
    %c0_153 = arith.constant 0 : index
    %c0_154 = arith.constant 0 : index
    %c0_155 = arith.constant 0 : index
    %380 = vector.load %arg9[%c0_153, %c0_154, %c0_155] : memref<8x8x64xf32, #tpu.memory_space<vmem>>, vector<8x8x64xf32>
    %381 = vector.shape_cast %380 : vector<8x8x64xf32> to vector<64x64xf32>
    %c1_156 = arith.constant 1 : index
    %c0_157 = arith.constant 0 : index
    %c0_158 = arith.constant 0 : index
    %382 = vector.load %arg3[%c1_156, %c0_157, %c0_158] : memref<4x64x256xf32, #tpu.memory_space<vmem>>, vector<1x64x256xf32>
    %383 = vector.shape_cast %382 : vector<1x64x256xf32> to vector<64x256xf32>
    %cst_159 = arith.constant dense<0.000000e+00> : vector<64x256xf32>
    %384 = tpu.matmul %381, %383, %cst_159 {dimension_numbers = #tpu.dot_dimension_numbers<[1], [0], [0], [1], [0, 0, 1, 1], [], []>} : vector<64x64xf32>, vector<64x256xf32>, vector<64x256xf32> -> vector<64x256xf32>
    %c1_160 = arith.constant 1 : index
    %c0_161 = arith.constant 0 : index
    %c0_162 = arith.constant 0 : index
    %385 = vector.load %arg5[%c1_160, %c0_161, %c0_162] : memref<4x1x256xf32, #tpu.memory_space<vmem>>, vector<1x1x256xf32>
    %386 = vector.shape_cast %385 : vector<1x1x256xf32> to vector<1x256xf32>
    %387 = vector.broadcast %386 : vector<1x256xf32> to vector<64x256xf32>
    %388 = arith.addf %384, %387 : vector<64x256xf32>
    %389 = vector.shape_cast %388 : vector<64x256xf32> to vector<8x8x256xf32>
    %c0_163 = arith.constant 0 : index
    %c0_164 = arith.constant 0 : index
    %c0_165 = arith.constant 0 : index
    %390 = vector.load %arg10[%c0_163, %c0_164, %c0_165] : memref<8x8x256xf32, #tpu.memory_space<vmem>>, vector<8x8x256xf32>
    tpu.vector_store %arg10[%c0_163, %c0_164, %c0_165], %389 {strides = array<i32>} : memref<8x8x256xf32, #tpu.memory_space<vmem>>, vector<8x8x256xf32>,
    %c2_166 = arith.constant 2 : index
    %c0_167 = arith.constant 0 : index
    %c0_168 = arith.constant 0 : index
    %391 = vector.load %arg4[%c2_166, %c0_167, %c0_168] : memref<5x64x256xf32, #tpu.memory_space<vmem>>, vector<1x64x256xf32>
    %392 = vector.shape_cast %391 : vector<1x64x256xf32> to vector<64x256xf32>
    %cst_169 = arith.constant 0.000000e+00 : f32
    %393 = vector.broadcast %cst_169 : f32 to vector<8x64xf32>
    %cst_170 = arith.constant 0.000000e+00 : f32
    %394 = vector.broadcast %cst_170 : f32 to vector<8x64xf32>
    %cst_171 = arith.constant dense<0.000000e+00> : vector<8x256xf32>
    %395 = tpu.matmul %393, %392, %cst_171 {dimension_numbers = #tpu.dot_dimension_numbers<[1], [0], [0], [1], [0, 0, 1, 1], [], []>} : vector<8x64xf32>, vector<64x256xf32>, vector<8x256xf32> -> vector<8x256xf32>
    %c0_172 = arith.constant 0 : index
    %c0_173 = arith.constant 0 : index
    %c0_174 = arith.constant 0 : index
    %396 = vector.load %arg10[%c0_172, %c0_173, %c0_174] : memref<8x8x256xf32, #tpu.memory_space<vmem>>, vector<1x8x256xf32>
    %397 = vector.shape_cast %396 : vector<1x8x256xf32> to vector<8x256xf32>
    %398 = arith.addf %395, %397 : vector<8x256xf32>
    %399 = arith.negf %398 : vector<8x256xf32>
    %400 = math.exp %399 : vector<8x256xf32>
    %cst_175 = arith.constant 1.000000e+00 : f32
    %401 = vector.broadcast %cst_175 : f32 to vector<8x256xf32>
    %402 = arith.addf %401, %400 : vector<8x256xf32>
    %403 = arith.divf %401, %402 : vector<8x256xf32>
    %404 = vector.extract_strided_slice %403 {offsets = [0, 0], sizes = [8, 64], strides = [1, 1]} : vector<8x256xf32> to vector<8x64xf32>
    %405 = vector.extract_strided_slice %403 {offsets = [0, 64], sizes = [8, 64], strides = [1, 1]} : vector<8x256xf32> to vector<8x64xf32>
    %406 = vector.extract_strided_slice %403 {offsets = [0, 192], sizes = [8, 64], strides = [1, 1]} : vector<8x256xf32> to vector<8x64xf32>
    %407 = vector.extract_strided_slice %398 {offsets = [0, 128], sizes = [8, 64], strides = [1, 1]} : vector<8x256xf32> to vector<8x64xf32>
    %408 = math.tanh %407 : vector<8x64xf32>
    %409 = arith.mulf %405, %394 : vector<8x64xf32>
    %410 = arith.mulf %404, %408 : vector<8x64xf32>
    %411 = arith.addf %409, %410 : vector<8x64xf32>
    %412 = math.tanh %411 : vector<8x64xf32>
    %413 = arith.mulf %406, %412 : vector<8x64xf32>
    %c0_176 = arith.constant 0 : index
    %c0_177 = arith.constant 0 : index
    %c0_178 = arith.constant 0 : index
    %414 = vector.load %arg9[%c0_176, %c0_177, %c0_178] : memref<8x8x64xf32, #tpu.memory_space<vmem>>, vector<1x8x64xf32>
    %415 = vector.shape_cast %414 : vector<1x8x64xf32> to vector<8x64xf32>
    %416 = vector.shape_cast %413 : vector<8x64xf32> to vector<1x8x64xf32>
    tpu.vector_store %arg9[%c0_176, %c0_177, %c0_178], %416 {strides = array<i32>} : memref<8x8x64xf32, #tpu.memory_space<vmem>>, vector<1x8x64xf32>,
    %cst_179 = arith.constant dense<0.000000e+00> : vector<8x256xf32>
    %417 = tpu.matmul %413, %392, %cst_179 {dimension_numbers = #tpu.dot_dimension_numbers<[1], [0], [0], [1], [0, 0, 1, 1], [], []>} : vector<8x64xf32>, vector<64x256xf32>, vector<8x256xf32> -> vector<8x256xf32>
    %c1_180 = arith.constant 1 : index
    %c0_181 = arith.constant 0 : index
    %c0_182 = arith.constant 0 : index
    %418 = vector.load %arg10[%c1_180, %c0_181, %c0_182] : memref<8x8x256xf32, #tpu.memory_space<vmem>>, vector<1x8x256xf32>
    %419 = vector.shape_cast %418 : vector<1x8x256xf32> to vector<8x256xf32>
    %420 = arith.addf %417, %419 : vector<8x256xf32>
    %421 = arith.negf %420 : vector<8x256xf32>
    %422 = math.exp %421 : vector<8x256xf32>
    %cst_183 = arith.constant 1.000000e+00 : f32
    %423 = vector.broadcast %cst_183 : f32 to vector<8x256xf32>
    %424 = arith.addf %423, %422 : vector<8x256xf32>
    %425 = arith.divf %423, %424 : vector<8x256xf32>
    %426 = vector.extract_strided_slice %425 {offsets = [0, 0], sizes = [8, 64], strides = [1, 1]} : vector<8x256xf32> to vector<8x64xf32>
    %427 = vector.extract_strided_slice %425 {offsets = [0, 64], sizes = [8, 64], strides = [1, 1]} : vector<8x256xf32> to vector<8x64xf32>
    %428 = vector.extract_strided_slice %425 {offsets = [0, 192], sizes = [8, 64], strides = [1, 1]} : vector<8x256xf32> to vector<8x64xf32>
    %429 = vector.extract_strided_slice %420 {offsets = [0, 128], sizes = [8, 64], strides = [1, 1]} : vector<8x256xf32> to vector<8x64xf32>
    %430 = math.tanh %429 : vector<8x64xf32>
    %431 = arith.mulf %427, %411 : vector<8x64xf32>
    %432 = arith.mulf %426, %430 : vector<8x64xf32>
    %433 = arith.addf %431, %432 : vector<8x64xf32>
    %434 = math.tanh %433 : vector<8x64xf32>
    %435 = arith.mulf %428, %434 : vector<8x64xf32>
    %c1_184 = arith.constant 1 : index
    %c0_185 = arith.constant 0 : index
    %c0_186 = arith.constant 0 : index
    %436 = vector.load %arg9[%c1_184, %c0_185, %c0_186] : memref<8x8x64xf32, #tpu.memory_space<vmem>>, vector<1x8x64xf32>
    %437 = vector.shape_cast %436 : vector<1x8x64xf32> to vector<8x64xf32>
    %438 = vector.shape_cast %435 : vector<8x64xf32> to vector<1x8x64xf32>
    tpu.vector_store %arg9[%c1_184, %c0_185, %c0_186], %438 {strides = array<i32>} : memref<8x8x64xf32, #tpu.memory_space<vmem>>, vector<1x8x64xf32>,
    %cst_187 = arith.constant dense<0.000000e+00> : vector<8x256xf32>
    %439 = tpu.matmul %435, %392, %cst_187 {dimension_numbers = #tpu.dot_dimension_numbers<[1], [0], [0], [1], [0, 0, 1, 1], [], []>} : vector<8x64xf32>, vector<64x256xf32>, vector<8x256xf32> -> vector<8x256xf32>
    %c2_188 = arith.constant 2 : index
    %c0_189 = arith.constant 0 : index
    %c0_190 = arith.constant 0 : index
    %440 = vector.load %arg10[%c2_188, %c0_189, %c0_190] : memref<8x8x256xf32, #tpu.memory_space<vmem>>, vector<1x8x256xf32>
    %441 = vector.shape_cast %440 : vector<1x8x256xf32> to vector<8x256xf32>
    %442 = arith.addf %439, %441 : vector<8x256xf32>
    %443 = arith.negf %442 : vector<8x256xf32>
    %444 = math.exp %443 : vector<8x256xf32>
    %cst_191 = arith.constant 1.000000e+00 : f32
    %445 = vector.broadcast %cst_191 : f32 to vector<8x256xf32>
    %446 = arith.addf %445, %444 : vector<8x256xf32>
    %447 = arith.divf %445, %446 : vector<8x256xf32>
    %448 = vector.extract_strided_slice %447 {offsets = [0, 0], sizes = [8, 64], strides = [1, 1]} : vector<8x256xf32> to vector<8x64xf32>
    %449 = vector.extract_strided_slice %447 {offsets = [0, 64], sizes = [8, 64], strides = [1, 1]} : vector<8x256xf32> to vector<8x64xf32>
    %450 = vector.extract_strided_slice %447 {offsets = [0, 192], sizes = [8, 64], strides = [1, 1]} : vector<8x256xf32> to vector<8x64xf32>
    %451 = vector.extract_strided_slice %442 {offsets = [0, 128], sizes = [8, 64], strides = [1, 1]} : vector<8x256xf32> to vector<8x64xf32>
    %452 = math.tanh %451 : vector<8x64xf32>
    %453 = arith.mulf %449, %433 : vector<8x64xf32>
    %454 = arith.mulf %448, %452 : vector<8x64xf32>
    %455 = arith.addf %453, %454 : vector<8x64xf32>
    %456 = math.tanh %455 : vector<8x64xf32>
    %457 = arith.mulf %450, %456 : vector<8x64xf32>
    %c2_192 = arith.constant 2 : index
    %c0_193 = arith.constant 0 : index
    %c0_194 = arith.constant 0 : index
    %458 = vector.load %arg9[%c2_192, %c0_193, %c0_194] : memref<8x8x64xf32, #tpu.memory_space<vmem>>, vector<1x8x64xf32>
    %459 = vector.shape_cast %458 : vector<1x8x64xf32> to vector<8x64xf32>
    %460 = vector.shape_cast %457 : vector<8x64xf32> to vector<1x8x64xf32>
    tpu.vector_store %arg9[%c2_192, %c0_193, %c0_194], %460 {strides = array<i32>} : memref<8x8x64xf32, #tpu.memory_space<vmem>>, vector<1x8x64xf32>,
    %cst_195 = arith.constant dense<0.000000e+00> : vector<8x256xf32>
    %461 = tpu.matmul %457, %392, %cst_195 {dimension_numbers = #tpu.dot_dimension_numbers<[1], [0], [0], [1], [0, 0, 1, 1], [], []>} : vector<8x64xf32>, vector<64x256xf32>, vector<8x256xf32> -> vector<8x256xf32>
    %c3_196 = arith.constant 3 : index
    %c0_197 = arith.constant 0 : index
    %c0_198 = arith.constant 0 : index
    %462 = vector.load %arg10[%c3_196, %c0_197, %c0_198] : memref<8x8x256xf32, #tpu.memory_space<vmem>>, vector<1x8x256xf32>
    %463 = vector.shape_cast %462 : vector<1x8x256xf32> to vector<8x256xf32>
    %464 = arith.addf %461, %463 : vector<8x256xf32>
    %465 = arith.negf %464 : vector<8x256xf32>
    %466 = math.exp %465 : vector<8x256xf32>
    %cst_199 = arith.constant 1.000000e+00 : f32
    %467 = vector.broadcast %cst_199 : f32 to vector<8x256xf32>
    %468 = arith.addf %467, %466 : vector<8x256xf32>
    %469 = arith.divf %467, %468 : vector<8x256xf32>
    %470 = vector.extract_strided_slice %469 {offsets = [0, 0], sizes = [8, 64], strides = [1, 1]} : vector<8x256xf32> to vector<8x64xf32>
    %471 = vector.extract_strided_slice %469 {offsets = [0, 64], sizes = [8, 64], strides = [1, 1]} : vector<8x256xf32> to vector<8x64xf32>
    %472 = vector.extract_strided_slice %469 {offsets = [0, 192], sizes = [8, 64], strides = [1, 1]} : vector<8x256xf32> to vector<8x64xf32>
    %473 = vector.extract_strided_slice %464 {offsets = [0, 128], sizes = [8, 64], strides = [1, 1]} : vector<8x256xf32> to vector<8x64xf32>
    %474 = math.tanh %473 : vector<8x64xf32>
    %475 = arith.mulf %471, %455 : vector<8x64xf32>
    %476 = arith.mulf %470, %474 : vector<8x64xf32>
    %477 = arith.addf %475, %476 : vector<8x64xf32>
    %478 = math.tanh %477 : vector<8x64xf32>
    %479 = arith.mulf %472, %478 : vector<8x64xf32>
    %c3_200 = arith.constant 3 : index
    %c0_201 = arith.constant 0 : index
    %c0_202 = arith.constant 0 : index
    %480 = vector.load %arg9[%c3_200, %c0_201, %c0_202] : memref<8x8x64xf32, #tpu.memory_space<vmem>>, vector<1x8x64xf32>
    %481 = vector.shape_cast %480 : vector<1x8x64xf32> to vector<8x64xf32>
    %482 = vector.shape_cast %479 : vector<8x64xf32> to vector<1x8x64xf32>
    tpu.vector_store %arg9[%c3_200, %c0_201, %c0_202], %482 {strides = array<i32>} : memref<8x8x64xf32, #tpu.memory_space<vmem>>, vector<1x8x64xf32>,
    %cst_203 = arith.constant dense<0.000000e+00> : vector<8x256xf32>
    %483 = tpu.matmul %479, %392, %cst_203 {dimension_numbers = #tpu.dot_dimension_numbers<[1], [0], [0], [1], [0, 0, 1, 1], [], []>} : vector<8x64xf32>, vector<64x256xf32>, vector<8x256xf32> -> vector<8x256xf32>
    %c4_204 = arith.constant 4 : index
    %c0_205 = arith.constant 0 : index
    %c0_206 = arith.constant 0 : index
    %484 = vector.load %arg10[%c4_204, %c0_205, %c0_206] : memref<8x8x256xf32, #tpu.memory_space<vmem>>, vector<1x8x256xf32>
    %485 = vector.shape_cast %484 : vector<1x8x256xf32> to vector<8x256xf32>
    %486 = arith.addf %483, %485 : vector<8x256xf32>
    %487 = arith.negf %486 : vector<8x256xf32>
    %488 = math.exp %487 : vector<8x256xf32>
    %cst_207 = arith.constant 1.000000e+00 : f32
    %489 = vector.broadcast %cst_207 : f32 to vector<8x256xf32>
    %490 = arith.addf %489, %488 : vector<8x256xf32>
    %491 = arith.divf %489, %490 : vector<8x256xf32>
    %492 = vector.extract_strided_slice %491 {offsets = [0, 0], sizes = [8, 64], strides = [1, 1]} : vector<8x256xf32> to vector<8x64xf32>
    %493 = vector.extract_strided_slice %491 {offsets = [0, 64], sizes = [8, 64], strides = [1, 1]} : vector<8x256xf32> to vector<8x64xf32>
    %494 = vector.extract_strided_slice %491 {offsets = [0, 192], sizes = [8, 64], strides = [1, 1]} : vector<8x256xf32> to vector<8x64xf32>
    %495 = vector.extract_strided_slice %486 {offsets = [0, 128], sizes = [8, 64], strides = [1, 1]} : vector<8x256xf32> to vector<8x64xf32>
    %496 = math.tanh %495 : vector<8x64xf32>
    %497 = arith.mulf %493, %477 : vector<8x64xf32>
    %498 = arith.mulf %492, %496 : vector<8x64xf32>
    %499 = arith.addf %497, %498 : vector<8x64xf32>
    %500 = math.tanh %499 : vector<8x64xf32>
    %501 = arith.mulf %494, %500 : vector<8x64xf32>
    %c4_208 = arith.constant 4 : index
    %c0_209 = arith.constant 0 : index
    %c0_210 = arith.constant 0 : index
    %502 = vector.load %arg9[%c4_208, %c0_209, %c0_210] : memref<8x8x64xf32, #tpu.memory_space<vmem>>, vector<1x8x64xf32>
    %503 = vector.shape_cast %502 : vector<1x8x64xf32> to vector<8x64xf32>
    %504 = vector.shape_cast %501 : vector<8x64xf32> to vector<1x8x64xf32>
    tpu.vector_store %arg9[%c4_208, %c0_209, %c0_210], %504 {strides = array<i32>} : memref<8x8x64xf32, #tpu.memory_space<vmem>>, vector<1x8x64xf32>,
    %cst_211 = arith.constant dense<0.000000e+00> : vector<8x256xf32>
    %505 = tpu.matmul %501, %392, %cst_211 {dimension_numbers = #tpu.dot_dimension_numbers<[1], [0], [0], [1], [0, 0, 1, 1], [], []>} : vector<8x64xf32>, vector<64x256xf32>, vector<8x256xf32> -> vector<8x256xf32>
    %c5_212 = arith.constant 5 : index
    %c0_213 = arith.constant 0 : index
    %c0_214 = arith.constant 0 : index
    %506 = vector.load %arg10[%c5_212, %c0_213, %c0_214] : memref<8x8x256xf32, #tpu.memory_space<vmem>>, vector<1x8x256xf32>
    %507 = vector.shape_cast %506 : vector<1x8x256xf32> to vector<8x256xf32>
    %508 = arith.addf %505, %507 : vector<8x256xf32>
    %509 = arith.negf %508 : vector<8x256xf32>
    %510 = math.exp %509 : vector<8x256xf32>
    %cst_215 = arith.constant 1.000000e+00 : f32
    %511 = vector.broadcast %cst_215 : f32 to vector<8x256xf32>
    %512 = arith.addf %511, %510 : vector<8x256xf32>
    %513 = arith.divf %511, %512 : vector<8x256xf32>
    %514 = vector.extract_strided_slice %513 {offsets = [0, 0], sizes = [8, 64], strides = [1, 1]} : vector<8x256xf32> to vector<8x64xf32>
    %515 = vector.extract_strided_slice %513 {offsets = [0, 64], sizes = [8, 64], strides = [1, 1]} : vector<8x256xf32> to vector<8x64xf32>
    %516 = vector.extract_strided_slice %513 {offsets = [0, 192], sizes = [8, 64], strides = [1, 1]} : vector<8x256xf32> to vector<8x64xf32>
    %517 = vector.extract_strided_slice %508 {offsets = [0, 128], sizes = [8, 64], strides = [1, 1]} : vector<8x256xf32> to vector<8x64xf32>
    %518 = math.tanh %517 : vector<8x64xf32>
    %519 = arith.mulf %515, %499 : vector<8x64xf32>
    %520 = arith.mulf %514, %518 : vector<8x64xf32>
    %521 = arith.addf %519, %520 : vector<8x64xf32>
    %522 = math.tanh %521 : vector<8x64xf32>
    %523 = arith.mulf %516, %522 : vector<8x64xf32>
    %c5_216 = arith.constant 5 : index
    %c0_217 = arith.constant 0 : index
    %c0_218 = arith.constant 0 : index
    %524 = vector.load %arg9[%c5_216, %c0_217, %c0_218] : memref<8x8x64xf32, #tpu.memory_space<vmem>>, vector<1x8x64xf32>
    %525 = vector.shape_cast %524 : vector<1x8x64xf32> to vector<8x64xf32>
    %526 = vector.shape_cast %523 : vector<8x64xf32> to vector<1x8x64xf32>
    tpu.vector_store %arg9[%c5_216, %c0_217, %c0_218], %526 {strides = array<i32>} : memref<8x8x64xf32, #tpu.memory_space<vmem>>, vector<1x8x64xf32>,
    %cst_219 = arith.constant dense<0.000000e+00> : vector<8x256xf32>
    %527 = tpu.matmul %523, %392, %cst_219 {dimension_numbers = #tpu.dot_dimension_numbers<[1], [0], [0], [1], [0, 0, 1, 1], [], []>} : vector<8x64xf32>, vector<64x256xf32>, vector<8x256xf32> -> vector<8x256xf32>
    %c6_220 = arith.constant 6 : index
    %c0_221 = arith.constant 0 : index
    %c0_222 = arith.constant 0 : index
    %528 = vector.load %arg10[%c6_220, %c0_221, %c0_222] : memref<8x8x256xf32, #tpu.memory_space<vmem>>, vector<1x8x256xf32>
    %529 = vector.shape_cast %528 : vector<1x8x256xf32> to vector<8x256xf32>
    %530 = arith.addf %527, %529 : vector<8x256xf32>
    %531 = arith.negf %530 : vector<8x256xf32>
    %532 = math.exp %531 : vector<8x256xf32>
    %cst_223 = arith.constant 1.000000e+00 : f32
    %533 = vector.broadcast %cst_223 : f32 to vector<8x256xf32>
    %534 = arith.addf %533, %532 : vector<8x256xf32>
    %535 = arith.divf %533, %534 : vector<8x256xf32>
    %536 = vector.extract_strided_slice %535 {offsets = [0, 0], sizes = [8, 64], strides = [1, 1]} : vector<8x256xf32> to vector<8x64xf32>
    %537 = vector.extract_strided_slice %535 {offsets = [0, 64], sizes = [8, 64], strides = [1, 1]} : vector<8x256xf32> to vector<8x64xf32>
    %538 = vector.extract_strided_slice %535 {offsets = [0, 192], sizes = [8, 64], strides = [1, 1]} : vector<8x256xf32> to vector<8x64xf32>
    %539 = vector.extract_strided_slice %530 {offsets = [0, 128], sizes = [8, 64], strides = [1, 1]} : vector<8x256xf32> to vector<8x64xf32>
    %540 = math.tanh %539 : vector<8x64xf32>
    %541 = arith.mulf %537, %521 : vector<8x64xf32>
    %542 = arith.mulf %536, %540 : vector<8x64xf32>
    %543 = arith.addf %541, %542 : vector<8x64xf32>
    %544 = math.tanh %543 : vector<8x64xf32>
    %545 = arith.mulf %538, %544 : vector<8x64xf32>
    %c6_224 = arith.constant 6 : index
    %c0_225 = arith.constant 0 : index
    %c0_226 = arith.constant 0 : index
    %546 = vector.load %arg9[%c6_224, %c0_225, %c0_226] : memref<8x8x64xf32, #tpu.memory_space<vmem>>, vector<1x8x64xf32>
    %547 = vector.shape_cast %546 : vector<1x8x64xf32> to vector<8x64xf32>
    %548 = vector.shape_cast %545 : vector<8x64xf32> to vector<1x8x64xf32>
    tpu.vector_store %arg9[%c6_224, %c0_225, %c0_226], %548 {strides = array<i32>} : memref<8x8x64xf32, #tpu.memory_space<vmem>>, vector<1x8x64xf32>,
    %cst_227 = arith.constant dense<0.000000e+00> : vector<8x256xf32>
    %549 = tpu.matmul %545, %392, %cst_227 {dimension_numbers = #tpu.dot_dimension_numbers<[1], [0], [0], [1], [0, 0, 1, 1], [], []>} : vector<8x64xf32>, vector<64x256xf32>, vector<8x256xf32> -> vector<8x256xf32>
    %c7_228 = arith.constant 7 : index
    %c0_229 = arith.constant 0 : index
    %c0_230 = arith.constant 0 : index
    %550 = vector.load %arg10[%c7_228, %c0_229, %c0_230] : memref<8x8x256xf32, #tpu.memory_space<vmem>>, vector<1x8x256xf32>
    %551 = vector.shape_cast %550 : vector<1x8x256xf32> to vector<8x256xf32>
    %552 = arith.addf %549, %551 : vector<8x256xf32>
    %553 = arith.negf %552 : vector<8x256xf32>
    %554 = math.exp %553 : vector<8x256xf32>
    %cst_231 = arith.constant 1.000000e+00 : f32
    %555 = vector.broadcast %cst_231 : f32 to vector<8x256xf32>
    %556 = arith.addf %555, %554 : vector<8x256xf32>
    %557 = arith.divf %555, %556 : vector<8x256xf32>
    %558 = vector.extract_strided_slice %557 {offsets = [0, 0], sizes = [8, 64], strides = [1, 1]} : vector<8x256xf32> to vector<8x64xf32>
    %559 = vector.extract_strided_slice %557 {offsets = [0, 64], sizes = [8, 64], strides = [1, 1]} : vector<8x256xf32> to vector<8x64xf32>
    %560 = vector.extract_strided_slice %557 {offsets = [0, 192], sizes = [8, 64], strides = [1, 1]} : vector<8x256xf32> to vector<8x64xf32>
    %561 = vector.extract_strided_slice %552 {offsets = [0, 128], sizes = [8, 64], strides = [1, 1]} : vector<8x256xf32> to vector<8x64xf32>
    %562 = math.tanh %561 : vector<8x64xf32>
    %563 = arith.mulf %559, %543 : vector<8x64xf32>
    %564 = arith.mulf %558, %562 : vector<8x64xf32>
    %565 = arith.addf %563, %564 : vector<8x64xf32>
    %566 = math.tanh %565 : vector<8x64xf32>
    %567 = arith.mulf %560, %566 : vector<8x64xf32>
    %c7_232 = arith.constant 7 : index
    %c0_233 = arith.constant 0 : index
    %c0_234 = arith.constant 0 : index
    %568 = vector.load %arg9[%c7_232, %c0_233, %c0_234] : memref<8x8x64xf32, #tpu.memory_space<vmem>>, vector<1x8x64xf32>
    %569 = vector.shape_cast %568 : vector<1x8x64xf32> to vector<8x64xf32>
    %570 = vector.shape_cast %567 : vector<8x64xf32> to vector<1x8x64xf32>
    tpu.vector_store %arg9[%c7_232, %c0_233, %c0_234], %570 {strides = array<i32>} : memref<8x8x64xf32, #tpu.memory_space<vmem>>, vector<1x8x64xf32>,
    %c0_235 = arith.constant 0 : index
    %c0_236 = arith.constant 0 : index
    %c0_237 = arith.constant 0 : index
    %571 = vector.load %arg9[%c0_235, %c0_236, %c0_237] : memref<8x8x64xf32, #tpu.memory_space<vmem>>, vector<8x8x64xf32>
    %572 = vector.shape_cast %571 : vector<8x8x64xf32> to vector<64x64xf32>
    %c2_238 = arith.constant 2 : index
    %c0_239 = arith.constant 0 : index
    %c0_240 = arith.constant 0 : index
    %573 = vector.load %arg3[%c2_238, %c0_239, %c0_240] : memref<4x64x256xf32, #tpu.memory_space<vmem>>, vector<1x64x256xf32>
    %574 = vector.shape_cast %573 : vector<1x64x256xf32> to vector<64x256xf32>
    %cst_241 = arith.constant dense<0.000000e+00> : vector<64x256xf32>
    %575 = tpu.matmul %572, %574, %cst_241 {dimension_numbers = #tpu.dot_dimension_numbers<[1], [0], [0], [1], [0, 0, 1, 1], [], []>} : vector<64x64xf32>, vector<64x256xf32>, vector<64x256xf32> -> vector<64x256xf32>
    %c2_242 = arith.constant 2 : index
    %c0_243 = arith.constant 0 : index
    %c0_244 = arith.constant 0 : index
    %576 = vector.load %arg5[%c2_242, %c0_243, %c0_244] : memref<4x1x256xf32, #tpu.memory_space<vmem>>, vector<1x1x256xf32>
    %577 = vector.shape_cast %576 : vector<1x1x256xf32> to vector<1x256xf32>
    %578 = vector.broadcast %577 : vector<1x256xf32> to vector<64x256xf32>
    %579 = arith.addf %575, %578 : vector<64x256xf32>
    %580 = vector.shape_cast %579 : vector<64x256xf32> to vector<8x8x256xf32>
    %c0_245 = arith.constant 0 : index
    %c0_246 = arith.constant 0 : index
    %c0_247 = arith.constant 0 : index
    %581 = vector.load %arg10[%c0_245, %c0_246, %c0_247] : memref<8x8x256xf32, #tpu.memory_space<vmem>>, vector<8x8x256xf32>
    tpu.vector_store %arg10[%c0_245, %c0_246, %c0_247], %580 {strides = array<i32>} : memref<8x8x256xf32, #tpu.memory_space<vmem>>, vector<8x8x256xf32>,
    %c3_248 = arith.constant 3 : index
    %c0_249 = arith.constant 0 : index
    %c0_250 = arith.constant 0 : index
    %582 = vector.load %arg4[%c3_248, %c0_249, %c0_250] : memref<5x64x256xf32, #tpu.memory_space<vmem>>, vector<1x64x256xf32>
    %583 = vector.shape_cast %582 : vector<1x64x256xf32> to vector<64x256xf32>
    %cst_251 = arith.constant 0.000000e+00 : f32
    %584 = vector.broadcast %cst_251 : f32 to vector<8x64xf32>
    %cst_252 = arith.constant 0.000000e+00 : f32
    %585 = vector.broadcast %cst_252 : f32 to vector<8x64xf32>
    %cst_253 = arith.constant dense<0.000000e+00> : vector<8x256xf32>
    %586 = tpu.matmul %584, %583, %cst_253 {dimension_numbers = #tpu.dot_dimension_numbers<[1], [0], [0], [1], [0, 0, 1, 1], [], []>} : vector<8x64xf32>, vector<64x256xf32>, vector<8x256xf32> -> vector<8x256xf32>
    %c0_254 = arith.constant 0 : index
    %c0_255 = arith.constant 0 : index
    %c0_256 = arith.constant 0 : index
    %587 = vector.load %arg10[%c0_254, %c0_255, %c0_256] : memref<8x8x256xf32, #tpu.memory_space<vmem>>, vector<1x8x256xf32>
    %588 = vector.shape_cast %587 : vector<1x8x256xf32> to vector<8x256xf32>
    %589 = arith.addf %586, %588 : vector<8x256xf32>
    %590 = arith.negf %589 : vector<8x256xf32>
    %591 = math.exp %590 : vector<8x256xf32>
    %cst_257 = arith.constant 1.000000e+00 : f32
    %592 = vector.broadcast %cst_257 : f32 to vector<8x256xf32>
    %593 = arith.addf %592, %591 : vector<8x256xf32>
    %594 = arith.divf %592, %593 : vector<8x256xf32>
    %595 = vector.extract_strided_slice %594 {offsets = [0, 0], sizes = [8, 64], strides = [1, 1]} : vector<8x256xf32> to vector<8x64xf32>
    %596 = vector.extract_strided_slice %594 {offsets = [0, 64], sizes = [8, 64], strides = [1, 1]} : vector<8x256xf32> to vector<8x64xf32>
    %597 = vector.extract_strided_slice %594 {offsets = [0, 192], sizes = [8, 64], strides = [1, 1]} : vector<8x256xf32> to vector<8x64xf32>
    %598 = vector.extract_strided_slice %589 {offsets = [0, 128], sizes = [8, 64], strides = [1, 1]} : vector<8x256xf32> to vector<8x64xf32>
    %599 = math.tanh %598 : vector<8x64xf32>
    %600 = arith.mulf %596, %585 : vector<8x64xf32>
    %601 = arith.mulf %595, %599 : vector<8x64xf32>
    %602 = arith.addf %600, %601 : vector<8x64xf32>
    %603 = math.tanh %602 : vector<8x64xf32>
    %604 = arith.mulf %597, %603 : vector<8x64xf32>
    %c0_258 = arith.constant 0 : index
    %c0_259 = arith.constant 0 : index
    %c0_260 = arith.constant 0 : index
    %605 = vector.load %arg9[%c0_258, %c0_259, %c0_260] : memref<8x8x64xf32, #tpu.memory_space<vmem>>, vector<1x8x64xf32>
    %606 = vector.shape_cast %605 : vector<1x8x64xf32> to vector<8x64xf32>
    %607 = vector.shape_cast %604 : vector<8x64xf32> to vector<1x8x64xf32>
    tpu.vector_store %arg9[%c0_258, %c0_259, %c0_260], %607 {strides = array<i32>} : memref<8x8x64xf32, #tpu.memory_space<vmem>>, vector<1x8x64xf32>,
    %cst_261 = arith.constant dense<0.000000e+00> : vector<8x256xf32>
    %608 = tpu.matmul %604, %583, %cst_261 {dimension_numbers = #tpu.dot_dimension_numbers<[1], [0], [0], [1], [0, 0, 1, 1], [], []>} : vector<8x64xf32>, vector<64x256xf32>, vector<8x256xf32> -> vector<8x256xf32>
    %c1_262 = arith.constant 1 : index
    %c0_263 = arith.constant 0 : index
    %c0_264 = arith.constant 0 : index
    %609 = vector.load %arg10[%c1_262, %c0_263, %c0_264] : memref<8x8x256xf32, #tpu.memory_space<vmem>>, vector<1x8x256xf32>
    %610 = vector.shape_cast %609 : vector<1x8x256xf32> to vector<8x256xf32>
    %611 = arith.addf %608, %610 : vector<8x256xf32>
    %612 = arith.negf %611 : vector<8x256xf32>
    %613 = math.exp %612 : vector<8x256xf32>
    %cst_265 = arith.constant 1.000000e+00 : f32
    %614 = vector.broadcast %cst_265 : f32 to vector<8x256xf32>
    %615 = arith.addf %614, %613 : vector<8x256xf32>
    %616 = arith.divf %614, %615 : vector<8x256xf32>
    %617 = vector.extract_strided_slice %616 {offsets = [0, 0], sizes = [8, 64], strides = [1, 1]} : vector<8x256xf32> to vector<8x64xf32>
    %618 = vector.extract_strided_slice %616 {offsets = [0, 64], sizes = [8, 64], strides = [1, 1]} : vector<8x256xf32> to vector<8x64xf32>
    %619 = vector.extract_strided_slice %616 {offsets = [0, 192], sizes = [8, 64], strides = [1, 1]} : vector<8x256xf32> to vector<8x64xf32>
    %620 = vector.extract_strided_slice %611 {offsets = [0, 128], sizes = [8, 64], strides = [1, 1]} : vector<8x256xf32> to vector<8x64xf32>
    %621 = math.tanh %620 : vector<8x64xf32>
    %622 = arith.mulf %618, %602 : vector<8x64xf32>
    %623 = arith.mulf %617, %621 : vector<8x64xf32>
    %624 = arith.addf %622, %623 : vector<8x64xf32>
    %625 = math.tanh %624 : vector<8x64xf32>
    %626 = arith.mulf %619, %625 : vector<8x64xf32>
    %c1_266 = arith.constant 1 : index
    %c0_267 = arith.constant 0 : index
    %c0_268 = arith.constant 0 : index
    %627 = vector.load %arg9[%c1_266, %c0_267, %c0_268] : memref<8x8x64xf32, #tpu.memory_space<vmem>>, vector<1x8x64xf32>
    %628 = vector.shape_cast %627 : vector<1x8x64xf32> to vector<8x64xf32>
    %629 = vector.shape_cast %626 : vector<8x64xf32> to vector<1x8x64xf32>
    tpu.vector_store %arg9[%c1_266, %c0_267, %c0_268], %629 {strides = array<i32>} : memref<8x8x64xf32, #tpu.memory_space<vmem>>, vector<1x8x64xf32>,
    %cst_269 = arith.constant dense<0.000000e+00> : vector<8x256xf32>
    %630 = tpu.matmul %626, %583, %cst_269 {dimension_numbers = #tpu.dot_dimension_numbers<[1], [0], [0], [1], [0, 0, 1, 1], [], []>} : vector<8x64xf32>, vector<64x256xf32>, vector<8x256xf32> -> vector<8x256xf32>
    %c2_270 = arith.constant 2 : index
    %c0_271 = arith.constant 0 : index
    %c0_272 = arith.constant 0 : index
    %631 = vector.load %arg10[%c2_270, %c0_271, %c0_272] : memref<8x8x256xf32, #tpu.memory_space<vmem>>, vector<1x8x256xf32>
    %632 = vector.shape_cast %631 : vector<1x8x256xf32> to vector<8x256xf32>
    %633 = arith.addf %630, %632 : vector<8x256xf32>
    %634 = arith.negf %633 : vector<8x256xf32>
    %635 = math.exp %634 : vector<8x256xf32>
    %cst_273 = arith.constant 1.000000e+00 : f32
    %636 = vector.broadcast %cst_273 : f32 to vector<8x256xf32>
    %637 = arith.addf %636, %635 : vector<8x256xf32>
    %638 = arith.divf %636, %637 : vector<8x256xf32>
    %639 = vector.extract_strided_slice %638 {offsets = [0, 0], sizes = [8, 64], strides = [1, 1]} : vector<8x256xf32> to vector<8x64xf32>
    %640 = vector.extract_strided_slice %638 {offsets = [0, 64], sizes = [8, 64], strides = [1, 1]} : vector<8x256xf32> to vector<8x64xf32>
    %641 = vector.extract_strided_slice %638 {offsets = [0, 192], sizes = [8, 64], strides = [1, 1]} : vector<8x256xf32> to vector<8x64xf32>
    %642 = vector.extract_strided_slice %633 {offsets = [0, 128], sizes = [8, 64], strides = [1, 1]} : vector<8x256xf32> to vector<8x64xf32>
    %643 = math.tanh %642 : vector<8x64xf32>
    %644 = arith.mulf %640, %624 : vector<8x64xf32>
    %645 = arith.mulf %639, %643 : vector<8x64xf32>
    %646 = arith.addf %644, %645 : vector<8x64xf32>
    %647 = math.tanh %646 : vector<8x64xf32>
    %648 = arith.mulf %641, %647 : vector<8x64xf32>
    %c2_274 = arith.constant 2 : index
    %c0_275 = arith.constant 0 : index
    %c0_276 = arith.constant 0 : index
    %649 = vector.load %arg9[%c2_274, %c0_275, %c0_276] : memref<8x8x64xf32, #tpu.memory_space<vmem>>, vector<1x8x64xf32>
    %650 = vector.shape_cast %649 : vector<1x8x64xf32> to vector<8x64xf32>
    %651 = vector.shape_cast %648 : vector<8x64xf32> to vector<1x8x64xf32>
    tpu.vector_store %arg9[%c2_274, %c0_275, %c0_276], %651 {strides = array<i32>} : memref<8x8x64xf32, #tpu.memory_space<vmem>>, vector<1x8x64xf32>,
    %cst_277 = arith.constant dense<0.000000e+00> : vector<8x256xf32>
    %652 = tpu.matmul %648, %583, %cst_277 {dimension_numbers = #tpu.dot_dimension_numbers<[1], [0], [0], [1], [0, 0, 1, 1], [], []>} : vector<8x64xf32>, vector<64x256xf32>, vector<8x256xf32> -> vector<8x256xf32>
    %c3_278 = arith.constant 3 : index
    %c0_279 = arith.constant 0 : index
    %c0_280 = arith.constant 0 : index
    %653 = vector.load %arg10[%c3_278, %c0_279, %c0_280] : memref<8x8x256xf32, #tpu.memory_space<vmem>>, vector<1x8x256xf32>
    %654 = vector.shape_cast %653 : vector<1x8x256xf32> to vector<8x256xf32>
    %655 = arith.addf %652, %654 : vector<8x256xf32>
    %656 = arith.negf %655 : vector<8x256xf32>
    %657 = math.exp %656 : vector<8x256xf32>
    %cst_281 = arith.constant 1.000000e+00 : f32
    %658 = vector.broadcast %cst_281 : f32 to vector<8x256xf32>
    %659 = arith.addf %658, %657 : vector<8x256xf32>
    %660 = arith.divf %658, %659 : vector<8x256xf32>
    %661 = vector.extract_strided_slice %660 {offsets = [0, 0], sizes = [8, 64], strides = [1, 1]} : vector<8x256xf32> to vector<8x64xf32>
    %662 = vector.extract_strided_slice %660 {offsets = [0, 64], sizes = [8, 64], strides = [1, 1]} : vector<8x256xf32> to vector<8x64xf32>
    %663 = vector.extract_strided_slice %660 {offsets = [0, 192], sizes = [8, 64], strides = [1, 1]} : vector<8x256xf32> to vector<8x64xf32>
    %664 = vector.extract_strided_slice %655 {offsets = [0, 128], sizes = [8, 64], strides = [1, 1]} : vector<8x256xf32> to vector<8x64xf32>
    %665 = math.tanh %664 : vector<8x64xf32>
    %666 = arith.mulf %662, %646 : vector<8x64xf32>
    %667 = arith.mulf %661, %665 : vector<8x64xf32>
    %668 = arith.addf %666, %667 : vector<8x64xf32>
    %669 = math.tanh %668 : vector<8x64xf32>
    %670 = arith.mulf %663, %669 : vector<8x64xf32>
    %c3_282 = arith.constant 3 : index
    %c0_283 = arith.constant 0 : index
    %c0_284 = arith.constant 0 : index
    %671 = vector.load %arg9[%c3_282, %c0_283, %c0_284] : memref<8x8x64xf32, #tpu.memory_space<vmem>>, vector<1x8x64xf32>
    %672 = vector.shape_cast %671 : vector<1x8x64xf32> to vector<8x64xf32>
    %673 = vector.shape_cast %670 : vector<8x64xf32> to vector<1x8x64xf32>
    tpu.vector_store %arg9[%c3_282, %c0_283, %c0_284], %673 {strides = array<i32>} : memref<8x8x64xf32, #tpu.memory_space<vmem>>, vector<1x8x64xf32>,
    %cst_285 = arith.constant dense<0.000000e+00> : vector<8x256xf32>
    %674 = tpu.matmul %670, %583, %cst_285 {dimension_numbers = #tpu.dot_dimension_numbers<[1], [0], [0], [1], [0, 0, 1, 1], [], []>} : vector<8x64xf32>, vector<64x256xf32>, vector<8x256xf32> -> vector<8x256xf32>
    %c4_286 = arith.constant 4 : index
    %c0_287 = arith.constant 0 : index
    %c0_288 = arith.constant 0 : index
    %675 = vector.load %arg10[%c4_286, %c0_287, %c0_288] : memref<8x8x256xf32, #tpu.memory_space<vmem>>, vector<1x8x256xf32>
    %676 = vector.shape_cast %675 : vector<1x8x256xf32> to vector<8x256xf32>
    %677 = arith.addf %674, %676 : vector<8x256xf32>
    %678 = arith.negf %677 : vector<8x256xf32>
    %679 = math.exp %678 : vector<8x256xf32>
    %cst_289 = arith.constant 1.000000e+00 : f32
    %680 = vector.broadcast %cst_289 : f32 to vector<8x256xf32>
    %681 = arith.addf %680, %679 : vector<8x256xf32>
    %682 = arith.divf %680, %681 : vector<8x256xf32>
    %683 = vector.extract_strided_slice %682 {offsets = [0, 0], sizes = [8, 64], strides = [1, 1]} : vector<8x256xf32> to vector<8x64xf32>
    %684 = vector.extract_strided_slice %682 {offsets = [0, 64], sizes = [8, 64], strides = [1, 1]} : vector<8x256xf32> to vector<8x64xf32>
    %685 = vector.extract_strided_slice %682 {offsets = [0, 192], sizes = [8, 64], strides = [1, 1]} : vector<8x256xf32> to vector<8x64xf32>
    %686 = vector.extract_strided_slice %677 {offsets = [0, 128], sizes = [8, 64], strides = [1, 1]} : vector<8x256xf32> to vector<8x64xf32>
    %687 = math.tanh %686 : vector<8x64xf32>
    %688 = arith.mulf %684, %668 : vector<8x64xf32>
    %689 = arith.mulf %683, %687 : vector<8x64xf32>
    %690 = arith.addf %688, %689 : vector<8x64xf32>
    %691 = math.tanh %690 : vector<8x64xf32>
    %692 = arith.mulf %685, %691 : vector<8x64xf32>
    %c4_290 = arith.constant 4 : index
    %c0_291 = arith.constant 0 : index
    %c0_292 = arith.constant 0 : index
    %693 = vector.load %arg9[%c4_290, %c0_291, %c0_292] : memref<8x8x64xf32, #tpu.memory_space<vmem>>, vector<1x8x64xf32>
    %694 = vector.shape_cast %693 : vector<1x8x64xf32> to vector<8x64xf32>
    %695 = vector.shape_cast %692 : vector<8x64xf32> to vector<1x8x64xf32>
    tpu.vector_store %arg9[%c4_290, %c0_291, %c0_292], %695 {strides = array<i32>} : memref<8x8x64xf32, #tpu.memory_space<vmem>>, vector<1x8x64xf32>,
    %cst_293 = arith.constant dense<0.000000e+00> : vector<8x256xf32>
    %696 = tpu.matmul %692, %583, %cst_293 {dimension_numbers = #tpu.dot_dimension_numbers<[1], [0], [0], [1], [0, 0, 1, 1], [], []>} : vector<8x64xf32>, vector<64x256xf32>, vector<8x256xf32> -> vector<8x256xf32>
    %c5_294 = arith.constant 5 : index
    %c0_295 = arith.constant 0 : index
    %c0_296 = arith.constant 0 : index
    %697 = vector.load %arg10[%c5_294, %c0_295, %c0_296] : memref<8x8x256xf32, #tpu.memory_space<vmem>>, vector<1x8x256xf32>
    %698 = vector.shape_cast %697 : vector<1x8x256xf32> to vector<8x256xf32>
    %699 = arith.addf %696, %698 : vector<8x256xf32>
    %700 = arith.negf %699 : vector<8x256xf32>
    %701 = math.exp %700 : vector<8x256xf32>
    %cst_297 = arith.constant 1.000000e+00 : f32
    %702 = vector.broadcast %cst_297 : f32 to vector<8x256xf32>
    %703 = arith.addf %702, %701 : vector<8x256xf32>
    %704 = arith.divf %702, %703 : vector<8x256xf32>
    %705 = vector.extract_strided_slice %704 {offsets = [0, 0], sizes = [8, 64], strides = [1, 1]} : vector<8x256xf32> to vector<8x64xf32>
    %706 = vector.extract_strided_slice %704 {offsets = [0, 64], sizes = [8, 64], strides = [1, 1]} : vector<8x256xf32> to vector<8x64xf32>
    %707 = vector.extract_strided_slice %704 {offsets = [0, 192], sizes = [8, 64], strides = [1, 1]} : vector<8x256xf32> to vector<8x64xf32>
    %708 = vector.extract_strided_slice %699 {offsets = [0, 128], sizes = [8, 64], strides = [1, 1]} : vector<8x256xf32> to vector<8x64xf32>
    %709 = math.tanh %708 : vector<8x64xf32>
    %710 = arith.mulf %706, %690 : vector<8x64xf32>
    %711 = arith.mulf %705, %709 : vector<8x64xf32>
    %712 = arith.addf %710, %711 : vector<8x64xf32>
    %713 = math.tanh %712 : vector<8x64xf32>
    %714 = arith.mulf %707, %713 : vector<8x64xf32>
    %c5_298 = arith.constant 5 : index
    %c0_299 = arith.constant 0 : index
    %c0_300 = arith.constant 0 : index
    %715 = vector.load %arg9[%c5_298, %c0_299, %c0_300] : memref<8x8x64xf32, #tpu.memory_space<vmem>>, vector<1x8x64xf32>
    %716 = vector.shape_cast %715 : vector<1x8x64xf32> to vector<8x64xf32>
    %717 = vector.shape_cast %714 : vector<8x64xf32> to vector<1x8x64xf32>
    tpu.vector_store %arg9[%c5_298, %c0_299, %c0_300], %717 {strides = array<i32>} : memref<8x8x64xf32, #tpu.memory_space<vmem>>, vector<1x8x64xf32>,
    %cst_301 = arith.constant dense<0.000000e+00> : vector<8x256xf32>
    %718 = tpu.matmul %714, %583, %cst_301 {dimension_numbers = #tpu.dot_dimension_numbers<[1], [0], [0], [1], [0, 0, 1, 1], [], []>} : vector<8x64xf32>, vector<64x256xf32>, vector<8x256xf32> -> vector<8x256xf32>
    %c6_302 = arith.constant 6 : index
    %c0_303 = arith.constant 0 : index
    %c0_304 = arith.constant 0 : index
    %719 = vector.load %arg10[%c6_302, %c0_303, %c0_304] : memref<8x8x256xf32, #tpu.memory_space<vmem>>, vector<1x8x256xf32>
    %720 = vector.shape_cast %719 : vector<1x8x256xf32> to vector<8x256xf32>
    %721 = arith.addf %718, %720 : vector<8x256xf32>
    %722 = arith.negf %721 : vector<8x256xf32>
    %723 = math.exp %722 : vector<8x256xf32>
    %cst_305 = arith.constant 1.000000e+00 : f32
    %724 = vector.broadcast %cst_305 : f32 to vector<8x256xf32>
    %725 = arith.addf %724, %723 : vector<8x256xf32>
    %726 = arith.divf %724, %725 : vector<8x256xf32>
    %727 = vector.extract_strided_slice %726 {offsets = [0, 0], sizes = [8, 64], strides = [1, 1]} : vector<8x256xf32> to vector<8x64xf32>
    %728 = vector.extract_strided_slice %726 {offsets = [0, 64], sizes = [8, 64], strides = [1, 1]} : vector<8x256xf32> to vector<8x64xf32>
    %729 = vector.extract_strided_slice %726 {offsets = [0, 192], sizes = [8, 64], strides = [1, 1]} : vector<8x256xf32> to vector<8x64xf32>
    %730 = vector.extract_strided_slice %721 {offsets = [0, 128], sizes = [8, 64], strides = [1, 1]} : vector<8x256xf32> to vector<8x64xf32>
    %731 = math.tanh %730 : vector<8x64xf32>
    %732 = arith.mulf %728, %712 : vector<8x64xf32>
    %733 = arith.mulf %727, %731 : vector<8x64xf32>
    %734 = arith.addf %732, %733 : vector<8x64xf32>
    %735 = math.tanh %734 : vector<8x64xf32>
    %736 = arith.mulf %729, %735 : vector<8x64xf32>
    %c6_306 = arith.constant 6 : index
    %c0_307 = arith.constant 0 : index
    %c0_308 = arith.constant 0 : index
    %737 = vector.load %arg9[%c6_306, %c0_307, %c0_308] : memref<8x8x64xf32, #tpu.memory_space<vmem>>, vector<1x8x64xf32>
    %738 = vector.shape_cast %737 : vector<1x8x64xf32> to vector<8x64xf32>
    %739 = vector.shape_cast %736 : vector<8x64xf32> to vector<1x8x64xf32>
    tpu.vector_store %arg9[%c6_306, %c0_307, %c0_308], %739 {strides = array<i32>} : memref<8x8x64xf32, #tpu.memory_space<vmem>>, vector<1x8x64xf32>,
    %cst_309 = arith.constant dense<0.000000e+00> : vector<8x256xf32>
    %740 = tpu.matmul %736, %583, %cst_309 {dimension_numbers = #tpu.dot_dimension_numbers<[1], [0], [0], [1], [0, 0, 1, 1], [], []>} : vector<8x64xf32>, vector<64x256xf32>, vector<8x256xf32> -> vector<8x256xf32>
    %c7_310 = arith.constant 7 : index
    %c0_311 = arith.constant 0 : index
    %c0_312 = arith.constant 0 : index
    %741 = vector.load %arg10[%c7_310, %c0_311, %c0_312] : memref<8x8x256xf32, #tpu.memory_space<vmem>>, vector<1x8x256xf32>
    %742 = vector.shape_cast %741 : vector<1x8x256xf32> to vector<8x256xf32>
    %743 = arith.addf %740, %742 : vector<8x256xf32>
    %744 = arith.negf %743 : vector<8x256xf32>
    %745 = math.exp %744 : vector<8x256xf32>
    %cst_313 = arith.constant 1.000000e+00 : f32
    %746 = vector.broadcast %cst_313 : f32 to vector<8x256xf32>
    %747 = arith.addf %746, %745 : vector<8x256xf32>
    %748 = arith.divf %746, %747 : vector<8x256xf32>
    %749 = vector.extract_strided_slice %748 {offsets = [0, 0], sizes = [8, 64], strides = [1, 1]} : vector<8x256xf32> to vector<8x64xf32>
    %750 = vector.extract_strided_slice %748 {offsets = [0, 64], sizes = [8, 64], strides = [1, 1]} : vector<8x256xf32> to vector<8x64xf32>
    %751 = vector.extract_strided_slice %748 {offsets = [0, 192], sizes = [8, 64], strides = [1, 1]} : vector<8x256xf32> to vector<8x64xf32>
    %752 = vector.extract_strided_slice %743 {offsets = [0, 128], sizes = [8, 64], strides = [1, 1]} : vector<8x256xf32> to vector<8x64xf32>
    %753 = math.tanh %752 : vector<8x64xf32>
    %754 = arith.mulf %750, %734 : vector<8x64xf32>
    %755 = arith.mulf %749, %753 : vector<8x64xf32>
    %756 = arith.addf %754, %755 : vector<8x64xf32>
    %757 = math.tanh %756 : vector<8x64xf32>
    %758 = arith.mulf %751, %757 : vector<8x64xf32>
    %c7_314 = arith.constant 7 : index
    %c0_315 = arith.constant 0 : index
    %c0_316 = arith.constant 0 : index
    %759 = vector.load %arg9[%c7_314, %c0_315, %c0_316] : memref<8x8x64xf32, #tpu.memory_space<vmem>>, vector<1x8x64xf32>
    %760 = vector.shape_cast %759 : vector<1x8x64xf32> to vector<8x64xf32>
    %761 = vector.shape_cast %758 : vector<8x64xf32> to vector<1x8x64xf32>
    tpu.vector_store %arg9[%c7_314, %c0_315, %c0_316], %761 {strides = array<i32>} : memref<8x8x64xf32, #tpu.memory_space<vmem>>, vector<1x8x64xf32>,
    %c0_317 = arith.constant 0 : index
    %c0_318 = arith.constant 0 : index
    %c0_319 = arith.constant 0 : index
    %762 = vector.load %arg9[%c0_317, %c0_318, %c0_319] : memref<8x8x64xf32, #tpu.memory_space<vmem>>, vector<8x8x64xf32>
    %763 = vector.shape_cast %762 : vector<8x8x64xf32> to vector<64x64xf32>
    %c3_320 = arith.constant 3 : index
    %c0_321 = arith.constant 0 : index
    %c0_322 = arith.constant 0 : index
    %764 = vector.load %arg3[%c3_320, %c0_321, %c0_322] : memref<4x64x256xf32, #tpu.memory_space<vmem>>, vector<1x64x256xf32>
    %765 = vector.shape_cast %764 : vector<1x64x256xf32> to vector<64x256xf32>
    %cst_323 = arith.constant dense<0.000000e+00> : vector<64x256xf32>
    %766 = tpu.matmul %763, %765, %cst_323 {dimension_numbers = #tpu.dot_dimension_numbers<[1], [0], [0], [1], [0, 0, 1, 1], [], []>} : vector<64x64xf32>, vector<64x256xf32>, vector<64x256xf32> -> vector<64x256xf32>
    %c3_324 = arith.constant 3 : index
    %c0_325 = arith.constant 0 : index
    %c0_326 = arith.constant 0 : index
    %767 = vector.load %arg5[%c3_324, %c0_325, %c0_326] : memref<4x1x256xf32, #tpu.memory_space<vmem>>, vector<1x1x256xf32>
    %768 = vector.shape_cast %767 : vector<1x1x256xf32> to vector<1x256xf32>
    %769 = vector.broadcast %768 : vector<1x256xf32> to vector<64x256xf32>
    %770 = arith.addf %766, %769 : vector<64x256xf32>
    %771 = vector.shape_cast %770 : vector<64x256xf32> to vector<8x8x256xf32>
    %c0_327 = arith.constant 0 : index
    %c0_328 = arith.constant 0 : index
    %c0_329 = arith.constant 0 : index
    %772 = vector.load %arg10[%c0_327, %c0_328, %c0_329] : memref<8x8x256xf32, #tpu.memory_space<vmem>>, vector<8x8x256xf32>
    tpu.vector_store %arg10[%c0_327, %c0_328, %c0_329], %771 {strides = array<i32>} : memref<8x8x256xf32, #tpu.memory_space<vmem>>, vector<8x8x256xf32>,
    %c4_330 = arith.constant 4 : index
    %c0_331 = arith.constant 0 : index
    %c0_332 = arith.constant 0 : index
    %773 = vector.load %arg4[%c4_330, %c0_331, %c0_332] : memref<5x64x256xf32, #tpu.memory_space<vmem>>, vector<1x64x256xf32>
    %774 = vector.shape_cast %773 : vector<1x64x256xf32> to vector<64x256xf32>
    %cst_333 = arith.constant 0.000000e+00 : f32
    %775 = vector.broadcast %cst_333 : f32 to vector<8x64xf32>
    %cst_334 = arith.constant 0.000000e+00 : f32
    %776 = vector.broadcast %cst_334 : f32 to vector<8x64xf32>
    %cst_335 = arith.constant dense<0.000000e+00> : vector<8x256xf32>
    %777 = tpu.matmul %775, %774, %cst_335 {dimension_numbers = #tpu.dot_dimension_numbers<[1], [0], [0], [1], [0, 0, 1, 1], [], []>} : vector<8x64xf32>, vector<64x256xf32>, vector<8x256xf32> -> vector<8x256xf32>
    %c0_336 = arith.constant 0 : index
    %c0_337 = arith.constant 0 : index
    %c0_338 = arith.constant 0 : index
    %778 = vector.load %arg10[%c0_336, %c0_337, %c0_338] : memref<8x8x256xf32, #tpu.memory_space<vmem>>, vector<1x8x256xf32>
    %779 = vector.shape_cast %778 : vector<1x8x256xf32> to vector<8x256xf32>
    %780 = arith.addf %777, %779 : vector<8x256xf32>
    %781 = arith.negf %780 : vector<8x256xf32>
    %782 = math.exp %781 : vector<8x256xf32>
    %cst_339 = arith.constant 1.000000e+00 : f32
    %783 = vector.broadcast %cst_339 : f32 to vector<8x256xf32>
    %784 = arith.addf %783, %782 : vector<8x256xf32>
    %785 = arith.divf %783, %784 : vector<8x256xf32>
    %786 = vector.extract_strided_slice %785 {offsets = [0, 0], sizes = [8, 64], strides = [1, 1]} : vector<8x256xf32> to vector<8x64xf32>
    %787 = vector.extract_strided_slice %785 {offsets = [0, 64], sizes = [8, 64], strides = [1, 1]} : vector<8x256xf32> to vector<8x64xf32>
    %788 = vector.extract_strided_slice %785 {offsets = [0, 192], sizes = [8, 64], strides = [1, 1]} : vector<8x256xf32> to vector<8x64xf32>
    %789 = vector.extract_strided_slice %780 {offsets = [0, 128], sizes = [8, 64], strides = [1, 1]} : vector<8x256xf32> to vector<8x64xf32>
    %790 = math.tanh %789 : vector<8x64xf32>
    %791 = arith.mulf %787, %776 : vector<8x64xf32>
    %792 = arith.mulf %786, %790 : vector<8x64xf32>
    %793 = arith.addf %791, %792 : vector<8x64xf32>
    %794 = math.tanh %793 : vector<8x64xf32>
    %795 = arith.mulf %788, %794 : vector<8x64xf32>
    %c0_340 = arith.constant 0 : index
    %c0_341 = arith.constant 0 : index
    %c0_342 = arith.constant 0 : index
    %796 = vector.load %arg9[%c0_340, %c0_341, %c0_342] : memref<8x8x64xf32, #tpu.memory_space<vmem>>, vector<1x8x64xf32>
    %797 = vector.shape_cast %796 : vector<1x8x64xf32> to vector<8x64xf32>
    %798 = vector.shape_cast %795 : vector<8x64xf32> to vector<1x8x64xf32>
    tpu.vector_store %arg9[%c0_340, %c0_341, %c0_342], %798 {strides = array<i32>} : memref<8x8x64xf32, #tpu.memory_space<vmem>>, vector<1x8x64xf32>,
    %cst_343 = arith.constant dense<0.000000e+00> : vector<8x256xf32>
    %799 = tpu.matmul %795, %774, %cst_343 {dimension_numbers = #tpu.dot_dimension_numbers<[1], [0], [0], [1], [0, 0, 1, 1], [], []>} : vector<8x64xf32>, vector<64x256xf32>, vector<8x256xf32> -> vector<8x256xf32>
    %c1_344 = arith.constant 1 : index
    %c0_345 = arith.constant 0 : index
    %c0_346 = arith.constant 0 : index
    %800 = vector.load %arg10[%c1_344, %c0_345, %c0_346] : memref<8x8x256xf32, #tpu.memory_space<vmem>>, vector<1x8x256xf32>
    %801 = vector.shape_cast %800 : vector<1x8x256xf32> to vector<8x256xf32>
    %802 = arith.addf %799, %801 : vector<8x256xf32>
    %803 = arith.negf %802 : vector<8x256xf32>
    %804 = math.exp %803 : vector<8x256xf32>
    %cst_347 = arith.constant 1.000000e+00 : f32
    %805 = vector.broadcast %cst_347 : f32 to vector<8x256xf32>
    %806 = arith.addf %805, %804 : vector<8x256xf32>
    %807 = arith.divf %805, %806 : vector<8x256xf32>
    %808 = vector.extract_strided_slice %807 {offsets = [0, 0], sizes = [8, 64], strides = [1, 1]} : vector<8x256xf32> to vector<8x64xf32>
    %809 = vector.extract_strided_slice %807 {offsets = [0, 64], sizes = [8, 64], strides = [1, 1]} : vector<8x256xf32> to vector<8x64xf32>
    %810 = vector.extract_strided_slice %807 {offsets = [0, 192], sizes = [8, 64], strides = [1, 1]} : vector<8x256xf32> to vector<8x64xf32>
    %811 = vector.extract_strided_slice %802 {offsets = [0, 128], sizes = [8, 64], strides = [1, 1]} : vector<8x256xf32> to vector<8x64xf32>
    %812 = math.tanh %811 : vector<8x64xf32>
    %813 = arith.mulf %809, %793 : vector<8x64xf32>
    %814 = arith.mulf %808, %812 : vector<8x64xf32>
    %815 = arith.addf %813, %814 : vector<8x64xf32>
    %816 = math.tanh %815 : vector<8x64xf32>
    %817 = arith.mulf %810, %816 : vector<8x64xf32>
    %c1_348 = arith.constant 1 : index
    %c0_349 = arith.constant 0 : index
    %c0_350 = arith.constant 0 : index
    %818 = vector.load %arg9[%c1_348, %c0_349, %c0_350] : memref<8x8x64xf32, #tpu.memory_space<vmem>>, vector<1x8x64xf32>
    %819 = vector.shape_cast %818 : vector<1x8x64xf32> to vector<8x64xf32>
    %820 = vector.shape_cast %817 : vector<8x64xf32> to vector<1x8x64xf32>
    tpu.vector_store %arg9[%c1_348, %c0_349, %c0_350], %820 {strides = array<i32>} : memref<8x8x64xf32, #tpu.memory_space<vmem>>, vector<1x8x64xf32>,
    %cst_351 = arith.constant dense<0.000000e+00> : vector<8x256xf32>
    %821 = tpu.matmul %817, %774, %cst_351 {dimension_numbers = #tpu.dot_dimension_numbers<[1], [0], [0], [1], [0, 0, 1, 1], [], []>} : vector<8x64xf32>, vector<64x256xf32>, vector<8x256xf32> -> vector<8x256xf32>
    %c2_352 = arith.constant 2 : index
    %c0_353 = arith.constant 0 : index
    %c0_354 = arith.constant 0 : index
    %822 = vector.load %arg10[%c2_352, %c0_353, %c0_354] : memref<8x8x256xf32, #tpu.memory_space<vmem>>, vector<1x8x256xf32>
    %823 = vector.shape_cast %822 : vector<1x8x256xf32> to vector<8x256xf32>
    %824 = arith.addf %821, %823 : vector<8x256xf32>
    %825 = arith.negf %824 : vector<8x256xf32>
    %826 = math.exp %825 : vector<8x256xf32>
    %cst_355 = arith.constant 1.000000e+00 : f32
    %827 = vector.broadcast %cst_355 : f32 to vector<8x256xf32>
    %828 = arith.addf %827, %826 : vector<8x256xf32>
    %829 = arith.divf %827, %828 : vector<8x256xf32>
    %830 = vector.extract_strided_slice %829 {offsets = [0, 0], sizes = [8, 64], strides = [1, 1]} : vector<8x256xf32> to vector<8x64xf32>
    %831 = vector.extract_strided_slice %829 {offsets = [0, 64], sizes = [8, 64], strides = [1, 1]} : vector<8x256xf32> to vector<8x64xf32>
    %832 = vector.extract_strided_slice %829 {offsets = [0, 192], sizes = [8, 64], strides = [1, 1]} : vector<8x256xf32> to vector<8x64xf32>
    %833 = vector.extract_strided_slice %824 {offsets = [0, 128], sizes = [8, 64], strides = [1, 1]} : vector<8x256xf32> to vector<8x64xf32>
    %834 = math.tanh %833 : vector<8x64xf32>
    %835 = arith.mulf %831, %815 : vector<8x64xf32>
    %836 = arith.mulf %830, %834 : vector<8x64xf32>
    %837 = arith.addf %835, %836 : vector<8x64xf32>
    %838 = math.tanh %837 : vector<8x64xf32>
    %839 = arith.mulf %832, %838 : vector<8x64xf32>
    %c2_356 = arith.constant 2 : index
    %c0_357 = arith.constant 0 : index
    %c0_358 = arith.constant 0 : index
    %840 = vector.load %arg9[%c2_356, %c0_357, %c0_358] : memref<8x8x64xf32, #tpu.memory_space<vmem>>, vector<1x8x64xf32>
    %841 = vector.shape_cast %840 : vector<1x8x64xf32> to vector<8x64xf32>
    %842 = vector.shape_cast %839 : vector<8x64xf32> to vector<1x8x64xf32>
    tpu.vector_store %arg9[%c2_356, %c0_357, %c0_358], %842 {strides = array<i32>} : memref<8x8x64xf32, #tpu.memory_space<vmem>>, vector<1x8x64xf32>,
    %cst_359 = arith.constant dense<0.000000e+00> : vector<8x256xf32>
    %843 = tpu.matmul %839, %774, %cst_359 {dimension_numbers = #tpu.dot_dimension_numbers<[1], [0], [0], [1], [0, 0, 1, 1], [], []>} : vector<8x64xf32>, vector<64x256xf32>, vector<8x256xf32> -> vector<8x256xf32>
    %c3_360 = arith.constant 3 : index
    %c0_361 = arith.constant 0 : index
    %c0_362 = arith.constant 0 : index
    %844 = vector.load %arg10[%c3_360, %c0_361, %c0_362] : memref<8x8x256xf32, #tpu.memory_space<vmem>>, vector<1x8x256xf32>
    %845 = vector.shape_cast %844 : vector<1x8x256xf32> to vector<8x256xf32>
    %846 = arith.addf %843, %845 : vector<8x256xf32>
    %847 = arith.negf %846 : vector<8x256xf32>
    %848 = math.exp %847 : vector<8x256xf32>
    %cst_363 = arith.constant 1.000000e+00 : f32
    %849 = vector.broadcast %cst_363 : f32 to vector<8x256xf32>
    %850 = arith.addf %849, %848 : vector<8x256xf32>
    %851 = arith.divf %849, %850 : vector<8x256xf32>
    %852 = vector.extract_strided_slice %851 {offsets = [0, 0], sizes = [8, 64], strides = [1, 1]} : vector<8x256xf32> to vector<8x64xf32>
    %853 = vector.extract_strided_slice %851 {offsets = [0, 64], sizes = [8, 64], strides = [1, 1]} : vector<8x256xf32> to vector<8x64xf32>
    %854 = vector.extract_strided_slice %851 {offsets = [0, 192], sizes = [8, 64], strides = [1, 1]} : vector<8x256xf32> to vector<8x64xf32>
    %855 = vector.extract_strided_slice %846 {offsets = [0, 128], sizes = [8, 64], strides = [1, 1]} : vector<8x256xf32> to vector<8x64xf32>
    %856 = math.tanh %855 : vector<8x64xf32>
    %857 = arith.mulf %853, %837 : vector<8x64xf32>
    %858 = arith.mulf %852, %856 : vector<8x64xf32>
    %859 = arith.addf %857, %858 : vector<8x64xf32>
    %860 = math.tanh %859 : vector<8x64xf32>
    %861 = arith.mulf %854, %860 : vector<8x64xf32>
    %c3_364 = arith.constant 3 : index
    %c0_365 = arith.constant 0 : index
    %c0_366 = arith.constant 0 : index
    %862 = vector.load %arg9[%c3_364, %c0_365, %c0_366] : memref<8x8x64xf32, #tpu.memory_space<vmem>>, vector<1x8x64xf32>
    %863 = vector.shape_cast %862 : vector<1x8x64xf32> to vector<8x64xf32>
    %864 = vector.shape_cast %861 : vector<8x64xf32> to vector<1x8x64xf32>
    tpu.vector_store %arg9[%c3_364, %c0_365, %c0_366], %864 {strides = array<i32>} : memref<8x8x64xf32, #tpu.memory_space<vmem>>, vector<1x8x64xf32>,
    %cst_367 = arith.constant dense<0.000000e+00> : vector<8x256xf32>
    %865 = tpu.matmul %861, %774, %cst_367 {dimension_numbers = #tpu.dot_dimension_numbers<[1], [0], [0], [1], [0, 0, 1, 1], [], []>} : vector<8x64xf32>, vector<64x256xf32>, vector<8x256xf32> -> vector<8x256xf32>
    %c4_368 = arith.constant 4 : index
    %c0_369 = arith.constant 0 : index
    %c0_370 = arith.constant 0 : index
    %866 = vector.load %arg10[%c4_368, %c0_369, %c0_370] : memref<8x8x256xf32, #tpu.memory_space<vmem>>, vector<1x8x256xf32>
    %867 = vector.shape_cast %866 : vector<1x8x256xf32> to vector<8x256xf32>
    %868 = arith.addf %865, %867 : vector<8x256xf32>
    %869 = arith.negf %868 : vector<8x256xf32>
    %870 = math.exp %869 : vector<8x256xf32>
    %cst_371 = arith.constant 1.000000e+00 : f32
    %871 = vector.broadcast %cst_371 : f32 to vector<8x256xf32>
    %872 = arith.addf %871, %870 : vector<8x256xf32>
    %873 = arith.divf %871, %872 : vector<8x256xf32>
    %874 = vector.extract_strided_slice %873 {offsets = [0, 0], sizes = [8, 64], strides = [1, 1]} : vector<8x256xf32> to vector<8x64xf32>
    %875 = vector.extract_strided_slice %873 {offsets = [0, 64], sizes = [8, 64], strides = [1, 1]} : vector<8x256xf32> to vector<8x64xf32>
    %876 = vector.extract_strided_slice %873 {offsets = [0, 192], sizes = [8, 64], strides = [1, 1]} : vector<8x256xf32> to vector<8x64xf32>
    %877 = vector.extract_strided_slice %868 {offsets = [0, 128], sizes = [8, 64], strides = [1, 1]} : vector<8x256xf32> to vector<8x64xf32>
    %878 = math.tanh %877 : vector<8x64xf32>
    %879 = arith.mulf %875, %859 : vector<8x64xf32>
    %880 = arith.mulf %874, %878 : vector<8x64xf32>
    %881 = arith.addf %879, %880 : vector<8x64xf32>
    %882 = math.tanh %881 : vector<8x64xf32>
    %883 = arith.mulf %876, %882 : vector<8x64xf32>
    %c4_372 = arith.constant 4 : index
    %c0_373 = arith.constant 0 : index
    %c0_374 = arith.constant 0 : index
    %884 = vector.load %arg9[%c4_372, %c0_373, %c0_374] : memref<8x8x64xf32, #tpu.memory_space<vmem>>, vector<1x8x64xf32>
    %885 = vector.shape_cast %884 : vector<1x8x64xf32> to vector<8x64xf32>
    %886 = vector.shape_cast %883 : vector<8x64xf32> to vector<1x8x64xf32>
    tpu.vector_store %arg9[%c4_372, %c0_373, %c0_374], %886 {strides = array<i32>} : memref<8x8x64xf32, #tpu.memory_space<vmem>>, vector<1x8x64xf32>,
    %cst_375 = arith.constant dense<0.000000e+00> : vector<8x256xf32>
    %887 = tpu.matmul %883, %774, %cst_375 {dimension_numbers = #tpu.dot_dimension_numbers<[1], [0], [0], [1], [0, 0, 1, 1], [], []>} : vector<8x64xf32>, vector<64x256xf32>, vector<8x256xf32> -> vector<8x256xf32>
    %c5_376 = arith.constant 5 : index
    %c0_377 = arith.constant 0 : index
    %c0_378 = arith.constant 0 : index
    %888 = vector.load %arg10[%c5_376, %c0_377, %c0_378] : memref<8x8x256xf32, #tpu.memory_space<vmem>>, vector<1x8x256xf32>
    %889 = vector.shape_cast %888 : vector<1x8x256xf32> to vector<8x256xf32>
    %890 = arith.addf %887, %889 : vector<8x256xf32>
    %891 = arith.negf %890 : vector<8x256xf32>
    %892 = math.exp %891 : vector<8x256xf32>
    %cst_379 = arith.constant 1.000000e+00 : f32
    %893 = vector.broadcast %cst_379 : f32 to vector<8x256xf32>
    %894 = arith.addf %893, %892 : vector<8x256xf32>
    %895 = arith.divf %893, %894 : vector<8x256xf32>
    %896 = vector.extract_strided_slice %895 {offsets = [0, 0], sizes = [8, 64], strides = [1, 1]} : vector<8x256xf32> to vector<8x64xf32>
    %897 = vector.extract_strided_slice %895 {offsets = [0, 64], sizes = [8, 64], strides = [1, 1]} : vector<8x256xf32> to vector<8x64xf32>
    %898 = vector.extract_strided_slice %895 {offsets = [0, 192], sizes = [8, 64], strides = [1, 1]} : vector<8x256xf32> to vector<8x64xf32>
    %899 = vector.extract_strided_slice %890 {offsets = [0, 128], sizes = [8, 64], strides = [1, 1]} : vector<8x256xf32> to vector<8x64xf32>
    %900 = math.tanh %899 : vector<8x64xf32>
    %901 = arith.mulf %897, %881 : vector<8x64xf32>
    %902 = arith.mulf %896, %900 : vector<8x64xf32>
    %903 = arith.addf %901, %902 : vector<8x64xf32>
    %904 = math.tanh %903 : vector<8x64xf32>
    %905 = arith.mulf %898, %904 : vector<8x64xf32>
    %c5_380 = arith.constant 5 : index
    %c0_381 = arith.constant 0 : index
    %c0_382 = arith.constant 0 : index
    %906 = vector.load %arg9[%c5_380, %c0_381, %c0_382] : memref<8x8x64xf32, #tpu.memory_space<vmem>>, vector<1x8x64xf32>
    %907 = vector.shape_cast %906 : vector<1x8x64xf32> to vector<8x64xf32>
    %908 = vector.shape_cast %905 : vector<8x64xf32> to vector<1x8x64xf32>
    tpu.vector_store %arg9[%c5_380, %c0_381, %c0_382], %908 {strides = array<i32>} : memref<8x8x64xf32, #tpu.memory_space<vmem>>, vector<1x8x64xf32>,
    %cst_383 = arith.constant dense<0.000000e+00> : vector<8x256xf32>
    %909 = tpu.matmul %905, %774, %cst_383 {dimension_numbers = #tpu.dot_dimension_numbers<[1], [0], [0], [1], [0, 0, 1, 1], [], []>} : vector<8x64xf32>, vector<64x256xf32>, vector<8x256xf32> -> vector<8x256xf32>
    %c6_384 = arith.constant 6 : index
    %c0_385 = arith.constant 0 : index
    %c0_386 = arith.constant 0 : index
    %910 = vector.load %arg10[%c6_384, %c0_385, %c0_386] : memref<8x8x256xf32, #tpu.memory_space<vmem>>, vector<1x8x256xf32>
    %911 = vector.shape_cast %910 : vector<1x8x256xf32> to vector<8x256xf32>
    %912 = arith.addf %909, %911 : vector<8x256xf32>
    %913 = arith.negf %912 : vector<8x256xf32>
    %914 = math.exp %913 : vector<8x256xf32>
    %cst_387 = arith.constant 1.000000e+00 : f32
    %915 = vector.broadcast %cst_387 : f32 to vector<8x256xf32>
    %916 = arith.addf %915, %914 : vector<8x256xf32>
    %917 = arith.divf %915, %916 : vector<8x256xf32>
    %918 = vector.extract_strided_slice %917 {offsets = [0, 0], sizes = [8, 64], strides = [1, 1]} : vector<8x256xf32> to vector<8x64xf32>
    %919 = vector.extract_strided_slice %917 {offsets = [0, 64], sizes = [8, 64], strides = [1, 1]} : vector<8x256xf32> to vector<8x64xf32>
    %920 = vector.extract_strided_slice %917 {offsets = [0, 192], sizes = [8, 64], strides = [1, 1]} : vector<8x256xf32> to vector<8x64xf32>
    %921 = vector.extract_strided_slice %912 {offsets = [0, 128], sizes = [8, 64], strides = [1, 1]} : vector<8x256xf32> to vector<8x64xf32>
    %922 = math.tanh %921 : vector<8x64xf32>
    %923 = arith.mulf %919, %903 : vector<8x64xf32>
    %924 = arith.mulf %918, %922 : vector<8x64xf32>
    %925 = arith.addf %923, %924 : vector<8x64xf32>
    %926 = math.tanh %925 : vector<8x64xf32>
    %927 = arith.mulf %920, %926 : vector<8x64xf32>
    %c6_388 = arith.constant 6 : index
    %c0_389 = arith.constant 0 : index
    %c0_390 = arith.constant 0 : index
    %928 = vector.load %arg9[%c6_388, %c0_389, %c0_390] : memref<8x8x64xf32, #tpu.memory_space<vmem>>, vector<1x8x64xf32>
    %929 = vector.shape_cast %928 : vector<1x8x64xf32> to vector<8x64xf32>
    %930 = vector.shape_cast %927 : vector<8x64xf32> to vector<1x8x64xf32>
    tpu.vector_store %arg9[%c6_388, %c0_389, %c0_390], %930 {strides = array<i32>} : memref<8x8x64xf32, #tpu.memory_space<vmem>>, vector<1x8x64xf32>,
    %cst_391 = arith.constant dense<0.000000e+00> : vector<8x256xf32>
    %931 = tpu.matmul %927, %774, %cst_391 {dimension_numbers = #tpu.dot_dimension_numbers<[1], [0], [0], [1], [0, 0, 1, 1], [], []>} : vector<8x64xf32>, vector<64x256xf32>, vector<8x256xf32> -> vector<8x256xf32>
    %c7_392 = arith.constant 7 : index
    %c0_393 = arith.constant 0 : index
    %c0_394 = arith.constant 0 : index
    %932 = vector.load %arg10[%c7_392, %c0_393, %c0_394] : memref<8x8x256xf32, #tpu.memory_space<vmem>>, vector<1x8x256xf32>
    %933 = vector.shape_cast %932 : vector<1x8x256xf32> to vector<8x256xf32>
    %934 = arith.addf %931, %933 : vector<8x256xf32>
    %935 = arith.negf %934 : vector<8x256xf32>
    %936 = math.exp %935 : vector<8x256xf32>
    %cst_395 = arith.constant 1.000000e+00 : f32
    %937 = vector.broadcast %cst_395 : f32 to vector<8x256xf32>
    %938 = arith.addf %937, %936 : vector<8x256xf32>
    %939 = arith.divf %937, %938 : vector<8x256xf32>
    %940 = vector.extract_strided_slice %939 {offsets = [0, 0], sizes = [8, 64], strides = [1, 1]} : vector<8x256xf32> to vector<8x64xf32>
    %941 = vector.extract_strided_slice %939 {offsets = [0, 64], sizes = [8, 64], strides = [1, 1]} : vector<8x256xf32> to vector<8x64xf32>
    %942 = vector.extract_strided_slice %939 {offsets = [0, 192], sizes = [8, 64], strides = [1, 1]} : vector<8x256xf32> to vector<8x64xf32>
    %943 = vector.extract_strided_slice %934 {offsets = [0, 128], sizes = [8, 64], strides = [1, 1]} : vector<8x256xf32> to vector<8x64xf32>
    %944 = math.tanh %943 : vector<8x64xf32>
    %945 = arith.mulf %941, %925 : vector<8x64xf32>
    %946 = arith.mulf %940, %944 : vector<8x64xf32>
    %947 = arith.addf %945, %946 : vector<8x64xf32>
    %948 = math.tanh %947 : vector<8x64xf32>
    %949 = arith.mulf %942, %948 : vector<8x64xf32>
    %c7_396 = arith.constant 7 : index
    %c0_397 = arith.constant 0 : index
    %c0_398 = arith.constant 0 : index
    %950 = vector.load %arg9[%c7_396, %c0_397, %c0_398] : memref<8x8x64xf32, #tpu.memory_space<vmem>>, vector<1x8x64xf32>
    %951 = vector.shape_cast %950 : vector<1x8x64xf32> to vector<8x64xf32>
    %952 = vector.shape_cast %949 : vector<8x64xf32> to vector<1x8x64xf32>
    tpu.vector_store %arg9[%c7_396, %c0_397, %c0_398], %952 {strides = array<i32>} : memref<8x8x64xf32, #tpu.memory_space<vmem>>, vector<1x8x64xf32>,
    %c7_399 = arith.constant 7 : index
    %c0_400 = arith.constant 0 : index
    %c0_401 = arith.constant 0 : index
    %953 = vector.load %arg9[%c7_399, %c0_400, %c0_401] : memref<8x8x64xf32, #tpu.memory_space<vmem>>, vector<1x8x64xf32>
    %954 = vector.shape_cast %953 : vector<1x8x64xf32> to vector<8x64xf32>
    %c0_402 = arith.constant 0 : index
    %c0_403 = arith.constant 0 : index
    %955 = vector.load %arg6[%c0_402, %c0_403] : memref<64x1xf32, #tpu.memory_space<vmem>>, vector<64x1xf32>
    %cst_404 = arith.constant dense<0.000000e+00> : vector<8x1xf32>
    %956 = tpu.matmul %954, %955, %cst_404 {dimension_numbers = #tpu.dot_dimension_numbers<[1], [0], [0], [1], [0, 0, 1, 1], [], []>} : vector<8x64xf32>, vector<64x1xf32>, vector<8x1xf32> -> vector<8x1xf32>
    %c0_405 = arith.constant 0 : index
    %c0_406 = arith.constant 0 : index
    %957 = vector.load %arg7[%c0_405, %c0_406] : memref<1x1xf32, #tpu.memory_space<vmem>>, vector<1x1xf32>
    %958 = vector.broadcast %957 : vector<1x1xf32> to vector<8x1xf32>
    %959 = arith.addf %956, %958 : vector<8x1xf32>
    %c0_407 = arith.constant 0 : index
    %c0_408 = arith.constant 0 : index
    %960 = vector.load %arg8[%c0_407, %c0_408] : memref<8x1xf32, #tpu.memory_space<vmem>>, vector<8x1xf32>
    tpu.vector_store %arg8[%c0_407, %c0_408], %959 {strides = array<i32>} : memref<8x1xf32, #tpu.memory_space<vmem>>, vector<8x1xf32>,
    return
  }
}

</mosaic_0001>

<llo_original>
// kernel: tpu_custom_call.1
$region0: #{tpu_custom_call.1}
  #allocation0 [shape = 'u32[]', space=smem, size = 0x4, offset = 0x4, fixed_abs, tag = 'smem constant byte address 0x4 - core index']
  #allocation1 [shape = 'u32[72,128]{1,0:T(1,128)}', space=vmem, size = 0x9000, scoped, tag = 'internal scratch']
  #allocation2 [shape = 'f32[8,8,64]{2,1,0:T(8,128)}', space=vmem, size = 0x8000, scoped, tag = 'scratch operand']
  #allocation3 [shape = 'f32[8,8,256]{2,1,0:T(8,128)}', space=vmem, size = 0x10000, scoped, tag = 'scratch operand']
  #allocation4 [shape = 'f32[1,1]{1,0:T(1,128)S(1)}', space=vmem, size = 0x200, scoped, tag = 'scoped memory for tpu_custom_call.1']
  %s0 = inlined_call_operand.vmem [shape: f32[8,8,2], index: 0, kind: input, shape index: {}]
  %s1 = inlined_call_operand.vmem [shape: f32[2,256], index: 1, kind: input, shape index: {}]
  %s2 = inlined_call_operand.vmem [shape: f32[1,256], index: 2, kind: input, shape index: {}]
  %s3 = inlined_call_operand.hbm [shape: f32[4,64,256], index: 3, kind: input, shape index: {}]
  %s4 = inlined_call_operand.hbm [shape: f32[5,64,256], index: 4, kind: input, shape index: {}]
  %s5 = inlined_call_operand.vmem [shape: f32[4,1,256], index: 5, kind: input, shape index: {}]
  %s6 = inlined_call_operand.vmem [shape: f32[64,1], index: 6, kind: input, shape index: {}]
  %s7 = inlined_call_operand.<no memory space> [shape: f32[1,1], index: 7, kind: input, shape index: {}]
  %s8 = inlined_call_operand.vmem [shape: f32[8,1], index: 8, kind: output, shape index: {}]
  %s9 = sld [smem:[#allocation0]]
  $region50: #{tpu_custom_call.1} parent=0
    _
  %s11 = ssub.s32 1, %s9
  %s12 = scalar_select 0, %s11, %s9
  %v13 = vstv %s7
  %14 = vst [vmem:[#allocation4] sm:$0x1] %v13
  $region1: #{tpu_custom_call.1} parent=0
    #allocation5 [shape = 'u8[262144]{0}', space=vmem, size = 0x40000, scoped, tag = 'input window, operand 3, single buffered']
    #allocation6 [shape = 's32[1]{0}', space=sflag, size = 0x4, scoped, tag = 'scoped memory for tpu_custom_call.1']
    #allocation7 [shape = 'u8[327680]{0}', space=vmem, size = 0x50000, scoped, tag = 'input window, operand 4, single buffered']
    #allocation8 [shape = 's32[1]{0}', space=sflag, size = 0x4, scoped, tag = 'scoped memory for tpu_custom_call.1']
    %15 = vsyncpa [#allocation6], 0
    %16 = vsyncpa [#allocation8], 0
    // Predicated region
    $region2: #{tpu_custom_call.1} parent=1 // pred_check
      _
    $region3: #{tpu_custom_call.1} parent=1 // pred_check_branch
      %18 = sbr.rel (0) target = $region5
    $region4: #{tpu_custom_call.1} parent=1 // pred_region
      _
    $region5: #{tpu_custom_call.1} parent=1 // pred_fallthru
      _
    // Predicated region
    $region6: #{tpu_custom_call.1} parent=1 // pred_check
      _
    $region7: #{tpu_custom_call.1} parent=1 // pred_check_branch
      %20 = sbr.rel (0) target = $region9
    $region8: #{tpu_custom_call.1} parent=1 // pred_region
      _
    $region9: #{tpu_custom_call.1} parent=1 // pred_fallthru
      _
    // Predicated region
    $region10: #{tpu_custom_call.1} parent=1 // pred_check
      _
    $region11: #{tpu_custom_call.1} parent=1 // pred_check_branch
      %22 = sbr.rel (0) target = $region13
    $region12: #{tpu_custom_call.1} parent=1 // pred_region
      _
    $region13: #{tpu_custom_call.1} parent=1 // pred_fallthru
      _
    // Predicated region
    $region14: #{tpu_custom_call.1} parent=1 // pred_check
      _
    $region15: #{tpu_custom_call.1} parent=1 // pred_check_branch
      %24 = sbr.rel (0) target = $region17
    $region16: #{tpu_custom_call.1} parent=1 // pred_region
      %26 = vsyncadd [#allocation6], 0
      %s27 = sshll.u32 %s3, 4
      %s28 = int_to_ptr.hbm [resolvable:$true] %s27
      %s29 = sshll.u32 [#allocation5], 4
      %s30 = int_to_ptr.vmem [resolvable:$true] %s29
      %35 = dma.hbm_to_vmem [thread:$0]  %s28, 8192, %s30, [#allocation6], 256, 256, 16
    $region17: #{tpu_custom_call.1} parent=1 // pred_fallthru
      _
    // Predicated region
    $region18: #{tpu_custom_call.1} parent=1 // pred_check
      _
    $region19: #{tpu_custom_call.1} parent=1 // pred_check_branch
      %37 = sbr.rel (0) target = $region21
    $region20: #{tpu_custom_call.1} parent=1 // pred_region
      %39 = vsyncadd [#allocation8], 0
      %s40 = sshll.u32 %s4, 4
      %s41 = int_to_ptr.hbm [resolvable:$true] %s40
      %s42 = sshll.u32 [#allocation7], 4
      %s43 = int_to_ptr.vmem [resolvable:$true] %s42
      %48 = dma.hbm_to_vmem [thread:$0]  %s41, 10240, %s43, [#allocation8], 256, 256, 16
    $region21: #{tpu_custom_call.1} parent=1 // pred_fallthru
      _
    // Predicated region
    $region22: #{tpu_custom_call.1} parent=1 // pred_check
      _
    $region23: #{tpu_custom_call.1} parent=1 // pred_check_branch
      %50 = sbr.rel (0) target = $region25
    $region24: #{tpu_custom_call.1} parent=1 // pred_region
      _
    $region25: #{tpu_custom_call.1} parent=1 // pred_fallthru
      _
    // Predicated region
    $region26: #{tpu_custom_call.1} parent=1 // pred_check
      _
    $region27: #{tpu_custom_call.1} parent=1 // pred_check_branch
      %52 = sbr.rel (0) target = $region29
    $region28: #{tpu_custom_call.1} parent=1 // pred_region
      _
    $region29: #{tpu_custom_call.1} parent=1 // pred_fallthru
      _
    // Predicated region
    $region30: #{tpu_custom_call.1} parent=1 // pred_check
      _
    $region31: #{tpu_custom_call.1} parent=1 // pred_check_branch
      %54 = sbr.rel (0) target = $region33
    $region32: #{tpu_custom_call.1} parent=1 // pred_region
      _
    $region33: #{tpu_custom_call.1} parent=1 // pred_fallthru
      _
    // Predicated region
    $region34: #{tpu_custom_call.1} parent=1 // pred_check
      _
    $region35: #{tpu_custom_call.1} parent=1 // pred_check_branch
      %56 = sbr.rel (0) target = $region37
    $region36: #{tpu_custom_call.1} parent=1 // pred_region
      %58 = dma.done [#allocation6], 8192
    $region37: #{tpu_custom_call.1} parent=1 // pred_fallthru
      _
    // Predicated region
    $region38: #{tpu_custom_call.1} parent=1 // pred_check
      _
    $region39: #{tpu_custom_call.1} parent=1 // pred_check_branch
      %60 = sbr.rel (0) target = $region41
    $region40: #{tpu_custom_call.1} parent=1 // pred_region
      %62 = dma.done [#allocation8], 10240
    $region41: #{tpu_custom_call.1} parent=1 // pred_fallthru
      _
    %v63 = vld [vmem:[%s0] sm:$0xff]
    %v64 = vld [vmem:[%s0 + $0x8] sm:$0xff]
    %v65 = vld [vmem:[%s0 + $0x10] sm:$0xff]
    %v66 = vld [vmem:[%s0 + $0x18] sm:$0xff]
    %v67 = vld [vmem:[%s0 + $0x20] sm:$0xff]
    %v68 = vld [vmem:[%s0 + $0x28] sm:$0xff]
    %v69 = vld [vmem:[%s0 + $0x30] sm:$0xff]
    %v70 = vld [vmem:[%s0 + $0x38] sm:$0xff]
    %v71 = vld [vmem:[%s1] sm:$0xf]
    %v72 = vld [vmem:[%s2] sm:$0x3]
    %v74 = vperm.slane %v72, 0
    %v75 = vperm.slane %v72, 1
    %79 = vst [vmem:[#allocation1] ss:$4 sm:$0xff] %v71
    %v80 = vld.sshfl [vmem:[#allocation1] sm:$0xff pattern:$0x73625140]
    %v81 = vld.sshfl [vmem:[#allocation1 + $0x8] sm:$0xff pattern:$0x73625140]
    %vm82 = vcmask 15360
    %v84 = vsel %vm82, %v63, 0
    %v87 = vsel %vm82, %v64, 0
    %v90 = vsel %vm82, %v65, 0
    %v93 = vsel %vm82, %v66, 0
    %v96 = vsel %vm82, %v67, 0
    %v99 = vsel %vm82, %v68, 0
    %v102 = vsel %vm82, %v69, 0
    %v105 = vsel %vm82, %v70, 0
    %vm107 = vcmask 1041408
    %v108 = vsel %vm107, %v80, 0
    %v110 = vsel %vm107, %v81, 0
    %112 = vmatpush.msra.mxu0 0.0
    %113 = vmatpush.msra.mxu0 0.0
    %114 = vmatpush.msra.mxu0 0.0
    %115 = vmatpush.msra.mxu0 0.0
    %116 = vmatpush.msra.mxu0 0.0
    %117 = vmatpush.msra.mxu0 0.0
    %118 = vmatpush.msra.mxu0 0.0
    %119 = vmatpush.msra.mxu0 0.0
    %120 = vmatpush.msra.mxu0 0.0
    %121 = vmatpush.msra.mxu0 0.0
    %122 = vmatpush.msra.mxu0 0.0
    %123 = vmatpush.msra.mxu0 0.0
    %124 = vmatpush.msra.mxu0 0.0
    %125 = vmatpush.msra.mxu0 0.0
    %126 = vmatpush.msra.mxu0 0.0
    %127 = vmatpush.msra.mxu0 %v108
    %128 = vmatmul.f32.gmra.mxu0 %v84
    %v129 = vpop.f32.mrf.mxu0
    %v130 = vadd.f32 %v74, %v129
    %131 = vmatmul.f32.gmra.mxu0 %v87
    %v132 = vpop.f32.mrf.mxu0
    %v133 = vadd.f32 %v74, %v132
    %134 = vmatmul.f32.gmra.mxu0 %v90
    %v135 = vpop.f32.mrf.mxu0
    %v136 = vadd.f32 %v74, %v135
    %137 = vmatmul.f32.gmra.mxu0 %v93
    %v138 = vpop.f32.mrf.mxu0
    %v139 = vadd.f32 %v74, %v138
    %140 = vmatmul.f32.gmra.mxu0 %v96
    %v141 = vpop.f32.mrf.mxu0
    %v142 = vadd.f32 %v74, %v141
    %143 = vmatmul.f32.gmra.mxu0 %v99
    %v144 = vpop.f32.mrf.mxu0
    %v145 = vadd.f32 %v74, %v144
    %146 = vmatmul.f32.gmra.mxu0 %v102
    %v147 = vpop.f32.mrf.mxu0
    %v148 = vadd.f32 %v74, %v147
    %149 = vmatmul.f32.gmra.mxu0 %v105
    %v150 = vpop.f32.mrf.mxu0
    %v151 = vadd.f32 %v74, %v150
    %152 = vdwg.mxu0
    %153 = vmatpush.msra.mxu0 0.0
    %154 = vmatpush.msra.mxu0 0.0
    %155 = vmatpush.msra.mxu0 0.0
    %156 = vmatpush.msra.mxu0 0.0
    %157 = vmatpush.msra.mxu0 0.0
    %158 = vmatpush.msra.mxu0 0.0
    %159 = vmatpush.msra.mxu0 0.0
    %160 = vmatpush.msra.mxu0 0.0
    %161 = vmatpush.msra.mxu0 0.0
    %162 = vmatpush.msra.mxu0 0.0
    %163 = vmatpush.msra.mxu0 0.0
    %164 = vmatpush.msra.mxu0 0.0
    %165 = vmatpush.msra.mxu0 0.0
    %166 = vmatpush.msra.mxu0 0.0
    %167 = vmatpush.msra.mxu0 0.0
    %168 = vmatpush.msra.mxu0 %v110
    %169 = vmatmul.f32.gmra.mxu0 %v84
    %v170 = vpop.f32.mrf.mxu0
    %v171 = vadd.f32 %v75, %v170
    %172 = vmatmul.f32.gmra.mxu0 %v87
    %v173 = vpop.f32.mrf.mxu0
    %v174 = vadd.f32 %v75, %v173
    %175 = vmatmul.f32.gmra.mxu0 %v90
    %v176 = vpop.f32.mrf.mxu0
    %v177 = vadd.f32 %v75, %v176
    %178 = vmatmul.f32.gmra.mxu0 %v93
    %v179 = vpop.f32.mrf.mxu0
    %v180 = vadd.f32 %v75, %v179
    %181 = vmatmul.f32.gmra.mxu0 %v96
    %v182 = vpop.f32.mrf.mxu0
    %v183 = vadd.f32 %v75, %v182
    %184 = vmatmul.f32.gmra.mxu0 %v99
    %v185 = vpop.f32.mrf.mxu0
    %v186 = vadd.f32 %v75, %v185
    %187 = vmatmul.f32.gmra.mxu0 %v102
    %v188 = vpop.f32.mrf.mxu0
    %v189 = vadd.f32 %v75, %v188
    %190 = vmatmul.f32.gmra.mxu0 %v105
    %v191 = vpop.f32.mrf.mxu0
    %v192 = vadd.f32 %v75, %v191
    %193 = vdwg.mxu0
    %194 = vst [vmem:[#allocation3] sm:$0xff] %v130
    %195 = vst [vmem:[#allocation3 + $0x8] sm:$0xff] %v171
    %196 = vst [vmem:[#allocation3 + $0x10] sm:$0xff] %v133
    %197 = vst [vmem:[#allocation3 + $0x18] sm:$0xff] %v174
    %198 = vst [vmem:[#allocation3 + $0x20] sm:$0xff] %v136
    %199 = vst [vmem:[#allocation3 + $0x28] sm:$0xff] %v177
    %200 = vst [vmem:[#allocation3 + $0x30] sm:$0xff] %v139
    %201 = vst [vmem:[#allocation3 + $0x38] sm:$0xff] %v180
    %202 = vst [vmem:[#allocation3 + $0x40] sm:$0xff] %v142
    %203 = vst [vmem:[#allocation3 + $0x48] sm:$0xff] %v183
    %204 = vst [vmem:[#allocation3 + $0x50] sm:$0xff] %v145
    %205 = vst [vmem:[#allocation3 + $0x58] sm:$0xff] %v186
    %206 = vst [vmem:[#allocation3 + $0x60] sm:$0xff] %v148
    %207 = vst [vmem:[#allocation3 + $0x68] sm:$0xff] %v189
    %208 = vst [vmem:[#allocation3 + $0x70] sm:$0xff] %v151
    %209 = vst [vmem:[#allocation3 + $0x78] sm:$0xff] %v192
    %v210 = vld [vmem:[#allocation7] sm:$0xff]
    %v211 = vld [vmem:[#allocation7 + $0x8] sm:$0xff]
    %v212 = vld [vmem:[#allocation7 + $0x10] sm:$0xff]
    %v213 = vld [vmem:[#allocation7 + $0x18] sm:$0xff]
    %v214 = vld [vmem:[#allocation7 + $0x20] sm:$0xff]
    %v215 = vld [vmem:[#allocation7 + $0x28] sm:$0xff]
    %v216 = vld [vmem:[#allocation7 + $0x30] sm:$0xff]
    %v217 = vld [vmem:[#allocation7 + $0x38] sm:$0xff]
    %v218 = vld [vmem:[#allocation7 + $0x40] sm:$0xff]
    %v219 = vld [vmem:[#allocation7 + $0x48] sm:$0xff]
    %v220 = vld [vmem:[#allocation7 + $0x50] sm:$0xff]
    %v221 = vld [vmem:[#allocation7 + $0x58] sm:$0xff]
    %v222 = vld [vmem:[#allocation7 + $0x60] sm:$0xff]
    %v223 = vld [vmem:[#allocation7 + $0x68] sm:$0xff]
    %v224 = vld [vmem:[#allocation7 + $0x70] sm:$0xff]
    %v225 = vld [vmem:[#allocation7 + $0x78] sm:$0xff]
    %v226 = vld [vmem:[#allocation3] sm:$0xff]
    %v227 = vld [vmem:[#allocation3 + $0x8] sm:$0xff]
    %vm228 = vcmask 523264
    %v230 = vsel %vm228, 0.0, 0
    %232 = vmatpush.msra.mxu0 0.0
    %233 = vmatpush.msra.mxu0 0.0
    %234 = vmatpush.msra.mxu0 0.0
    %235 = vmatpush.msra.mxu0 0.0
    %236 = vmatpush.msra.mxu0 0.0
    %237 = vmatpush.msra.mxu0 0.0
    %238 = vmatpush.msra.mxu0 0.0
    %239 = vmatpush.msra.mxu0 0.0
    %240 = vmatpush.msra.mxu0 %v224
    %241 = vmatpush.msra.mxu0 %v222
    %242 = vmatpush.msra.mxu0 %v220
    %243 = vmatpush.msra.mxu0 %v218
    %244 = vmatpush.msra.mxu0 %v216
    %245 = vmatpush.msra.mxu0 %v214
    %246 = vmatpush.msra.mxu0 %v212
    %247 = vmatpush.msra.mxu0 %v210
    %248 = vmatmul.f32.gmra.mxu0 %v230
    %v249 = vpop.f32.mrf.mxu0
    %v250 = vadd.f32 %v226, %v249
    %251 = vdwg.mxu0
    %252 = vmatpush.msra.mxu0 0.0
    %253 = vmatpush.msra.mxu0 0.0
    %254 = vmatpush.msra.mxu0 0.0
    %255 = vmatpush.msra.mxu0 0.0
    %256 = vmatpush.msra.mxu0 0.0
    %257 = vmatpush.msra.mxu0 0.0
    %258 = vmatpush.msra.mxu0 0.0
    %259 = vmatpush.msra.mxu0 0.0
    %260 = vmatpush.msra.mxu0 %v225
    %261 = vmatpush.msra.mxu0 %v223
    %262 = vmatpush.msra.mxu0 %v221
    %263 = vmatpush.msra.mxu0 %v219
    %264 = vmatpush.msra.mxu0 %v217
    %265 = vmatpush.msra.mxu0 %v215
    %266 = vmatpush.msra.mxu0 %v213
    %267 = vmatpush.msra.mxu0 %v211
    %268 = vmatmul.f32.gmra.mxu0 %v230
    %v269 = vpop.f32.mrf.mxu0
    %v270 = vadd.f32 %v227, %v269
    %271 = vdwg.mxu0
    %v272 = vxor.u32 %v250, 2147483648
    %v273 = vxor.u32 %v270, 2147483648
    %v274 = vmul.f32 %v272, 1.442695
    %v275 = vpow.pop %v274
    %v276 = vmul.f32 %v273, 1.442695
    %v277 = vpow.pop %v276
    %v278 = vadd.f32 %v275, 1.0
    %v279 = vadd.f32 %v277, 1.0
    %v280 = vrcp.pop %v278
    %v281 = vmul.f32 %v278, %v280
    %v282 = vsub.f32 1.0, %v281
    %v283 = vmul.f32 %v280, %v282
    %v284 = vadd.f32 %v280, %v283
    %vm285 = vweird.f32 %v278
    %vm286 = vweird.f32 %v280
    %vm287 = vmor %vm285, %vm286
    %v288 = vsel %vm287, %v280, %v284
    %v289 = vand.u32 2147483647, %v278
    %vm290 = vcmp.eq.f32.partialorder %v289, 8.507059e+37
    %v291 = vand.u32 %v278, 2147483648
    %v292 = vor.u32 1.1754944e-38, %v291
    %v293 = vsel %vm290, %v292, %v288
    %v294 = vmul.f32 1.0, %v293
    %v295 = vrcp.pop %v279
    %v296 = vmul.f32 %v279, %v295
    %v297 = vsub.f32 1.0, %v296
    %v298 = vmul.f32 %v295, %v297
    %v299 = vadd.f32 %v295, %v298
    %vm300 = vweird.f32 %v279
    %vm301 = vweird.f32 %v295
    %vm302 = vmor %vm300, %vm301
    %v303 = vsel %vm302, %v295, %v299
    %v304 = vand.u32 2147483647, %v279
    %vm305 = vcmp.eq.f32.partialorder %v304, 8.507059e+37
    %v306 = vand.u32 %v279, 2147483648
    %v307 = vor.u32 1.1754944e-38, %v306
    %v308 = vsel %vm305, %v307, %v303
    %v309 = vmul.f32 1.0, %v308
    %v310 = vtanh.pop %v270
    %v311 = vmul.f32 %v294, 0.0
    %v312 = vmul.f32 %v294, %v310
    %314 = vrot.lane.b32.xlu0 %v312, 64
    %v315 = vpop.permute.xlu0 %314
    %v317 = vadd.f32 %v311, %v315
    %v318 = vtanh.pop %v317
    %v319 = vmul.f32 %v309, %v318
    %321 = vrot.lane.b32.xlu0 %v319, 64
    %v322 = vpop.permute.xlu0 %321
    %324 = vst.msk [vmem:[#allocation2] sm:$0xff] %vm228, %v322
    %s325 = scalar_lea.vmem [#allocation3], 16
    %v326 = vld [vmem:[%s325] sm:$0xff]
    %v327 = vld [vmem:[%s325 + $0x8] sm:$0xff]
    %v328 = vsel %vm228, %v322, 0
    %330 = vmatpush.msra.mxu0 0.0
    %331 = vmatpush.msra.mxu0 0.0
    %332 = vmatpush.msra.mxu0 0.0
    %333 = vmatpush.msra.mxu0 0.0
    %334 = vmatpush.msra.mxu0 0.0
    %335 = vmatpush.msra.mxu0 0.0
    %336 = vmatpush.msra.mxu0 0.0
    %337 = vmatpush.msra.mxu0 0.0
    %338 = vmatpush.msra.mxu0 %v224
    %339 = vmatpush.msra.mxu0 %v222
    %340 = vmatpush.msra.mxu0 %v220
    %341 = vmatpush.msra.mxu0 %v218
    %342 = vmatpush.msra.mxu0 %v216
    %343 = vmatpush.msra.mxu0 %v214
    %344 = vmatpush.msra.mxu0 %v212
    %345 = vmatpush.msra.mxu0 %v210
    %346 = vmatmul.f32.gmra.mxu0 %v328
    %v347 = vpop.f32.mrf.mxu0
    %v348 = vadd.f32 %v326, %v347
    %349 = vdwg.mxu0
    %350 = vmatpush.msra.mxu0 0.0
    %351 = vmatpush.msra.mxu0 0.0
    %352 = vmatpush.msra.mxu0 0.0
    %353 = vmatpush.msra.mxu0 0.0
    %354 = vmatpush.msra.mxu0 0.0
    %355 = vmatpush.msra.mxu0 0.0
    %356 = vmatpush.msra.mxu0 0.0
    %357 = vmatpush.msra.mxu0 0.0
    %358 = vmatpush.msra.mxu0 %v225
    %359 = vmatpush.msra.mxu0 %v223
    %360 = vmatpush.msra.mxu0 %v221
    %361 = vmatpush.msra.mxu0 %v219
    %362 = vmatpush.msra.mxu0 %v217
    %363 = vmatpush.msra.mxu0 %v215
    %364 = vmatpush.msra.mxu0 %v213
    %365 = vmatpush.msra.mxu0 %v211
    %366 = vmatmul.f32.gmra.mxu0 %v328
    %v367 = vpop.f32.mrf.mxu0
    %v368 = vadd.f32 %v327, %v367
    %369 = vdwg.mxu0
    %v370 = vxor.u32 %v348, 2147483648
    %v371 = vxor.u32 %v368, 2147483648
    %v372 = vmul.f32 %v370, 1.442695
    %v373 = vpow.pop %v372
    %v374 = vmul.f32 %v371, 1.442695
    %v375 = vpow.pop %v374
    %v376 = vadd.f32 %v373, 1.0
    %v377 = vadd.f32 %v375, 1.0
    %v378 = vrcp.pop %v376
    %v379 = vmul.f32 %v376, %v378
    %v380 = vsub.f32 1.0, %v379
    %v381 = vmul.f32 %v378, %v380
    %v382 = vadd.f32 %v378, %v381
    %vm383 = vweird.f32 %v376
    %vm384 = vweird.f32 %v378
    %vm385 = vmor %vm383, %vm384
    %v386 = vsel %vm385, %v378, %v382
    %v387 = vand.u32 2147483647, %v376
    %vm388 = vcmp.eq.f32.partialorder %v387, 8.507059e+37
    %v389 = vand.u32 %v376, 2147483648
    %v390 = vor.u32 1.1754944e-38, %v389
    %v391 = vsel %vm388, %v390, %v386
    %v392 = vmul.f32 1.0, %v391
    %v393 = vrcp.pop %v377
    %v394 = vmul.f32 %v377, %v393
    %v395 = vsub.f32 1.0, %v394
    %v396 = vmul.f32 %v393, %v395
    %v397 = vadd.f32 %v393, %v396
    %vm398 = vweird.f32 %v377
    %vm399 = vweird.f32 %v393
    %vm400 = vmor %vm398, %vm399
    %v401 = vsel %vm400, %v393, %v397
    %v402 = vand.u32 2147483647, %v377
    %vm403 = vcmp.eq.f32.partialorder %v402, 8.507059e+37
    %v404 = vand.u32 %v377, 2147483648
    %v405 = vor.u32 1.1754944e-38, %v404
    %v406 = vsel %vm403, %v405, %v401
    %v407 = vmul.f32 1.0, %v406
    %v408 = vtanh.pop %v368
    %v409 = vmul.f32 %v392, %v317
    %v410 = vmul.f32 %v392, %v408
    %412 = vrot.lane.b32.xlu0 %v410, 64
    %v413 = vpop.permute.xlu0 %412
    %v415 = vadd.f32 %v409, %v413
    %v416 = vtanh.pop %v415
    %v417 = vmul.f32 %v407, %v416
    %419 = vrot.lane.b32.xlu0 %v417, 64
    %v420 = vpop.permute.xlu0 %419
    %s422 = scalar_lea.vmem [#allocation2], 8
    %423 = vst.msk [vmem:[%s422] sm:$0xff] %vm228, %v420
    %s424 = scalar_lea.vmem [#allocation3], 32
    %v425 = vld [vmem:[%s424] sm:$0xff]
    %v426 = vld [vmem:[%s424 + $0x8] sm:$0xff]
    %v427 = vsel %vm228, %v420, 0
    %429 = vmatpush.msra.mxu0 0.0
    %430 = vmatpush.msra.mxu0 0.0
    %431 = vmatpush.msra.mxu0 0.0
    %432 = vmatpush.msra.mxu0 0.0
    %433 = vmatpush.msra.mxu0 0.0
    %434 = vmatpush.msra.mxu0 0.0
    %435 = vmatpush.msra.mxu0 0.0
    %436 = vmatpush.msra.mxu0 0.0
    %437 = vmatpush.msra.mxu0 %v224
    %438 = vmatpush.msra.mxu0 %v222
    %439 = vmatpush.msra.mxu0 %v220
    %440 = vmatpush.msra.mxu0 %v218
    %441 = vmatpush.msra.mxu0 %v216
    %442 = vmatpush.msra.mxu0 %v214
    %443 = vmatpush.msra.mxu0 %v212
    %444 = vmatpush.msra.mxu0 %v210
    %445 = vmatmul.f32.gmra.mxu0 %v427
    %v446 = vpop.f32.mrf.mxu0
    %v447 = vadd.f32 %v425, %v446
    %448 = vdwg.mxu0
    %449 = vmatpush.msra.mxu0 0.0
    %450 = vmatpush.msra.mxu0 0.0
    %451 = vmatpush.msra.mxu0 0.0
    %452 = vmatpush.msra.mxu0 0.0
    %453 = vmatpush.msra.mxu0 0.0
    %454 = vmatpush.msra.mxu0 0.0
    %455 = vmatpush.msra.mxu0 0.0
    %456 = vmatpush.msra.mxu0 0.0
    %457 = vmatpush.msra.mxu0 %v225
    %458 = vmatpush.msra.mxu0 %v223
    %459 = vmatpush.msra.mxu0 %v221
    %460 = vmatpush.msra.mxu0 %v219
    %461 = vmatpush.msra.mxu0 %v217
    %462 = vmatpush.msra.mxu0 %v215
    %463 = vmatpush.msra.mxu0 %v213
    %464 = vmatpush.msra.mxu0 %v211
    %465 = vmatmul.f32.gmra.mxu0 %v427
    %v466 = vpop.f32.mrf.mxu0
    %v467 = vadd.f32 %v426, %v466
    %468 = vdwg.mxu0
    %v469 = vxor.u32 %v447, 2147483648
    %v470 = vxor.u32 %v467, 2147483648
    %v471 = vmul.f32 %v469, 1.442695
    %v472 = vpow.pop %v471
    %v473 = vmul.f32 %v470, 1.442695
    %v474 = vpow.pop %v473
    %v475 = vadd.f32 %v472, 1.0
    %v476 = vadd.f32 %v474, 1.0
    %v477 = vrcp.pop %v475
    %v478 = vmul.f32 %v475, %v477
    %v479 = vsub.f32 1.0, %v478
    %v480 = vmul.f32 %v477, %v479
    %v481 = vadd.f32 %v477, %v480
    %vm482 = vweird.f32 %v475
    %vm483 = vweird.f32 %v477
    %vm484 = vmor %vm482, %vm483
    %v485 = vsel %vm484, %v477, %v481
    %v486 = vand.u32 2147483647, %v475
    %vm487 = vcmp.eq.f32.partialorder %v486, 8.507059e+37
    %v488 = vand.u32 %v475, 2147483648
    %v489 = vor.u32 1.1754944e-38, %v488
    %v490 = vsel %vm487, %v489, %v485
    %v491 = vmul.f32 1.0, %v490
    %v492 = vrcp.pop %v476
    %v493 = vmul.f32 %v476, %v492
    %v494 = vsub.f32 1.0, %v493
    %v495 = vmul.f32 %v492, %v494
    %v496 = vadd.f32 %v492, %v495
    %vm497 = vweird.f32 %v476
    %vm498 = vweird.f32 %v492
    %vm499 = vmor %vm497, %vm498
    %v500 = vsel %vm499, %v492, %v496
    %v501 = vand.u32 2147483647, %v476
    %vm502 = vcmp.eq.f32.partialorder %v501, 8.507059e+37
    %v503 = vand.u32 %v476, 2147483648
    %v504 = vor.u32 1.1754944e-38, %v503
    %v505 = vsel %vm502, %v504, %v500
    %v506 = vmul.f32 1.0, %v505
    %v507 = vtanh.pop %v467
    %v508 = vmul.f32 %v491, %v415
    %v509 = vmul.f32 %v491, %v507
    %511 = vrot.lane.b32.xlu0 %v509, 64
    %v512 = vpop.permute.xlu0 %511
    %v514 = vadd.f32 %v508, %v512
    %v515 = vtanh.pop %v514
    %v516 = vmul.f32 %v506, %v515
    %518 = vrot.lane.b32.xlu0 %v516, 64
    %v519 = vpop.permute.xlu0 %518
    %s521 = scalar_lea.vmem [#allocation2], 16
    %522 = vst.msk [vmem:[%s521] sm:$0xff] %vm228, %v519
    %s523 = scalar_lea.vmem [#allocation3], 48
    %v524 = vld [vmem:[%s523] sm:$0xff]
    %v525 = vld [vmem:[%s523 + $0x8] sm:$0xff]
    %v526 = vsel %vm228, %v519, 0
    %528 = vmatpush.msra.mxu0 0.0
    %529 = vmatpush.msra.mxu0 0.0
    %530 = vmatpush.msra.mxu0 0.0
    %531 = vmatpush.msra.mxu0 0.0
    %532 = vmatpush.msra.mxu0 0.0
    %533 = vmatpush.msra.mxu0 0.0
    %534 = vmatpush.msra.mxu0 0.0
    %535 = vmatpush.msra.mxu0 0.0
    %536 = vmatpush.msra.mxu0 %v224
    %537 = vmatpush.msra.mxu0 %v222
    %538 = vmatpush.msra.mxu0 %v220
    %539 = vmatpush.msra.mxu0 %v218
    %540 = vmatpush.msra.mxu0 %v216
    %541 = vmatpush.msra.mxu0 %v214
    %542 = vmatpush.msra.mxu0 %v212
    %543 = vmatpush.msra.mxu0 %v210
    %544 = vmatmul.f32.gmra.mxu0 %v526
    %v545 = vpop.f32.mrf.mxu0
    %v546 = vadd.f32 %v524, %v545
    %547 = vdwg.mxu0
    %548 = vmatpush.msra.mxu0 0.0
    %549 = vmatpush.msra.mxu0 0.0
    %550 = vmatpush.msra.mxu0 0.0
    %551 = vmatpush.msra.mxu0 0.0
    %552 = vmatpush.msra.mxu0 0.0
    %553 = vmatpush.msra.mxu0 0.0
    %554 = vmatpush.msra.mxu0 0.0
    %555 = vmatpush.msra.mxu0 0.0
    %556 = vmatpush.msra.mxu0 %v225
    %557 = vmatpush.msra.mxu0 %v223
    %558 = vmatpush.msra.mxu0 %v221
    %559 = vmatpush.msra.mxu0 %v219
    %560 = vmatpush.msra.mxu0 %v217
    %561 = vmatpush.msra.mxu0 %v215
    %562 = vmatpush.msra.mxu0 %v213
    %563 = vmatpush.msra.mxu0 %v211
    %564 = vmatmul.f32.gmra.mxu0 %v526
    %v565 = vpop.f32.mrf.mxu0
    %v566 = vadd.f32 %v525, %v565
    %567 = vdwg.mxu0
    %v568 = vxor.u32 %v546, 2147483648
    %v569 = vxor.u32 %v566, 2147483648
    %v570 = vmul.f32 %v568, 1.442695
    %v571 = vpow.pop %v570
    %v572 = vmul.f32 %v569, 1.442695
    %v573 = vpow.pop %v572
    %v574 = vadd.f32 %v571, 1.0
    %v575 = vadd.f32 %v573, 1.0
    %v576 = vrcp.pop %v574
    %v577 = vmul.f32 %v574, %v576
    %v578 = vsub.f32 1.0, %v577
    %v579 = vmul.f32 %v576, %v578
    %v580 = vadd.f32 %v576, %v579
    %vm581 = vweird.f32 %v574
    %vm582 = vweird.f32 %v576
    %vm583 = vmor %vm581, %vm582
    %v584 = vsel %vm583, %v576, %v580
    %v585 = vand.u32 2147483647, %v574
    %vm586 = vcmp.eq.f32.partialorder %v585, 8.507059e+37
    %v587 = vand.u32 %v574, 2147483648
    %v588 = vor.u32 1.1754944e-38, %v587
    %v589 = vsel %vm586, %v588, %v584
    %v590 = vmul.f32 1.0, %v589
    %v591 = vrcp.pop %v575
    %v592 = vmul.f32 %v575, %v591
    %v593 = vsub.f32 1.0, %v592
    %v594 = vmul.f32 %v591, %v593
    %v595 = vadd.f32 %v591, %v594
    %vm596 = vweird.f32 %v575
    %vm597 = vweird.f32 %v591
    %vm598 = vmor %vm596, %vm597
    %v599 = vsel %vm598, %v591, %v595
    %v600 = vand.u32 2147483647, %v575
    %vm601 = vcmp.eq.f32.partialorder %v600, 8.507059e+37
    %v602 = vand.u32 %v575, 2147483648
    %v603 = vor.u32 1.1754944e-38, %v602
    %v604 = vsel %vm601, %v603, %v599
    %v605 = vmul.f32 1.0, %v604
    %v606 = vtanh.pop %v566
    %v607 = vmul.f32 %v590, %v514
    %v608 = vmul.f32 %v590, %v606
    %610 = vrot.lane.b32.xlu0 %v608, 64
    %v611 = vpop.permute.xlu0 %610
    %v613 = vadd.f32 %v607, %v611
    %v614 = vtanh.pop %v613
    %v615 = vmul.f32 %v605, %v614
    %617 = vrot.lane.b32.xlu0 %v615, 64
    %v618 = vpop.permute.xlu0 %617
    %s620 = scalar_lea.vmem [#allocation2], 24
    %621 = vst.msk [vmem:[%s620] sm:$0xff] %vm228, %v618
    %s622 = scalar_lea.vmem [#allocation3], 64
    %v623 = vld [vmem:[%s622] sm:$0xff]
    %v624 = vld [vmem:[%s622 + $0x8] sm:$0xff]
    %v625 = vsel %vm228, %v618, 0
    %627 = vmatpush.msra.mxu0 0.0
    %628 = vmatpush.msra.mxu0 0.0
    %629 = vmatpush.msra.mxu0 0.0
    %630 = vmatpush.msra.mxu0 0.0
    %631 = vmatpush.msra.mxu0 0.0
    %632 = vmatpush.msra.mxu0 0.0
    %633 = vmatpush.msra.mxu0 0.0
    %634 = vmatpush.msra.mxu0 0.0
    %635 = vmatpush.msra.mxu0 %v224
    %636 = vmatpush.msra.mxu0 %v222
    %637 = vmatpush.msra.mxu0 %v220
    %638 = vmatpush.msra.mxu0 %v218
    %639 = vmatpush.msra.mxu0 %v216
    %640 = vmatpush.msra.mxu0 %v214
    %641 = vmatpush.msra.mxu0 %v212
    %642 = vmatpush.msra.mxu0 %v210
    %643 = vmatmul.f32.gmra.mxu0 %v625
    %v644 = vpop.f32.mrf.mxu0
    %v645 = vadd.f32 %v623, %v644
    %646 = vdwg.mxu0
    %647 = vmatpush.msra.mxu0 0.0
    %648 = vmatpush.msra.mxu0 0.0
    %649 = vmatpush.msra.mxu0 0.0
    %650 = vmatpush.msra.mxu0 0.0
    %651 = vmatpush.msra.mxu0 0.0
    %652 = vmatpush.msra.mxu0 0.0
    %653 = vmatpush.msra.mxu0 0.0
    %654 = vmatpush.msra.mxu0 0.0
    %655 = vmatpush.msra.mxu0 %v225
    %656 = vmatpush.msra.mxu0 %v223
    %657 = vmatpush.msra.mxu0 %v221
    %658 = vmatpush.msra.mxu0 %v219
    %659 = vmatpush.msra.mxu0 %v217
    %660 = vmatpush.msra.mxu0 %v215
    %661 = vmatpush.msra.mxu0 %v213
    %662 = vmatpush.msra.mxu0 %v211
    %663 = vmatmul.f32.gmra.mxu0 %v625
    %v664 = vpop.f32.mrf.mxu0
    %v665 = vadd.f32 %v624, %v664
    %666 = vdwg.mxu0
    %v667 = vxor.u32 %v645, 2147483648
    %v668 = vxor.u32 %v665, 2147483648
    %v669 = vmul.f32 %v667, 1.442695
    %v670 = vpow.pop %v669
    %v671 = vmul.f32 %v668, 1.442695
    %v672 = vpow.pop %v671
    %v673 = vadd.f32 %v670, 1.0
    %v674 = vadd.f32 %v672, 1.0
    %v675 = vrcp.pop %v673
    %v676 = vmul.f32 %v673, %v675
    %v677 = vsub.f32 1.0, %v676
    %v678 = vmul.f32 %v675, %v677
    %v679 = vadd.f32 %v675, %v678
    %vm680 = vweird.f32 %v673
    %vm681 = vweird.f32 %v675
    %vm682 = vmor %vm680, %vm681
    %v683 = vsel %vm682, %v675, %v679
    %v684 = vand.u32 2147483647, %v673
    %vm685 = vcmp.eq.f32.partialorder %v684, 8.507059e+37
    %v686 = vand.u32 %v673, 2147483648
    %v687 = vor.u32 1.1754944e-38, %v686
    %v688 = vsel %vm685, %v687, %v683
    %v689 = vmul.f32 1.0, %v688
    %v690 = vrcp.pop %v674
    %v691 = vmul.f32 %v674, %v690
    %v692 = vsub.f32 1.0, %v691
    %v693 = vmul.f32 %v690, %v692
    %v694 = vadd.f32 %v690, %v693
    %vm695 = vweird.f32 %v674
    %vm696 = vweird.f32 %v690
    %vm697 = vmor %vm695, %vm696
    %v698 = vsel %vm697, %v690, %v694
    %v699 = vand.u32 2147483647, %v674
    %vm700 = vcmp.eq.f32.partialorder %v699, 8.507059e+37
    %v701 = vand.u32 %v674, 2147483648
    %v702 = vor.u32 1.1754944e-38, %v701
    %v703 = vsel %vm700, %v702, %v698
    %v704 = vmul.f32 1.0, %v703
    %v705 = vtanh.pop %v665
    %v706 = vmul.f32 %v689, %v613
    %v707 = vmul.f32 %v689, %v705
    %709 = vrot.lane.b32.xlu0 %v707, 64
    %v710 = vpop.permute.xlu0 %709
    %v712 = vadd.f32 %v706, %v710
    %v713 = vtanh.pop %v712
    %v714 = vmul.f32 %v704, %v713
    %716 = vrot.lane.b32.xlu0 %v714, 64
    %v717 = vpop.permute.xlu0 %716
    %s719 = scalar_lea.vmem [#allocation2], 32
    %720 = vst.msk [vmem:[%s719] sm:$0xff] %vm228, %v717
    %s721 = scalar_lea.vmem [#allocation3], 80
    %v722 = vld [vmem:[%s721] sm:$0xff]
    %v723 = vld [vmem:[%s721 + $0x8] sm:$0xff]
    %v724 = vsel %vm228, %v717, 0
    %726 = vmatpush.msra.mxu0 0.0
    %727 = vmatpush.msra.mxu0 0.0
    %728 = vmatpush.msra.mxu0 0.0
    %729 = vmatpush.msra.mxu0 0.0
    %730 = vmatpush.msra.mxu0 0.0
    %731 = vmatpush.msra.mxu0 0.0
    %732 = vmatpush.msra.mxu0 0.0
    %733 = vmatpush.msra.mxu0 0.0
    %734 = vmatpush.msra.mxu0 %v224
    %735 = vmatpush.msra.mxu0 %v222
    %736 = vmatpush.msra.mxu0 %v220
    %737 = vmatpush.msra.mxu0 %v218
    %738 = vmatpush.msra.mxu0 %v216
    %739 = vmatpush.msra.mxu0 %v214
    %740 = vmatpush.msra.mxu0 %v212
    %741 = vmatpush.msra.mxu0 %v210
    %742 = vmatmul.f32.gmra.mxu0 %v724
    %v743 = vpop.f32.mrf.mxu0
    %v744 = vadd.f32 %v722, %v743
    %745 = vdwg.mxu0
    %746 = vmatpush.msra.mxu0 0.0
    %747 = vmatpush.msra.mxu0 0.0
    %748 = vmatpush.msra.mxu0 0.0
    %749 = vmatpush.msra.mxu0 0.0
    %750 = vmatpush.msra.mxu0 0.0
    %751 = vmatpush.msra.mxu0 0.0
    %752 = vmatpush.msra.mxu0 0.0
    %753 = vmatpush.msra.mxu0 0.0
    %754 = vmatpush.msra.mxu0 %v225
    %755 = vmatpush.msra.mxu0 %v223
    %756 = vmatpush.msra.mxu0 %v221
    %757 = vmatpush.msra.mxu0 %v219
    %758 = vmatpush.msra.mxu0 %v217
    %759 = vmatpush.msra.mxu0 %v215
    %760 = vmatpush.msra.mxu0 %v213
    %761 = vmatpush.msra.mxu0 %v211
    %762 = vmatmul.f32.gmra.mxu0 %v724
    %v763 = vpop.f32.mrf.mxu0
    %v764 = vadd.f32 %v723, %v763
    %765 = vdwg.mxu0
    %v766 = vxor.u32 %v744, 2147483648
    %v767 = vxor.u32 %v764, 2147483648
    %v768 = vmul.f32 %v766, 1.442695
    %v769 = vpow.pop %v768
    %v770 = vmul.f32 %v767, 1.442695
    %v771 = vpow.pop %v770
    %v772 = vadd.f32 %v769, 1.0
    %v773 = vadd.f32 %v771, 1.0
    %v774 = vrcp.pop %v772
    %v775 = vmul.f32 %v772, %v774
    %v776 = vsub.f32 1.0, %v775
    %v777 = vmul.f32 %v774, %v776
    %v778 = vadd.f32 %v774, %v777
    %vm779 = vweird.f32 %v772
    %vm780 = vweird.f32 %v774
    %vm781 = vmor %vm779, %vm780
    %v782 = vsel %vm781, %v774, %v778
    %v783 = vand.u32 2147483647, %v772
    %vm784 = vcmp.eq.f32.partialorder %v783, 8.507059e+37
    %v785 = vand.u32 %v772, 2147483648
    %v786 = vor.u32 1.1754944e-38, %v785
    %v787 = vsel %vm784, %v786, %v782
    %v788 = vmul.f32 1.0, %v787
    %v789 = vrcp.pop %v773
    %v790 = vmul.f32 %v773, %v789
    %v791 = vsub.f32 1.0, %v790
    %v792 = vmul.f32 %v789, %v791
    %v793 = vadd.f32 %v789, %v792
    %vm794 = vweird.f32 %v773
    %vm795 = vweird.f32 %v789
    %vm796 = vmor %vm794, %vm795
    %v797 = vsel %vm796, %v789, %v793
    %v798 = vand.u32 2147483647, %v773
    %vm799 = vcmp.eq.f32.partialorder %v798, 8.507059e+37
    %v800 = vand.u32 %v773, 2147483648
    %v801 = vor.u32 1.1754944e-38, %v800
    %v802 = vsel %vm799, %v801, %v797
    %v803 = vmul.f32 1.0, %v802
    %v804 = vtanh.pop %v764
    %v805 = vmul.f32 %v788, %v712
    %v806 = vmul.f32 %v788, %v804
    %808 = vrot.lane.b32.xlu0 %v806, 64
    %v809 = vpop.permute.xlu0 %808
    %v811 = vadd.f32 %v805, %v809
    %v812 = vtanh.pop %v811
    %v813 = vmul.f32 %v803, %v812
    %815 = vrot.lane.b32.xlu0 %v813, 64
    %v816 = vpop.permute.xlu0 %815
    %s818 = scalar_lea.vmem [#allocation2], 40
    %819 = vst.msk [vmem:[%s818] sm:$0xff] %vm228, %v816
    %s820 = scalar_lea.vmem [#allocation3], 96
    %v821 = vld [vmem:[%s820] sm:$0xff]
    %v822 = vld [vmem:[%s820 + $0x8] sm:$0xff]
    %v823 = vsel %vm228, %v816, 0
    %825 = vmatpush.msra.mxu0 0.0
    %826 = vmatpush.msra.mxu0 0.0
    %827 = vmatpush.msra.mxu0 0.0
    %828 = vmatpush.msra.mxu0 0.0
    %829 = vmatpush.msra.mxu0 0.0
    %830 = vmatpush.msra.mxu0 0.0
    %831 = vmatpush.msra.mxu0 0.0
    %832 = vmatpush.msra.mxu0 0.0
    %833 = vmatpush.msra.mxu0 %v224
    %834 = vmatpush.msra.mxu0 %v222
    %835 = vmatpush.msra.mxu0 %v220
    %836 = vmatpush.msra.mxu0 %v218
    %837 = vmatpush.msra.mxu0 %v216
    %838 = vmatpush.msra.mxu0 %v214
    %839 = vmatpush.msra.mxu0 %v212
    %840 = vmatpush.msra.mxu0 %v210
    %841 = vmatmul.f32.gmra.mxu0 %v823
    %v842 = vpop.f32.mrf.mxu0
    %v843 = vadd.f32 %v821, %v842
    %844 = vdwg.mxu0
    %845 = vmatpush.msra.mxu0 0.0
    %846 = vmatpush.msra.mxu0 0.0
    %847 = vmatpush.msra.mxu0 0.0
    %848 = vmatpush.msra.mxu0 0.0
    %849 = vmatpush.msra.mxu0 0.0
    %850 = vmatpush.msra.mxu0 0.0
    %851 = vmatpush.msra.mxu0 0.0
    %852 = vmatpush.msra.mxu0 0.0
    %853 = vmatpush.msra.mxu0 %v225
    %854 = vmatpush.msra.mxu0 %v223
    %855 = vmatpush.msra.mxu0 %v221
    %856 = vmatpush.msra.mxu0 %v219
    %857 = vmatpush.msra.mxu0 %v217
    %858 = vmatpush.msra.mxu0 %v215
    %859 = vmatpush.msra.mxu0 %v213
    %860 = vmatpush.msra.mxu0 %v211
    %861 = vmatmul.f32.gmra.mxu0 %v823
    %v862 = vpop.f32.mrf.mxu0
    %v863 = vadd.f32 %v822, %v862
    %864 = vdwg.mxu0
    %v865 = vxor.u32 %v843, 2147483648
    %v866 = vxor.u32 %v863, 2147483648
    %v867 = vmul.f32 %v865, 1.442695
    %v868 = vpow.pop %v867
    %v869 = vmul.f32 %v866, 1.442695
    %v870 = vpow.pop %v869
    %v871 = vadd.f32 %v868, 1.0
    %v872 = vadd.f32 %v870, 1.0
    %v873 = vrcp.pop %v871
    %v874 = vmul.f32 %v871, %v873
    %v875 = vsub.f32 1.0, %v874
    %v876 = vmul.f32 %v873, %v875
    %v877 = vadd.f32 %v873, %v876
    %vm878 = vweird.f32 %v871
    %vm879 = vweird.f32 %v873
    %vm880 = vmor %vm878, %vm879
    %v881 = vsel %vm880, %v873, %v877
    %v882 = vand.u32 2147483647, %v871
    %vm883 = vcmp.eq.f32.partialorder %v882, 8.507059e+37
    %v884 = vand.u32 %v871, 2147483648
    %v885 = vor.u32 1.1754944e-38, %v884
    %v886 = vsel %vm883, %v885, %v881
    %v887 = vmul.f32 1.0, %v886
    %v888 = vrcp.pop %v872
    %v889 = vmul.f32 %v872, %v888
    %v890 = vsub.f32 1.0, %v889
    %v891 = vmul.f32 %v888, %v890
    %v892 = vadd.f32 %v888, %v891
    %vm893 = vweird.f32 %v872
    %vm894 = vweird.f32 %v888
    %vm895 = vmor %vm893, %vm894
    %v896 = vsel %vm895, %v888, %v892
    %v897 = vand.u32 2147483647, %v872
    %vm898 = vcmp.eq.f32.partialorder %v897, 8.507059e+37
    %v899 = vand.u32 %v872, 2147483648
    %v900 = vor.u32 1.1754944e-38, %v899
    %v901 = vsel %vm898, %v900, %v896
    %v902 = vmul.f32 1.0, %v901
    %v903 = vtanh.pop %v863
    %v904 = vmul.f32 %v887, %v811
    %v905 = vmul.f32 %v887, %v903
    %907 = vrot.lane.b32.xlu0 %v905, 64
    %v908 = vpop.permute.xlu0 %907
    %v910 = vadd.f32 %v904, %v908
    %v911 = vtanh.pop %v910
    %v912 = vmul.f32 %v902, %v911
    %914 = vrot.lane.b32.xlu0 %v912, 64
    %v915 = vpop.permute.xlu0 %914
    %s917 = scalar_lea.vmem [#allocation2], 48
    %918 = vst.msk [vmem:[%s917] sm:$0xff] %vm228, %v915
    %s919 = scalar_lea.vmem [#allocation3], 112
    %v920 = vld [vmem:[%s919] sm:$0xff]
    %v921 = vld [vmem:[%s919 + $0x8] sm:$0xff]
    %v922 = vsel %vm228, %v915, 0
    %924 = vmatpush.msra.mxu0 0.0
    %925 = vmatpush.msra.mxu0 0.0
    %926 = vmatpush.msra.mxu0 0.0
    %927 = vmatpush.msra.mxu0 0.0
    %928 = vmatpush.msra.mxu0 0.0
    %929 = vmatpush.msra.mxu0 0.0
    %930 = vmatpush.msra.mxu0 0.0
    %931 = vmatpush.msra.mxu0 0.0
    %932 = vmatpush.msra.mxu0 %v224
    %933 = vmatpush.msra.mxu0 %v222
    %934 = vmatpush.msra.mxu0 %v220
    %935 = vmatpush.msra.mxu0 %v218
    %936 = vmatpush.msra.mxu0 %v216
    %937 = vmatpush.msra.mxu0 %v214
    %938 = vmatpush.msra.mxu0 %v212
    %939 = vmatpush.msra.mxu0 %v210
    %940 = vmatmul.f32.gmra.mxu0 %v922
    %v941 = vpop.f32.mrf.mxu0
    %v942 = vadd.f32 %v920, %v941
    %943 = vdwg.mxu0
    %944 = vmatpush.msra.mxu0 0.0
    %945 = vmatpush.msra.mxu0 0.0
    %946 = vmatpush.msra.mxu0 0.0
    %947 = vmatpush.msra.mxu0 0.0
    %948 = vmatpush.msra.mxu0 0.0
    %949 = vmatpush.msra.mxu0 0.0
    %950 = vmatpush.msra.mxu0 0.0
    %951 = vmatpush.msra.mxu0 0.0
    %952 = vmatpush.msra.mxu0 %v225
    %953 = vmatpush.msra.mxu0 %v223
    %954 = vmatpush.msra.mxu0 %v221
    %955 = vmatpush.msra.mxu0 %v219
    %956 = vmatpush.msra.mxu0 %v217
    %957 = vmatpush.msra.mxu0 %v215
    %958 = vmatpush.msra.mxu0 %v213
    %959 = vmatpush.msra.mxu0 %v211
    %960 = vmatmul.f32.gmra.mxu0 %v922
    %v961 = vpop.f32.mrf.mxu0
    %v962 = vadd.f32 %v921, %v961
    %963 = vdwg.mxu0
    %v964 = vxor.u32 %v942, 2147483648
    %v965 = vxor.u32 %v962, 2147483648
    %v966 = vmul.f32 %v964, 1.442695
    %v967 = vpow.pop %v966
    %v968 = vmul.f32 %v965, 1.442695
    %v969 = vpow.pop %v968
    %v970 = vadd.f32 %v967, 1.0
    %v971 = vadd.f32 %v969, 1.0
    %v972 = vrcp.pop %v970
    %v973 = vmul.f32 %v970, %v972
    %v974 = vsub.f32 1.0, %v973
    %v975 = vmul.f32 %v972, %v974
    %v976 = vadd.f32 %v972, %v975
    %vm977 = vweird.f32 %v970
    %vm978 = vweird.f32 %v972
    %vm979 = vmor %vm977, %vm978
    %v980 = vsel %vm979, %v972, %v976
    %v981 = vand.u32 2147483647, %v970
    %vm982 = vcmp.eq.f32.partialorder %v981, 8.507059e+37
    %v983 = vand.u32 %v970, 2147483648
    %v984 = vor.u32 1.1754944e-38, %v983
    %v985 = vsel %vm982, %v984, %v980
    %v986 = vmul.f32 1.0, %v985
    %v987 = vrcp.pop %v971
    %v988 = vmul.f32 %v971, %v987
    %v989 = vsub.f32 1.0, %v988
    %v990 = vmul.f32 %v987, %v989
    %v991 = vadd.f32 %v987, %v990
    %vm992 = vweird.f32 %v971
    %vm993 = vweird.f32 %v987
    %vm994 = vmor %vm992, %vm993
    %v995 = vsel %vm994, %v987, %v991
    %v996 = vand.u32 2147483647, %v971
    %vm997 = vcmp.eq.f32.partialorder %v996, 8.507059e+37
    %v998 = vand.u32 %v971, 2147483648
    %v999 = vor.u32 1.1754944e-38, %v998
    %v1000 = vsel %vm997, %v999, %v995
    %v1001 = vmul.f32 1.0, %v1000
    %v1002 = vtanh.pop %v962
    %v1003 = vmul.f32 %v986, %v910
    %v1004 = vmul.f32 %v986, %v1002
    %1006 = vrot.lane.b32.xlu0 %v1004, 64
    %v1007 = vpop.permute.xlu0 %1006
    %v1009 = vadd.f32 %v1003, %v1007
    %v1010 = vtanh.pop %v1009
    %v1011 = vmul.f32 %v1001, %v1010
    %1013 = vrot.lane.b32.xlu0 %v1011, 64
    %v1014 = vpop.permute.xlu0 %1013
    %s1016 = scalar_lea.vmem [#allocation2], 56
    %1017 = vst.msk [vmem:[%s1016] sm:$0xff] %vm228, %v1014
    %v1018 = vld [vmem:[#allocation2] sm:$0xff]
    %v1019 = vld [vmem:[#allocation2 + $0x8] sm:$0xff]
    %v1020 = vld [vmem:[#allocation2 + $0x10] sm:$0xff]
    %v1021 = vld [vmem:[#allocation2 + $0x18] sm:$0xff]
    %v1022 = vld [vmem:[#allocation2 + $0x20] sm:$0xff]
    %v1023 = vld [vmem:[#allocation2 + $0x28] sm:$0xff]
    %v1024 = vld [vmem:[#allocation2 + $0x30] sm:$0xff]
    %v1025 = vld [vmem:[#allocation2 + $0x38] sm:$0xff]
    %v1026 = vld [vmem:[#allocation5] sm:$0xff]
    %v1027 = vld [vmem:[#allocation5 + $0x8] sm:$0xff]
    %v1028 = vld [vmem:[#allocation5 + $0x10] sm:$0xff]
    %v1029 = vld [vmem:[#allocation5 + $0x18] sm:$0xff]
    %v1030 = vld [vmem:[#allocation5 + $0x20] sm:$0xff]
    %v1031 = vld [vmem:[#allocation5 + $0x28] sm:$0xff]
    %v1032 = vld [vmem:[#allocation5 + $0x30] sm:$0xff]
    %v1033 = vld [vmem:[#allocation5 + $0x38] sm:$0xff]
    %v1034 = vld [vmem:[#allocation5 + $0x40] sm:$0xff]
    %v1035 = vld [vmem:[#allocation5 + $0x48] sm:$0xff]
    %v1036 = vld [vmem:[#allocation5 + $0x50] sm:$0xff]
    %v1037 = vld [vmem:[#allocation5 + $0x58] sm:$0xff]
    %v1038 = vld [vmem:[#allocation5 + $0x60] sm:$0xff]
    %v1039 = vld [vmem:[#allocation5 + $0x68] sm:$0xff]
    %v1040 = vld [vmem:[#allocation5 + $0x70] sm:$0xff]
    %v1041 = vld [vmem:[#allocation5 + $0x78] sm:$0xff]
    %v1042 = vld [vmem:[%s5] sm:$0x3]
    %v1044 = vperm.slane %v1042, 0
    %v1045 = vperm.slane %v1042, 1
    %v1049 = vsel %vm228, %v1018, 0
    %v1052 = vsel %vm228, %v1019, 0
    %v1055 = vsel %vm228, %v1020, 0
    %v1058 = vsel %vm228, %v1021, 0
    %v1061 = vsel %vm228, %v1022, 0
    %v1064 = vsel %vm228, %v1023, 0
    %v1067 = vsel %vm228, %v1024, 0
    %v1070 = vsel %vm228, %v1025, 0
    %1072 = vmatpush.msra.mxu0 0.0
    %1073 = vmatpush.msra.mxu0 0.0
    %1074 = vmatpush.msra.mxu0 0.0
    %1075 = vmatpush.msra.mxu0 0.0
    %1076 = vmatpush.msra.mxu0 0.0
    %1077 = vmatpush.msra.mxu0 0.0
    %1078 = vmatpush.msra.mxu0 0.0
    %1079 = vmatpush.msra.mxu0 0.0
    %1080 = vmatpush.msra.mxu0 %v1040
    %1081 = vmatpush.msra.mxu0 %v1038
    %1082 = vmatpush.msra.mxu0 %v1036
    %1083 = vmatpush.msra.mxu0 %v1034
    %1084 = vmatpush.msra.mxu0 %v1032
    %1085 = vmatpush.msra.mxu0 %v1030
    %1086 = vmatpush.msra.mxu0 %v1028
    %1087 = vmatpush.msra.mxu0 %v1026
    %1088 = vmatmul.f32.gmra.mxu0 %v1049
    %v1089 = vpop.f32.mrf.mxu0
    %v1090 = vadd.f32 %v1044, %v1089
    %1091 = vmatmul.f32.gmra.mxu0 %v1052
    %v1092 = vpop.f32.mrf.mxu0
    %v1093 = vadd.f32 %v1044, %v1092
    %1094 = vmatmul.f32.gmra.mxu0 %v1055
    %v1095 = vpop.f32.mrf.mxu0
    %v1096 = vadd.f32 %v1044, %v1095
    %1097 = vmatmul.f32.gmra.mxu0 %v1058
    %v1098 = vpop.f32.mrf.mxu0
    %v1099 = vadd.f32 %v1044, %v1098
    %1100 = vmatmul.f32.gmra.mxu0 %v1061
    %v1101 = vpop.f32.mrf.mxu0
    %v1102 = vadd.f32 %v1044, %v1101
    %1103 = vmatmul.f32.gmra.mxu0 %v1064
    %v1104 = vpop.f32.mrf.mxu0
    %v1105 = vadd.f32 %v1044, %v1104
    %1106 = vmatmul.f32.gmra.mxu0 %v1067
    %v1107 = vpop.f32.mrf.mxu0
    %v1108 = vadd.f32 %v1044, %v1107
    %1109 = vmatmul.f32.gmra.mxu0 %v1070
    %v1110 = vpop.f32.mrf.mxu0
    %v1111 = vadd.f32 %v1044, %v1110
    %1112 = vdwg.mxu0
    %1113 = vmatpush.msra.mxu0 0.0
    %1114 = vmatpush.msra.mxu0 0.0
    %1115 = vmatpush.msra.mxu0 0.0
    %1116 = vmatpush.msra.mxu0 0.0
    %1117 = vmatpush.msra.mxu0 0.0
    %1118 = vmatpush.msra.mxu0 0.0
    %1119 = vmatpush.msra.mxu0 0.0
    %1120 = vmatpush.msra.mxu0 0.0
    %1121 = vmatpush.msra.mxu0 %v1041
    %1122 = vmatpush.msra.mxu0 %v1039
    %1123 = vmatpush.msra.mxu0 %v1037
    %1124 = vmatpush.msra.mxu0 %v1035
    %1125 = vmatpush.msra.mxu0 %v1033
    %1126 = vmatpush.msra.mxu0 %v1031
    %1127 = vmatpush.msra.mxu0 %v1029
    %1128 = vmatpush.msra.mxu0 %v1027
    %1129 = vmatmul.f32.gmra.mxu0 %v1049
    %v1130 = vpop.f32.mrf.mxu0
    %v1131 = vadd.f32 %v1045, %v1130
    %1132 = vmatmul.f32.gmra.mxu0 %v1052
    %v1133 = vpop.f32.mrf.mxu0
    %v1134 = vadd.f32 %v1045, %v1133
    %1135 = vmatmul.f32.gmra.mxu0 %v1055
    %v1136 = vpop.f32.mrf.mxu0
    %v1137 = vadd.f32 %v1045, %v1136
    %1138 = vmatmul.f32.gmra.mxu0 %v1058
    %v1139 = vpop.f32.mrf.mxu0
    %v1140 = vadd.f32 %v1045, %v1139
    %1141 = vmatmul.f32.gmra.mxu0 %v1061
    %v1142 = vpop.f32.mrf.mxu0
    %v1143 = vadd.f32 %v1045, %v1142
    %1144 = vmatmul.f32.gmra.mxu0 %v1064
    %v1145 = vpop.f32.mrf.mxu0
    %v1146 = vadd.f32 %v1045, %v1145
    %1147 = vmatmul.f32.gmra.mxu0 %v1067
    %v1148 = vpop.f32.mrf.mxu0
    %v1149 = vadd.f32 %v1045, %v1148
    %1150 = vmatmul.f32.gmra.mxu0 %v1070
    %v1151 = vpop.f32.mrf.mxu0
    %v1152 = vadd.f32 %v1045, %v1151
    %1153 = vdwg.mxu0
    %1154 = vst [vmem:[#allocation3] sm:$0xff] %v1090
    %1155 = vst [vmem:[#allocation3 + $0x8] sm:$0xff] %v1131
    %1156 = vst [vmem:[#allocation3 + $0x10] sm:$0xff] %v1093
    %1157 = vst [vmem:[#allocation3 + $0x18] sm:$0xff] %v1134
    %1158 = vst [vmem:[#allocation3 + $0x20] sm:$0xff] %v1096
    %1159 = vst [vmem:[#allocation3 + $0x28] sm:$0xff] %v1137
    %1160 = vst [vmem:[#allocation3 + $0x30] sm:$0xff] %v1099
    %1161 = vst [vmem:[#allocation3 + $0x38] sm:$0xff] %v1140
    %1162 = vst [vmem:[#allocation3 + $0x40] sm:$0xff] %v1102
    %1163 = vst [vmem:[#allocation3 + $0x48] sm:$0xff] %v1143
    %1164 = vst [vmem:[#allocation3 + $0x50] sm:$0xff] %v1105
    %1165 = vst [vmem:[#allocation3 + $0x58] sm:$0xff] %v1146
    %1166 = vst [vmem:[#allocation3 + $0x60] sm:$0xff] %v1108
    %1167 = vst [vmem:[#allocation3 + $0x68] sm:$0xff] %v1149
    %1168 = vst [vmem:[#allocation3 + $0x70] sm:$0xff] %v1111
    %1169 = vst [vmem:[#allocation3 + $0x78] sm:$0xff] %v1152
    %s1170 = scalar_lea.vmem [#allocation7], 128
    %v1171 = vld [vmem:[%s1170] sm:$0xff]
    %v1172 = vld [vmem:[%s1170 + $0x8] sm:$0xff]
    %v1173 = vld [vmem:[%s1170 + $0x10] sm:$0xff]
    %v1174 = vld [vmem:[%s1170 + $0x18] sm:$0xff]
    %v1175 = vld [vmem:[%s1170 + $0x20] sm:$0xff]
    %v1176 = vld [vmem:[%s1170 + $0x28] sm:$0xff]
    %v1177 = vld [vmem:[%s1170 + $0x30] sm:$0xff]
    %v1178 = vld [vmem:[%s1170 + $0x38] sm:$0xff]
    %v1179 = vld [vmem:[%s1170 + $0x40] sm:$0xff]
    %v1180 = vld [vmem:[%s1170 + $0x48] sm:$0xff]
    %v1181 = vld [vmem:[%s1170 + $0x50] sm:$0xff]
    %v1182 = vld [vmem:[%s1170 + $0x58] sm:$0xff]
    %v1183 = vld [vmem:[%s1170 + $0x60] sm:$0xff]
    %v1184 = vld [vmem:[%s1170 + $0x68] sm:$0xff]
    %v1185 = vld [vmem:[%s1170 + $0x70] sm:$0xff]
    %v1186 = vld [vmem:[%s1170 + $0x78] sm:$0xff]
    %v1187 = vld [vmem:[#allocation3] sm:$0xff]
    %v1188 = vld [vmem:[#allocation3 + $0x8] sm:$0xff]
    %1189 = vmatpush.msra.mxu0 0.0
    %1190 = vmatpush.msra.mxu0 0.0
    %1191 = vmatpush.msra.mxu0 0.0
    %1192 = vmatpush.msra.mxu0 0.0
    %1193 = vmatpush.msra.mxu0 0.0
    %1194 = vmatpush.msra.mxu0 0.0
    %1195 = vmatpush.msra.mxu0 0.0
    %1196 = vmatpush.msra.mxu0 0.0
    %1197 = vmatpush.msra.mxu0 %v1185
    %1198 = vmatpush.msra.mxu0 %v1183
    %1199 = vmatpush.msra.mxu0 %v1181
    %1200 = vmatpush.msra.mxu0 %v1179
    %1201 = vmatpush.msra.mxu0 %v1177
    %1202 = vmatpush.msra.mxu0 %v1175
    %1203 = vmatpush.msra.mxu0 %v1173
    %1204 = vmatpush.msra.mxu0 %v1171
    %1205 = vmatmul.f32.gmra.mxu0 %v230
    %v1206 = vpop.f32.mrf.mxu0
    %v1207 = vadd.f32 %v1187, %v1206
    %1208 = vdwg.mxu0
    %1209 = vmatpush.msra.mxu0 0.0
    %1210 = vmatpush.msra.mxu0 0.0
    %1211 = vmatpush.msra.mxu0 0.0
    %1212 = vmatpush.msra.mxu0 0.0
    %1213 = vmatpush.msra.mxu0 0.0
    %1214 = vmatpush.msra.mxu0 0.0
    %1215 = vmatpush.msra.mxu0 0.0
    %1216 = vmatpush.msra.mxu0 0.0
    %1217 = vmatpush.msra.mxu0 %v1186
    %1218 = vmatpush.msra.mxu0 %v1184
    %1219 = vmatpush.msra.mxu0 %v1182
    %1220 = vmatpush.msra.mxu0 %v1180
    %1221 = vmatpush.msra.mxu0 %v1178
    %1222 = vmatpush.msra.mxu0 %v1176
    %1223 = vmatpush.msra.mxu0 %v1174
    %1224 = vmatpush.msra.mxu0 %v1172
    %1225 = vmatmul.f32.gmra.mxu0 %v230
    %v1226 = vpop.f32.mrf.mxu0
    %v1227 = vadd.f32 %v1188, %v1226
    %1228 = vdwg.mxu0
    %v1229 = vxor.u32 %v1207, 2147483648
    %v1230 = vxor.u32 %v1227, 2147483648
    %v1231 = vmul.f32 %v1229, 1.442695
    %v1232 = vpow.pop %v1231
    %v1233 = vmul.f32 %v1230, 1.442695
    %v1234 = vpow.pop %v1233
    %v1235 = vadd.f32 %v1232, 1.0
    %v1236 = vadd.f32 %v1234, 1.0
    %v1237 = vrcp.pop %v1235
    %v1238 = vmul.f32 %v1235, %v1237
    %v1239 = vsub.f32 1.0, %v1238
    %v1240 = vmul.f32 %v1237, %v1239
    %v1241 = vadd.f32 %v1237, %v1240
    %vm1242 = vweird.f32 %v1235
    %vm1243 = vweird.f32 %v1237
    %vm1244 = vmor %vm1242, %vm1243
    %v1245 = vsel %vm1244, %v1237, %v1241
    %v1246 = vand.u32 2147483647, %v1235
    %vm1247 = vcmp.eq.f32.partialorder %v1246, 8.507059e+37
    %v1248 = vand.u32 %v1235, 2147483648
    %v1249 = vor.u32 1.1754944e-38, %v1248
    %v1250 = vsel %vm1247, %v1249, %v1245
    %v1251 = vmul.f32 1.0, %v1250
    %v1252 = vrcp.pop %v1236
    %v1253 = vmul.f32 %v1236, %v1252
    %v1254 = vsub.f32 1.0, %v1253
    %v1255 = vmul.f32 %v1252, %v1254
    %v1256 = vadd.f32 %v1252, %v1255
    %vm1257 = vweird.f32 %v1236
    %vm1258 = vweird.f32 %v1252
    %vm1259 = vmor %vm1257, %vm1258
    %v1260 = vsel %vm1259, %v1252, %v1256
    %v1261 = vand.u32 2147483647, %v1236
    %vm1262 = vcmp.eq.f32.partialorder %v1261, 8.507059e+37
    %v1263 = vand.u32 %v1236, 2147483648
    %v1264 = vor.u32 1.1754944e-38, %v1263
    %v1265 = vsel %vm1262, %v1264, %v1260
    %v1266 = vmul.f32 1.0, %v1265
    %v1267 = vtanh.pop %v1227
    %v1268 = vmul.f32 %v1251, 0.0
    %v1269 = vmul.f32 %v1251, %v1267
    %1271 = vrot.lane.b32.xlu0 %v1269, 64
    %v1272 = vpop.permute.xlu0 %1271
    %v1274 = vadd.f32 %v1268, %v1272
    %v1275 = vtanh.pop %v1274
    %v1276 = vmul.f32 %v1266, %v1275
    %1278 = vrot.lane.b32.xlu0 %v1276, 64
    %v1279 = vpop.permute.xlu0 %1278
    %1281 = vst.msk [vmem:[#allocation2] sm:$0xff] %vm228, %v1279
    %v1282 = vld [vmem:[%s325] sm:$0xff]
    %v1283 = vld [vmem:[%s325 + $0x8] sm:$0xff]
    %v1284 = vsel %vm228, %v1279, 0
    %1286 = vmatpush.msra.mxu0 0.0
    %1287 = vmatpush.msra.mxu0 0.0
    %1288 = vmatpush.msra.mxu0 0.0
    %1289 = vmatpush.msra.mxu0 0.0
    %1290 = vmatpush.msra.mxu0 0.0
    %1291 = vmatpush.msra.mxu0 0.0
    %1292 = vmatpush.msra.mxu0 0.0
    %1293 = vmatpush.msra.mxu0 0.0
    %1294 = vmatpush.msra.mxu0 %v1185
    %1295 = vmatpush.msra.mxu0 %v1183
    %1296 = vmatpush.msra.mxu0 %v1181
    %1297 = vmatpush.msra.mxu0 %v1179
    %1298 = vmatpush.msra.mxu0 %v1177
    %1299 = vmatpush.msra.mxu0 %v1175
    %1300 = vmatpush.msra.mxu0 %v1173
    %1301 = vmatpush.msra.mxu0 %v1171
    %1302 = vmatmul.f32.gmra.mxu0 %v1284
    %v1303 = vpop.f32.mrf.mxu0
    %v1304 = vadd.f32 %v1282, %v1303
    %1305 = vdwg.mxu0
    %1306 = vmatpush.msra.mxu0 0.0
    %1307 = vmatpush.msra.mxu0 0.0
    %1308 = vmatpush.msra.mxu0 0.0
    %1309 = vmatpush.msra.mxu0 0.0
    %1310 = vmatpush.msra.mxu0 0.0
    %1311 = vmatpush.msra.mxu0 0.0
    %1312 = vmatpush.msra.mxu0 0.0
    %1313 = vmatpush.msra.mxu0 0.0
    %1314 = vmatpush.msra.mxu0 %v1186
    %1315 = vmatpush.msra.mxu0 %v1184
    %1316 = vmatpush.msra.mxu0 %v1182
    %1317 = vmatpush.msra.mxu0 %v1180
    %1318 = vmatpush.msra.mxu0 %v1178
    %1319 = vmatpush.msra.mxu0 %v1176
    %1320 = vmatpush.msra.mxu0 %v1174
    %1321 = vmatpush.msra.mxu0 %v1172
    %1322 = vmatmul.f32.gmra.mxu0 %v1284
    %v1323 = vpop.f32.mrf.mxu0
    %v1324 = vadd.f32 %v1283, %v1323
    %1325 = vdwg.mxu0
    %v1326 = vxor.u32 %v1304, 2147483648
    %v1327 = vxor.u32 %v1324, 2147483648
    %v1328 = vmul.f32 %v1326, 1.442695
    %v1329 = vpow.pop %v1328
    %v1330 = vmul.f32 %v1327, 1.442695
    %v1331 = vpow.pop %v1330
    %v1332 = vadd.f32 %v1329, 1.0
    %v1333 = vadd.f32 %v1331, 1.0
    %v1334 = vrcp.pop %v1332
    %v1335 = vmul.f32 %v1332, %v1334
    %v1336 = vsub.f32 1.0, %v1335
    %v1337 = vmul.f32 %v1334, %v1336
    %v1338 = vadd.f32 %v1334, %v1337
    %vm1339 = vweird.f32 %v1332
    %vm1340 = vweird.f32 %v1334
    %vm1341 = vmor %vm1339, %vm1340
    %v1342 = vsel %vm1341, %v1334, %v1338
    %v1343 = vand.u32 2147483647, %v1332
    %vm1344 = vcmp.eq.f32.partialorder %v1343, 8.507059e+37
    %v1345 = vand.u32 %v1332, 2147483648
    %v1346 = vor.u32 1.1754944e-38, %v1345
    %v1347 = vsel %vm1344, %v1346, %v1342
    %v1348 = vmul.f32 1.0, %v1347
    %v1349 = vrcp.pop %v1333
    %v1350 = vmul.f32 %v1333, %v1349
    %v1351 = vsub.f32 1.0, %v1350
    %v1352 = vmul.f32 %v1349, %v1351
    %v1353 = vadd.f32 %v1349, %v1352
    %vm1354 = vweird.f32 %v1333
    %vm1355 = vweird.f32 %v1349
    %vm1356 = vmor %vm1354, %vm1355
    %v1357 = vsel %vm1356, %v1349, %v1353
    %v1358 = vand.u32 2147483647, %v1333
    %vm1359 = vcmp.eq.f32.partialorder %v1358, 8.507059e+37
    %v1360 = vand.u32 %v1333, 2147483648
    %v1361 = vor.u32 1.1754944e-38, %v1360
    %v1362 = vsel %vm1359, %v1361, %v1357
    %v1363 = vmul.f32 1.0, %v1362
    %v1364 = vtanh.pop %v1324
    %v1365 = vmul.f32 %v1348, %v1274
    %v1366 = vmul.f32 %v1348, %v1364
    %1368 = vrot.lane.b32.xlu0 %v1366, 64
    %v1369 = vpop.permute.xlu0 %1368
    %v1371 = vadd.f32 %v1365, %v1369
    %v1372 = vtanh.pop %v1371
    %v1373 = vmul.f32 %v1363, %v1372
    %1375 = vrot.lane.b32.xlu0 %v1373, 64
    %v1376 = vpop.permute.xlu0 %1375
    %1378 = vst.msk [vmem:[%s422] sm:$0xff] %vm228, %v1376
    %v1379 = vld [vmem:[%s424] sm:$0xff]
    %v1380 = vld [vmem:[%s424 + $0x8] sm:$0xff]
    %v1381 = vsel %vm228, %v1376, 0
    %1383 = vmatpush.msra.mxu0 0.0
    %1384 = vmatpush.msra.mxu0 0.0
    %1385 = vmatpush.msra.mxu0 0.0
    %1386 = vmatpush.msra.mxu0 0.0
    %1387 = vmatpush.msra.mxu0 0.0
    %1388 = vmatpush.msra.mxu0 0.0
    %1389 = vmatpush.msra.mxu0 0.0
    %1390 = vmatpush.msra.mxu0 0.0
    %1391 = vmatpush.msra.mxu0 %v1185
    %1392 = vmatpush.msra.mxu0 %v1183
    %1393 = vmatpush.msra.mxu0 %v1181
    %1394 = vmatpush.msra.mxu0 %v1179
    %1395 = vmatpush.msra.mxu0 %v1177
    %1396 = vmatpush.msra.mxu0 %v1175
    %1397 = vmatpush.msra.mxu0 %v1173
    %1398 = vmatpush.msra.mxu0 %v1171
    %1399 = vmatmul.f32.gmra.mxu0 %v1381
    %v1400 = vpop.f32.mrf.mxu0
    %v1401 = vadd.f32 %v1379, %v1400
    %1402 = vdwg.mxu0
    %1403 = vmatpush.msra.mxu0 0.0
    %1404 = vmatpush.msra.mxu0 0.0
    %1405 = vmatpush.msra.mxu0 0.0
    %1406 = vmatpush.msra.mxu0 0.0
    %1407 = vmatpush.msra.mxu0 0.0
    %1408 = vmatpush.msra.mxu0 0.0
    %1409 = vmatpush.msra.mxu0 0.0
    %1410 = vmatpush.msra.mxu0 0.0
    %1411 = vmatpush.msra.mxu0 %v1186
    %1412 = vmatpush.msra.mxu0 %v1184
    %1413 = vmatpush.msra.mxu0 %v1182
    %1414 = vmatpush.msra.mxu0 %v1180
    %1415 = vmatpush.msra.mxu0 %v1178
    %1416 = vmatpush.msra.mxu0 %v1176
    %1417 = vmatpush.msra.mxu0 %v1174
    %1418 = vmatpush.msra.mxu0 %v1172
    %1419 = vmatmul.f32.gmra.mxu0 %v1381
    %v1420 = vpop.f32.mrf.mxu0
    %v1421 = vadd.f32 %v1380, %v1420
    %1422 = vdwg.mxu0
    %v1423 = vxor.u32 %v1401, 2147483648
    %v1424 = vxor.u32 %v1421, 2147483648
    %v1425 = vmul.f32 %v1423, 1.442695
    %v1426 = vpow.pop %v1425
    %v1427 = vmul.f32 %v1424, 1.442695
    %v1428 = vpow.pop %v1427
    %v1429 = vadd.f32 %v1426, 1.0
    %v1430 = vadd.f32 %v1428, 1.0
    %v1431 = vrcp.pop %v1429
    %v1432 = vmul.f32 %v1429, %v1431
    %v1433 = vsub.f32 1.0, %v1432
    %v1434 = vmul.f32 %v1431, %v1433
    %v1435 = vadd.f32 %v1431, %v1434
    %vm1436 = vweird.f32 %v1429
    %vm1437 = vweird.f32 %v1431
    %vm1438 = vmor %vm1436, %vm1437
    %v1439 = vsel %vm1438, %v1431, %v1435
    %v1440 = vand.u32 2147483647, %v1429
    %vm1441 = vcmp.eq.f32.partialorder %v1440, 8.507059e+37
    %v1442 = vand.u32 %v1429, 2147483648
    %v1443 = vor.u32 1.1754944e-38, %v1442
    %v1444 = vsel %vm1441, %v1443, %v1439
    %v1445 = vmul.f32 1.0, %v1444
    %v1446 = vrcp.pop %v1430
    %v1447 = vmul.f32 %v1430, %v1446
    %v1448 = vsub.f32 1.0, %v1447
    %v1449 = vmul.f32 %v1446, %v1448
    %v1450 = vadd.f32 %v1446, %v1449
    %vm1451 = vweird.f32 %v1430
    %vm1452 = vweird.f32 %v1446
    %vm1453 = vmor %vm1451, %vm1452
    %v1454 = vsel %vm1453, %v1446, %v1450
    %v1455 = vand.u32 2147483647, %v1430
    %vm1456 = vcmp.eq.f32.partialorder %v1455, 8.507059e+37
    %v1457 = vand.u32 %v1430, 2147483648
    %v1458 = vor.u32 1.1754944e-38, %v1457
    %v1459 = vsel %vm1456, %v1458, %v1454
    %v1460 = vmul.f32 1.0, %v1459
    %v1461 = vtanh.pop %v1421
    %v1462 = vmul.f32 %v1445, %v1371
    %v1463 = vmul.f32 %v1445, %v1461
    %1465 = vrot.lane.b32.xlu0 %v1463, 64
    %v1466 = vpop.permute.xlu0 %1465
    %v1468 = vadd.f32 %v1462, %v1466
    %v1469 = vtanh.pop %v1468
    %v1470 = vmul.f32 %v1460, %v1469
    %1472 = vrot.lane.b32.xlu0 %v1470, 64
    %v1473 = vpop.permute.xlu0 %1472
    %1475 = vst.msk [vmem:[%s521] sm:$0xff] %vm228, %v1473
    %v1476 = vld [vmem:[%s523] sm:$0xff]
    %v1477 = vld [vmem:[%s523 + $0x8] sm:$0xff]
    %v1478 = vsel %vm228, %v1473, 0
    %1480 = vmatpush.msra.mxu0 0.0
    %1481 = vmatpush.msra.mxu0 0.0
    %1482 = vmatpush.msra.mxu0 0.0
    %1483 = vmatpush.msra.mxu0 0.0
    %1484 = vmatpush.msra.mxu0 0.0
    %1485 = vmatpush.msra.mxu0 0.0
    %1486 = vmatpush.msra.mxu0 0.0
    %1487 = vmatpush.msra.mxu0 0.0
    %1488 = vmatpush.msra.mxu0 %v1185
    %1489 = vmatpush.msra.mxu0 %v1183
    %1490 = vmatpush.msra.mxu0 %v1181
    %1491 = vmatpush.msra.mxu0 %v1179
    %1492 = vmatpush.msra.mxu0 %v1177
    %1493 = vmatpush.msra.mxu0 %v1175
    %1494 = vmatpush.msra.mxu0 %v1173
    %1495 = vmatpush.msra.mxu0 %v1171
    %1496 = vmatmul.f32.gmra.mxu0 %v1478
    %v1497 = vpop.f32.mrf.mxu0
    %v1498 = vadd.f32 %v1476, %v1497
    %1499 = vdwg.mxu0
    %1500 = vmatpush.msra.mxu0 0.0
    %1501 = vmatpush.msra.mxu0 0.0
    %1502 = vmatpush.msra.mxu0 0.0
    %1503 = vmatpush.msra.mxu0 0.0
    %1504 = vmatpush.msra.mxu0 0.0
    %1505 = vmatpush.msra.mxu0 0.0
    %1506 = vmatpush.msra.mxu0 0.0
    %1507 = vmatpush.msra.mxu0 0.0
    %1508 = vmatpush.msra.mxu0 %v1186
    %1509 = vmatpush.msra.mxu0 %v1184
    %1510 = vmatpush.msra.mxu0 %v1182
    %1511 = vmatpush.msra.mxu0 %v1180
    %1512 = vmatpush.msra.mxu0 %v1178
    %1513 = vmatpush.msra.mxu0 %v1176
    %1514 = vmatpush.msra.mxu0 %v1174
    %1515 = vmatpush.msra.mxu0 %v1172
    %1516 = vmatmul.f32.gmra.mxu0 %v1478
    %v1517 = vpop.f32.mrf.mxu0
    %v1518 = vadd.f32 %v1477, %v1517
    %1519 = vdwg.mxu0
    %v1520 = vxor.u32 %v1498, 2147483648
    %v1521 = vxor.u32 %v1518, 2147483648
    %v1522 = vmul.f32 %v1520, 1.442695
    %v1523 = vpow.pop %v1522
    %v1524 = vmul.f32 %v1521, 1.442695
    %v1525 = vpow.pop %v1524
    %v1526 = vadd.f32 %v1523, 1.0
    %v1527 = vadd.f32 %v1525, 1.0
    %v1528 = vrcp.pop %v1526
    %v1529 = vmul.f32 %v1526, %v1528
    %v1530 = vsub.f32 1.0, %v1529
    %v1531 = vmul.f32 %v1528, %v1530
    %v1532 = vadd.f32 %v1528, %v1531
    %vm1533 = vweird.f32 %v1526
    %vm1534 = vweird.f32 %v1528
    %vm1535 = vmor %vm1533, %vm1534
    %v1536 = vsel %vm1535, %v1528, %v1532
    %v1537 = vand.u32 2147483647, %v1526
    %vm1538 = vcmp.eq.f32.partialorder %v1537, 8.507059e+37
    %v1539 = vand.u32 %v1526, 2147483648
    %v1540 = vor.u32 1.1754944e-38, %v1539
    %v1541 = vsel %vm1538, %v1540, %v1536
    %v1542 = vmul.f32 1.0, %v1541
    %v1543 = vrcp.pop %v1527
    %v1544 = vmul.f32 %v1527, %v1543
    %v1545 = vsub.f32 1.0, %v1544
    %v1546 = vmul.f32 %v1543, %v1545
    %v1547 = vadd.f32 %v1543, %v1546
    %vm1548 = vweird.f32 %v1527
    %vm1549 = vweird.f32 %v1543
    %vm1550 = vmor %vm1548, %vm1549
    %v1551 = vsel %vm1550, %v1543, %v1547
    %v1552 = vand.u32 2147483647, %v1527
    %vm1553 = vcmp.eq.f32.partialorder %v1552, 8.507059e+37
    %v1554 = vand.u32 %v1527, 2147483648
    %v1555 = vor.u32 1.1754944e-38, %v1554
    %v1556 = vsel %vm1553, %v1555, %v1551
    %v1557 = vmul.f32 1.0, %v1556
    %v1558 = vtanh.pop %v1518
    %v1559 = vmul.f32 %v1542, %v1468
    %v1560 = vmul.f32 %v1542, %v1558
    %1562 = vrot.lane.b32.xlu0 %v1560, 64
    %v1563 = vpop.permute.xlu0 %1562
    %v1565 = vadd.f32 %v1559, %v1563
    %v1566 = vtanh.pop %v1565
    %v1567 = vmul.f32 %v1557, %v1566
    %1569 = vrot.lane.b32.xlu0 %v1567, 64
    %v1570 = vpop.permute.xlu0 %1569
    %1572 = vst.msk [vmem:[%s620] sm:$0xff] %vm228, %v1570
    %v1573 = vld [vmem:[%s622] sm:$0xff]
    %v1574 = vld [vmem:[%s622 + $0x8] sm:$0xff]
    %v1575 = vsel %vm228, %v1570, 0
    %1577 = vmatpush.msra.mxu0 0.0
    %1578 = vmatpush.msra.mxu0 0.0
    %1579 = vmatpush.msra.mxu0 0.0
    %1580 = vmatpush.msra.mxu0 0.0
    %1581 = vmatpush.msra.mxu0 0.0
    %1582 = vmatpush.msra.mxu0 0.0
    %1583 = vmatpush.msra.mxu0 0.0
    %1584 = vmatpush.msra.mxu0 0.0
    %1585 = vmatpush.msra.mxu0 %v1185
    %1586 = vmatpush.msra.mxu0 %v1183
    %1587 = vmatpush.msra.mxu0 %v1181
    %1588 = vmatpush.msra.mxu0 %v1179
    %1589 = vmatpush.msra.mxu0 %v1177
    %1590 = vmatpush.msra.mxu0 %v1175
    %1591 = vmatpush.msra.mxu0 %v1173
    %1592 = vmatpush.msra.mxu0 %v1171
    %1593 = vmatmul.f32.gmra.mxu0 %v1575
    %v1594 = vpop.f32.mrf.mxu0
    %v1595 = vadd.f32 %v1573, %v1594
    %1596 = vdwg.mxu0
    %1597 = vmatpush.msra.mxu0 0.0
    %1598 = vmatpush.msra.mxu0 0.0
    %1599 = vmatpush.msra.mxu0 0.0
    %1600 = vmatpush.msra.mxu0 0.0
    %1601 = vmatpush.msra.mxu0 0.0
    %1602 = vmatpush.msra.mxu0 0.0
    %1603 = vmatpush.msra.mxu0 0.0
    %1604 = vmatpush.msra.mxu0 0.0
    %1605 = vmatpush.msra.mxu0 %v1186
    %1606 = vmatpush.msra.mxu0 %v1184
    %1607 = vmatpush.msra.mxu0 %v1182
    %1608 = vmatpush.msra.mxu0 %v1180
    %1609 = vmatpush.msra.mxu0 %v1178
    %1610 = vmatpush.msra.mxu0 %v1176
    %1611 = vmatpush.msra.mxu0 %v1174
    %1612 = vmatpush.msra.mxu0 %v1172
    %1613 = vmatmul.f32.gmra.mxu0 %v1575
    %v1614 = vpop.f32.mrf.mxu0
    %v1615 = vadd.f32 %v1574, %v1614
    %1616 = vdwg.mxu0
    %v1617 = vxor.u32 %v1595, 2147483648
    %v1618 = vxor.u32 %v1615, 2147483648
    %v1619 = vmul.f32 %v1617, 1.442695
    %v1620 = vpow.pop %v1619
    %v1621 = vmul.f32 %v1618, 1.442695
    %v1622 = vpow.pop %v1621
    %v1623 = vadd.f32 %v1620, 1.0
    %v1624 = vadd.f32 %v1622, 1.0
    %v1625 = vrcp.pop %v1623
    %v1626 = vmul.f32 %v1623, %v1625
    %v1627 = vsub.f32 1.0, %v1626
    %v1628 = vmul.f32 %v1625, %v1627
    %v1629 = vadd.f32 %v1625, %v1628
    %vm1630 = vweird.f32 %v1623
    %vm1631 = vweird.f32 %v1625
    %vm1632 = vmor %vm1630, %vm1631
    %v1633 = vsel %vm1632, %v1625, %v1629
    %v1634 = vand.u32 2147483647, %v1623
    %vm1635 = vcmp.eq.f32.partialorder %v1634, 8.507059e+37
    %v1636 = vand.u32 %v1623, 2147483648
    %v1637 = vor.u32 1.1754944e-38, %v1636
    %v1638 = vsel %vm1635, %v1637, %v1633
    %v1639 = vmul.f32 1.0, %v1638
    %v1640 = vrcp.pop %v1624
    %v1641 = vmul.f32 %v1624, %v1640
    %v1642 = vsub.f32 1.0, %v1641
    %v1643 = vmul.f32 %v1640, %v1642
    %v1644 = vadd.f32 %v1640, %v1643
    %vm1645 = vweird.f32 %v1624
    %vm1646 = vweird.f32 %v1640
    %vm1647 = vmor %vm1645, %vm1646
    %v1648 = vsel %vm1647, %v1640, %v1644
    %v1649 = vand.u32 2147483647, %v1624
    %vm1650 = vcmp.eq.f32.partialorder %v1649, 8.507059e+37
    %v1651 = vand.u32 %v1624, 2147483648
    %v1652 = vor.u32 1.1754944e-38, %v1651
    %v1653 = vsel %vm1650, %v1652, %v1648
    %v1654 = vmul.f32 1.0, %v1653
    %v1655 = vtanh.pop %v1615
    %v1656 = vmul.f32 %v1639, %v1565
    %v1657 = vmul.f32 %v1639, %v1655
    %1659 = vrot.lane.b32.xlu0 %v1657, 64
    %v1660 = vpop.permute.xlu0 %1659
    %v1662 = vadd.f32 %v1656, %v1660
    %v1663 = vtanh.pop %v1662
    %v1664 = vmul.f32 %v1654, %v1663
    %1666 = vrot.lane.b32.xlu0 %v1664, 64
    %v1667 = vpop.permute.xlu0 %1666
    %1669 = vst.msk [vmem:[%s719] sm:$0xff] %vm228, %v1667
    %v1670 = vld [vmem:[%s721] sm:$0xff]
    %v1671 = vld [vmem:[%s721 + $0x8] sm:$0xff]
    %v1672 = vsel %vm228, %v1667, 0
    %1674 = vmatpush.msra.mxu0 0.0
    %1675 = vmatpush.msra.mxu0 0.0
    %1676 = vmatpush.msra.mxu0 0.0
    %1677 = vmatpush.msra.mxu0 0.0
    %1678 = vmatpush.msra.mxu0 0.0
    %1679 = vmatpush.msra.mxu0 0.0
    %1680 = vmatpush.msra.mxu0 0.0
    %1681 = vmatpush.msra.mxu0 0.0
    %1682 = vmatpush.msra.mxu0 %v1185
    %1683 = vmatpush.msra.mxu0 %v1183
    %1684 = vmatpush.msra.mxu0 %v1181
    %1685 = vmatpush.msra.mxu0 %v1179
    %1686 = vmatpush.msra.mxu0 %v1177
    %1687 = vmatpush.msra.mxu0 %v1175
    %1688 = vmatpush.msra.mxu0 %v1173
    %1689 = vmatpush.msra.mxu0 %v1171
    %1690 = vmatmul.f32.gmra.mxu0 %v1672
    %v1691 = vpop.f32.mrf.mxu0
    %v1692 = vadd.f32 %v1670, %v1691
    %1693 = vdwg.mxu0
    %1694 = vmatpush.msra.mxu0 0.0
    %1695 = vmatpush.msra.mxu0 0.0
    %1696 = vmatpush.msra.mxu0 0.0
    %1697 = vmatpush.msra.mxu0 0.0
    %1698 = vmatpush.msra.mxu0 0.0
    %1699 = vmatpush.msra.mxu0 0.0
    %1700 = vmatpush.msra.mxu0 0.0
    %1701 = vmatpush.msra.mxu0 0.0
    %1702 = vmatpush.msra.mxu0 %v1186
    %1703 = vmatpush.msra.mxu0 %v1184
    %1704 = vmatpush.msra.mxu0 %v1182
    %1705 = vmatpush.msra.mxu0 %v1180
    %1706 = vmatpush.msra.mxu0 %v1178
    %1707 = vmatpush.msra.mxu0 %v1176
    %1708 = vmatpush.msra.mxu0 %v1174
    %1709 = vmatpush.msra.mxu0 %v1172
    %1710 = vmatmul.f32.gmra.mxu0 %v1672
    %v1711 = vpop.f32.mrf.mxu0
    %v1712 = vadd.f32 %v1671, %v1711
    %1713 = vdwg.mxu0
    %v1714 = vxor.u32 %v1692, 2147483648
    %v1715 = vxor.u32 %v1712, 2147483648
    %v1716 = vmul.f32 %v1714, 1.442695
    %v1717 = vpow.pop %v1716
    %v1718 = vmul.f32 %v1715, 1.442695
    %v1719 = vpow.pop %v1718
    %v1720 = vadd.f32 %v1717, 1.0
    %v1721 = vadd.f32 %v1719, 1.0
    %v1722 = vrcp.pop %v1720
    %v1723 = vmul.f32 %v1720, %v1722
    %v1724 = vsub.f32 1.0, %v1723
    %v1725 = vmul.f32 %v1722, %v1724
    %v1726 = vadd.f32 %v1722, %v1725
    %vm1727 = vweird.f32 %v1720
    %vm1728 = vweird.f32 %v1722
    %vm1729 = vmor %vm1727, %vm1728
    %v1730 = vsel %vm1729, %v1722, %v1726
    %v1731 = vand.u32 2147483647, %v1720
    %vm1732 = vcmp.eq.f32.partialorder %v1731, 8.507059e+37
    %v1733 = vand.u32 %v1720, 2147483648
    %v1734 = vor.u32 1.1754944e-38, %v1733
    %v1735 = vsel %vm1732, %v1734, %v1730
    %v1736 = vmul.f32 1.0, %v1735
    %v1737 = vrcp.pop %v1721
    %v1738 = vmul.f32 %v1721, %v1737
    %v1739 = vsub.f32 1.0, %v1738
    %v1740 = vmul.f32 %v1737, %v1739
    %v1741 = vadd.f32 %v1737, %v1740
    %vm1742 = vweird.f32 %v1721
    %vm1743 = vweird.f32 %v1737
    %vm1744 = vmor %vm1742, %vm1743
    %v1745 = vsel %vm1744, %v1737, %v1741
    %v1746 = vand.u32 2147483647, %v1721
    %vm1747 = vcmp.eq.f32.partialorder %v1746, 8.507059e+37
    %v1748 = vand.u32 %v1721, 2147483648
    %v1749 = vor.u32 1.1754944e-38, %v1748
    %v1750 = vsel %vm1747, %v1749, %v1745
    %v1751 = vmul.f32 1.0, %v1750
    %v1752 = vtanh.pop %v1712
    %v1753 = vmul.f32 %v1736, %v1662
    %v1754 = vmul.f32 %v1736, %v1752
    %1756 = vrot.lane.b32.xlu0 %v1754, 64
    %v1757 = vpop.permute.xlu0 %1756
    %v1759 = vadd.f32 %v1753, %v1757
    %v1760 = vtanh.pop %v1759
    %v1761 = vmul.f32 %v1751, %v1760
    %1763 = vrot.lane.b32.xlu0 %v1761, 64
    %v1764 = vpop.permute.xlu0 %1763
    %1766 = vst.msk [vmem:[%s818] sm:$0xff] %vm228, %v1764
    %v1767 = vld [vmem:[%s820] sm:$0xff]
    %v1768 = vld [vmem:[%s820 + $0x8] sm:$0xff]
    %v1769 = vsel %vm228, %v1764, 0
    %1771 = vmatpush.msra.mxu0 0.0
    %1772 = vmatpush.msra.mxu0 0.0
    %1773 = vmatpush.msra.mxu0 0.0
    %1774 = vmatpush.msra.mxu0 0.0
    %1775 = vmatpush.msra.mxu0 0.0
    %1776 = vmatpush.msra.mxu0 0.0
    %1777 = vmatpush.msra.mxu0 0.0
    %1778 = vmatpush.msra.mxu0 0.0
    %1779 = vmatpush.msra.mxu0 %v1185
    %1780 = vmatpush.msra.mxu0 %v1183
    %1781 = vmatpush.msra.mxu0 %v1181
    %1782 = vmatpush.msra.mxu0 %v1179
    %1783 = vmatpush.msra.mxu0 %v1177
    %1784 = vmatpush.msra.mxu0 %v1175
    %1785 = vmatpush.msra.mxu0 %v1173
    %1786 = vmatpush.msra.mxu0 %v1171
    %1787 = vmatmul.f32.gmra.mxu0 %v1769
    %v1788 = vpop.f32.mrf.mxu0
    %v1789 = vadd.f32 %v1767, %v1788
    %1790 = vdwg.mxu0
    %1791 = vmatpush.msra.mxu0 0.0
    %1792 = vmatpush.msra.mxu0 0.0
    %1793 = vmatpush.msra.mxu0 0.0
    %1794 = vmatpush.msra.mxu0 0.0
    %1795 = vmatpush.msra.mxu0 0.0
    %1796 = vmatpush.msra.mxu0 0.0
    %1797 = vmatpush.msra.mxu0 0.0
    %1798 = vmatpush.msra.mxu0 0.0
    %1799 = vmatpush.msra.mxu0 %v1186
    %1800 = vmatpush.msra.mxu0 %v1184
    %1801 = vmatpush.msra.mxu0 %v1182
    %1802 = vmatpush.msra.mxu0 %v1180
    %1803 = vmatpush.msra.mxu0 %v1178
    %1804 = vmatpush.msra.mxu0 %v1176
    %1805 = vmatpush.msra.mxu0 %v1174
    %1806 = vmatpush.msra.mxu0 %v1172
    %1807 = vmatmul.f32.gmra.mxu0 %v1769
    %v1808 = vpop.f32.mrf.mxu0
    %v1809 = vadd.f32 %v1768, %v1808
    %1810 = vdwg.mxu0
    %v1811 = vxor.u32 %v1789, 2147483648
    %v1812 = vxor.u32 %v1809, 2147483648
    %v1813 = vmul.f32 %v1811, 1.442695
    %v1814 = vpow.pop %v1813
    %v1815 = vmul.f32 %v1812, 1.442695
    %v1816 = vpow.pop %v1815
    %v1817 = vadd.f32 %v1814, 1.0
    %v1818 = vadd.f32 %v1816, 1.0
    %v1819 = vrcp.pop %v1817
    %v1820 = vmul.f32 %v1817, %v1819
    %v1821 = vsub.f32 1.0, %v1820
    %v1822 = vmul.f32 %v1819, %v1821
    %v1823 = vadd.f32 %v1819, %v1822
    %vm1824 = vweird.f32 %v1817
    %vm1825 = vweird.f32 %v1819
    %vm1826 = vmor %vm1824, %vm1825
    %v1827 = vsel %vm1826, %v1819, %v1823
    %v1828 = vand.u32 2147483647, %v1817
    %vm1829 = vcmp.eq.f32.partialorder %v1828, 8.507059e+37
    %v1830 = vand.u32 %v1817, 2147483648
    %v1831 = vor.u32 1.1754944e-38, %v1830
    %v1832 = vsel %vm1829, %v1831, %v1827
    %v1833 = vmul.f32 1.0, %v1832
    %v1834 = vrcp.pop %v1818
    %v1835 = vmul.f32 %v1818, %v1834
    %v1836 = vsub.f32 1.0, %v1835
    %v1837 = vmul.f32 %v1834, %v1836
    %v1838 = vadd.f32 %v1834, %v1837
    %vm1839 = vweird.f32 %v1818
    %vm1840 = vweird.f32 %v1834
    %vm1841 = vmor %vm1839, %vm1840
    %v1842 = vsel %vm1841, %v1834, %v1838
    %v1843 = vand.u32 2147483647, %v1818
    %vm1844 = vcmp.eq.f32.partialorder %v1843, 8.507059e+37
    %v1845 = vand.u32 %v1818, 2147483648
    %v1846 = vor.u32 1.1754944e-38, %v1845
    %v1847 = vsel %vm1844, %v1846, %v1842
    %v1848 = vmul.f32 1.0, %v1847
    %v1849 = vtanh.pop %v1809
    %v1850 = vmul.f32 %v1833, %v1759
    %v1851 = vmul.f32 %v1833, %v1849
    %1853 = vrot.lane.b32.xlu0 %v1851, 64
    %v1854 = vpop.permute.xlu0 %1853
    %v1856 = vadd.f32 %v1850, %v1854
    %v1857 = vtanh.pop %v1856
    %v1858 = vmul.f32 %v1848, %v1857
    %1860 = vrot.lane.b32.xlu0 %v1858, 64
    %v1861 = vpop.permute.xlu0 %1860
    %1863 = vst.msk [vmem:[%s917] sm:$0xff] %vm228, %v1861
    %v1864 = vld [vmem:[%s919] sm:$0xff]
    %v1865 = vld [vmem:[%s919 + $0x8] sm:$0xff]
    %v1866 = vsel %vm228, %v1861, 0
    %1868 = vmatpush.msra.mxu0 0.0
    %1869 = vmatpush.msra.mxu0 0.0
    %1870 = vmatpush.msra.mxu0 0.0
    %1871 = vmatpush.msra.mxu0 0.0
    %1872 = vmatpush.msra.mxu0 0.0
    %1873 = vmatpush.msra.mxu0 0.0
    %1874 = vmatpush.msra.mxu0 0.0
    %1875 = vmatpush.msra.mxu0 0.0
    %1876 = vmatpush.msra.mxu0 %v1185
    %1877 = vmatpush.msra.mxu0 %v1183
    %1878 = vmatpush.msra.mxu0 %v1181
    %1879 = vmatpush.msra.mxu0 %v1179
    %1880 = vmatpush.msra.mxu0 %v1177
    %1881 = vmatpush.msra.mxu0 %v1175
    %1882 = vmatpush.msra.mxu0 %v1173
    %1883 = vmatpush.msra.mxu0 %v1171
    %1884 = vmatmul.f32.gmra.mxu0 %v1866
    %v1885 = vpop.f32.mrf.mxu0
    %v1886 = vadd.f32 %v1864, %v1885
    %1887 = vdwg.mxu0
    %1888 = vmatpush.msra.mxu0 0.0
    %1889 = vmatpush.msra.mxu0 0.0
    %1890 = vmatpush.msra.mxu0 0.0
    %1891 = vmatpush.msra.mxu0 0.0
    %1892 = vmatpush.msra.mxu0 0.0
    %1893 = vmatpush.msra.mxu0 0.0
    %1894 = vmatpush.msra.mxu0 0.0
    %1895 = vmatpush.msra.mxu0 0.0
    %1896 = vmatpush.msra.mxu0 %v1186
    %1897 = vmatpush.msra.mxu0 %v1184
    %1898 = vmatpush.msra.mxu0 %v1182
    %1899 = vmatpush.msra.mxu0 %v1180
    %1900 = vmatpush.msra.mxu0 %v1178
    %1901 = vmatpush.msra.mxu0 %v1176
    %1902 = vmatpush.msra.mxu0 %v1174
    %1903 = vmatpush.msra.mxu0 %v1172
    %1904 = vmatmul.f32.gmra.mxu0 %v1866
    %v1905 = vpop.f32.mrf.mxu0
    %v1906 = vadd.f32 %v1865, %v1905
    %1907 = vdwg.mxu0
    %v1908 = vxor.u32 %v1886, 2147483648
    %v1909 = vxor.u32 %v1906, 2147483648
    %v1910 = vmul.f32 %v1908, 1.442695
    %v1911 = vpow.pop %v1910
    %v1912 = vmul.f32 %v1909, 1.442695
    %v1913 = vpow.pop %v1912
    %v1914 = vadd.f32 %v1911, 1.0
    %v1915 = vadd.f32 %v1913, 1.0
    %v1916 = vrcp.pop %v1914
    %v1917 = vmul.f32 %v1914, %v1916
    %v1918 = vsub.f32 1.0, %v1917
    %v1919 = vmul.f32 %v1916, %v1918
    %v1920 = vadd.f32 %v1916, %v1919
    %vm1921 = vweird.f32 %v1914
    %vm1922 = vweird.f32 %v1916
    %vm1923 = vmor %vm1921, %vm1922
    %v1924 = vsel %vm1923, %v1916, %v1920
    %v1925 = vand.u32 2147483647, %v1914
    %vm1926 = vcmp.eq.f32.partialorder %v1925, 8.507059e+37
    %v1927 = vand.u32 %v1914, 2147483648
    %v1928 = vor.u32 1.1754944e-38, %v1927
    %v1929 = vsel %vm1926, %v1928, %v1924
    %v1930 = vmul.f32 1.0, %v1929
    %v1931 = vrcp.pop %v1915
    %v1932 = vmul.f32 %v1915, %v1931
    %v1933 = vsub.f32 1.0, %v1932
    %v1934 = vmul.f32 %v1931, %v1933
    %v1935 = vadd.f32 %v1931, %v1934
    %vm1936 = vweird.f32 %v1915
    %vm1937 = vweird.f32 %v1931
    %vm1938 = vmor %vm1936, %vm1937
    %v1939 = vsel %vm1938, %v1931, %v1935
    %v1940 = vand.u32 2147483647, %v1915
    %vm1941 = vcmp.eq.f32.partialorder %v1940, 8.507059e+37
    %v1942 = vand.u32 %v1915, 2147483648
    %v1943 = vor.u32 1.1754944e-38, %v1942
    %v1944 = vsel %vm1941, %v1943, %v1939
    %v1945 = vmul.f32 1.0, %v1944
    %v1946 = vtanh.pop %v1906
    %v1947 = vmul.f32 %v1930, %v1856
    %v1948 = vmul.f32 %v1930, %v1946
    %1950 = vrot.lane.b32.xlu0 %v1948, 64
    %v1951 = vpop.permute.xlu0 %1950
    %v1953 = vadd.f32 %v1947, %v1951
    %v1954 = vtanh.pop %v1953
    %v1955 = vmul.f32 %v1945, %v1954
    %1957 = vrot.lane.b32.xlu0 %v1955, 64
    %v1958 = vpop.permute.xlu0 %1957
    %1960 = vst.msk [vmem:[%s1016] sm:$0xff] %vm228, %v1958
    %v1961 = vld [vmem:[#allocation2] sm:$0xff]
    %v1962 = vld [vmem:[#allocation2 + $0x8] sm:$0xff]
    %v1963 = vld [vmem:[#allocation2 + $0x10] sm:$0xff]
    %v1964 = vld [vmem:[#allocation2 + $0x18] sm:$0xff]
    %v1965 = vld [vmem:[#allocation2 + $0x20] sm:$0xff]
    %v1966 = vld [vmem:[#allocation2 + $0x28] sm:$0xff]
    %v1967 = vld [vmem:[#allocation2 + $0x30] sm:$0xff]
    %v1968 = vld [vmem:[#allocation2 + $0x38] sm:$0xff]
    %s1969 = scalar_lea.vmem [#allocation5], 128
    %v1970 = vld [vmem:[%s1969] sm:$0xff]
    %v1971 = vld [vmem:[%s1969 + $0x8] sm:$0xff]
    %v1972 = vld [vmem:[%s1969 + $0x10] sm:$0xff]
    %v1973 = vld [vmem:[%s1969 + $0x18] sm:$0xff]
    %v1974 = vld [vmem:[%s1969 + $0x20] sm:$0xff]
    %v1975 = vld [vmem:[%s1969 + $0x28] sm:$0xff]
    %v1976 = vld [vmem:[%s1969 + $0x30] sm:$0xff]
    %v1977 = vld [vmem:[%s1969 + $0x38] sm:$0xff]
    %v1978 = vld [vmem:[%s1969 + $0x40] sm:$0xff]
    %v1979 = vld [vmem:[%s1969 + $0x48] sm:$0xff]
    %v1980 = vld [vmem:[%s1969 + $0x50] sm:$0xff]
    %v1981 = vld [vmem:[%s1969 + $0x58] sm:$0xff]
    %v1982 = vld [vmem:[%s1969 + $0x60] sm:$0xff]
    %v1983 = vld [vmem:[%s1969 + $0x68] sm:$0xff]
    %v1984 = vld [vmem:[%s1969 + $0x70] sm:$0xff]
    %v1985 = vld [vmem:[%s1969 + $0x78] sm:$0xff]
    %s1986 = scalar_lea.vmem %s5, 2
    %v1987 = vld [vmem:[%s1986] sm:$0x3]
    %v1989 = vperm.slane %v1987, 0
    %v1990 = vperm.slane %v1987, 1
    %v1994 = vsel %vm228, %v1961, 0
    %v1997 = vsel %vm228, %v1962, 0
    %v2000 = vsel %vm228, %v1963, 0
    %v2003 = vsel %vm228, %v1964, 0
    %v2006 = vsel %vm228, %v1965, 0
    %v2009 = vsel %vm228, %v1966, 0
    %v2012 = vsel %vm228, %v1967, 0
    %v2015 = vsel %vm228, %v1968, 0
    %2017 = vmatpush.msra.mxu0 0.0
    %2018 = vmatpush.msra.mxu0 0.0
    %2019 = vmatpush.msra.mxu0 0.0
    %2020 = vmatpush.msra.mxu0 0.0
    %2021 = vmatpush.msra.mxu0 0.0
    %2022 = vmatpush.msra.mxu0 0.0
    %2023 = vmatpush.msra.mxu0 0.0
    %2024 = vmatpush.msra.mxu0 0.0
    %2025 = vmatpush.msra.mxu0 %v1984
    %2026 = vmatpush.msra.mxu0 %v1982
    %2027 = vmatpush.msra.mxu0 %v1980
    %2028 = vmatpush.msra.mxu0 %v1978
    %2029 = vmatpush.msra.mxu0 %v1976
    %2030 = vmatpush.msra.mxu0 %v1974
    %2031 = vmatpush.msra.mxu0 %v1972
    %2032 = vmatpush.msra.mxu0 %v1970
    %2033 = vmatmul.f32.gmra.mxu0 %v1994
    %v2034 = vpop.f32.mrf.mxu0
    %v2035 = vadd.f32 %v1989, %v2034
    %2036 = vmatmul.f32.gmra.mxu0 %v1997
    %v2037 = vpop.f32.mrf.mxu0
    %v2038 = vadd.f32 %v1989, %v2037
    %2039 = vmatmul.f32.gmra.mxu0 %v2000
    %v2040 = vpop.f32.mrf.mxu0
    %v2041 = vadd.f32 %v1989, %v2040
    %2042 = vmatmul.f32.gmra.mxu0 %v2003
    %v2043 = vpop.f32.mrf.mxu0
    %v2044 = vadd.f32 %v1989, %v2043
    %2045 = vmatmul.f32.gmra.mxu0 %v2006
    %v2046 = vpop.f32.mrf.mxu0
    %v2047 = vadd.f32 %v1989, %v2046
    %2048 = vmatmul.f32.gmra.mxu0 %v2009
    %v2049 = vpop.f32.mrf.mxu0
    %v2050 = vadd.f32 %v1989, %v2049
    %2051 = vmatmul.f32.gmra.mxu0 %v2012
    %v2052 = vpop.f32.mrf.mxu0
    %v2053 = vadd.f32 %v1989, %v2052
    %2054 = vmatmul.f32.gmra.mxu0 %v2015
    %v2055 = vpop.f32.mrf.mxu0
    %v2056 = vadd.f32 %v1989, %v2055
    %2057 = vdwg.mxu0
    %2058 = vmatpush.msra.mxu0 0.0
    %2059 = vmatpush.msra.mxu0 0.0
    %2060 = vmatpush.msra.mxu0 0.0
    %2061 = vmatpush.msra.mxu0 0.0
    %2062 = vmatpush.msra.mxu0 0.0
    %2063 = vmatpush.msra.mxu0 0.0
    %2064 = vmatpush.msra.mxu0 0.0
    %2065 = vmatpush.msra.mxu0 0.0
    %2066 = vmatpush.msra.mxu0 %v1985
    %2067 = vmatpush.msra.mxu0 %v1983
    %2068 = vmatpush.msra.mxu0 %v1981
    %2069 = vmatpush.msra.mxu0 %v1979
    %2070 = vmatpush.msra.mxu0 %v1977
    %2071 = vmatpush.msra.mxu0 %v1975
    %2072 = vmatpush.msra.mxu0 %v1973
    %2073 = vmatpush.msra.mxu0 %v1971
    %2074 = vmatmul.f32.gmra.mxu0 %v1994
    %v2075 = vpop.f32.mrf.mxu0
    %v2076 = vadd.f32 %v1990, %v2075
    %2077 = vmatmul.f32.gmra.mxu0 %v1997
    %v2078 = vpop.f32.mrf.mxu0
    %v2079 = vadd.f32 %v1990, %v2078
    %2080 = vmatmul.f32.gmra.mxu0 %v2000
    %v2081 = vpop.f32.mrf.mxu0
    %v2082 = vadd.f32 %v1990, %v2081
    %2083 = vmatmul.f32.gmra.mxu0 %v2003
    %v2084 = vpop.f32.mrf.mxu0
    %v2085 = vadd.f32 %v1990, %v2084
    %2086 = vmatmul.f32.gmra.mxu0 %v2006
    %v2087 = vpop.f32.mrf.mxu0
    %v2088 = vadd.f32 %v1990, %v2087
    %2089 = vmatmul.f32.gmra.mxu0 %v2009
    %v2090 = vpop.f32.mrf.mxu0
    %v2091 = vadd.f32 %v1990, %v2090
    %2092 = vmatmul.f32.gmra.mxu0 %v2012
    %v2093 = vpop.f32.mrf.mxu0
    %v2094 = vadd.f32 %v1990, %v2093
    %2095 = vmatmul.f32.gmra.mxu0 %v2015
    %v2096 = vpop.f32.mrf.mxu0
    %v2097 = vadd.f32 %v1990, %v2096
    %2098 = vdwg.mxu0
    %2099 = vst [vmem:[#allocation3] sm:$0xff] %v2035
    %2100 = vst [vmem:[#allocation3 + $0x8] sm:$0xff] %v2076
    %2101 = vst [vmem:[#allocation3 + $0x10] sm:$0xff] %v2038
    %2102 = vst [vmem:[#allocation3 + $0x18] sm:$0xff] %v2079
    %2103 = vst [vmem:[#allocation3 + $0x20] sm:$0xff] %v2041
    %2104 = vst [vmem:[#allocation3 + $0x28] sm:$0xff] %v2082
    %2105 = vst [vmem:[#allocation3 + $0x30] sm:$0xff] %v2044
    %2106 = vst [vmem:[#allocation3 + $0x38] sm:$0xff] %v2085
    %2107 = vst [vmem:[#allocation3 + $0x40] sm:$0xff] %v2047
    %2108 = vst [vmem:[#allocation3 + $0x48] sm:$0xff] %v2088
    %2109 = vst [vmem:[#allocation3 + $0x50] sm:$0xff] %v2050
    %2110 = vst [vmem:[#allocation3 + $0x58] sm:$0xff] %v2091
    %2111 = vst [vmem:[#allocation3 + $0x60] sm:$0xff] %v2053
    %2112 = vst [vmem:[#allocation3 + $0x68] sm:$0xff] %v2094
    %2113 = vst [vmem:[#allocation3 + $0x70] sm:$0xff] %v2056
    %2114 = vst [vmem:[#allocation3 + $0x78] sm:$0xff] %v2097
    %s2115 = scalar_lea.vmem [#allocation7], 256
    %v2116 = vld [vmem:[%s2115] sm:$0xff]
    %v2117 = vld [vmem:[%s2115 + $0x8] sm:$0xff]
    %v2118 = vld [vmem:[%s2115 + $0x10] sm:$0xff]
    %v2119 = vld [vmem:[%s2115 + $0x18] sm:$0xff]
    %v2120 = vld [vmem:[%s2115 + $0x20] sm:$0xff]
    %v2121 = vld [vmem:[%s2115 + $0x28] sm:$0xff]
    %v2122 = vld [vmem:[%s2115 + $0x30] sm:$0xff]
    %v2123 = vld [vmem:[%s2115 + $0x38] sm:$0xff]
    %v2124 = vld [vmem:[%s2115 + $0x40] sm:$0xff]
    %v2125 = vld [vmem:[%s2115 + $0x48] sm:$0xff]
    %v2126 = vld [vmem:[%s2115 + $0x50] sm:$0xff]
    %v2127 = vld [vmem:[%s2115 + $0x58] sm:$0xff]
    %v2128 = vld [vmem:[%s2115 + $0x60] sm:$0xff]
    %v2129 = vld [vmem:[%s2115 + $0x68] sm:$0xff]
    %v2130 = vld [vmem:[%s2115 + $0x70] sm:$0xff]
    %v2131 = vld [vmem:[%s2115 + $0x78] sm:$0xff]
    %v2132 = vld [vmem:[#allocation3] sm:$0xff]
    %v2133 = vld [vmem:[#allocation3 + $0x8] sm:$0xff]
    %2134 = vmatpush.msra.mxu0 0.0
    %2135 = vmatpush.msra.mxu0 0.0
    %2136 = vmatpush.msra.mxu0 0.0
    %2137 = vmatpush.msra.mxu0 0.0
    %2138 = vmatpush.msra.mxu0 0.0
    %2139 = vmatpush.msra.mxu0 0.0
    %2140 = vmatpush.msra.mxu0 0.0
    %2141 = vmatpush.msra.mxu0 0.0
    %2142 = vmatpush.msra.mxu0 %v2130
    %2143 = vmatpush.msra.mxu0 %v2128
    %2144 = vmatpush.msra.mxu0 %v2126
    %2145 = vmatpush.msra.mxu0 %v2124
    %2146 = vmatpush.msra.mxu0 %v2122
    %2147 = vmatpush.msra.mxu0 %v2120
    %2148 = vmatpush.msra.mxu0 %v2118
    %2149 = vmatpush.msra.mxu0 %v2116
    %2150 = vmatmul.f32.gmra.mxu0 %v230
    %v2151 = vpop.f32.mrf.mxu0
    %v2152 = vadd.f32 %v2132, %v2151
    %2153 = vdwg.mxu0
    %2154 = vmatpush.msra.mxu0 0.0
    %2155 = vmatpush.msra.mxu0 0.0
    %2156 = vmatpush.msra.mxu0 0.0
    %2157 = vmatpush.msra.mxu0 0.0
    %2158 = vmatpush.msra.mxu0 0.0
    %2159 = vmatpush.msra.mxu0 0.0
    %2160 = vmatpush.msra.mxu0 0.0
    %2161 = vmatpush.msra.mxu0 0.0
    %2162 = vmatpush.msra.mxu0 %v2131
    %2163 = vmatpush.msra.mxu0 %v2129
    %2164 = vmatpush.msra.mxu0 %v2127
    %2165 = vmatpush.msra.mxu0 %v2125
    %2166 = vmatpush.msra.mxu0 %v2123
    %2167 = vmatpush.msra.mxu0 %v2121
    %2168 = vmatpush.msra.mxu0 %v2119
    %2169 = vmatpush.msra.mxu0 %v2117
    %2170 = vmatmul.f32.gmra.mxu0 %v230
    %v2171 = vpop.f32.mrf.mxu0
    %v2172 = vadd.f32 %v2133, %v2171
    %2173 = vdwg.mxu0
    %v2174 = vxor.u32 %v2152, 2147483648
    %v2175 = vxor.u32 %v2172, 2147483648
    %v2176 = vmul.f32 %v2174, 1.442695
    %v2177 = vpow.pop %v2176
    %v2178 = vmul.f32 %v2175, 1.442695
    %v2179 = vpow.pop %v2178
    %v2180 = vadd.f32 %v2177, 1.0
    %v2181 = vadd.f32 %v2179, 1.0
    %v2182 = vrcp.pop %v2180
    %v2183 = vmul.f32 %v2180, %v2182
    %v2184 = vsub.f32 1.0, %v2183
    %v2185 = vmul.f32 %v2182, %v2184
    %v2186 = vadd.f32 %v2182, %v2185
    %vm2187 = vweird.f32 %v2180
    %vm2188 = vweird.f32 %v2182
    %vm2189 = vmor %vm2187, %vm2188
    %v2190 = vsel %vm2189, %v2182, %v2186
    %v2191 = vand.u32 2147483647, %v2180
    %vm2192 = vcmp.eq.f32.partialorder %v2191, 8.507059e+37
    %v2193 = vand.u32 %v2180, 2147483648
    %v2194 = vor.u32 1.1754944e-38, %v2193
    %v2195 = vsel %vm2192, %v2194, %v2190
    %v2196 = vmul.f32 1.0, %v2195
    %v2197 = vrcp.pop %v2181
    %v2198 = vmul.f32 %v2181, %v2197
    %v2199 = vsub.f32 1.0, %v2198
    %v2200 = vmul.f32 %v2197, %v2199
    %v2201 = vadd.f32 %v2197, %v2200
    %vm2202 = vweird.f32 %v2181
    %vm2203 = vweird.f32 %v2197
    %vm2204 = vmor %vm2202, %vm2203
    %v2205 = vsel %vm2204, %v2197, %v2201
    %v2206 = vand.u32 2147483647, %v2181
    %vm2207 = vcmp.eq.f32.partialorder %v2206, 8.507059e+37
    %v2208 = vand.u32 %v2181, 2147483648
    %v2209 = vor.u32 1.1754944e-38, %v2208
    %v2210 = vsel %vm2207, %v2209, %v2205
    %v2211 = vmul.f32 1.0, %v2210
    %v2212 = vtanh.pop %v2172
    %v2213 = vmul.f32 %v2196, 0.0
    %v2214 = vmul.f32 %v2196, %v2212
    %2216 = vrot.lane.b32.xlu0 %v2214, 64
    %v2217 = vpop.permute.xlu0 %2216
    %v2219 = vadd.f32 %v2213, %v2217
    %v2220 = vtanh.pop %v2219
    %v2221 = vmul.f32 %v2211, %v2220
    %2223 = vrot.lane.b32.xlu0 %v2221, 64
    %v2224 = vpop.permute.xlu0 %2223
    %2226 = vst.msk [vmem:[#allocation2] sm:$0xff] %vm228, %v2224
    %v2227 = vld [vmem:[%s325] sm:$0xff]
    %v2228 = vld [vmem:[%s325 + $0x8] sm:$0xff]
    %v2229 = vsel %vm228, %v2224, 0
    %2231 = vmatpush.msra.mxu0 0.0
    %2232 = vmatpush.msra.mxu0 0.0
    %2233 = vmatpush.msra.mxu0 0.0
    %2234 = vmatpush.msra.mxu0 0.0
    %2235 = vmatpush.msra.mxu0 0.0
    %2236 = vmatpush.msra.mxu0 0.0
    %2237 = vmatpush.msra.mxu0 0.0
    %2238 = vmatpush.msra.mxu0 0.0
    %2239 = vmatpush.msra.mxu0 %v2130
    %2240 = vmatpush.msra.mxu0 %v2128
    %2241 = vmatpush.msra.mxu0 %v2126
    %2242 = vmatpush.msra.mxu0 %v2124
    %2243 = vmatpush.msra.mxu0 %v2122
    %2244 = vmatpush.msra.mxu0 %v2120
    %2245 = vmatpush.msra.mxu0 %v2118
    %2246 = vmatpush.msra.mxu0 %v2116
    %2247 = vmatmul.f32.gmra.mxu0 %v2229
    %v2248 = vpop.f32.mrf.mxu0
    %v2249 = vadd.f32 %v2227, %v2248
    %2250 = vdwg.mxu0
    %2251 = vmatpush.msra.mxu0 0.0
    %2252 = vmatpush.msra.mxu0 0.0
    %2253 = vmatpush.msra.mxu0 0.0
    %2254 = vmatpush.msra.mxu0 0.0
    %2255 = vmatpush.msra.mxu0 0.0
    %2256 = vmatpush.msra.mxu0 0.0
    %2257 = vmatpush.msra.mxu0 0.0
    %2258 = vmatpush.msra.mxu0 0.0
    %2259 = vmatpush.msra.mxu0 %v2131
    %2260 = vmatpush.msra.mxu0 %v2129
    %2261 = vmatpush.msra.mxu0 %v2127
    %2262 = vmatpush.msra.mxu0 %v2125
    %2263 = vmatpush.msra.mxu0 %v2123
    %2264 = vmatpush.msra.mxu0 %v2121
    %2265 = vmatpush.msra.mxu0 %v2119
    %2266 = vmatpush.msra.mxu0 %v2117
    %2267 = vmatmul.f32.gmra.mxu0 %v2229
    %v2268 = vpop.f32.mrf.mxu0
    %v2269 = vadd.f32 %v2228, %v2268
    %2270 = vdwg.mxu0
    %v2271 = vxor.u32 %v2249, 2147483648
    %v2272 = vxor.u32 %v2269, 2147483648
    %v2273 = vmul.f32 %v2271, 1.442695
    %v2274 = vpow.pop %v2273
    %v2275 = vmul.f32 %v2272, 1.442695
    %v2276 = vpow.pop %v2275
    %v2277 = vadd.f32 %v2274, 1.0
    %v2278 = vadd.f32 %v2276, 1.0
    %v2279 = vrcp.pop %v2277
    %v2280 = vmul.f32 %v2277, %v2279
    %v2281 = vsub.f32 1.0, %v2280
    %v2282 = vmul.f32 %v2279, %v2281
    %v2283 = vadd.f32 %v2279, %v2282
    %vm2284 = vweird.f32 %v2277
    %vm2285 = vweird.f32 %v2279
    %vm2286 = vmor %vm2284, %vm2285
    %v2287 = vsel %vm2286, %v2279, %v2283
    %v2288 = vand.u32 2147483647, %v2277
    %vm2289 = vcmp.eq.f32.partialorder %v2288, 8.507059e+37
    %v2290 = vand.u32 %v2277, 2147483648
    %v2291 = vor.u32 1.1754944e-38, %v2290
    %v2292 = vsel %vm2289, %v2291, %v2287
    %v2293 = vmul.f32 1.0, %v2292
    %v2294 = vrcp.pop %v2278
    %v2295 = vmul.f32 %v2278, %v2294
    %v2296 = vsub.f32 1.0, %v2295
    %v2297 = vmul.f32 %v2294, %v2296
    %v2298 = vadd.f32 %v2294, %v2297
    %vm2299 = vweird.f32 %v2278
    %vm2300 = vweird.f32 %v2294
    %vm2301 = vmor %vm2299, %vm2300
    %v2302 = vsel %vm2301, %v2294, %v2298
    %v2303 = vand.u32 2147483647, %v2278
    %vm2304 = vcmp.eq.f32.partialorder %v2303, 8.507059e+37
    %v2305 = vand.u32 %v2278, 2147483648
    %v2306 = vor.u32 1.1754944e-38, %v2305
    %v2307 = vsel %vm2304, %v2306, %v2302
    %v2308 = vmul.f32 1.0, %v2307
    %v2309 = vtanh.pop %v2269
    %v2310 = vmul.f32 %v2293, %v2219
    %v2311 = vmul.f32 %v2293, %v2309
    %2313 = vrot.lane.b32.xlu0 %v2311, 64
    %v2314 = vpop.permute.xlu0 %2313
    %v2316 = vadd.f32 %v2310, %v2314
    %v2317 = vtanh.pop %v2316
    %v2318 = vmul.f32 %v2308, %v2317
    %2320 = vrot.lane.b32.xlu0 %v2318, 64
    %v2321 = vpop.permute.xlu0 %2320
    %2323 = vst.msk [vmem:[%s422] sm:$0xff] %vm228, %v2321
    %v2324 = vld [vmem:[%s424] sm:$0xff]
    %v2325 = vld [vmem:[%s424 + $0x8] sm:$0xff]
    %v2326 = vsel %vm228, %v2321, 0
    %2328 = vmatpush.msra.mxu0 0.0
    %2329 = vmatpush.msra.mxu0 0.0
    %2330 = vmatpush.msra.mxu0 0.0
    %2331 = vmatpush.msra.mxu0 0.0
    %2332 = vmatpush.msra.mxu0 0.0
    %2333 = vmatpush.msra.mxu0 0.0
    %2334 = vmatpush.msra.mxu0 0.0
    %2335 = vmatpush.msra.mxu0 0.0
    %2336 = vmatpush.msra.mxu0 %v2130
    %2337 = vmatpush.msra.mxu0 %v2128
    %2338 = vmatpush.msra.mxu0 %v2126
    %2339 = vmatpush.msra.mxu0 %v2124
    %2340 = vmatpush.msra.mxu0 %v2122
    %2341 = vmatpush.msra.mxu0 %v2120
    %2342 = vmatpush.msra.mxu0 %v2118
    %2343 = vmatpush.msra.mxu0 %v2116
    %2344 = vmatmul.f32.gmra.mxu0 %v2326
    %v2345 = vpop.f32.mrf.mxu0
    %v2346 = vadd.f32 %v2324, %v2345
    %2347 = vdwg.mxu0
    %2348 = vmatpush.msra.mxu0 0.0
    %2349 = vmatpush.msra.mxu0 0.0
    %2350 = vmatpush.msra.mxu0 0.0
    %2351 = vmatpush.msra.mxu0 0.0
    %2352 = vmatpush.msra.mxu0 0.0
    %2353 = vmatpush.msra.mxu0 0.0
    %2354 = vmatpush.msra.mxu0 0.0
    %2355 = vmatpush.msra.mxu0 0.0
    %2356 = vmatpush.msra.mxu0 %v2131
    %2357 = vmatpush.msra.mxu0 %v2129
    %2358 = vmatpush.msra.mxu0 %v2127
    %2359 = vmatpush.msra.mxu0 %v2125
    %2360 = vmatpush.msra.mxu0 %v2123
    %2361 = vmatpush.msra.mxu0 %v2121
    %2362 = vmatpush.msra.mxu0 %v2119
    %2363 = vmatpush.msra.mxu0 %v2117
    %2364 = vmatmul.f32.gmra.mxu0 %v2326
    %v2365 = vpop.f32.mrf.mxu0
    %v2366 = vadd.f32 %v2325, %v2365
    %2367 = vdwg.mxu0
    %v2368 = vxor.u32 %v2346, 2147483648
    %v2369 = vxor.u32 %v2366, 2147483648
    %v2370 = vmul.f32 %v2368, 1.442695
    %v2371 = vpow.pop %v2370
    %v2372 = vmul.f32 %v2369, 1.442695
    %v2373 = vpow.pop %v2372
    %v2374 = vadd.f32 %v2371, 1.0
    %v2375 = vadd.f32 %v2373, 1.0
    %v2376 = vrcp.pop %v2374
    %v2377 = vmul.f32 %v2374, %v2376
    %v2378 = vsub.f32 1.0, %v2377
    %v2379 = vmul.f32 %v2376, %v2378
    %v2380 = vadd.f32 %v2376, %v2379
    %vm2381 = vweird.f32 %v2374
    %vm2382 = vweird.f32 %v2376
    %vm2383 = vmor %vm2381, %vm2382
    %v2384 = vsel %vm2383, %v2376, %v2380
    %v2385 = vand.u32 2147483647, %v2374
    %vm2386 = vcmp.eq.f32.partialorder %v2385, 8.507059e+37
    %v2387 = vand.u32 %v2374, 2147483648
    %v2388 = vor.u32 1.1754944e-38, %v2387
    %v2389 = vsel %vm2386, %v2388, %v2384
    %v2390 = vmul.f32 1.0, %v2389
    %v2391 = vrcp.pop %v2375
    %v2392 = vmul.f32 %v2375, %v2391
    %v2393 = vsub.f32 1.0, %v2392
    %v2394 = vmul.f32 %v2391, %v2393
    %v2395 = vadd.f32 %v2391, %v2394
    %vm2396 = vweird.f32 %v2375
    %vm2397 = vweird.f32 %v2391
    %vm2398 = vmor %vm2396, %vm2397
    %v2399 = vsel %vm2398, %v2391, %v2395
    %v2400 = vand.u32 2147483647, %v2375
    %vm2401 = vcmp.eq.f32.partialorder %v2400, 8.507059e+37
    %v2402 = vand.u32 %v2375, 2147483648
    %v2403 = vor.u32 1.1754944e-38, %v2402
    %v2404 = vsel %vm2401, %v2403, %v2399
    %v2405 = vmul.f32 1.0, %v2404
    %v2406 = vtanh.pop %v2366
    %v2407 = vmul.f32 %v2390, %v2316
    %v2408 = vmul.f32 %v2390, %v2406
    %2410 = vrot.lane.b32.xlu0 %v2408, 64
    %v2411 = vpop.permute.xlu0 %2410
    %v2413 = vadd.f32 %v2407, %v2411
    %v2414 = vtanh.pop %v2413
    %v2415 = vmul.f32 %v2405, %v2414
    %2417 = vrot.lane.b32.xlu0 %v2415, 64
    %v2418 = vpop.permute.xlu0 %2417
    %2420 = vst.msk [vmem:[%s521] sm:$0xff] %vm228, %v2418
    %v2421 = vld [vmem:[%s523] sm:$0xff]
    %v2422 = vld [vmem:[%s523 + $0x8] sm:$0xff]
    %v2423 = vsel %vm228, %v2418, 0
    %2425 = vmatpush.msra.mxu0 0.0
    %2426 = vmatpush.msra.mxu0 0.0
    %2427 = vmatpush.msra.mxu0 0.0
    %2428 = vmatpush.msra.mxu0 0.0
    %2429 = vmatpush.msra.mxu0 0.0
    %2430 = vmatpush.msra.mxu0 0.0
    %2431 = vmatpush.msra.mxu0 0.0
    %2432 = vmatpush.msra.mxu0 0.0
    %2433 = vmatpush.msra.mxu0 %v2130
    %2434 = vmatpush.msra.mxu0 %v2128
    %2435 = vmatpush.msra.mxu0 %v2126
    %2436 = vmatpush.msra.mxu0 %v2124
    %2437 = vmatpush.msra.mxu0 %v2122
    %2438 = vmatpush.msra.mxu0 %v2120
    %2439 = vmatpush.msra.mxu0 %v2118
    %2440 = vmatpush.msra.mxu0 %v2116
    %2441 = vmatmul.f32.gmra.mxu0 %v2423
    %v2442 = vpop.f32.mrf.mxu0
    %v2443 = vadd.f32 %v2421, %v2442
    %2444 = vdwg.mxu0
    %2445 = vmatpush.msra.mxu0 0.0
    %2446 = vmatpush.msra.mxu0 0.0
    %2447 = vmatpush.msra.mxu0 0.0
    %2448 = vmatpush.msra.mxu0 0.0
    %2449 = vmatpush.msra.mxu0 0.0
    %2450 = vmatpush.msra.mxu0 0.0
    %2451 = vmatpush.msra.mxu0 0.0
    %2452 = vmatpush.msra.mxu0 0.0
    %2453 = vmatpush.msra.mxu0 %v2131
    %2454 = vmatpush.msra.mxu0 %v2129
    %2455 = vmatpush.msra.mxu0 %v2127
    %2456 = vmatpush.msra.mxu0 %v2125
    %2457 = vmatpush.msra.mxu0 %v2123
    %2458 = vmatpush.msra.mxu0 %v2121
    %2459 = vmatpush.msra.mxu0 %v2119
    %2460 = vmatpush.msra.mxu0 %v2117
    %2461 = vmatmul.f32.gmra.mxu0 %v2423
    %v2462 = vpop.f32.mrf.mxu0
    %v2463 = vadd.f32 %v2422, %v2462
    %2464 = vdwg.mxu0
    %v2465 = vxor.u32 %v2443, 2147483648
    %v2466 = vxor.u32 %v2463, 2147483648
    %v2467 = vmul.f32 %v2465, 1.442695
    %v2468 = vpow.pop %v2467
    %v2469 = vmul.f32 %v2466, 1.442695
    %v2470 = vpow.pop %v2469
    %v2471 = vadd.f32 %v2468, 1.0
    %v2472 = vadd.f32 %v2470, 1.0
    %v2473 = vrcp.pop %v2471
    %v2474 = vmul.f32 %v2471, %v2473
    %v2475 = vsub.f32 1.0, %v2474
    %v2476 = vmul.f32 %v2473, %v2475
    %v2477 = vadd.f32 %v2473, %v2476
    %vm2478 = vweird.f32 %v2471
    %vm2479 = vweird.f32 %v2473
    %vm2480 = vmor %vm2478, %vm2479
    %v2481 = vsel %vm2480, %v2473, %v2477
    %v2482 = vand.u32 2147483647, %v2471
    %vm2483 = vcmp.eq.f32.partialorder %v2482, 8.507059e+37
    %v2484 = vand.u32 %v2471, 2147483648
    %v2485 = vor.u32 1.1754944e-38, %v2484
    %v2486 = vsel %vm2483, %v2485, %v2481
    %v2487 = vmul.f32 1.0, %v2486
    %v2488 = vrcp.pop %v2472
    %v2489 = vmul.f32 %v2472, %v2488
    %v2490 = vsub.f32 1.0, %v2489
    %v2491 = vmul.f32 %v2488, %v2490
    %v2492 = vadd.f32 %v2488, %v2491
    %vm2493 = vweird.f32 %v2472
    %vm2494 = vweird.f32 %v2488
    %vm2495 = vmor %vm2493, %vm2494
    %v2496 = vsel %vm2495, %v2488, %v2492
    %v2497 = vand.u32 2147483647, %v2472
    %vm2498 = vcmp.eq.f32.partialorder %v2497, 8.507059e+37
    %v2499 = vand.u32 %v2472, 2147483648
    %v2500 = vor.u32 1.1754944e-38, %v2499
    %v2501 = vsel %vm2498, %v2500, %v2496
    %v2502 = vmul.f32 1.0, %v2501
    %v2503 = vtanh.pop %v2463
    %v2504 = vmul.f32 %v2487, %v2413
    %v2505 = vmul.f32 %v2487, %v2503
    %2507 = vrot.lane.b32.xlu0 %v2505, 64
    %v2508 = vpop.permute.xlu0 %2507
    %v2510 = vadd.f32 %v2504, %v2508
    %v2511 = vtanh.pop %v2510
    %v2512 = vmul.f32 %v2502, %v2511
    %2514 = vrot.lane.b32.xlu0 %v2512, 64
    %v2515 = vpop.permute.xlu0 %2514
    %2517 = vst.msk [vmem:[%s620] sm:$0xff] %vm228, %v2515
    %v2518 = vld [vmem:[%s622] sm:$0xff]
    %v2519 = vld [vmem:[%s622 + $0x8] sm:$0xff]
    %v2520 = vsel %vm228, %v2515, 0
    %2522 = vmatpush.msra.mxu0 0.0
    %2523 = vmatpush.msra.mxu0 0.0
    %2524 = vmatpush.msra.mxu0 0.0
    %2525 = vmatpush.msra.mxu0 0.0
    %2526 = vmatpush.msra.mxu0 0.0
    %2527 = vmatpush.msra.mxu0 0.0
    %2528 = vmatpush.msra.mxu0 0.0
    %2529 = vmatpush.msra.mxu0 0.0
    %2530 = vmatpush.msra.mxu0 %v2130
    %2531 = vmatpush.msra.mxu0 %v2128
    %2532 = vmatpush.msra.mxu0 %v2126
    %2533 = vmatpush.msra.mxu0 %v2124
    %2534 = vmatpush.msra.mxu0 %v2122
    %2535 = vmatpush.msra.mxu0 %v2120
    %2536 = vmatpush.msra.mxu0 %v2118
    %2537 = vmatpush.msra.mxu0 %v2116
    %2538 = vmatmul.f32.gmra.mxu0 %v2520
    %v2539 = vpop.f32.mrf.mxu0
    %v2540 = vadd.f32 %v2518, %v2539
    %2541 = vdwg.mxu0
    %2542 = vmatpush.msra.mxu0 0.0
    %2543 = vmatpush.msra.mxu0 0.0
    %2544 = vmatpush.msra.mxu0 0.0
    %2545 = vmatpush.msra.mxu0 0.0
    %2546 = vmatpush.msra.mxu0 0.0
    %2547 = vmatpush.msra.mxu0 0.0
    %2548 = vmatpush.msra.mxu0 0.0
    %2549 = vmatpush.msra.mxu0 0.0
    %2550 = vmatpush.msra.mxu0 %v2131
    %2551 = vmatpush.msra.mxu0 %v2129
    %2552 = vmatpush.msra.mxu0 %v2127
    %2553 = vmatpush.msra.mxu0 %v2125
    %2554 = vmatpush.msra.mxu0 %v2123
    %2555 = vmatpush.msra.mxu0 %v2121
    %2556 = vmatpush.msra.mxu0 %v2119
    %2557 = vmatpush.msra.mxu0 %v2117
    %2558 = vmatmul.f32.gmra.mxu0 %v2520
    %v2559 = vpop.f32.mrf.mxu0
    %v2560 = vadd.f32 %v2519, %v2559
    %2561 = vdwg.mxu0
    %v2562 = vxor.u32 %v2540, 2147483648
    %v2563 = vxor.u32 %v2560, 2147483648
    %v2564 = vmul.f32 %v2562, 1.442695
    %v2565 = vpow.pop %v2564
    %v2566 = vmul.f32 %v2563, 1.442695
    %v2567 = vpow.pop %v2566
    %v2568 = vadd.f32 %v2565, 1.0
    %v2569 = vadd.f32 %v2567, 1.0
    %v2570 = vrcp.pop %v2568
    %v2571 = vmul.f32 %v2568, %v2570
    %v2572 = vsub.f32 1.0, %v2571
    %v2573 = vmul.f32 %v2570, %v2572
    %v2574 = vadd.f32 %v2570, %v2573
    %vm2575 = vweird.f32 %v2568
    %vm2576 = vweird.f32 %v2570
    %vm2577 = vmor %vm2575, %vm2576
    %v2578 = vsel %vm2577, %v2570, %v2574
    %v2579 = vand.u32 2147483647, %v2568
    %vm2580 = vcmp.eq.f32.partialorder %v2579, 8.507059e+37
    %v2581 = vand.u32 %v2568, 2147483648
    %v2582 = vor.u32 1.1754944e-38, %v2581
    %v2583 = vsel %vm2580, %v2582, %v2578
    %v2584 = vmul.f32 1.0, %v2583
    %v2585 = vrcp.pop %v2569
    %v2586 = vmul.f32 %v2569, %v2585
    %v2587 = vsub.f32 1.0, %v2586
    %v2588 = vmul.f32 %v2585, %v2587
    %v2589 = vadd.f32 %v2585, %v2588
    %vm2590 = vweird.f32 %v2569
    %vm2591 = vweird.f32 %v2585
    %vm2592 = vmor %vm2590, %vm2591
    %v2593 = vsel %vm2592, %v2585, %v2589
    %v2594 = vand.u32 2147483647, %v2569
    %vm2595 = vcmp.eq.f32.partialorder %v2594, 8.507059e+37
    %v2596 = vand.u32 %v2569, 2147483648
    %v2597 = vor.u32 1.1754944e-38, %v2596
    %v2598 = vsel %vm2595, %v2597, %v2593
    %v2599 = vmul.f32 1.0, %v2598
    %v2600 = vtanh.pop %v2560
    %v2601 = vmul.f32 %v2584, %v2510
    %v2602 = vmul.f32 %v2584, %v2600
    %2604 = vrot.lane.b32.xlu0 %v2602, 64
    %v2605 = vpop.permute.xlu0 %2604
    %v2607 = vadd.f32 %v2601, %v2605
    %v2608 = vtanh.pop %v2607
    %v2609 = vmul.f32 %v2599, %v2608
    %2611 = vrot.lane.b32.xlu0 %v2609, 64
    %v2612 = vpop.permute.xlu0 %2611
    %2614 = vst.msk [vmem:[%s719] sm:$0xff] %vm228, %v2612
    %v2615 = vld [vmem:[%s721] sm:$0xff]
    %v2616 = vld [vmem:[%s721 + $0x8] sm:$0xff]
    %v2617 = vsel %vm228, %v2612, 0
    %2619 = vmatpush.msra.mxu0 0.0
    %2620 = vmatpush.msra.mxu0 0.0
    %2621 = vmatpush.msra.mxu0 0.0
    %2622 = vmatpush.msra.mxu0 0.0
    %2623 = vmatpush.msra.mxu0 0.0
    %2624 = vmatpush.msra.mxu0 0.0
    %2625 = vmatpush.msra.mxu0 0.0
    %2626 = vmatpush.msra.mxu0 0.0
    %2627 = vmatpush.msra.mxu0 %v2130
    %2628 = vmatpush.msra.mxu0 %v2128
    %2629 = vmatpush.msra.mxu0 %v2126
    %2630 = vmatpush.msra.mxu0 %v2124
    %2631 = vmatpush.msra.mxu0 %v2122
    %2632 = vmatpush.msra.mxu0 %v2120
    %2633 = vmatpush.msra.mxu0 %v2118
    %2634 = vmatpush.msra.mxu0 %v2116
    %2635 = vmatmul.f32.gmra.mxu0 %v2617
    %v2636 = vpop.f32.mrf.mxu0
    %v2637 = vadd.f32 %v2615, %v2636
    %2638 = vdwg.mxu0
    %2639 = vmatpush.msra.mxu0 0.0
    %2640 = vmatpush.msra.mxu0 0.0
    %2641 = vmatpush.msra.mxu0 0.0
    %2642 = vmatpush.msra.mxu0 0.0
    %2643 = vmatpush.msra.mxu0 0.0
    %2644 = vmatpush.msra.mxu0 0.0
    %2645 = vmatpush.msra.mxu0 0.0
    %2646 = vmatpush.msra.mxu0 0.0
    %2647 = vmatpush.msra.mxu0 %v2131
    %2648 = vmatpush.msra.mxu0 %v2129
    %2649 = vmatpush.msra.mxu0 %v2127
    %2650 = vmatpush.msra.mxu0 %v2125
    %2651 = vmatpush.msra.mxu0 %v2123
    %2652 = vmatpush.msra.mxu0 %v2121
    %2653 = vmatpush.msra.mxu0 %v2119
    %2654 = vmatpush.msra.mxu0 %v2117
    %2655 = vmatmul.f32.gmra.mxu0 %v2617
    %v2656 = vpop.f32.mrf.mxu0
    %v2657 = vadd.f32 %v2616, %v2656
    %2658 = vdwg.mxu0
    %v2659 = vxor.u32 %v2637, 2147483648
    %v2660 = vxor.u32 %v2657, 2147483648
    %v2661 = vmul.f32 %v2659, 1.442695
    %v2662 = vpow.pop %v2661
    %v2663 = vmul.f32 %v2660, 1.442695
    %v2664 = vpow.pop %v2663
    %v2665 = vadd.f32 %v2662, 1.0
    %v2666 = vadd.f32 %v2664, 1.0
    %v2667 = vrcp.pop %v2665
    %v2668 = vmul.f32 %v2665, %v2667
    %v2669 = vsub.f32 1.0, %v2668
    %v2670 = vmul.f32 %v2667, %v2669
    %v2671 = vadd.f32 %v2667, %v2670
    %vm2672 = vweird.f32 %v2665
    %vm2673 = vweird.f32 %v2667
    %vm2674 = vmor %vm2672, %vm2673
    %v2675 = vsel %vm2674, %v2667, %v2671
    %v2676 = vand.u32 2147483647, %v2665
    %vm2677 = vcmp.eq.f32.partialorder %v2676, 8.507059e+37
    %v2678 = vand.u32 %v2665, 2147483648
    %v2679 = vor.u32 1.1754944e-38, %v2678
    %v2680 = vsel %vm2677, %v2679, %v2675
    %v2681 = vmul.f32 1.0, %v2680
    %v2682 = vrcp.pop %v2666
    %v2683 = vmul.f32 %v2666, %v2682
    %v2684 = vsub.f32 1.0, %v2683
    %v2685 = vmul.f32 %v2682, %v2684
    %v2686 = vadd.f32 %v2682, %v2685
    %vm2687 = vweird.f32 %v2666
    %vm2688 = vweird.f32 %v2682
    %vm2689 = vmor %vm2687, %vm2688
    %v2690 = vsel %vm2689, %v2682, %v2686
    %v2691 = vand.u32 2147483647, %v2666
    %vm2692 = vcmp.eq.f32.partialorder %v2691, 8.507059e+37
    %v2693 = vand.u32 %v2666, 2147483648
    %v2694 = vor.u32 1.1754944e-38, %v2693
    %v2695 = vsel %vm2692, %v2694, %v2690
    %v2696 = vmul.f32 1.0, %v2695
    %v2697 = vtanh.pop %v2657
    %v2698 = vmul.f32 %v2681, %v2607
    %v2699 = vmul.f32 %v2681, %v2697
    %2701 = vrot.lane.b32.xlu0 %v2699, 64
    %v2702 = vpop.permute.xlu0 %2701
    %v2704 = vadd.f32 %v2698, %v2702
    %v2705 = vtanh.pop %v2704
    %v2706 = vmul.f32 %v2696, %v2705
    %2708 = vrot.lane.b32.xlu0 %v2706, 64
    %v2709 = vpop.permute.xlu0 %2708
    %2711 = vst.msk [vmem:[%s818] sm:$0xff] %vm228, %v2709
    %v2712 = vld [vmem:[%s820] sm:$0xff]
    %v2713 = vld [vmem:[%s820 + $0x8] sm:$0xff]
    %v2714 = vsel %vm228, %v2709, 0
    %2716 = vmatpush.msra.mxu0 0.0
    %2717 = vmatpush.msra.mxu0 0.0
    %2718 = vmatpush.msra.mxu0 0.0
    %2719 = vmatpush.msra.mxu0 0.0
    %2720 = vmatpush.msra.mxu0 0.0
    %2721 = vmatpush.msra.mxu0 0.0
    %2722 = vmatpush.msra.mxu0 0.0
    %2723 = vmatpush.msra.mxu0 0.0
    %2724 = vmatpush.msra.mxu0 %v2130
    %2725 = vmatpush.msra.mxu0 %v2128
    %2726 = vmatpush.msra.mxu0 %v2126
    %2727 = vmatpush.msra.mxu0 %v2124
    %2728 = vmatpush.msra.mxu0 %v2122
    %2729 = vmatpush.msra.mxu0 %v2120
    %2730 = vmatpush.msra.mxu0 %v2118
    %2731 = vmatpush.msra.mxu0 %v2116
    %2732 = vmatmul.f32.gmra.mxu0 %v2714
    %v2733 = vpop.f32.mrf.mxu0
    %v2734 = vadd.f32 %v2712, %v2733
    %2735 = vdwg.mxu0
    %2736 = vmatpush.msra.mxu0 0.0
    %2737 = vmatpush.msra.mxu0 0.0
    %2738 = vmatpush.msra.mxu0 0.0
    %2739 = vmatpush.msra.mxu0 0.0
    %2740 = vmatpush.msra.mxu0 0.0
    %2741 = vmatpush.msra.mxu0 0.0
    %2742 = vmatpush.msra.mxu0 0.0
    %2743 = vmatpush.msra.mxu0 0.0
    %2744 = vmatpush.msra.mxu0 %v2131
    %2745 = vmatpush.msra.mxu0 %v2129
    %2746 = vmatpush.msra.mxu0 %v2127
    %2747 = vmatpush.msra.mxu0 %v2125
    %2748 = vmatpush.msra.mxu0 %v2123
    %2749 = vmatpush.msra.mxu0 %v2121
    %2750 = vmatpush.msra.mxu0 %v2119
    %2751 = vmatpush.msra.mxu0 %v2117
    %2752 = vmatmul.f32.gmra.mxu0 %v2714
    %v2753 = vpop.f32.mrf.mxu0
    %v2754 = vadd.f32 %v2713, %v2753
    %2755 = vdwg.mxu0
    %v2756 = vxor.u32 %v2734, 2147483648
    %v2757 = vxor.u32 %v2754, 2147483648
    %v2758 = vmul.f32 %v2756, 1.442695
    %v2759 = vpow.pop %v2758
    %v2760 = vmul.f32 %v2757, 1.442695
    %v2761 = vpow.pop %v2760
    %v2762 = vadd.f32 %v2759, 1.0
    %v2763 = vadd.f32 %v2761, 1.0
    %v2764 = vrcp.pop %v2762
    %v2765 = vmul.f32 %v2762, %v2764
    %v2766 = vsub.f32 1.0, %v2765
    %v2767 = vmul.f32 %v2764, %v2766
    %v2768 = vadd.f32 %v2764, %v2767
    %vm2769 = vweird.f32 %v2762
    %vm2770 = vweird.f32 %v2764
    %vm2771 = vmor %vm2769, %vm2770
    %v2772 = vsel %vm2771, %v2764, %v2768
    %v2773 = vand.u32 2147483647, %v2762
    %vm2774 = vcmp.eq.f32.partialorder %v2773, 8.507059e+37
    %v2775 = vand.u32 %v2762, 2147483648
    %v2776 = vor.u32 1.1754944e-38, %v2775
    %v2777 = vsel %vm2774, %v2776, %v2772
    %v2778 = vmul.f32 1.0, %v2777
    %v2779 = vrcp.pop %v2763
    %v2780 = vmul.f32 %v2763, %v2779
    %v2781 = vsub.f32 1.0, %v2780
    %v2782 = vmul.f32 %v2779, %v2781
    %v2783 = vadd.f32 %v2779, %v2782
    %vm2784 = vweird.f32 %v2763
    %vm2785 = vweird.f32 %v2779
    %vm2786 = vmor %vm2784, %vm2785
    %v2787 = vsel %vm2786, %v2779, %v2783
    %v2788 = vand.u32 2147483647, %v2763
    %vm2789 = vcmp.eq.f32.partialorder %v2788, 8.507059e+37
    %v2790 = vand.u32 %v2763, 2147483648
    %v2791 = vor.u32 1.1754944e-38, %v2790
    %v2792 = vsel %vm2789, %v2791, %v2787
    %v2793 = vmul.f32 1.0, %v2792
    %v2794 = vtanh.pop %v2754
    %v2795 = vmul.f32 %v2778, %v2704
    %v2796 = vmul.f32 %v2778, %v2794
    %2798 = vrot.lane.b32.xlu0 %v2796, 64
    %v2799 = vpop.permute.xlu0 %2798
    %v2801 = vadd.f32 %v2795, %v2799
    %v2802 = vtanh.pop %v2801
    %v2803 = vmul.f32 %v2793, %v2802
    %2805 = vrot.lane.b32.xlu0 %v2803, 64
    %v2806 = vpop.permute.xlu0 %2805
    %2808 = vst.msk [vmem:[%s917] sm:$0xff] %vm228, %v2806
    %v2809 = vld [vmem:[%s919] sm:$0xff]
    %v2810 = vld [vmem:[%s919 + $0x8] sm:$0xff]
    %v2811 = vsel %vm228, %v2806, 0
    %2813 = vmatpush.msra.mxu0 0.0
    %2814 = vmatpush.msra.mxu0 0.0
    %2815 = vmatpush.msra.mxu0 0.0
    %2816 = vmatpush.msra.mxu0 0.0
    %2817 = vmatpush.msra.mxu0 0.0
    %2818 = vmatpush.msra.mxu0 0.0
    %2819 = vmatpush.msra.mxu0 0.0
    %2820 = vmatpush.msra.mxu0 0.0
    %2821 = vmatpush.msra.mxu0 %v2130
    %2822 = vmatpush.msra.mxu0 %v2128
    %2823 = vmatpush.msra.mxu0 %v2126
    %2824 = vmatpush.msra.mxu0 %v2124
    %2825 = vmatpush.msra.mxu0 %v2122
    %2826 = vmatpush.msra.mxu0 %v2120
    %2827 = vmatpush.msra.mxu0 %v2118
    %2828 = vmatpush.msra.mxu0 %v2116
    %2829 = vmatmul.f32.gmra.mxu0 %v2811
    %v2830 = vpop.f32.mrf.mxu0
    %v2831 = vadd.f32 %v2809, %v2830
    %2832 = vdwg.mxu0
    %2833 = vmatpush.msra.mxu0 0.0
    %2834 = vmatpush.msra.mxu0 0.0
    %2835 = vmatpush.msra.mxu0 0.0
    %2836 = vmatpush.msra.mxu0 0.0
    %2837 = vmatpush.msra.mxu0 0.0
    %2838 = vmatpush.msra.mxu0 0.0
    %2839 = vmatpush.msra.mxu0 0.0
    %2840 = vmatpush.msra.mxu0 0.0
    %2841 = vmatpush.msra.mxu0 %v2131
    %2842 = vmatpush.msra.mxu0 %v2129
    %2843 = vmatpush.msra.mxu0 %v2127
    %2844 = vmatpush.msra.mxu0 %v2125
    %2845 = vmatpush.msra.mxu0 %v2123
    %2846 = vmatpush.msra.mxu0 %v2121
    %2847 = vmatpush.msra.mxu0 %v2119
    %2848 = vmatpush.msra.mxu0 %v2117
    %2849 = vmatmul.f32.gmra.mxu0 %v2811
    %v2850 = vpop.f32.mrf.mxu0
    %v2851 = vadd.f32 %v2810, %v2850
    %2852 = vdwg.mxu0
    %v2853 = vxor.u32 %v2831, 2147483648
    %v2854 = vxor.u32 %v2851, 2147483648
    %v2855 = vmul.f32 %v2853, 1.442695
    %v2856 = vpow.pop %v2855
    %v2857 = vmul.f32 %v2854, 1.442695
    %v2858 = vpow.pop %v2857
    %v2859 = vadd.f32 %v2856, 1.0
    %v2860 = vadd.f32 %v2858, 1.0
    %v2861 = vrcp.pop %v2859
    %v2862 = vmul.f32 %v2859, %v2861
    %v2863 = vsub.f32 1.0, %v2862
    %v2864 = vmul.f32 %v2861, %v2863
    %v2865 = vadd.f32 %v2861, %v2864
    %vm2866 = vweird.f32 %v2859
    %vm2867 = vweird.f32 %v2861
    %vm2868 = vmor %vm2866, %vm2867
    %v2869 = vsel %vm2868, %v2861, %v2865
    %v2870 = vand.u32 2147483647, %v2859
    %vm2871 = vcmp.eq.f32.partialorder %v2870, 8.507059e+37
    %v2872 = vand.u32 %v2859, 2147483648
    %v2873 = vor.u32 1.1754944e-38, %v2872
    %v2874 = vsel %vm2871, %v2873, %v2869
    %v2875 = vmul.f32 1.0, %v2874
    %v2876 = vrcp.pop %v2860
    %v2877 = vmul.f32 %v2860, %v2876
    %v2878 = vsub.f32 1.0, %v2877
    %v2879 = vmul.f32 %v2876, %v2878
    %v2880 = vadd.f32 %v2876, %v2879
    %vm2881 = vweird.f32 %v2860
    %vm2882 = vweird.f32 %v2876
    %vm2883 = vmor %vm2881, %vm2882
    %v2884 = vsel %vm2883, %v2876, %v2880
    %v2885 = vand.u32 2147483647, %v2860
    %vm2886 = vcmp.eq.f32.partialorder %v2885, 8.507059e+37
    %v2887 = vand.u32 %v2860, 2147483648
    %v2888 = vor.u32 1.1754944e-38, %v2887
    %v2889 = vsel %vm2886, %v2888, %v2884
    %v2890 = vmul.f32 1.0, %v2889
    %v2891 = vtanh.pop %v2851
    %v2892 = vmul.f32 %v2875, %v2801
    %v2893 = vmul.f32 %v2875, %v2891
    %2895 = vrot.lane.b32.xlu0 %v2893, 64
    %v2896 = vpop.permute.xlu0 %2895
    %v2898 = vadd.f32 %v2892, %v2896
    %v2899 = vtanh.pop %v2898
    %v2900 = vmul.f32 %v2890, %v2899
    %2902 = vrot.lane.b32.xlu0 %v2900, 64
    %v2903 = vpop.permute.xlu0 %2902
    %2905 = vst.msk [vmem:[%s1016] sm:$0xff] %vm228, %v2903
    %v2906 = vld [vmem:[#allocation2] sm:$0xff]
    %v2907 = vld [vmem:[#allocation2 + $0x8] sm:$0xff]
    %v2908 = vld [vmem:[#allocation2 + $0x10] sm:$0xff]
    %v2909 = vld [vmem:[#allocation2 + $0x18] sm:$0xff]
    %v2910 = vld [vmem:[#allocation2 + $0x20] sm:$0xff]
    %v2911 = vld [vmem:[#allocation2 + $0x28] sm:$0xff]
    %v2912 = vld [vmem:[#allocation2 + $0x30] sm:$0xff]
    %v2913 = vld [vmem:[#allocation2 + $0x38] sm:$0xff]
    %s2914 = scalar_lea.vmem [#allocation5], 256
    %v2915 = vld [vmem:[%s2914] sm:$0xff]
    %v2916 = vld [vmem:[%s2914 + $0x8] sm:$0xff]
    %v2917 = vld [vmem:[%s2914 + $0x10] sm:$0xff]
    %v2918 = vld [vmem:[%s2914 + $0x18] sm:$0xff]
    %v2919 = vld [vmem:[%s2914 + $0x20] sm:$0xff]
    %v2920 = vld [vmem:[%s2914 + $0x28] sm:$0xff]
    %v2921 = vld [vmem:[%s2914 + $0x30] sm:$0xff]
    %v2922 = vld [vmem:[%s2914 + $0x38] sm:$0xff]
    %v2923 = vld [vmem:[%s2914 + $0x40] sm:$0xff]
    %v2924 = vld [vmem:[%s2914 + $0x48] sm:$0xff]
    %v2925 = vld [vmem:[%s2914 + $0x50] sm:$0xff]
    %v2926 = vld [vmem:[%s2914 + $0x58] sm:$0xff]
    %v2927 = vld [vmem:[%s2914 + $0x60] sm:$0xff]
    %v2928 = vld [vmem:[%s2914 + $0x68] sm:$0xff]
    %v2929 = vld [vmem:[%s2914 + $0x70] sm:$0xff]
    %v2930 = vld [vmem:[%s2914 + $0x78] sm:$0xff]
    %s2931 = scalar_lea.vmem %s5, 4
    %v2932 = vld [vmem:[%s2931] sm:$0x3]
    %v2934 = vperm.slane %v2932, 0
    %v2935 = vperm.slane %v2932, 1
    %v2939 = vsel %vm228, %v2906, 0
    %v2942 = vsel %vm228, %v2907, 0
    %v2945 = vsel %vm228, %v2908, 0
    %v2948 = vsel %vm228, %v2909, 0
    %v2951 = vsel %vm228, %v2910, 0
    %v2954 = vsel %vm228, %v2911, 0
    %v2957 = vsel %vm228, %v2912, 0
    %v2960 = vsel %vm228, %v2913, 0
    %2962 = vmatpush.msra.mxu0 0.0
    %2963 = vmatpush.msra.mxu0 0.0
    %2964 = vmatpush.msra.mxu0 0.0
    %2965 = vmatpush.msra.mxu0 0.0
    %2966 = vmatpush.msra.mxu0 0.0
    %2967 = vmatpush.msra.mxu0 0.0
    %2968 = vmatpush.msra.mxu0 0.0
    %2969 = vmatpush.msra.mxu0 0.0
    %2970 = vmatpush.msra.mxu0 %v2929
    %2971 = vmatpush.msra.mxu0 %v2927
    %2972 = vmatpush.msra.mxu0 %v2925
    %2973 = vmatpush.msra.mxu0 %v2923
    %2974 = vmatpush.msra.mxu0 %v2921
    %2975 = vmatpush.msra.mxu0 %v2919
    %2976 = vmatpush.msra.mxu0 %v2917
    %2977 = vmatpush.msra.mxu0 %v2915
    %2978 = vmatmul.f32.gmra.mxu0 %v2939
    %v2979 = vpop.f32.mrf.mxu0
    %v2980 = vadd.f32 %v2934, %v2979
    %2981 = vmatmul.f32.gmra.mxu0 %v2942
    %v2982 = vpop.f32.mrf.mxu0
    %v2983 = vadd.f32 %v2934, %v2982
    %2984 = vmatmul.f32.gmra.mxu0 %v2945
    %v2985 = vpop.f32.mrf.mxu0
    %v2986 = vadd.f32 %v2934, %v2985
    %2987 = vmatmul.f32.gmra.mxu0 %v2948
    %v2988 = vpop.f32.mrf.mxu0
    %v2989 = vadd.f32 %v2934, %v2988
    %2990 = vmatmul.f32.gmra.mxu0 %v2951
    %v2991 = vpop.f32.mrf.mxu0
    %v2992 = vadd.f32 %v2934, %v2991
    %2993 = vmatmul.f32.gmra.mxu0 %v2954
    %v2994 = vpop.f32.mrf.mxu0
    %v2995 = vadd.f32 %v2934, %v2994
    %2996 = vmatmul.f32.gmra.mxu0 %v2957
    %v2997 = vpop.f32.mrf.mxu0
    %v2998 = vadd.f32 %v2934, %v2997
    %2999 = vmatmul.f32.gmra.mxu0 %v2960
    %v3000 = vpop.f32.mrf.mxu0
    %v3001 = vadd.f32 %v2934, %v3000
    %3002 = vdwg.mxu0
    %3003 = vmatpush.msra.mxu0 0.0
    %3004 = vmatpush.msra.mxu0 0.0
    %3005 = vmatpush.msra.mxu0 0.0
    %3006 = vmatpush.msra.mxu0 0.0
    %3007 = vmatpush.msra.mxu0 0.0
    %3008 = vmatpush.msra.mxu0 0.0
    %3009 = vmatpush.msra.mxu0 0.0
    %3010 = vmatpush.msra.mxu0 0.0
    %3011 = vmatpush.msra.mxu0 %v2930
    %3012 = vmatpush.msra.mxu0 %v2928
    %3013 = vmatpush.msra.mxu0 %v2926
    %3014 = vmatpush.msra.mxu0 %v2924
    %3015 = vmatpush.msra.mxu0 %v2922
    %3016 = vmatpush.msra.mxu0 %v2920
    %3017 = vmatpush.msra.mxu0 %v2918
    %3018 = vmatpush.msra.mxu0 %v2916
    %3019 = vmatmul.f32.gmra.mxu0 %v2939
    %v3020 = vpop.f32.mrf.mxu0
    %v3021 = vadd.f32 %v2935, %v3020
    %3022 = vmatmul.f32.gmra.mxu0 %v2942
    %v3023 = vpop.f32.mrf.mxu0
    %v3024 = vadd.f32 %v2935, %v3023
    %3025 = vmatmul.f32.gmra.mxu0 %v2945
    %v3026 = vpop.f32.mrf.mxu0
    %v3027 = vadd.f32 %v2935, %v3026
    %3028 = vmatmul.f32.gmra.mxu0 %v2948
    %v3029 = vpop.f32.mrf.mxu0
    %v3030 = vadd.f32 %v2935, %v3029
    %3031 = vmatmul.f32.gmra.mxu0 %v2951
    %v3032 = vpop.f32.mrf.mxu0
    %v3033 = vadd.f32 %v2935, %v3032
    %3034 = vmatmul.f32.gmra.mxu0 %v2954
    %v3035 = vpop.f32.mrf.mxu0
    %v3036 = vadd.f32 %v2935, %v3035
    %3037 = vmatmul.f32.gmra.mxu0 %v2957
    %v3038 = vpop.f32.mrf.mxu0
    %v3039 = vadd.f32 %v2935, %v3038
    %3040 = vmatmul.f32.gmra.mxu0 %v2960
    %v3041 = vpop.f32.mrf.mxu0
    %v3042 = vadd.f32 %v2935, %v3041
    %3043 = vdwg.mxu0
    %3044 = vst [vmem:[#allocation3] sm:$0xff] %v2980
    %3045 = vst [vmem:[#allocation3 + $0x8] sm:$0xff] %v3021
    %3046 = vst [vmem:[#allocation3 + $0x10] sm:$0xff] %v2983
    %3047 = vst [vmem:[#allocation3 + $0x18] sm:$0xff] %v3024
    %3048 = vst [vmem:[#allocation3 + $0x20] sm:$0xff] %v2986
    %3049 = vst [vmem:[#allocation3 + $0x28] sm:$0xff] %v3027
    %3050 = vst [vmem:[#allocation3 + $0x30] sm:$0xff] %v2989
    %3051 = vst [vmem:[#allocation3 + $0x38] sm:$0xff] %v3030
    %3052 = vst [vmem:[#allocation3 + $0x40] sm:$0xff] %v2992
    %3053 = vst [vmem:[#allocation3 + $0x48] sm:$0xff] %v3033
    %3054 = vst [vmem:[#allocation3 + $0x50] sm:$0xff] %v2995
    %3055 = vst [vmem:[#allocation3 + $0x58] sm:$0xff] %v3036
    %3056 = vst [vmem:[#allocation3 + $0x60] sm:$0xff] %v2998
    %3057 = vst [vmem:[#allocation3 + $0x68] sm:$0xff] %v3039
    %3058 = vst [vmem:[#allocation3 + $0x70] sm:$0xff] %v3001
    %3059 = vst [vmem:[#allocation3 + $0x78] sm:$0xff] %v3042
    %s3060 = scalar_lea.vmem [#allocation7], 384
    %v3061 = vld [vmem:[%s3060] sm:$0xff]
    %v3062 = vld [vmem:[%s3060 + $0x8] sm:$0xff]
    %v3063 = vld [vmem:[%s3060 + $0x10] sm:$0xff]
    %v3064 = vld [vmem:[%s3060 + $0x18] sm:$0xff]
    %v3065 = vld [vmem:[%s3060 + $0x20] sm:$0xff]
    %v3066 = vld [vmem:[%s3060 + $0x28] sm:$0xff]
    %v3067 = vld [vmem:[%s3060 + $0x30] sm:$0xff]
    %v3068 = vld [vmem:[%s3060 + $0x38] sm:$0xff]
    %v3069 = vld [vmem:[%s3060 + $0x40] sm:$0xff]
    %v3070 = vld [vmem:[%s3060 + $0x48] sm:$0xff]
    %v3071 = vld [vmem:[%s3060 + $0x50] sm:$0xff]
    %v3072 = vld [vmem:[%s3060 + $0x58] sm:$0xff]
    %v3073 = vld [vmem:[%s3060 + $0x60] sm:$0xff]
    %v3074 = vld [vmem:[%s3060 + $0x68] sm:$0xff]
    %v3075 = vld [vmem:[%s3060 + $0x70] sm:$0xff]
    %v3076 = vld [vmem:[%s3060 + $0x78] sm:$0xff]
    %v3077 = vld [vmem:[#allocation3] sm:$0xff]
    %v3078 = vld [vmem:[#allocation3 + $0x8] sm:$0xff]
    %3079 = vmatpush.msra.mxu0 0.0
    %3080 = vmatpush.msra.mxu0 0.0
    %3081 = vmatpush.msra.mxu0 0.0
    %3082 = vmatpush.msra.mxu0 0.0
    %3083 = vmatpush.msra.mxu0 0.0
    %3084 = vmatpush.msra.mxu0 0.0
    %3085 = vmatpush.msra.mxu0 0.0
    %3086 = vmatpush.msra.mxu0 0.0
    %3087 = vmatpush.msra.mxu0 %v3075
    %3088 = vmatpush.msra.mxu0 %v3073
    %3089 = vmatpush.msra.mxu0 %v3071
    %3090 = vmatpush.msra.mxu0 %v3069
    %3091 = vmatpush.msra.mxu0 %v3067
    %3092 = vmatpush.msra.mxu0 %v3065
    %3093 = vmatpush.msra.mxu0 %v3063
    %3094 = vmatpush.msra.mxu0 %v3061
    %3095 = vmatmul.f32.gmra.mxu0 %v230
    %v3096 = vpop.f32.mrf.mxu0
    %v3097 = vadd.f32 %v3077, %v3096
    %3098 = vdwg.mxu0
    %3099 = vmatpush.msra.mxu0 0.0
    %3100 = vmatpush.msra.mxu0 0.0
    %3101 = vmatpush.msra.mxu0 0.0
    %3102 = vmatpush.msra.mxu0 0.0
    %3103 = vmatpush.msra.mxu0 0.0
    %3104 = vmatpush.msra.mxu0 0.0
    %3105 = vmatpush.msra.mxu0 0.0
    %3106 = vmatpush.msra.mxu0 0.0
    %3107 = vmatpush.msra.mxu0 %v3076
    %3108 = vmatpush.msra.mxu0 %v3074
    %3109 = vmatpush.msra.mxu0 %v3072
    %3110 = vmatpush.msra.mxu0 %v3070
    %3111 = vmatpush.msra.mxu0 %v3068
    %3112 = vmatpush.msra.mxu0 %v3066
    %3113 = vmatpush.msra.mxu0 %v3064
    %3114 = vmatpush.msra.mxu0 %v3062
    %3115 = vmatmul.f32.gmra.mxu0 %v230
    %v3116 = vpop.f32.mrf.mxu0
    %v3117 = vadd.f32 %v3078, %v3116
    %3118 = vdwg.mxu0
    %v3119 = vxor.u32 %v3097, 2147483648
    %v3120 = vxor.u32 %v3117, 2147483648
    %v3121 = vmul.f32 %v3119, 1.442695
    %v3122 = vpow.pop %v3121
    %v3123 = vmul.f32 %v3120, 1.442695
    %v3124 = vpow.pop %v3123
    %v3125 = vadd.f32 %v3122, 1.0
    %v3126 = vadd.f32 %v3124, 1.0
    %v3127 = vrcp.pop %v3125
    %v3128 = vmul.f32 %v3125, %v3127
    %v3129 = vsub.f32 1.0, %v3128
    %v3130 = vmul.f32 %v3127, %v3129
    %v3131 = vadd.f32 %v3127, %v3130
    %vm3132 = vweird.f32 %v3125
    %vm3133 = vweird.f32 %v3127
    %vm3134 = vmor %vm3132, %vm3133
    %v3135 = vsel %vm3134, %v3127, %v3131
    %v3136 = vand.u32 2147483647, %v3125
    %vm3137 = vcmp.eq.f32.partialorder %v3136, 8.507059e+37
    %v3138 = vand.u32 %v3125, 2147483648
    %v3139 = vor.u32 1.1754944e-38, %v3138
    %v3140 = vsel %vm3137, %v3139, %v3135
    %v3141 = vmul.f32 1.0, %v3140
    %v3142 = vrcp.pop %v3126
    %v3143 = vmul.f32 %v3126, %v3142
    %v3144 = vsub.f32 1.0, %v3143
    %v3145 = vmul.f32 %v3142, %v3144
    %v3146 = vadd.f32 %v3142, %v3145
    %vm3147 = vweird.f32 %v3126
    %vm3148 = vweird.f32 %v3142
    %vm3149 = vmor %vm3147, %vm3148
    %v3150 = vsel %vm3149, %v3142, %v3146
    %v3151 = vand.u32 2147483647, %v3126
    %vm3152 = vcmp.eq.f32.partialorder %v3151, 8.507059e+37
    %v3153 = vand.u32 %v3126, 2147483648
    %v3154 = vor.u32 1.1754944e-38, %v3153
    %v3155 = vsel %vm3152, %v3154, %v3150
    %v3156 = vmul.f32 1.0, %v3155
    %v3157 = vtanh.pop %v3117
    %v3158 = vmul.f32 %v3141, 0.0
    %v3159 = vmul.f32 %v3141, %v3157
    %3161 = vrot.lane.b32.xlu0 %v3159, 64
    %v3162 = vpop.permute.xlu0 %3161
    %v3164 = vadd.f32 %v3158, %v3162
    %v3165 = vtanh.pop %v3164
    %v3166 = vmul.f32 %v3156, %v3165
    %3168 = vrot.lane.b32.xlu0 %v3166, 64
    %v3169 = vpop.permute.xlu0 %3168
    %3171 = vst.msk [vmem:[#allocation2] sm:$0xff] %vm228, %v3169
    %v3172 = vld [vmem:[%s325] sm:$0xff]
    %v3173 = vld [vmem:[%s325 + $0x8] sm:$0xff]
    %v3174 = vsel %vm228, %v3169, 0
    %3176 = vmatpush.msra.mxu0 0.0
    %3177 = vmatpush.msra.mxu0 0.0
    %3178 = vmatpush.msra.mxu0 0.0
    %3179 = vmatpush.msra.mxu0 0.0
    %3180 = vmatpush.msra.mxu0 0.0
    %3181 = vmatpush.msra.mxu0 0.0
    %3182 = vmatpush.msra.mxu0 0.0
    %3183 = vmatpush.msra.mxu0 0.0
    %3184 = vmatpush.msra.mxu0 %v3075
    %3185 = vmatpush.msra.mxu0 %v3073
    %3186 = vmatpush.msra.mxu0 %v3071
    %3187 = vmatpush.msra.mxu0 %v3069
    %3188 = vmatpush.msra.mxu0 %v3067
    %3189 = vmatpush.msra.mxu0 %v3065
    %3190 = vmatpush.msra.mxu0 %v3063
    %3191 = vmatpush.msra.mxu0 %v3061
    %3192 = vmatmul.f32.gmra.mxu0 %v3174
    %v3193 = vpop.f32.mrf.mxu0
    %v3194 = vadd.f32 %v3172, %v3193
    %3195 = vdwg.mxu0
    %3196 = vmatpush.msra.mxu0 0.0
    %3197 = vmatpush.msra.mxu0 0.0
    %3198 = vmatpush.msra.mxu0 0.0
    %3199 = vmatpush.msra.mxu0 0.0
    %3200 = vmatpush.msra.mxu0 0.0
    %3201 = vmatpush.msra.mxu0 0.0
    %3202 = vmatpush.msra.mxu0 0.0
    %3203 = vmatpush.msra.mxu0 0.0
    %3204 = vmatpush.msra.mxu0 %v3076
    %3205 = vmatpush.msra.mxu0 %v3074
    %3206 = vmatpush.msra.mxu0 %v3072
    %3207 = vmatpush.msra.mxu0 %v3070
    %3208 = vmatpush.msra.mxu0 %v3068
    %3209 = vmatpush.msra.mxu0 %v3066
    %3210 = vmatpush.msra.mxu0 %v3064
    %3211 = vmatpush.msra.mxu0 %v3062
    %3212 = vmatmul.f32.gmra.mxu0 %v3174
    %v3213 = vpop.f32.mrf.mxu0
    %v3214 = vadd.f32 %v3173, %v3213
    %3215 = vdwg.mxu0
    %v3216 = vxor.u32 %v3194, 2147483648
    %v3217 = vxor.u32 %v3214, 2147483648
    %v3218 = vmul.f32 %v3216, 1.442695
    %v3219 = vpow.pop %v3218
    %v3220 = vmul.f32 %v3217, 1.442695
    %v3221 = vpow.pop %v3220
    %v3222 = vadd.f32 %v3219, 1.0
    %v3223 = vadd.f32 %v3221, 1.0
    %v3224 = vrcp.pop %v3222
    %v3225 = vmul.f32 %v3222, %v3224
    %v3226 = vsub.f32 1.0, %v3225
    %v3227 = vmul.f32 %v3224, %v3226
    %v3228 = vadd.f32 %v3224, %v3227
    %vm3229 = vweird.f32 %v3222
    %vm3230 = vweird.f32 %v3224
    %vm3231 = vmor %vm3229, %vm3230
    %v3232 = vsel %vm3231, %v3224, %v3228
    %v3233 = vand.u32 2147483647, %v3222
    %vm3234 = vcmp.eq.f32.partialorder %v3233, 8.507059e+37
    %v3235 = vand.u32 %v3222, 2147483648
    %v3236 = vor.u32 1.1754944e-38, %v3235
    %v3237 = vsel %vm3234, %v3236, %v3232
    %v3238 = vmul.f32 1.0, %v3237
    %v3239 = vrcp.pop %v3223
    %v3240 = vmul.f32 %v3223, %v3239
    %v3241 = vsub.f32 1.0, %v3240
    %v3242 = vmul.f32 %v3239, %v3241
    %v3243 = vadd.f32 %v3239, %v3242
    %vm3244 = vweird.f32 %v3223
    %vm3245 = vweird.f32 %v3239
    %vm3246 = vmor %vm3244, %vm3245
    %v3247 = vsel %vm3246, %v3239, %v3243
    %v3248 = vand.u32 2147483647, %v3223
    %vm3249 = vcmp.eq.f32.partialorder %v3248, 8.507059e+37
    %v3250 = vand.u32 %v3223, 2147483648
    %v3251 = vor.u32 1.1754944e-38, %v3250
    %v3252 = vsel %vm3249, %v3251, %v3247
    %v3253 = vmul.f32 1.0, %v3252
    %v3254 = vtanh.pop %v3214
    %v3255 = vmul.f32 %v3238, %v3164
    %v3256 = vmul.f32 %v3238, %v3254
    %3258 = vrot.lane.b32.xlu0 %v3256, 64
    %v3259 = vpop.permute.xlu0 %3258
    %v3261 = vadd.f32 %v3255, %v3259
    %v3262 = vtanh.pop %v3261
    %v3263 = vmul.f32 %v3253, %v3262
    %3265 = vrot.lane.b32.xlu0 %v3263, 64
    %v3266 = vpop.permute.xlu0 %3265
    %3268 = vst.msk [vmem:[%s422] sm:$0xff] %vm228, %v3266
    %v3269 = vld [vmem:[%s424] sm:$0xff]
    %v3270 = vld [vmem:[%s424 + $0x8] sm:$0xff]
    %v3271 = vsel %vm228, %v3266, 0
    %3273 = vmatpush.msra.mxu0 0.0
    %3274 = vmatpush.msra.mxu0 0.0
    %3275 = vmatpush.msra.mxu0 0.0
    %3276 = vmatpush.msra.mxu0 0.0
    %3277 = vmatpush.msra.mxu0 0.0
    %3278 = vmatpush.msra.mxu0 0.0
    %3279 = vmatpush.msra.mxu0 0.0
    %3280 = vmatpush.msra.mxu0 0.0
    %3281 = vmatpush.msra.mxu0 %v3075
    %3282 = vmatpush.msra.mxu0 %v3073
    %3283 = vmatpush.msra.mxu0 %v3071
    %3284 = vmatpush.msra.mxu0 %v3069
    %3285 = vmatpush.msra.mxu0 %v3067
    %3286 = vmatpush.msra.mxu0 %v3065
    %3287 = vmatpush.msra.mxu0 %v3063
    %3288 = vmatpush.msra.mxu0 %v3061
    %3289 = vmatmul.f32.gmra.mxu0 %v3271
    %v3290 = vpop.f32.mrf.mxu0
    %v3291 = vadd.f32 %v3269, %v3290
    %3292 = vdwg.mxu0
    %3293 = vmatpush.msra.mxu0 0.0
    %3294 = vmatpush.msra.mxu0 0.0
    %3295 = vmatpush.msra.mxu0 0.0
    %3296 = vmatpush.msra.mxu0 0.0
    %3297 = vmatpush.msra.mxu0 0.0
    %3298 = vmatpush.msra.mxu0 0.0
    %3299 = vmatpush.msra.mxu0 0.0
    %3300 = vmatpush.msra.mxu0 0.0
    %3301 = vmatpush.msra.mxu0 %v3076
    %3302 = vmatpush.msra.mxu0 %v3074
    %3303 = vmatpush.msra.mxu0 %v3072
    %3304 = vmatpush.msra.mxu0 %v3070
    %3305 = vmatpush.msra.mxu0 %v3068
    %3306 = vmatpush.msra.mxu0 %v3066
    %3307 = vmatpush.msra.mxu0 %v3064
    %3308 = vmatpush.msra.mxu0 %v3062
    %3309 = vmatmul.f32.gmra.mxu0 %v3271
    %v3310 = vpop.f32.mrf.mxu0
    %v3311 = vadd.f32 %v3270, %v3310
    %3312 = vdwg.mxu0
    %v3313 = vxor.u32 %v3291, 2147483648
    %v3314 = vxor.u32 %v3311, 2147483648
    %v3315 = vmul.f32 %v3313, 1.442695
    %v3316 = vpow.pop %v3315
    %v3317 = vmul.f32 %v3314, 1.442695
    %v3318 = vpow.pop %v3317
    %v3319 = vadd.f32 %v3316, 1.0
    %v3320 = vadd.f32 %v3318, 1.0
    %v3321 = vrcp.pop %v3319
    %v3322 = vmul.f32 %v3319, %v3321
    %v3323 = vsub.f32 1.0, %v3322
    %v3324 = vmul.f32 %v3321, %v3323
    %v3325 = vadd.f32 %v3321, %v3324
    %vm3326 = vweird.f32 %v3319
    %vm3327 = vweird.f32 %v3321
    %vm3328 = vmor %vm3326, %vm3327
    %v3329 = vsel %vm3328, %v3321, %v3325
    %v3330 = vand.u32 2147483647, %v3319
    %vm3331 = vcmp.eq.f32.partialorder %v3330, 8.507059e+37
    %v3332 = vand.u32 %v3319, 2147483648
    %v3333 = vor.u32 1.1754944e-38, %v3332
    %v3334 = vsel %vm3331, %v3333, %v3329
    %v3335 = vmul.f32 1.0, %v3334
    %v3336 = vrcp.pop %v3320
    %v3337 = vmul.f32 %v3320, %v3336
    %v3338 = vsub.f32 1.0, %v3337
    %v3339 = vmul.f32 %v3336, %v3338
    %v3340 = vadd.f32 %v3336, %v3339
    %vm3341 = vweird.f32 %v3320
    %vm3342 = vweird.f32 %v3336
    %vm3343 = vmor %vm3341, %vm3342
    %v3344 = vsel %vm3343, %v3336, %v3340
    %v3345 = vand.u32 2147483647, %v3320
    %vm3346 = vcmp.eq.f32.partialorder %v3345, 8.507059e+37
    %v3347 = vand.u32 %v3320, 2147483648
    %v3348 = vor.u32 1.1754944e-38, %v3347
    %v3349 = vsel %vm3346, %v3348, %v3344
    %v3350 = vmul.f32 1.0, %v3349
    %v3351 = vtanh.pop %v3311
    %v3352 = vmul.f32 %v3335, %v3261
    %v3353 = vmul.f32 %v3335, %v3351
    %3355 = vrot.lane.b32.xlu0 %v3353, 64
    %v3356 = vpop.permute.xlu0 %3355
    %v3358 = vadd.f32 %v3352, %v3356
    %v3359 = vtanh.pop %v3358
    %v3360 = vmul.f32 %v3350, %v3359
    %3362 = vrot.lane.b32.xlu0 %v3360, 64
    %v3363 = vpop.permute.xlu0 %3362
    %3365 = vst.msk [vmem:[%s521] sm:$0xff] %vm228, %v3363
    %v3366 = vld [vmem:[%s523] sm:$0xff]
    %v3367 = vld [vmem:[%s523 + $0x8] sm:$0xff]
    %v3368 = vsel %vm228, %v3363, 0
    %3370 = vmatpush.msra.mxu0 0.0
    %3371 = vmatpush.msra.mxu0 0.0
    %3372 = vmatpush.msra.mxu0 0.0
    %3373 = vmatpush.msra.mxu0 0.0
    %3374 = vmatpush.msra.mxu0 0.0
    %3375 = vmatpush.msra.mxu0 0.0
    %3376 = vmatpush.msra.mxu0 0.0
    %3377 = vmatpush.msra.mxu0 0.0
    %3378 = vmatpush.msra.mxu0 %v3075
    %3379 = vmatpush.msra.mxu0 %v3073
    %3380 = vmatpush.msra.mxu0 %v3071
    %3381 = vmatpush.msra.mxu0 %v3069
    %3382 = vmatpush.msra.mxu0 %v3067
    %3383 = vmatpush.msra.mxu0 %v3065
    %3384 = vmatpush.msra.mxu0 %v3063
    %3385 = vmatpush.msra.mxu0 %v3061
    %3386 = vmatmul.f32.gmra.mxu0 %v3368
    %v3387 = vpop.f32.mrf.mxu0
    %v3388 = vadd.f32 %v3366, %v3387
    %3389 = vdwg.mxu0
    %3390 = vmatpush.msra.mxu0 0.0
    %3391 = vmatpush.msra.mxu0 0.0
    %3392 = vmatpush.msra.mxu0 0.0
    %3393 = vmatpush.msra.mxu0 0.0
    %3394 = vmatpush.msra.mxu0 0.0
    %3395 = vmatpush.msra.mxu0 0.0
    %3396 = vmatpush.msra.mxu0 0.0
    %3397 = vmatpush.msra.mxu0 0.0
    %3398 = vmatpush.msra.mxu0 %v3076
    %3399 = vmatpush.msra.mxu0 %v3074
    %3400 = vmatpush.msra.mxu0 %v3072
    %3401 = vmatpush.msra.mxu0 %v3070
    %3402 = vmatpush.msra.mxu0 %v3068
    %3403 = vmatpush.msra.mxu0 %v3066
    %3404 = vmatpush.msra.mxu0 %v3064
    %3405 = vmatpush.msra.mxu0 %v3062
    %3406 = vmatmul.f32.gmra.mxu0 %v3368
    %v3407 = vpop.f32.mrf.mxu0
    %v3408 = vadd.f32 %v3367, %v3407
    %3409 = vdwg.mxu0
    %v3410 = vxor.u32 %v3388, 2147483648
    %v3411 = vxor.u32 %v3408, 2147483648
    %v3412 = vmul.f32 %v3410, 1.442695
    %v3413 = vpow.pop %v3412
    %v3414 = vmul.f32 %v3411, 1.442695
    %v3415 = vpow.pop %v3414
    %v3416 = vadd.f32 %v3413, 1.0
    %v3417 = vadd.f32 %v3415, 1.0
    %v3418 = vrcp.pop %v3416
    %v3419 = vmul.f32 %v3416, %v3418
    %v3420 = vsub.f32 1.0, %v3419
    %v3421 = vmul.f32 %v3418, %v3420
    %v3422 = vadd.f32 %v3418, %v3421
    %vm3423 = vweird.f32 %v3416
    %vm3424 = vweird.f32 %v3418
    %vm3425 = vmor %vm3423, %vm3424
    %v3426 = vsel %vm3425, %v3418, %v3422
    %v3427 = vand.u32 2147483647, %v3416
    %vm3428 = vcmp.eq.f32.partialorder %v3427, 8.507059e+37
    %v3429 = vand.u32 %v3416, 2147483648
    %v3430 = vor.u32 1.1754944e-38, %v3429
    %v3431 = vsel %vm3428, %v3430, %v3426
    %v3432 = vmul.f32 1.0, %v3431
    %v3433 = vrcp.pop %v3417
    %v3434 = vmul.f32 %v3417, %v3433
    %v3435 = vsub.f32 1.0, %v3434
    %v3436 = vmul.f32 %v3433, %v3435
    %v3437 = vadd.f32 %v3433, %v3436
    %vm3438 = vweird.f32 %v3417
    %vm3439 = vweird.f32 %v3433
    %vm3440 = vmor %vm3438, %vm3439
    %v3441 = vsel %vm3440, %v3433, %v3437
    %v3442 = vand.u32 2147483647, %v3417
    %vm3443 = vcmp.eq.f32.partialorder %v3442, 8.507059e+37
    %v3444 = vand.u32 %v3417, 2147483648
    %v3445 = vor.u32 1.1754944e-38, %v3444
    %v3446 = vsel %vm3443, %v3445, %v3441
    %v3447 = vmul.f32 1.0, %v3446
    %v3448 = vtanh.pop %v3408
    %v3449 = vmul.f32 %v3432, %v3358
    %v3450 = vmul.f32 %v3432, %v3448
    %3452 = vrot.lane.b32.xlu0 %v3450, 64
    %v3453 = vpop.permute.xlu0 %3452
    %v3455 = vadd.f32 %v3449, %v3453
    %v3456 = vtanh.pop %v3455
    %v3457 = vmul.f32 %v3447, %v3456
    %3459 = vrot.lane.b32.xlu0 %v3457, 64
    %v3460 = vpop.permute.xlu0 %3459
    %3462 = vst.msk [vmem:[%s620] sm:$0xff] %vm228, %v3460
    %v3463 = vld [vmem:[%s622] sm:$0xff]
    %v3464 = vld [vmem:[%s622 + $0x8] sm:$0xff]
    %v3465 = vsel %vm228, %v3460, 0
    %3467 = vmatpush.msra.mxu0 0.0
    %3468 = vmatpush.msra.mxu0 0.0
    %3469 = vmatpush.msra.mxu0 0.0
    %3470 = vmatpush.msra.mxu0 0.0
    %3471 = vmatpush.msra.mxu0 0.0
    %3472 = vmatpush.msra.mxu0 0.0
    %3473 = vmatpush.msra.mxu0 0.0
    %3474 = vmatpush.msra.mxu0 0.0
    %3475 = vmatpush.msra.mxu0 %v3075
    %3476 = vmatpush.msra.mxu0 %v3073
    %3477 = vmatpush.msra.mxu0 %v3071
    %3478 = vmatpush.msra.mxu0 %v3069
    %3479 = vmatpush.msra.mxu0 %v3067
    %3480 = vmatpush.msra.mxu0 %v3065
    %3481 = vmatpush.msra.mxu0 %v3063
    %3482 = vmatpush.msra.mxu0 %v3061
    %3483 = vmatmul.f32.gmra.mxu0 %v3465
    %v3484 = vpop.f32.mrf.mxu0
    %v3485 = vadd.f32 %v3463, %v3484
    %3486 = vdwg.mxu0
    %3487 = vmatpush.msra.mxu0 0.0
    %3488 = vmatpush.msra.mxu0 0.0
    %3489 = vmatpush.msra.mxu0 0.0
    %3490 = vmatpush.msra.mxu0 0.0
    %3491 = vmatpush.msra.mxu0 0.0
    %3492 = vmatpush.msra.mxu0 0.0
    %3493 = vmatpush.msra.mxu0 0.0
    %3494 = vmatpush.msra.mxu0 0.0
    %3495 = vmatpush.msra.mxu0 %v3076
    %3496 = vmatpush.msra.mxu0 %v3074
    %3497 = vmatpush.msra.mxu0 %v3072
    %3498 = vmatpush.msra.mxu0 %v3070
    %3499 = vmatpush.msra.mxu0 %v3068
    %3500 = vmatpush.msra.mxu0 %v3066
    %3501 = vmatpush.msra.mxu0 %v3064
    %3502 = vmatpush.msra.mxu0 %v3062
    %3503 = vmatmul.f32.gmra.mxu0 %v3465
    %v3504 = vpop.f32.mrf.mxu0
    %v3505 = vadd.f32 %v3464, %v3504
    %3506 = vdwg.mxu0
    %v3507 = vxor.u32 %v3485, 2147483648
    %v3508 = vxor.u32 %v3505, 2147483648
    %v3509 = vmul.f32 %v3507, 1.442695
    %v3510 = vpow.pop %v3509
    %v3511 = vmul.f32 %v3508, 1.442695
    %v3512 = vpow.pop %v3511
    %v3513 = vadd.f32 %v3510, 1.0
    %v3514 = vadd.f32 %v3512, 1.0
    %v3515 = vrcp.pop %v3513
    %v3516 = vmul.f32 %v3513, %v3515
    %v3517 = vsub.f32 1.0, %v3516
    %v3518 = vmul.f32 %v3515, %v3517
    %v3519 = vadd.f32 %v3515, %v3518
    %vm3520 = vweird.f32 %v3513
    %vm3521 = vweird.f32 %v3515
    %vm3522 = vmor %vm3520, %vm3521
    %v3523 = vsel %vm3522, %v3515, %v3519
    %v3524 = vand.u32 2147483647, %v3513
    %vm3525 = vcmp.eq.f32.partialorder %v3524, 8.507059e+37
    %v3526 = vand.u32 %v3513, 2147483648
    %v3527 = vor.u32 1.1754944e-38, %v3526
    %v3528 = vsel %vm3525, %v3527, %v3523
    %v3529 = vmul.f32 1.0, %v3528
    %v3530 = vrcp.pop %v3514
    %v3531 = vmul.f32 %v3514, %v3530
    %v3532 = vsub.f32 1.0, %v3531
    %v3533 = vmul.f32 %v3530, %v3532
    %v3534 = vadd.f32 %v3530, %v3533
    %vm3535 = vweird.f32 %v3514
    %vm3536 = vweird.f32 %v3530
    %vm3537 = vmor %vm3535, %vm3536
    %v3538 = vsel %vm3537, %v3530, %v3534
    %v3539 = vand.u32 2147483647, %v3514
    %vm3540 = vcmp.eq.f32.partialorder %v3539, 8.507059e+37
    %v3541 = vand.u32 %v3514, 2147483648
    %v3542 = vor.u32 1.1754944e-38, %v3541
    %v3543 = vsel %vm3540, %v3542, %v3538
    %v3544 = vmul.f32 1.0, %v3543
    %v3545 = vtanh.pop %v3505
    %v3546 = vmul.f32 %v3529, %v3455
    %v3547 = vmul.f32 %v3529, %v3545
    %3549 = vrot.lane.b32.xlu0 %v3547, 64
    %v3550 = vpop.permute.xlu0 %3549
    %v3552 = vadd.f32 %v3546, %v3550
    %v3553 = vtanh.pop %v3552
    %v3554 = vmul.f32 %v3544, %v3553
    %3556 = vrot.lane.b32.xlu0 %v3554, 64
    %v3557 = vpop.permute.xlu0 %3556
    %3559 = vst.msk [vmem:[%s719] sm:$0xff] %vm228, %v3557
    %v3560 = vld [vmem:[%s721] sm:$0xff]
    %v3561 = vld [vmem:[%s721 + $0x8] sm:$0xff]
    %v3562 = vsel %vm228, %v3557, 0
    %3564 = vmatpush.msra.mxu0 0.0
    %3565 = vmatpush.msra.mxu0 0.0
    %3566 = vmatpush.msra.mxu0 0.0
    %3567 = vmatpush.msra.mxu0 0.0
    %3568 = vmatpush.msra.mxu0 0.0
    %3569 = vmatpush.msra.mxu0 0.0
    %3570 = vmatpush.msra.mxu0 0.0
    %3571 = vmatpush.msra.mxu0 0.0
    %3572 = vmatpush.msra.mxu0 %v3075
    %3573 = vmatpush.msra.mxu0 %v3073
    %3574 = vmatpush.msra.mxu0 %v3071
    %3575 = vmatpush.msra.mxu0 %v3069
    %3576 = vmatpush.msra.mxu0 %v3067
    %3577 = vmatpush.msra.mxu0 %v3065
    %3578 = vmatpush.msra.mxu0 %v3063
    %3579 = vmatpush.msra.mxu0 %v3061
    %3580 = vmatmul.f32.gmra.mxu0 %v3562
    %v3581 = vpop.f32.mrf.mxu0
    %v3582 = vadd.f32 %v3560, %v3581
    %3583 = vdwg.mxu0
    %3584 = vmatpush.msra.mxu0 0.0
    %3585 = vmatpush.msra.mxu0 0.0
    %3586 = vmatpush.msra.mxu0 0.0
    %3587 = vmatpush.msra.mxu0 0.0
    %3588 = vmatpush.msra.mxu0 0.0
    %3589 = vmatpush.msra.mxu0 0.0
    %3590 = vmatpush.msra.mxu0 0.0
    %3591 = vmatpush.msra.mxu0 0.0
    %3592 = vmatpush.msra.mxu0 %v3076
    %3593 = vmatpush.msra.mxu0 %v3074
    %3594 = vmatpush.msra.mxu0 %v3072
    %3595 = vmatpush.msra.mxu0 %v3070
    %3596 = vmatpush.msra.mxu0 %v3068
    %3597 = vmatpush.msra.mxu0 %v3066
    %3598 = vmatpush.msra.mxu0 %v3064
    %3599 = vmatpush.msra.mxu0 %v3062
    %3600 = vmatmul.f32.gmra.mxu0 %v3562
    %v3601 = vpop.f32.mrf.mxu0
    %v3602 = vadd.f32 %v3561, %v3601
    %3603 = vdwg.mxu0
    %v3604 = vxor.u32 %v3582, 2147483648
    %v3605 = vxor.u32 %v3602, 2147483648
    %v3606 = vmul.f32 %v3604, 1.442695
    %v3607 = vpow.pop %v3606
    %v3608 = vmul.f32 %v3605, 1.442695
    %v3609 = vpow.pop %v3608
    %v3610 = vadd.f32 %v3607, 1.0
    %v3611 = vadd.f32 %v3609, 1.0
    %v3612 = vrcp.pop %v3610
    %v3613 = vmul.f32 %v3610, %v3612
    %v3614 = vsub.f32 1.0, %v3613
    %v3615 = vmul.f32 %v3612, %v3614
    %v3616 = vadd.f32 %v3612, %v3615
    %vm3617 = vweird.f32 %v3610
    %vm3618 = vweird.f32 %v3612
    %vm3619 = vmor %vm3617, %vm3618
    %v3620 = vsel %vm3619, %v3612, %v3616
    %v3621 = vand.u32 2147483647, %v3610
    %vm3622 = vcmp.eq.f32.partialorder %v3621, 8.507059e+37
    %v3623 = vand.u32 %v3610, 2147483648
    %v3624 = vor.u32 1.1754944e-38, %v3623
    %v3625 = vsel %vm3622, %v3624, %v3620
    %v3626 = vmul.f32 1.0, %v3625
    %v3627 = vrcp.pop %v3611
    %v3628 = vmul.f32 %v3611, %v3627
    %v3629 = vsub.f32 1.0, %v3628
    %v3630 = vmul.f32 %v3627, %v3629
    %v3631 = vadd.f32 %v3627, %v3630
    %vm3632 = vweird.f32 %v3611
    %vm3633 = vweird.f32 %v3627
    %vm3634 = vmor %vm3632, %vm3633
    %v3635 = vsel %vm3634, %v3627, %v3631
    %v3636 = vand.u32 2147483647, %v3611
    %vm3637 = vcmp.eq.f32.partialorder %v3636, 8.507059e+37
    %v3638 = vand.u32 %v3611, 2147483648
    %v3639 = vor.u32 1.1754944e-38, %v3638
    %v3640 = vsel %vm3637, %v3639, %v3635
    %v3641 = vmul.f32 1.0, %v3640
    %v3642 = vtanh.pop %v3602
    %v3643 = vmul.f32 %v3626, %v3552
    %v3644 = vmul.f32 %v3626, %v3642
    %3646 = vrot.lane.b32.xlu0 %v3644, 64
    %v3647 = vpop.permute.xlu0 %3646
    %v3649 = vadd.f32 %v3643, %v3647
    %v3650 = vtanh.pop %v3649
    %v3651 = vmul.f32 %v3641, %v3650
    %3653 = vrot.lane.b32.xlu0 %v3651, 64
    %v3654 = vpop.permute.xlu0 %3653
    %3656 = vst.msk [vmem:[%s818] sm:$0xff] %vm228, %v3654
    %v3657 = vld [vmem:[%s820] sm:$0xff]
    %v3658 = vld [vmem:[%s820 + $0x8] sm:$0xff]
    %v3659 = vsel %vm228, %v3654, 0
    %3661 = vmatpush.msra.mxu0 0.0
    %3662 = vmatpush.msra.mxu0 0.0
    %3663 = vmatpush.msra.mxu0 0.0
    %3664 = vmatpush.msra.mxu0 0.0
    %3665 = vmatpush.msra.mxu0 0.0
    %3666 = vmatpush.msra.mxu0 0.0
    %3667 = vmatpush.msra.mxu0 0.0
    %3668 = vmatpush.msra.mxu0 0.0
    %3669 = vmatpush.msra.mxu0 %v3075
    %3670 = vmatpush.msra.mxu0 %v3073
    %3671 = vmatpush.msra.mxu0 %v3071
    %3672 = vmatpush.msra.mxu0 %v3069
    %3673 = vmatpush.msra.mxu0 %v3067
    %3674 = vmatpush.msra.mxu0 %v3065
    %3675 = vmatpush.msra.mxu0 %v3063
    %3676 = vmatpush.msra.mxu0 %v3061
    %3677 = vmatmul.f32.gmra.mxu0 %v3659
    %v3678 = vpop.f32.mrf.mxu0
    %v3679 = vadd.f32 %v3657, %v3678
    %3680 = vdwg.mxu0
    %3681 = vmatpush.msra.mxu0 0.0
    %3682 = vmatpush.msra.mxu0 0.0
    %3683 = vmatpush.msra.mxu0 0.0
    %3684 = vmatpush.msra.mxu0 0.0
    %3685 = vmatpush.msra.mxu0 0.0
    %3686 = vmatpush.msra.mxu0 0.0
    %3687 = vmatpush.msra.mxu0 0.0
    %3688 = vmatpush.msra.mxu0 0.0
    %3689 = vmatpush.msra.mxu0 %v3076
    %3690 = vmatpush.msra.mxu0 %v3074
    %3691 = vmatpush.msra.mxu0 %v3072
    %3692 = vmatpush.msra.mxu0 %v3070
    %3693 = vmatpush.msra.mxu0 %v3068
    %3694 = vmatpush.msra.mxu0 %v3066
    %3695 = vmatpush.msra.mxu0 %v3064
    %3696 = vmatpush.msra.mxu0 %v3062
    %3697 = vmatmul.f32.gmra.mxu0 %v3659
    %v3698 = vpop.f32.mrf.mxu0
    %v3699 = vadd.f32 %v3658, %v3698
    %3700 = vdwg.mxu0
    %v3701 = vxor.u32 %v3679, 2147483648
    %v3702 = vxor.u32 %v3699, 2147483648
    %v3703 = vmul.f32 %v3701, 1.442695
    %v3704 = vpow.pop %v3703
    %v3705 = vmul.f32 %v3702, 1.442695
    %v3706 = vpow.pop %v3705
    %v3707 = vadd.f32 %v3704, 1.0
    %v3708 = vadd.f32 %v3706, 1.0
    %v3709 = vrcp.pop %v3707
    %v3710 = vmul.f32 %v3707, %v3709
    %v3711 = vsub.f32 1.0, %v3710
    %v3712 = vmul.f32 %v3709, %v3711
    %v3713 = vadd.f32 %v3709, %v3712
    %vm3714 = vweird.f32 %v3707
    %vm3715 = vweird.f32 %v3709
    %vm3716 = vmor %vm3714, %vm3715
    %v3717 = vsel %vm3716, %v3709, %v3713
    %v3718 = vand.u32 2147483647, %v3707
    %vm3719 = vcmp.eq.f32.partialorder %v3718, 8.507059e+37
    %v3720 = vand.u32 %v3707, 2147483648
    %v3721 = vor.u32 1.1754944e-38, %v3720
    %v3722 = vsel %vm3719, %v3721, %v3717
    %v3723 = vmul.f32 1.0, %v3722
    %v3724 = vrcp.pop %v3708
    %v3725 = vmul.f32 %v3708, %v3724
    %v3726 = vsub.f32 1.0, %v3725
    %v3727 = vmul.f32 %v3724, %v3726
    %v3728 = vadd.f32 %v3724, %v3727
    %vm3729 = vweird.f32 %v3708
    %vm3730 = vweird.f32 %v3724
    %vm3731 = vmor %vm3729, %vm3730
    %v3732 = vsel %vm3731, %v3724, %v3728
    %v3733 = vand.u32 2147483647, %v3708
    %vm3734 = vcmp.eq.f32.partialorder %v3733, 8.507059e+37
    %v3735 = vand.u32 %v3708, 2147483648
    %v3736 = vor.u32 1.1754944e-38, %v3735
    %v3737 = vsel %vm3734, %v3736, %v3732
    %v3738 = vmul.f32 1.0, %v3737
    %v3739 = vtanh.pop %v3699
    %v3740 = vmul.f32 %v3723, %v3649
    %v3741 = vmul.f32 %v3723, %v3739
    %3743 = vrot.lane.b32.xlu0 %v3741, 64
    %v3744 = vpop.permute.xlu0 %3743
    %v3746 = vadd.f32 %v3740, %v3744
    %v3747 = vtanh.pop %v3746
    %v3748 = vmul.f32 %v3738, %v3747
    %3750 = vrot.lane.b32.xlu0 %v3748, 64
    %v3751 = vpop.permute.xlu0 %3750
    %3753 = vst.msk [vmem:[%s917] sm:$0xff] %vm228, %v3751
    %v3754 = vld [vmem:[%s919] sm:$0xff]
    %v3755 = vld [vmem:[%s919 + $0x8] sm:$0xff]
    %v3756 = vsel %vm228, %v3751, 0
    %3758 = vmatpush.msra.mxu0 0.0
    %3759 = vmatpush.msra.mxu0 0.0
    %3760 = vmatpush.msra.mxu0 0.0
    %3761 = vmatpush.msra.mxu0 0.0
    %3762 = vmatpush.msra.mxu0 0.0
    %3763 = vmatpush.msra.mxu0 0.0
    %3764 = vmatpush.msra.mxu0 0.0
    %3765 = vmatpush.msra.mxu0 0.0
    %3766 = vmatpush.msra.mxu0 %v3075
    %3767 = vmatpush.msra.mxu0 %v3073
    %3768 = vmatpush.msra.mxu0 %v3071
    %3769 = vmatpush.msra.mxu0 %v3069
    %3770 = vmatpush.msra.mxu0 %v3067
    %3771 = vmatpush.msra.mxu0 %v3065
    %3772 = vmatpush.msra.mxu0 %v3063
    %3773 = vmatpush.msra.mxu0 %v3061
    %3774 = vmatmul.f32.gmra.mxu0 %v3756
    %v3775 = vpop.f32.mrf.mxu0
    %v3776 = vadd.f32 %v3754, %v3775
    %3777 = vdwg.mxu0
    %3778 = vmatpush.msra.mxu0 0.0
    %3779 = vmatpush.msra.mxu0 0.0
    %3780 = vmatpush.msra.mxu0 0.0
    %3781 = vmatpush.msra.mxu0 0.0
    %3782 = vmatpush.msra.mxu0 0.0
    %3783 = vmatpush.msra.mxu0 0.0
    %3784 = vmatpush.msra.mxu0 0.0
    %3785 = vmatpush.msra.mxu0 0.0
    %3786 = vmatpush.msra.mxu0 %v3076
    %3787 = vmatpush.msra.mxu0 %v3074
    %3788 = vmatpush.msra.mxu0 %v3072
    %3789 = vmatpush.msra.mxu0 %v3070
    %3790 = vmatpush.msra.mxu0 %v3068
    %3791 = vmatpush.msra.mxu0 %v3066
    %3792 = vmatpush.msra.mxu0 %v3064
    %3793 = vmatpush.msra.mxu0 %v3062
    %3794 = vmatmul.f32.gmra.mxu0 %v3756
    %v3795 = vpop.f32.mrf.mxu0
    %v3796 = vadd.f32 %v3755, %v3795
    %3797 = vdwg.mxu0
    %v3798 = vxor.u32 %v3776, 2147483648
    %v3799 = vxor.u32 %v3796, 2147483648
    %v3800 = vmul.f32 %v3798, 1.442695
    %v3801 = vpow.pop %v3800
    %v3802 = vmul.f32 %v3799, 1.442695
    %v3803 = vpow.pop %v3802
    %v3804 = vadd.f32 %v3801, 1.0
    %v3805 = vadd.f32 %v3803, 1.0
    %v3806 = vrcp.pop %v3804
    %v3807 = vmul.f32 %v3804, %v3806
    %v3808 = vsub.f32 1.0, %v3807
    %v3809 = vmul.f32 %v3806, %v3808
    %v3810 = vadd.f32 %v3806, %v3809
    %vm3811 = vweird.f32 %v3804
    %vm3812 = vweird.f32 %v3806
    %vm3813 = vmor %vm3811, %vm3812
    %v3814 = vsel %vm3813, %v3806, %v3810
    %v3815 = vand.u32 2147483647, %v3804
    %vm3816 = vcmp.eq.f32.partialorder %v3815, 8.507059e+37
    %v3817 = vand.u32 %v3804, 2147483648
    %v3818 = vor.u32 1.1754944e-38, %v3817
    %v3819 = vsel %vm3816, %v3818, %v3814
    %v3820 = vmul.f32 1.0, %v3819
    %v3821 = vrcp.pop %v3805
    %v3822 = vmul.f32 %v3805, %v3821
    %v3823 = vsub.f32 1.0, %v3822
    %v3824 = vmul.f32 %v3821, %v3823
    %v3825 = vadd.f32 %v3821, %v3824
    %vm3826 = vweird.f32 %v3805
    %vm3827 = vweird.f32 %v3821
    %vm3828 = vmor %vm3826, %vm3827
    %v3829 = vsel %vm3828, %v3821, %v3825
    %v3830 = vand.u32 2147483647, %v3805
    %vm3831 = vcmp.eq.f32.partialorder %v3830, 8.507059e+37
    %v3832 = vand.u32 %v3805, 2147483648
    %v3833 = vor.u32 1.1754944e-38, %v3832
    %v3834 = vsel %vm3831, %v3833, %v3829
    %v3835 = vmul.f32 1.0, %v3834
    %v3836 = vtanh.pop %v3796
    %v3837 = vmul.f32 %v3820, %v3746
    %v3838 = vmul.f32 %v3820, %v3836
    %3840 = vrot.lane.b32.xlu0 %v3838, 64
    %v3841 = vpop.permute.xlu0 %3840
    %v3843 = vadd.f32 %v3837, %v3841
    %v3844 = vtanh.pop %v3843
    %v3845 = vmul.f32 %v3835, %v3844
    %3847 = vrot.lane.b32.xlu0 %v3845, 64
    %v3848 = vpop.permute.xlu0 %3847
    %3850 = vst.msk [vmem:[%s1016] sm:$0xff] %vm228, %v3848
    %v3851 = vld [vmem:[#allocation2] sm:$0xff]
    %v3852 = vld [vmem:[#allocation2 + $0x8] sm:$0xff]
    %v3853 = vld [vmem:[#allocation2 + $0x10] sm:$0xff]
    %v3854 = vld [vmem:[#allocation2 + $0x18] sm:$0xff]
    %v3855 = vld [vmem:[#allocation2 + $0x20] sm:$0xff]
    %v3856 = vld [vmem:[#allocation2 + $0x28] sm:$0xff]
    %v3857 = vld [vmem:[#allocation2 + $0x30] sm:$0xff]
    %v3858 = vld [vmem:[#allocation2 + $0x38] sm:$0xff]
    %s3859 = scalar_lea.vmem [#allocation5], 384
    %v3860 = vld [vmem:[%s3859] sm:$0xff]
    %v3861 = vld [vmem:[%s3859 + $0x8] sm:$0xff]
    %v3862 = vld [vmem:[%s3859 + $0x10] sm:$0xff]
    %v3863 = vld [vmem:[%s3859 + $0x18] sm:$0xff]
    %v3864 = vld [vmem:[%s3859 + $0x20] sm:$0xff]
    %v3865 = vld [vmem:[%s3859 + $0x28] sm:$0xff]
    %v3866 = vld [vmem:[%s3859 + $0x30] sm:$0xff]
    %v3867 = vld [vmem:[%s3859 + $0x38] sm:$0xff]
    %v3868 = vld [vmem:[%s3859 + $0x40] sm:$0xff]
    %v3869 = vld [vmem:[%s3859 + $0x48] sm:$0xff]
    %v3870 = vld [vmem:[%s3859 + $0x50] sm:$0xff]
    %v3871 = vld [vmem:[%s3859 + $0x58] sm:$0xff]
    %v3872 = vld [vmem:[%s3859 + $0x60] sm:$0xff]
    %v3873 = vld [vmem:[%s3859 + $0x68] sm:$0xff]
    %v3874 = vld [vmem:[%s3859 + $0x70] sm:$0xff]
    %v3875 = vld [vmem:[%s3859 + $0x78] sm:$0xff]
    %s3876 = scalar_lea.vmem %s5, 6
    %v3877 = vld [vmem:[%s3876] sm:$0x3]
    %v3879 = vperm.slane %v3877, 0
    %v3880 = vperm.slane %v3877, 1
    %v3884 = vsel %vm228, %v3851, 0
    %v3887 = vsel %vm228, %v3852, 0
    %v3890 = vsel %vm228, %v3853, 0
    %v3893 = vsel %vm228, %v3854, 0
    %v3896 = vsel %vm228, %v3855, 0
    %v3899 = vsel %vm228, %v3856, 0
    %v3902 = vsel %vm228, %v3857, 0
    %v3905 = vsel %vm228, %v3858, 0
    %3907 = vmatpush.msra.mxu0 0.0
    %3908 = vmatpush.msra.mxu0 0.0
    %3909 = vmatpush.msra.mxu0 0.0
    %3910 = vmatpush.msra.mxu0 0.0
    %3911 = vmatpush.msra.mxu0 0.0
    %3912 = vmatpush.msra.mxu0 0.0
    %3913 = vmatpush.msra.mxu0 0.0
    %3914 = vmatpush.msra.mxu0 0.0
    %3915 = vmatpush.msra.mxu0 %v3874
    %3916 = vmatpush.msra.mxu0 %v3872
    %3917 = vmatpush.msra.mxu0 %v3870
    %3918 = vmatpush.msra.mxu0 %v3868
    %3919 = vmatpush.msra.mxu0 %v3866
    %3920 = vmatpush.msra.mxu0 %v3864
    %3921 = vmatpush.msra.mxu0 %v3862
    %3922 = vmatpush.msra.mxu0 %v3860
    %3923 = vmatmul.f32.gmra.mxu0 %v3884
    %v3924 = vpop.f32.mrf.mxu0
    %v3925 = vadd.f32 %v3879, %v3924
    %3926 = vmatmul.f32.gmra.mxu0 %v3887
    %v3927 = vpop.f32.mrf.mxu0
    %v3928 = vadd.f32 %v3879, %v3927
    %3929 = vmatmul.f32.gmra.mxu0 %v3890
    %v3930 = vpop.f32.mrf.mxu0
    %v3931 = vadd.f32 %v3879, %v3930
    %3932 = vmatmul.f32.gmra.mxu0 %v3893
    %v3933 = vpop.f32.mrf.mxu0
    %v3934 = vadd.f32 %v3879, %v3933
    %3935 = vmatmul.f32.gmra.mxu0 %v3896
    %v3936 = vpop.f32.mrf.mxu0
    %v3937 = vadd.f32 %v3879, %v3936
    %3938 = vmatmul.f32.gmra.mxu0 %v3899
    %v3939 = vpop.f32.mrf.mxu0
    %v3940 = vadd.f32 %v3879, %v3939
    %3941 = vmatmul.f32.gmra.mxu0 %v3902
    %v3942 = vpop.f32.mrf.mxu0
    %v3943 = vadd.f32 %v3879, %v3942
    %3944 = vmatmul.f32.gmra.mxu0 %v3905
    %v3945 = vpop.f32.mrf.mxu0
    %v3946 = vadd.f32 %v3879, %v3945
    %3947 = vdwg.mxu0
    %3948 = vmatpush.msra.mxu0 0.0
    %3949 = vmatpush.msra.mxu0 0.0
    %3950 = vmatpush.msra.mxu0 0.0
    %3951 = vmatpush.msra.mxu0 0.0
    %3952 = vmatpush.msra.mxu0 0.0
    %3953 = vmatpush.msra.mxu0 0.0
    %3954 = vmatpush.msra.mxu0 0.0
    %3955 = vmatpush.msra.mxu0 0.0
    %3956 = vmatpush.msra.mxu0 %v3875
    %3957 = vmatpush.msra.mxu0 %v3873
    %3958 = vmatpush.msra.mxu0 %v3871
    %3959 = vmatpush.msra.mxu0 %v3869
    %3960 = vmatpush.msra.mxu0 %v3867
    %3961 = vmatpush.msra.mxu0 %v3865
    %3962 = vmatpush.msra.mxu0 %v3863
    %3963 = vmatpush.msra.mxu0 %v3861
    %3964 = vmatmul.f32.gmra.mxu0 %v3884
    %v3965 = vpop.f32.mrf.mxu0
    %v3966 = vadd.f32 %v3880, %v3965
    %3967 = vmatmul.f32.gmra.mxu0 %v3887
    %v3968 = vpop.f32.mrf.mxu0
    %v3969 = vadd.f32 %v3880, %v3968
    %3970 = vmatmul.f32.gmra.mxu0 %v3890
    %v3971 = vpop.f32.mrf.mxu0
    %v3972 = vadd.f32 %v3880, %v3971
    %3973 = vmatmul.f32.gmra.mxu0 %v3893
    %v3974 = vpop.f32.mrf.mxu0
    %v3975 = vadd.f32 %v3880, %v3974
    %3976 = vmatmul.f32.gmra.mxu0 %v3896
    %v3977 = vpop.f32.mrf.mxu0
    %v3978 = vadd.f32 %v3880, %v3977
    %3979 = vmatmul.f32.gmra.mxu0 %v3899
    %v3980 = vpop.f32.mrf.mxu0
    %v3981 = vadd.f32 %v3880, %v3980
    %3982 = vmatmul.f32.gmra.mxu0 %v3902
    %v3983 = vpop.f32.mrf.mxu0
    %v3984 = vadd.f32 %v3880, %v3983
    %3985 = vmatmul.f32.gmra.mxu0 %v3905
    %v3986 = vpop.f32.mrf.mxu0
    %v3987 = vadd.f32 %v3880, %v3986
    %3988 = vdwg.mxu0
    %3989 = vst [vmem:[#allocation3] sm:$0xff] %v3925
    %3990 = vst [vmem:[#allocation3 + $0x8] sm:$0xff] %v3966
    %3991 = vst [vmem:[#allocation3 + $0x10] sm:$0xff] %v3928
    %3992 = vst [vmem:[#allocation3 + $0x18] sm:$0xff] %v3969
    %3993 = vst [vmem:[#allocation3 + $0x20] sm:$0xff] %v3931
    %3994 = vst [vmem:[#allocation3 + $0x28] sm:$0xff] %v3972
    %3995 = vst [vmem:[#allocation3 + $0x30] sm:$0xff] %v3934
    %3996 = vst [vmem:[#allocation3 + $0x38] sm:$0xff] %v3975
    %3997 = vst [vmem:[#allocation3 + $0x40] sm:$0xff] %v3937
    %3998 = vst [vmem:[#allocation3 + $0x48] sm:$0xff] %v3978
    %3999 = vst [vmem:[#allocation3 + $0x50] sm:$0xff] %v3940
    %4000 = vst [vmem:[#allocation3 + $0x58] sm:$0xff] %v3981
    %4001 = vst [vmem:[#allocation3 + $0x60] sm:$0xff] %v3943
    %4002 = vst [vmem:[#allocation3 + $0x68] sm:$0xff] %v3984
    %4003 = vst [vmem:[#allocation3 + $0x70] sm:$0xff] %v3946
    %4004 = vst [vmem:[#allocation3 + $0x78] sm:$0xff] %v3987
    %s4005 = scalar_lea.vmem [#allocation7], 512
    %v4006 = vld [vmem:[%s4005] sm:$0xff]
    %v4007 = vld [vmem:[%s4005 + $0x8] sm:$0xff]
    %v4008 = vld [vmem:[%s4005 + $0x10] sm:$0xff]
    %v4009 = vld [vmem:[%s4005 + $0x18] sm:$0xff]
    %v4010 = vld [vmem:[%s4005 + $0x20] sm:$0xff]
    %v4011 = vld [vmem:[%s4005 + $0x28] sm:$0xff]
    %v4012 = vld [vmem:[%s4005 + $0x30] sm:$0xff]
    %v4013 = vld [vmem:[%s4005 + $0x38] sm:$0xff]
    %v4014 = vld [vmem:[%s4005 + $0x40] sm:$0xff]
    %v4015 = vld [vmem:[%s4005 + $0x48] sm:$0xff]
    %v4016 = vld [vmem:[%s4005 + $0x50] sm:$0xff]
    %v4017 = vld [vmem:[%s4005 + $0x58] sm:$0xff]
    %v4018 = vld [vmem:[%s4005 + $0x60] sm:$0xff]
    %v4019 = vld [vmem:[%s4005 + $0x68] sm:$0xff]
    %v4020 = vld [vmem:[%s4005 + $0x70] sm:$0xff]
    %v4021 = vld [vmem:[%s4005 + $0x78] sm:$0xff]
    %v4022 = vld [vmem:[#allocation3] sm:$0xff]
    %v4023 = vld [vmem:[#allocation3 + $0x8] sm:$0xff]
    %4024 = vmatpush.msra.mxu0 0.0
    %4025 = vmatpush.msra.mxu0 0.0
    %4026 = vmatpush.msra.mxu0 0.0
    %4027 = vmatpush.msra.mxu0 0.0
    %4028 = vmatpush.msra.mxu0 0.0
    %4029 = vmatpush.msra.mxu0 0.0
    %4030 = vmatpush.msra.mxu0 0.0
    %4031 = vmatpush.msra.mxu0 0.0
    %4032 = vmatpush.msra.mxu0 %v4020
    %4033 = vmatpush.msra.mxu0 %v4018
    %4034 = vmatpush.msra.mxu0 %v4016
    %4035 = vmatpush.msra.mxu0 %v4014
    %4036 = vmatpush.msra.mxu0 %v4012
    %4037 = vmatpush.msra.mxu0 %v4010
    %4038 = vmatpush.msra.mxu0 %v4008
    %4039 = vmatpush.msra.mxu0 %v4006
    %4040 = vmatmul.f32.gmra.mxu0 %v230
    %v4041 = vpop.f32.mrf.mxu0
    %v4042 = vadd.f32 %v4022, %v4041
    %4043 = vdwg.mxu0
    %4044 = vmatpush.msra.mxu0 0.0
    %4045 = vmatpush.msra.mxu0 0.0
    %4046 = vmatpush.msra.mxu0 0.0
    %4047 = vmatpush.msra.mxu0 0.0
    %4048 = vmatpush.msra.mxu0 0.0
    %4049 = vmatpush.msra.mxu0 0.0
    %4050 = vmatpush.msra.mxu0 0.0
    %4051 = vmatpush.msra.mxu0 0.0
    %4052 = vmatpush.msra.mxu0 %v4021
    %4053 = vmatpush.msra.mxu0 %v4019
    %4054 = vmatpush.msra.mxu0 %v4017
    %4055 = vmatpush.msra.mxu0 %v4015
    %4056 = vmatpush.msra.mxu0 %v4013
    %4057 = vmatpush.msra.mxu0 %v4011
    %4058 = vmatpush.msra.mxu0 %v4009
    %4059 = vmatpush.msra.mxu0 %v4007
    %4060 = vmatmul.f32.gmra.mxu0 %v230
    %v4061 = vpop.f32.mrf.mxu0
    %v4062 = vadd.f32 %v4023, %v4061
    %4063 = vdwg.mxu0
    %v4064 = vxor.u32 %v4042, 2147483648
    %v4065 = vxor.u32 %v4062, 2147483648
    %v4066 = vmul.f32 %v4064, 1.442695
    %v4067 = vpow.pop %v4066
    %v4068 = vmul.f32 %v4065, 1.442695
    %v4069 = vpow.pop %v4068
    %v4070 = vadd.f32 %v4067, 1.0
    %v4071 = vadd.f32 %v4069, 1.0
    %v4072 = vrcp.pop %v4070
    %v4073 = vmul.f32 %v4070, %v4072
    %v4074 = vsub.f32 1.0, %v4073
    %v4075 = vmul.f32 %v4072, %v4074
    %v4076 = vadd.f32 %v4072, %v4075
    %vm4077 = vweird.f32 %v4070
    %vm4078 = vweird.f32 %v4072
    %vm4079 = vmor %vm4077, %vm4078
    %v4080 = vsel %vm4079, %v4072, %v4076
    %v4081 = vand.u32 2147483647, %v4070
    %vm4082 = vcmp.eq.f32.partialorder %v4081, 8.507059e+37
    %v4083 = vand.u32 %v4070, 2147483648
    %v4084 = vor.u32 1.1754944e-38, %v4083
    %v4085 = vsel %vm4082, %v4084, %v4080
    %v4086 = vmul.f32 1.0, %v4085
    %v4087 = vrcp.pop %v4071
    %v4088 = vmul.f32 %v4071, %v4087
    %v4089 = vsub.f32 1.0, %v4088
    %v4090 = vmul.f32 %v4087, %v4089
    %v4091 = vadd.f32 %v4087, %v4090
    %vm4092 = vweird.f32 %v4071
    %vm4093 = vweird.f32 %v4087
    %vm4094 = vmor %vm4092, %vm4093
    %v4095 = vsel %vm4094, %v4087, %v4091
    %v4096 = vand.u32 2147483647, %v4071
    %vm4097 = vcmp.eq.f32.partialorder %v4096, 8.507059e+37
    %v4098 = vand.u32 %v4071, 2147483648
    %v4099 = vor.u32 1.1754944e-38, %v4098
    %v4100 = vsel %vm4097, %v4099, %v4095
    %v4101 = vmul.f32 1.0, %v4100
    %v4102 = vtanh.pop %v4062
    %v4103 = vmul.f32 %v4086, 0.0
    %v4104 = vmul.f32 %v4086, %v4102
    %4106 = vrot.lane.b32.xlu0 %v4104, 64
    %v4107 = vpop.permute.xlu0 %4106
    %v4109 = vadd.f32 %v4103, %v4107
    %v4110 = vtanh.pop %v4109
    %v4111 = vmul.f32 %v4101, %v4110
    %4113 = vrot.lane.b32.xlu0 %v4111, 64
    %v4114 = vpop.permute.xlu0 %4113
    %4116 = vst.msk [vmem:[#allocation2] sm:$0xff] %vm228, %v4114
    %v4117 = vld [vmem:[%s325] sm:$0xff]
    %v4118 = vld [vmem:[%s325 + $0x8] sm:$0xff]
    %v4119 = vsel %vm228, %v4114, 0
    %4121 = vmatpush.msra.mxu0 0.0
    %4122 = vmatpush.msra.mxu0 0.0
    %4123 = vmatpush.msra.mxu0 0.0
    %4124 = vmatpush.msra.mxu0 0.0
    %4125 = vmatpush.msra.mxu0 0.0
    %4126 = vmatpush.msra.mxu0 0.0
    %4127 = vmatpush.msra.mxu0 0.0
    %4128 = vmatpush.msra.mxu0 0.0
    %4129 = vmatpush.msra.mxu0 %v4020
    %4130 = vmatpush.msra.mxu0 %v4018
    %4131 = vmatpush.msra.mxu0 %v4016
    %4132 = vmatpush.msra.mxu0 %v4014
    %4133 = vmatpush.msra.mxu0 %v4012
    %4134 = vmatpush.msra.mxu0 %v4010
    %4135 = vmatpush.msra.mxu0 %v4008
    %4136 = vmatpush.msra.mxu0 %v4006
    %4137 = vmatmul.f32.gmra.mxu0 %v4119
    %v4138 = vpop.f32.mrf.mxu0
    %v4139 = vadd.f32 %v4117, %v4138
    %4140 = vdwg.mxu0
    %4141 = vmatpush.msra.mxu0 0.0
    %4142 = vmatpush.msra.mxu0 0.0
    %4143 = vmatpush.msra.mxu0 0.0
    %4144 = vmatpush.msra.mxu0 0.0
    %4145 = vmatpush.msra.mxu0 0.0
    %4146 = vmatpush.msra.mxu0 0.0
    %4147 = vmatpush.msra.mxu0 0.0
    %4148 = vmatpush.msra.mxu0 0.0
    %4149 = vmatpush.msra.mxu0 %v4021
    %4150 = vmatpush.msra.mxu0 %v4019
    %4151 = vmatpush.msra.mxu0 %v4017
    %4152 = vmatpush.msra.mxu0 %v4015
    %4153 = vmatpush.msra.mxu0 %v4013
    %4154 = vmatpush.msra.mxu0 %v4011
    %4155 = vmatpush.msra.mxu0 %v4009
    %4156 = vmatpush.msra.mxu0 %v4007
    %4157 = vmatmul.f32.gmra.mxu0 %v4119
    %v4158 = vpop.f32.mrf.mxu0
    %v4159 = vadd.f32 %v4118, %v4158
    %4160 = vdwg.mxu0
    %v4161 = vxor.u32 %v4139, 2147483648
    %v4162 = vxor.u32 %v4159, 2147483648
    %v4163 = vmul.f32 %v4161, 1.442695
    %v4164 = vpow.pop %v4163
    %v4165 = vmul.f32 %v4162, 1.442695
    %v4166 = vpow.pop %v4165
    %v4167 = vadd.f32 %v4164, 1.0
    %v4168 = vadd.f32 %v4166, 1.0
    %v4169 = vrcp.pop %v4167
    %v4170 = vmul.f32 %v4167, %v4169
    %v4171 = vsub.f32 1.0, %v4170
    %v4172 = vmul.f32 %v4169, %v4171
    %v4173 = vadd.f32 %v4169, %v4172
    %vm4174 = vweird.f32 %v4167
    %vm4175 = vweird.f32 %v4169
    %vm4176 = vmor %vm4174, %vm4175
    %v4177 = vsel %vm4176, %v4169, %v4173
    %v4178 = vand.u32 2147483647, %v4167
    %vm4179 = vcmp.eq.f32.partialorder %v4178, 8.507059e+37
    %v4180 = vand.u32 %v4167, 2147483648
    %v4181 = vor.u32 1.1754944e-38, %v4180
    %v4182 = vsel %vm4179, %v4181, %v4177
    %v4183 = vmul.f32 1.0, %v4182
    %v4184 = vrcp.pop %v4168
    %v4185 = vmul.f32 %v4168, %v4184
    %v4186 = vsub.f32 1.0, %v4185
    %v4187 = vmul.f32 %v4184, %v4186
    %v4188 = vadd.f32 %v4184, %v4187
    %vm4189 = vweird.f32 %v4168
    %vm4190 = vweird.f32 %v4184
    %vm4191 = vmor %vm4189, %vm4190
    %v4192 = vsel %vm4191, %v4184, %v4188
    %v4193 = vand.u32 2147483647, %v4168
    %vm4194 = vcmp.eq.f32.partialorder %v4193, 8.507059e+37
    %v4195 = vand.u32 %v4168, 2147483648
    %v4196 = vor.u32 1.1754944e-38, %v4195
    %v4197 = vsel %vm4194, %v4196, %v4192
    %v4198 = vmul.f32 1.0, %v4197
    %v4199 = vtanh.pop %v4159
    %v4200 = vmul.f32 %v4183, %v4109
    %v4201 = vmul.f32 %v4183, %v4199
    %4203 = vrot.lane.b32.xlu0 %v4201, 64
    %v4204 = vpop.permute.xlu0 %4203
    %v4206 = vadd.f32 %v4200, %v4204
    %v4207 = vtanh.pop %v4206
    %v4208 = vmul.f32 %v4198, %v4207
    %4210 = vrot.lane.b32.xlu0 %v4208, 64
    %v4211 = vpop.permute.xlu0 %4210
    %4213 = vst.msk [vmem:[%s422] sm:$0xff] %vm228, %v4211
    %v4214 = vld [vmem:[%s424] sm:$0xff]
    %v4215 = vld [vmem:[%s424 + $0x8] sm:$0xff]
    %v4216 = vsel %vm228, %v4211, 0
    %4218 = vmatpush.msra.mxu0 0.0
    %4219 = vmatpush.msra.mxu0 0.0
    %4220 = vmatpush.msra.mxu0 0.0
    %4221 = vmatpush.msra.mxu0 0.0
    %4222 = vmatpush.msra.mxu0 0.0
    %4223 = vmatpush.msra.mxu0 0.0
    %4224 = vmatpush.msra.mxu0 0.0
    %4225 = vmatpush.msra.mxu0 0.0
    %4226 = vmatpush.msra.mxu0 %v4020
    %4227 = vmatpush.msra.mxu0 %v4018
    %4228 = vmatpush.msra.mxu0 %v4016
    %4229 = vmatpush.msra.mxu0 %v4014
    %4230 = vmatpush.msra.mxu0 %v4012
    %4231 = vmatpush.msra.mxu0 %v4010
    %4232 = vmatpush.msra.mxu0 %v4008
    %4233 = vmatpush.msra.mxu0 %v4006
    %4234 = vmatmul.f32.gmra.mxu0 %v4216
    %v4235 = vpop.f32.mrf.mxu0
    %v4236 = vadd.f32 %v4214, %v4235
    %4237 = vdwg.mxu0
    %4238 = vmatpush.msra.mxu0 0.0
    %4239 = vmatpush.msra.mxu0 0.0
    %4240 = vmatpush.msra.mxu0 0.0
    %4241 = vmatpush.msra.mxu0 0.0
    %4242 = vmatpush.msra.mxu0 0.0
    %4243 = vmatpush.msra.mxu0 0.0
    %4244 = vmatpush.msra.mxu0 0.0
    %4245 = vmatpush.msra.mxu0 0.0
    %4246 = vmatpush.msra.mxu0 %v4021
    %4247 = vmatpush.msra.mxu0 %v4019
    %4248 = vmatpush.msra.mxu0 %v4017
    %4249 = vmatpush.msra.mxu0 %v4015
    %4250 = vmatpush.msra.mxu0 %v4013
    %4251 = vmatpush.msra.mxu0 %v4011
    %4252 = vmatpush.msra.mxu0 %v4009
    %4253 = vmatpush.msra.mxu0 %v4007
    %4254 = vmatmul.f32.gmra.mxu0 %v4216
    %v4255 = vpop.f32.mrf.mxu0
    %v4256 = vadd.f32 %v4215, %v4255
    %4257 = vdwg.mxu0
    %v4258 = vxor.u32 %v4236, 2147483648
    %v4259 = vxor.u32 %v4256, 2147483648
    %v4260 = vmul.f32 %v4258, 1.442695
    %v4261 = vpow.pop %v4260
    %v4262 = vmul.f32 %v4259, 1.442695
    %v4263 = vpow.pop %v4262
    %v4264 = vadd.f32 %v4261, 1.0
    %v4265 = vadd.f32 %v4263, 1.0
    %v4266 = vrcp.pop %v4264
    %v4267 = vmul.f32 %v4264, %v4266
    %v4268 = vsub.f32 1.0, %v4267
    %v4269 = vmul.f32 %v4266, %v4268
    %v4270 = vadd.f32 %v4266, %v4269
    %vm4271 = vweird.f32 %v4264
    %vm4272 = vweird.f32 %v4266
    %vm4273 = vmor %vm4271, %vm4272
    %v4274 = vsel %vm4273, %v4266, %v4270
    %v4275 = vand.u32 2147483647, %v4264
    %vm4276 = vcmp.eq.f32.partialorder %v4275, 8.507059e+37
    %v4277 = vand.u32 %v4264, 2147483648
    %v4278 = vor.u32 1.1754944e-38, %v4277
    %v4279 = vsel %vm4276, %v4278, %v4274
    %v4280 = vmul.f32 1.0, %v4279
    %v4281 = vrcp.pop %v4265
    %v4282 = vmul.f32 %v4265, %v4281
    %v4283 = vsub.f32 1.0, %v4282
    %v4284 = vmul.f32 %v4281, %v4283
    %v4285 = vadd.f32 %v4281, %v4284
    %vm4286 = vweird.f32 %v4265
    %vm4287 = vweird.f32 %v4281
    %vm4288 = vmor %vm4286, %vm4287
    %v4289 = vsel %vm4288, %v4281, %v4285
    %v4290 = vand.u32 2147483647, %v4265
    %vm4291 = vcmp.eq.f32.partialorder %v4290, 8.507059e+37
    %v4292 = vand.u32 %v4265, 2147483648
    %v4293 = vor.u32 1.1754944e-38, %v4292
    %v4294 = vsel %vm4291, %v4293, %v4289
    %v4295 = vmul.f32 1.0, %v4294
    %v4296 = vtanh.pop %v4256
    %v4297 = vmul.f32 %v4280, %v4206
    %v4298 = vmul.f32 %v4280, %v4296
    %4300 = vrot.lane.b32.xlu0 %v4298, 64
    %v4301 = vpop.permute.xlu0 %4300
    %v4303 = vadd.f32 %v4297, %v4301
    %v4304 = vtanh.pop %v4303
    %v4305 = vmul.f32 %v4295, %v4304
    %4307 = vrot.lane.b32.xlu0 %v4305, 64
    %v4308 = vpop.permute.xlu0 %4307
    %4310 = vst.msk [vmem:[%s521] sm:$0xff] %vm228, %v4308
    %v4311 = vld [vmem:[%s523] sm:$0xff]
    %v4312 = vld [vmem:[%s523 + $0x8] sm:$0xff]
    %v4313 = vsel %vm228, %v4308, 0
    %4315 = vmatpush.msra.mxu0 0.0
    %4316 = vmatpush.msra.mxu0 0.0
    %4317 = vmatpush.msra.mxu0 0.0
    %4318 = vmatpush.msra.mxu0 0.0
    %4319 = vmatpush.msra.mxu0 0.0
    %4320 = vmatpush.msra.mxu0 0.0
    %4321 = vmatpush.msra.mxu0 0.0
    %4322 = vmatpush.msra.mxu0 0.0
    %4323 = vmatpush.msra.mxu0 %v4020
    %4324 = vmatpush.msra.mxu0 %v4018
    %4325 = vmatpush.msra.mxu0 %v4016
    %4326 = vmatpush.msra.mxu0 %v4014
    %4327 = vmatpush.msra.mxu0 %v4012
    %4328 = vmatpush.msra.mxu0 %v4010
    %4329 = vmatpush.msra.mxu0 %v4008
    %4330 = vmatpush.msra.mxu0 %v4006
    %4331 = vmatmul.f32.gmra.mxu0 %v4313
    %v4332 = vpop.f32.mrf.mxu0
    %v4333 = vadd.f32 %v4311, %v4332
    %4334 = vdwg.mxu0
    %4335 = vmatpush.msra.mxu0 0.0
    %4336 = vmatpush.msra.mxu0 0.0
    %4337 = vmatpush.msra.mxu0 0.0
    %4338 = vmatpush.msra.mxu0 0.0
    %4339 = vmatpush.msra.mxu0 0.0
    %4340 = vmatpush.msra.mxu0 0.0
    %4341 = vmatpush.msra.mxu0 0.0
    %4342 = vmatpush.msra.mxu0 0.0
    %4343 = vmatpush.msra.mxu0 %v4021
    %4344 = vmatpush.msra.mxu0 %v4019
    %4345 = vmatpush.msra.mxu0 %v4017
    %4346 = vmatpush.msra.mxu0 %v4015
    %4347 = vmatpush.msra.mxu0 %v4013
    %4348 = vmatpush.msra.mxu0 %v4011
    %4349 = vmatpush.msra.mxu0 %v4009
    %4350 = vmatpush.msra.mxu0 %v4007
    %4351 = vmatmul.f32.gmra.mxu0 %v4313
    %v4352 = vpop.f32.mrf.mxu0
    %v4353 = vadd.f32 %v4312, %v4352
    %4354 = vdwg.mxu0
    %v4355 = vxor.u32 %v4333, 2147483648
    %v4356 = vxor.u32 %v4353, 2147483648
    %v4357 = vmul.f32 %v4355, 1.442695
    %v4358 = vpow.pop %v4357
    %v4359 = vmul.f32 %v4356, 1.442695
    %v4360 = vpow.pop %v4359
    %v4361 = vadd.f32 %v4358, 1.0
    %v4362 = vadd.f32 %v4360, 1.0
    %v4363 = vrcp.pop %v4361
    %v4364 = vmul.f32 %v4361, %v4363
    %v4365 = vsub.f32 1.0, %v4364
    %v4366 = vmul.f32 %v4363, %v4365
    %v4367 = vadd.f32 %v4363, %v4366
    %vm4368 = vweird.f32 %v4361
    %vm4369 = vweird.f32 %v4363
    %vm4370 = vmor %vm4368, %vm4369
    %v4371 = vsel %vm4370, %v4363, %v4367
    %v4372 = vand.u32 2147483647, %v4361
    %vm4373 = vcmp.eq.f32.partialorder %v4372, 8.507059e+37
    %v4374 = vand.u32 %v4361, 2147483648
    %v4375 = vor.u32 1.1754944e-38, %v4374
    %v4376 = vsel %vm4373, %v4375, %v4371
    %v4377 = vmul.f32 1.0, %v4376
    %v4378 = vrcp.pop %v4362
    %v4379 = vmul.f32 %v4362, %v4378
    %v4380 = vsub.f32 1.0, %v4379
    %v4381 = vmul.f32 %v4378, %v4380
    %v4382 = vadd.f32 %v4378, %v4381
    %vm4383 = vweird.f32 %v4362
    %vm4384 = vweird.f32 %v4378
    %vm4385 = vmor %vm4383, %vm4384
    %v4386 = vsel %vm4385, %v4378, %v4382
    %v4387 = vand.u32 2147483647, %v4362
    %vm4388 = vcmp.eq.f32.partialorder %v4387, 8.507059e+37
    %v4389 = vand.u32 %v4362, 2147483648
    %v4390 = vor.u32 1.1754944e-38, %v4389
    %v4391 = vsel %vm4388, %v4390, %v4386
    %v4392 = vmul.f32 1.0, %v4391
    %v4393 = vtanh.pop %v4353
    %v4394 = vmul.f32 %v4377, %v4303
    %v4395 = vmul.f32 %v4377, %v4393
    %4397 = vrot.lane.b32.xlu0 %v4395, 64
    %v4398 = vpop.permute.xlu0 %4397
    %v4400 = vadd.f32 %v4394, %v4398
    %v4401 = vtanh.pop %v4400
    %v4402 = vmul.f32 %v4392, %v4401
    %4404 = vrot.lane.b32.xlu0 %v4402, 64
    %v4405 = vpop.permute.xlu0 %4404
    %4407 = vst.msk [vmem:[%s620] sm:$0xff] %vm228, %v4405
    %v4408 = vld [vmem:[%s622] sm:$0xff]
    %v4409 = vld [vmem:[%s622 + $0x8] sm:$0xff]
    %v4410 = vsel %vm228, %v4405, 0
    %4412 = vmatpush.msra.mxu0 0.0
    %4413 = vmatpush.msra.mxu0 0.0
    %4414 = vmatpush.msra.mxu0 0.0
    %4415 = vmatpush.msra.mxu0 0.0
    %4416 = vmatpush.msra.mxu0 0.0
    %4417 = vmatpush.msra.mxu0 0.0
    %4418 = vmatpush.msra.mxu0 0.0
    %4419 = vmatpush.msra.mxu0 0.0
    %4420 = vmatpush.msra.mxu0 %v4020
    %4421 = vmatpush.msra.mxu0 %v4018
    %4422 = vmatpush.msra.mxu0 %v4016
    %4423 = vmatpush.msra.mxu0 %v4014
    %4424 = vmatpush.msra.mxu0 %v4012
    %4425 = vmatpush.msra.mxu0 %v4010
    %4426 = vmatpush.msra.mxu0 %v4008
    %4427 = vmatpush.msra.mxu0 %v4006
    %4428 = vmatmul.f32.gmra.mxu0 %v4410
    %v4429 = vpop.f32.mrf.mxu0
    %v4430 = vadd.f32 %v4408, %v4429
    %4431 = vdwg.mxu0
    %4432 = vmatpush.msra.mxu0 0.0
    %4433 = vmatpush.msra.mxu0 0.0
    %4434 = vmatpush.msra.mxu0 0.0
    %4435 = vmatpush.msra.mxu0 0.0
    %4436 = vmatpush.msra.mxu0 0.0
    %4437 = vmatpush.msra.mxu0 0.0
    %4438 = vmatpush.msra.mxu0 0.0
    %4439 = vmatpush.msra.mxu0 0.0
    %4440 = vmatpush.msra.mxu0 %v4021
    %4441 = vmatpush.msra.mxu0 %v4019
    %4442 = vmatpush.msra.mxu0 %v4017
    %4443 = vmatpush.msra.mxu0 %v4015
    %4444 = vmatpush.msra.mxu0 %v4013
    %4445 = vmatpush.msra.mxu0 %v4011
    %4446 = vmatpush.msra.mxu0 %v4009
    %4447 = vmatpush.msra.mxu0 %v4007
    %4448 = vmatmul.f32.gmra.mxu0 %v4410
    %v4449 = vpop.f32.mrf.mxu0
    %v4450 = vadd.f32 %v4409, %v4449
    %4451 = vdwg.mxu0
    %v4452 = vxor.u32 %v4430, 2147483648
    %v4453 = vxor.u32 %v4450, 2147483648
    %v4454 = vmul.f32 %v4452, 1.442695
    %v4455 = vpow.pop %v4454
    %v4456 = vmul.f32 %v4453, 1.442695
    %v4457 = vpow.pop %v4456
    %v4458 = vadd.f32 %v4455, 1.0
    %v4459 = vadd.f32 %v4457, 1.0
    %v4460 = vrcp.pop %v4458
    %v4461 = vmul.f32 %v4458, %v4460
    %v4462 = vsub.f32 1.0, %v4461
    %v4463 = vmul.f32 %v4460, %v4462
    %v4464 = vadd.f32 %v4460, %v4463
    %vm4465 = vweird.f32 %v4458
    %vm4466 = vweird.f32 %v4460
    %vm4467 = vmor %vm4465, %vm4466
    %v4468 = vsel %vm4467, %v4460, %v4464
    %v4469 = vand.u32 2147483647, %v4458
    %vm4470 = vcmp.eq.f32.partialorder %v4469, 8.507059e+37
    %v4471 = vand.u32 %v4458, 2147483648
    %v4472 = vor.u32 1.1754944e-38, %v4471
    %v4473 = vsel %vm4470, %v4472, %v4468
    %v4474 = vmul.f32 1.0, %v4473
    %v4475 = vrcp.pop %v4459
    %v4476 = vmul.f32 %v4459, %v4475
    %v4477 = vsub.f32 1.0, %v4476
    %v4478 = vmul.f32 %v4475, %v4477
    %v4479 = vadd.f32 %v4475, %v4478
    %vm4480 = vweird.f32 %v4459
    %vm4481 = vweird.f32 %v4475
    %vm4482 = vmor %vm4480, %vm4481
    %v4483 = vsel %vm4482, %v4475, %v4479
    %v4484 = vand.u32 2147483647, %v4459
    %vm4485 = vcmp.eq.f32.partialorder %v4484, 8.507059e+37
    %v4486 = vand.u32 %v4459, 2147483648
    %v4487 = vor.u32 1.1754944e-38, %v4486
    %v4488 = vsel %vm4485, %v4487, %v4483
    %v4489 = vmul.f32 1.0, %v4488
    %v4490 = vtanh.pop %v4450
    %v4491 = vmul.f32 %v4474, %v4400
    %v4492 = vmul.f32 %v4474, %v4490
    %4494 = vrot.lane.b32.xlu0 %v4492, 64
    %v4495 = vpop.permute.xlu0 %4494
    %v4497 = vadd.f32 %v4491, %v4495
    %v4498 = vtanh.pop %v4497
    %v4499 = vmul.f32 %v4489, %v4498
    %4501 = vrot.lane.b32.xlu0 %v4499, 64
    %v4502 = vpop.permute.xlu0 %4501
    %4504 = vst.msk [vmem:[%s719] sm:$0xff] %vm228, %v4502
    %v4505 = vld [vmem:[%s721] sm:$0xff]
    %v4506 = vld [vmem:[%s721 + $0x8] sm:$0xff]
    %v4507 = vsel %vm228, %v4502, 0
    %4509 = vmatpush.msra.mxu0 0.0
    %4510 = vmatpush.msra.mxu0 0.0
    %4511 = vmatpush.msra.mxu0 0.0
    %4512 = vmatpush.msra.mxu0 0.0
    %4513 = vmatpush.msra.mxu0 0.0
    %4514 = vmatpush.msra.mxu0 0.0
    %4515 = vmatpush.msra.mxu0 0.0
    %4516 = vmatpush.msra.mxu0 0.0
    %4517 = vmatpush.msra.mxu0 %v4020
    %4518 = vmatpush.msra.mxu0 %v4018
    %4519 = vmatpush.msra.mxu0 %v4016
    %4520 = vmatpush.msra.mxu0 %v4014
    %4521 = vmatpush.msra.mxu0 %v4012
    %4522 = vmatpush.msra.mxu0 %v4010
    %4523 = vmatpush.msra.mxu0 %v4008
    %4524 = vmatpush.msra.mxu0 %v4006
    %4525 = vmatmul.f32.gmra.mxu0 %v4507
    %v4526 = vpop.f32.mrf.mxu0
    %v4527 = vadd.f32 %v4505, %v4526
    %4528 = vdwg.mxu0
    %4529 = vmatpush.msra.mxu0 0.0
    %4530 = vmatpush.msra.mxu0 0.0
    %4531 = vmatpush.msra.mxu0 0.0
    %4532 = vmatpush.msra.mxu0 0.0
    %4533 = vmatpush.msra.mxu0 0.0
    %4534 = vmatpush.msra.mxu0 0.0
    %4535 = vmatpush.msra.mxu0 0.0
    %4536 = vmatpush.msra.mxu0 0.0
    %4537 = vmatpush.msra.mxu0 %v4021
    %4538 = vmatpush.msra.mxu0 %v4019
    %4539 = vmatpush.msra.mxu0 %v4017
    %4540 = vmatpush.msra.mxu0 %v4015
    %4541 = vmatpush.msra.mxu0 %v4013
    %4542 = vmatpush.msra.mxu0 %v4011
    %4543 = vmatpush.msra.mxu0 %v4009
    %4544 = vmatpush.msra.mxu0 %v4007
    %4545 = vmatmul.f32.gmra.mxu0 %v4507
    %v4546 = vpop.f32.mrf.mxu0
    %v4547 = vadd.f32 %v4506, %v4546
    %4548 = vdwg.mxu0
    %v4549 = vxor.u32 %v4527, 2147483648
    %v4550 = vxor.u32 %v4547, 2147483648
    %v4551 = vmul.f32 %v4549, 1.442695
    %v4552 = vpow.pop %v4551
    %v4553 = vmul.f32 %v4550, 1.442695
    %v4554 = vpow.pop %v4553
    %v4555 = vadd.f32 %v4552, 1.0
    %v4556 = vadd.f32 %v4554, 1.0
    %v4557 = vrcp.pop %v4555
    %v4558 = vmul.f32 %v4555, %v4557
    %v4559 = vsub.f32 1.0, %v4558
    %v4560 = vmul.f32 %v4557, %v4559
    %v4561 = vadd.f32 %v4557, %v4560
    %vm4562 = vweird.f32 %v4555
    %vm4563 = vweird.f32 %v4557
    %vm4564 = vmor %vm4562, %vm4563
    %v4565 = vsel %vm4564, %v4557, %v4561
    %v4566 = vand.u32 2147483647, %v4555
    %vm4567 = vcmp.eq.f32.partialorder %v4566, 8.507059e+37
    %v4568 = vand.u32 %v4555, 2147483648
    %v4569 = vor.u32 1.1754944e-38, %v4568
    %v4570 = vsel %vm4567, %v4569, %v4565
    %v4571 = vmul.f32 1.0, %v4570
    %v4572 = vrcp.pop %v4556
    %v4573 = vmul.f32 %v4556, %v4572
    %v4574 = vsub.f32 1.0, %v4573
    %v4575 = vmul.f32 %v4572, %v4574
    %v4576 = vadd.f32 %v4572, %v4575
    %vm4577 = vweird.f32 %v4556
    %vm4578 = vweird.f32 %v4572
    %vm4579 = vmor %vm4577, %vm4578
    %v4580 = vsel %vm4579, %v4572, %v4576
    %v4581 = vand.u32 2147483647, %v4556
    %vm4582 = vcmp.eq.f32.partialorder %v4581, 8.507059e+37
    %v4583 = vand.u32 %v4556, 2147483648
    %v4584 = vor.u32 1.1754944e-38, %v4583
    %v4585 = vsel %vm4582, %v4584, %v4580
    %v4586 = vmul.f32 1.0, %v4585
    %v4587 = vtanh.pop %v4547
    %v4588 = vmul.f32 %v4571, %v4497
    %v4589 = vmul.f32 %v4571, %v4587
    %4591 = vrot.lane.b32.xlu0 %v4589, 64
    %v4592 = vpop.permute.xlu0 %4591
    %v4594 = vadd.f32 %v4588, %v4592
    %v4595 = vtanh.pop %v4594
    %v4596 = vmul.f32 %v4586, %v4595
    %4598 = vrot.lane.b32.xlu0 %v4596, 64
    %v4599 = vpop.permute.xlu0 %4598
    %4601 = vst.msk [vmem:[%s818] sm:$0xff] %vm228, %v4599
    %v4602 = vld [vmem:[%s820] sm:$0xff]
    %v4603 = vld [vmem:[%s820 + $0x8] sm:$0xff]
    %v4604 = vsel %vm228, %v4599, 0
    %4606 = vmatpush.msra.mxu0 0.0
    %4607 = vmatpush.msra.mxu0 0.0
    %4608 = vmatpush.msra.mxu0 0.0
    %4609 = vmatpush.msra.mxu0 0.0
    %4610 = vmatpush.msra.mxu0 0.0
    %4611 = vmatpush.msra.mxu0 0.0
    %4612 = vmatpush.msra.mxu0 0.0
    %4613 = vmatpush.msra.mxu0 0.0
    %4614 = vmatpush.msra.mxu0 %v4020
    %4615 = vmatpush.msra.mxu0 %v4018
    %4616 = vmatpush.msra.mxu0 %v4016
    %4617 = vmatpush.msra.mxu0 %v4014
    %4618 = vmatpush.msra.mxu0 %v4012
    %4619 = vmatpush.msra.mxu0 %v4010
    %4620 = vmatpush.msra.mxu0 %v4008
    %4621 = vmatpush.msra.mxu0 %v4006
    %4622 = vmatmul.f32.gmra.mxu0 %v4604
    %v4623 = vpop.f32.mrf.mxu0
    %v4624 = vadd.f32 %v4602, %v4623
    %4625 = vdwg.mxu0
    %4626 = vmatpush.msra.mxu0 0.0
    %4627 = vmatpush.msra.mxu0 0.0
    %4628 = vmatpush.msra.mxu0 0.0
    %4629 = vmatpush.msra.mxu0 0.0
    %4630 = vmatpush.msra.mxu0 0.0
    %4631 = vmatpush.msra.mxu0 0.0
    %4632 = vmatpush.msra.mxu0 0.0
    %4633 = vmatpush.msra.mxu0 0.0
    %4634 = vmatpush.msra.mxu0 %v4021
    %4635 = vmatpush.msra.mxu0 %v4019
    %4636 = vmatpush.msra.mxu0 %v4017
    %4637 = vmatpush.msra.mxu0 %v4015
    %4638 = vmatpush.msra.mxu0 %v4013
    %4639 = vmatpush.msra.mxu0 %v4011
    %4640 = vmatpush.msra.mxu0 %v4009
    %4641 = vmatpush.msra.mxu0 %v4007
    %4642 = vmatmul.f32.gmra.mxu0 %v4604
    %v4643 = vpop.f32.mrf.mxu0
    %v4644 = vadd.f32 %v4603, %v4643
    %4645 = vdwg.mxu0
    %v4646 = vxor.u32 %v4624, 2147483648
    %v4647 = vxor.u32 %v4644, 2147483648
    %v4648 = vmul.f32 %v4646, 1.442695
    %v4649 = vpow.pop %v4648
    %v4650 = vmul.f32 %v4647, 1.442695
    %v4651 = vpow.pop %v4650
    %v4652 = vadd.f32 %v4649, 1.0
    %v4653 = vadd.f32 %v4651, 1.0
    %v4654 = vrcp.pop %v4652
    %v4655 = vmul.f32 %v4652, %v4654
    %v4656 = vsub.f32 1.0, %v4655
    %v4657 = vmul.f32 %v4654, %v4656
    %v4658 = vadd.f32 %v4654, %v4657
    %vm4659 = vweird.f32 %v4652
    %vm4660 = vweird.f32 %v4654
    %vm4661 = vmor %vm4659, %vm4660
    %v4662 = vsel %vm4661, %v4654, %v4658
    %v4663 = vand.u32 2147483647, %v4652
    %vm4664 = vcmp.eq.f32.partialorder %v4663, 8.507059e+37
    %v4665 = vand.u32 %v4652, 2147483648
    %v4666 = vor.u32 1.1754944e-38, %v4665
    %v4667 = vsel %vm4664, %v4666, %v4662
    %v4668 = vmul.f32 1.0, %v4667
    %v4669 = vrcp.pop %v4653
    %v4670 = vmul.f32 %v4653, %v4669
    %v4671 = vsub.f32 1.0, %v4670
    %v4672 = vmul.f32 %v4669, %v4671
    %v4673 = vadd.f32 %v4669, %v4672
    %vm4674 = vweird.f32 %v4653
    %vm4675 = vweird.f32 %v4669
    %vm4676 = vmor %vm4674, %vm4675
    %v4677 = vsel %vm4676, %v4669, %v4673
    %v4678 = vand.u32 2147483647, %v4653
    %vm4679 = vcmp.eq.f32.partialorder %v4678, 8.507059e+37
    %v4680 = vand.u32 %v4653, 2147483648
    %v4681 = vor.u32 1.1754944e-38, %v4680
    %v4682 = vsel %vm4679, %v4681, %v4677
    %v4683 = vmul.f32 1.0, %v4682
    %v4684 = vtanh.pop %v4644
    %v4685 = vmul.f32 %v4668, %v4594
    %v4686 = vmul.f32 %v4668, %v4684
    %4688 = vrot.lane.b32.xlu0 %v4686, 64
    %v4689 = vpop.permute.xlu0 %4688
    %v4691 = vadd.f32 %v4685, %v4689
    %v4692 = vtanh.pop %v4691
    %v4693 = vmul.f32 %v4683, %v4692
    %4695 = vrot.lane.b32.xlu0 %v4693, 64
    %v4696 = vpop.permute.xlu0 %4695
    %4698 = vst.msk [vmem:[%s917] sm:$0xff] %vm228, %v4696
    %v4699 = vld [vmem:[%s919] sm:$0xff]
    %v4700 = vld [vmem:[%s919 + $0x8] sm:$0xff]
    %v4701 = vsel %vm228, %v4696, 0
    %4703 = vmatpush.msra.mxu0 0.0
    %4704 = vmatpush.msra.mxu0 0.0
    %4705 = vmatpush.msra.mxu0 0.0
    %4706 = vmatpush.msra.mxu0 0.0
    %4707 = vmatpush.msra.mxu0 0.0
    %4708 = vmatpush.msra.mxu0 0.0
    %4709 = vmatpush.msra.mxu0 0.0
    %4710 = vmatpush.msra.mxu0 0.0
    %4711 = vmatpush.msra.mxu0 %v4020
    %4712 = vmatpush.msra.mxu0 %v4018
    %4713 = vmatpush.msra.mxu0 %v4016
    %4714 = vmatpush.msra.mxu0 %v4014
    %4715 = vmatpush.msra.mxu0 %v4012
    %4716 = vmatpush.msra.mxu0 %v4010
    %4717 = vmatpush.msra.mxu0 %v4008
    %4718 = vmatpush.msra.mxu0 %v4006
    %4719 = vmatmul.f32.gmra.mxu0 %v4701
    %v4720 = vpop.f32.mrf.mxu0
    %v4721 = vadd.f32 %v4699, %v4720
    %4722 = vdwg.mxu0
    %4723 = vmatpush.msra.mxu0 0.0
    %4724 = vmatpush.msra.mxu0 0.0
    %4725 = vmatpush.msra.mxu0 0.0
    %4726 = vmatpush.msra.mxu0 0.0
    %4727 = vmatpush.msra.mxu0 0.0
    %4728 = vmatpush.msra.mxu0 0.0
    %4729 = vmatpush.msra.mxu0 0.0
    %4730 = vmatpush.msra.mxu0 0.0
    %4731 = vmatpush.msra.mxu0 %v4021
    %4732 = vmatpush.msra.mxu0 %v4019
    %4733 = vmatpush.msra.mxu0 %v4017
    %4734 = vmatpush.msra.mxu0 %v4015
    %4735 = vmatpush.msra.mxu0 %v4013
    %4736 = vmatpush.msra.mxu0 %v4011
    %4737 = vmatpush.msra.mxu0 %v4009
    %4738 = vmatpush.msra.mxu0 %v4007
    %4739 = vmatmul.f32.gmra.mxu0 %v4701
    %v4740 = vpop.f32.mrf.mxu0
    %v4741 = vadd.f32 %v4700, %v4740
    %4742 = vdwg.mxu0
    %v4743 = vxor.u32 %v4721, 2147483648
    %v4744 = vxor.u32 %v4741, 2147483648
    %v4745 = vmul.f32 %v4743, 1.442695
    %v4746 = vpow.pop %v4745
    %v4747 = vmul.f32 %v4744, 1.442695
    %v4748 = vpow.pop %v4747
    %v4749 = vadd.f32 %v4746, 1.0
    %v4750 = vadd.f32 %v4748, 1.0
    %v4751 = vrcp.pop %v4749
    %v4752 = vmul.f32 %v4749, %v4751
    %v4753 = vsub.f32 1.0, %v4752
    %v4754 = vmul.f32 %v4751, %v4753
    %v4755 = vadd.f32 %v4751, %v4754
    %vm4756 = vweird.f32 %v4749
    %vm4757 = vweird.f32 %v4751
    %vm4758 = vmor %vm4756, %vm4757
    %v4759 = vsel %vm4758, %v4751, %v4755
    %v4760 = vand.u32 2147483647, %v4749
    %vm4761 = vcmp.eq.f32.partialorder %v4760, 8.507059e+37
    %v4762 = vand.u32 %v4749, 2147483648
    %v4763 = vor.u32 1.1754944e-38, %v4762
    %v4764 = vsel %vm4761, %v4763, %v4759
    %v4765 = vmul.f32 1.0, %v4764
    %v4766 = vrcp.pop %v4750
    %v4767 = vmul.f32 %v4750, %v4766
    %v4768 = vsub.f32 1.0, %v4767
    %v4769 = vmul.f32 %v4766, %v4768
    %v4770 = vadd.f32 %v4766, %v4769
    %vm4771 = vweird.f32 %v4750
    %vm4772 = vweird.f32 %v4766
    %vm4773 = vmor %vm4771, %vm4772
    %v4774 = vsel %vm4773, %v4766, %v4770
    %v4775 = vand.u32 2147483647, %v4750
    %vm4776 = vcmp.eq.f32.partialorder %v4775, 8.507059e+37
    %v4777 = vand.u32 %v4750, 2147483648
    %v4778 = vor.u32 1.1754944e-38, %v4777
    %v4779 = vsel %vm4776, %v4778, %v4774
    %v4780 = vmul.f32 1.0, %v4779
    %v4781 = vtanh.pop %v4741
    %v4782 = vmul.f32 %v4765, %v4691
    %v4783 = vmul.f32 %v4765, %v4781
    %4785 = vrot.lane.b32.xlu0 %v4783, 64
    %v4786 = vpop.permute.xlu0 %4785
    %v4788 = vadd.f32 %v4782, %v4786
    %v4789 = vtanh.pop %v4788
    %v4790 = vmul.f32 %v4780, %v4789
    %4792 = vrot.lane.b32.xlu0 %v4790, 64
    %v4793 = vpop.permute.xlu0 %4792
    %4795 = vst.msk [vmem:[%s1016] sm:$0xff] %vm228, %v4793
    %v4796 = vld [vmem:[%s1016] sm:$0xff]
    %v4797 = vld [vmem:[%s6] sm:$0xff]
    %v4798 = vld [vmem:[%s6 + $0x8] sm:$0xff]
    %v4799 = vld [vmem:[%s6 + $0x10] sm:$0xff]
    %v4800 = vld [vmem:[%s6 + $0x18] sm:$0xff]
    %v4801 = vld [vmem:[%s6 + $0x20] sm:$0xff]
    %v4802 = vld [vmem:[%s6 + $0x28] sm:$0xff]
    %v4803 = vld [vmem:[%s6 + $0x30] sm:$0xff]
    %v4804 = vld [vmem:[%s6 + $0x38] sm:$0xff]
    %v4805 = vld [vmem:[#allocation4] sm:$0x1]
    %v4807 = vperm.slane %v4805, 0
    %v4810 = vsel %vm228, %v4796, 0
    %4812 = vmatpush.msra.mxu0 0.0
    %4813 = vmatpush.msra.mxu0 0.0
    %4814 = vmatpush.msra.mxu0 0.0
    %4815 = vmatpush.msra.mxu0 0.0
    %4816 = vmatpush.msra.mxu0 0.0
    %4817 = vmatpush.msra.mxu0 0.0
    %4818 = vmatpush.msra.mxu0 0.0
    %4819 = vmatpush.msra.mxu0 0.0
    %4820 = vmatpush.msra.mxu0 %v4804
    %4821 = vmatpush.msra.mxu0 %v4803
    %4822 = vmatpush.msra.mxu0 %v4802
    %4823 = vmatpush.msra.mxu0 %v4801
    %4824 = vmatpush.msra.mxu0 %v4800
    %4825 = vmatpush.msra.mxu0 %v4799
    %4826 = vmatpush.msra.mxu0 %v4798
    %4827 = vmatpush.msra.mxu0 %v4797
    %4828 = vmatmul.f32.gmra.mxu0 %v4810
    %v4829 = vpop.f32.mrf.mxu0
    %v4830 = vadd.f32 %v4807, %v4829
    %4831 = vdwg.mxu0
    %vm4832 = vcmask 7168
    %4833 = vst.msk [vmem:[%s8] sm:$0xff] %vm4832, %v4830
    // Predicated region
    $region42: #{tpu_custom_call.1} parent=1 // pred_check
      _
    $region43: #{tpu_custom_call.1} parent=1 // pred_check_branch
      %4835 = sbr.rel (0) target = $region45
    $region44: #{tpu_custom_call.1} parent=1 // pred_region
      _
    $region45: #{tpu_custom_call.1} parent=1 // pred_fallthru
      _
    // Predicated region
    $region46: #{tpu_custom_call.1} parent=1 // pred_check
      _
    $region47: #{tpu_custom_call.1} parent=1 // pred_check_branch
      %4837 = sbr.rel (0) target = $region49
    $region48: #{tpu_custom_call.1} parent=1 // pred_region
      _
    $region49: #{tpu_custom_call.1} parent=1 // pred_fallthru
      _
    %4838 = vsyncpa [#allocation6], 1
    %4839 = vsyncpa [#allocation8], 1

</llo_original>
